<compile_context>
chip_gen: v5e
topology: v5e:2x2
jax: 0.10.0
libtpu: 0.0.40
codegen_flags: <defaults>
</compile_context>

<pallas_src>
import functools

import jax
import jax.numpy as jnp
from jax.experimental import pallas as pl
from jax.experimental.pallas import tpu as pltpu


# ------------------------------ Pallas kernel ------------------------------- #
def _tap_conv3d_kernel(*refs, k_d, k_hw, Ho, Wo, out_halo):
    """Direct conv3d + bias + ReLU over one (n, d) output plane.

    Grid = (N, D), both "parallel".  refs = src_0..src_{k_d-1}, w, bias, out.
      src_kd : (1, 1, H_in, W_in, Cin) VMEM block -- the input plane for depth
               tap kd (index_map already applied d + kd - k_d//2, clamped).
      w      : (k_d, k_hw*k_hw*Cin, Cout) packed weights, VMEM-resident.
      bias   : (1, Cout) f32, VMEM-resident.
      out    : (1, 1, Ho+2*out_halo, Wo+2*out_halo, Cout); when out_halo > 0 the
               halo ring is zero-filled so the next conv consumes it directly.
    """
    src_refs = refs[:k_d]
    w_ref = refs[k_d]
    b_ref = refs[k_d + 1]
    o_ref = refs[k_d + 2]

    d = pl.program_id(1)
    n_d = pl.num_programs(1)
    half_d = k_d // 2
    cout = o_ref.shape[-1]

    acc = jnp.zeros((Ho * Wo, cout), jnp.float32)
    for kd in range(k_d):
        slab = src_refs[kd][0, 0]                       # (H_in, W_in, Cin)
        if kd != half_d:
            # Out-of-range depth taps are the implicit zero padding along depth:
            # the clamped index_map fetched *some* valid plane, so zero its
            # contribution (cheap scalar-broadcast multiply on the VPU).
            du = d + (kd - half_d)
            valid = jnp.logical_and(du >= 0, du < n_d)
            slab = slab * valid.astype(slab.dtype)
        if k_hw == 1:
            # conv1 path: in-plane taps were pre-packed into the channel axis,
            # so the LHS is just the flattened plane (free reshape, Wo % 8 == 0).
            lhs = slab.reshape(Ho * Wo, slab.shape[-1])
        else:
            # conv2 path: build one lane-dense (Ho*Wo, k*k*Cin) LHS per depth
            # tap from the 9 shifted, lane-aligned (Cin=128) slices.
            pieces = [slab[kh:kh + Ho, kw:kw + Wo, :]
                      for kh in range(k_hw) for kw in range(k_hw)]
            lhs = jnp.concatenate(pieces, axis=-1).reshape(Ho * Wo, -1)
        acc = acc + jnp.dot(lhs, w_ref[kd],
                            preferred_element_type=jnp.float32)

    res = jnp.maximum(acc + b_ref[...], 0.0)            # f32 epilogue
    res = res.astype(o_ref.dtype).reshape(Ho, Wo, cout)
    if out_halo:
        # Assemble the zero-padded plane in registers and issue a single
        # full-block store (no second, misaligned interior store).
        h = out_halo
        zr = jnp.zeros((h, Wo, cout), res.dtype)
        res = jnp.concatenate([zr, res, zr], axis=0)      # (Ho+2h, Wo, C)
        zc = jnp.zeros((Ho + 2 * h, h, cout), res.dtype)
        res = jnp.concatenate([zc, res, zc], axis=1)      # (Ho+2h, Wo+2h, C)
    o_ref[0, 0] = res


# ------------------------------ Python wrapper ------------------------------ #
def tap_conv3d_bias_relu(src, w_packed, bias, *, k_d, k_hw, Ho, Wo,
                         out_halo, out_dtype):
    """Fused direct conv3d (stride 1, 'same' pad) + bias + ReLU.

    src      : (N, D, H_in, W_in, Cin) channels-last.  For k_hw > 1 it must be
               zero-padded by k_hw//2 in H and W; for k_hw == 1 the in-plane
               taps are already packed into Cin.
    w_packed : (k_d, k_hw*k_hw*Cin, Cout), i.e. the DHWIO weight reshaped so
               the (kh, kw, ci) taps line up with the kernel's LHS packing.
    """
    N, D, H_in, W_in, Cin = src.shape
    cout = w_packed.shape[-1]
    half_d = k_d // 2
    assert Wo % 8 == 0, "Wo must be a multiple of 8 (free in-kernel reshapes)"
    assert w_packed.shape == (k_d, k_hw * k_hw * Cin, cout)

    inputs, in_specs = [], []
    # One ref per depth tap; clamped index (the kernel masks out-of-range taps).
    for kd in range(k_d):
        def src_map(n, d, _kd=kd):
            du = jnp.minimum(jnp.maximum(d + _kd - half_d, 0), D - 1)
            return (n, du, 0, 0, 0)

        inputs.append(src)
        in_specs.append(pl.BlockSpec((1, 1, H_in, W_in, Cin), src_map))

    # Whole weight / bias VMEM-resident (constant index_map -> fetched once).
    inputs.append(w_packed)
    in_specs.append(pl.BlockSpec(w_packed.shape, lambda n, d: (0, 0, 0)))
    inputs.append(bias.reshape(1, cout).astype(jnp.float32))
    in_specs.append(pl.BlockSpec((1, cout), lambda n, d: (0, 0)))

    Hp_o, Wp_o = Ho + 2 * out_halo, Wo + 2 * out_halo
    out_shape = jax.ShapeDtypeStruct((N, D, Hp_o, Wp_o, cout), out_dtype)
    out_spec = pl.BlockSpec((1, 1, Hp_o, Wp_o, cout),
                            lambda n, d: (n, d, 0, 0, 0))

    kernel = functools.partial(_tap_conv3d_kernel, k_d=k_d, k_hw=k_hw,
                               Ho=Ho, Wo=Wo, out_halo=out_halo)

    return pl.pallas_call(
        kernel,
        out_shape=out_shape,
        grid=(N, D),
        in_specs=in_specs,
        out_specs=out_spec,
        compiler_params=pltpu.CompilerParams(
            dimension_semantics=("parallel", "parallel"),
            vmem_limit_bytes=32 * 1024 * 1024),
    )(*inputs)


def upblock3d_forward(x, y, params, *, compute_dtype=jnp.bfloat16):
    """UpBlock3D.forward (batch_norm=False), channels-last NDHWC layout.

    x: (N, Dx, Hx, Wx, Cx);  y: (N, 2Dx, 2Hx, 2Wx, Cy).
    params: w1 (k,k,k,Cx+Cy,Cout) DHWIO, b1 (Cout,), w2 (k,k,k,Cout,Cout), b2.
    """
    N, Dx, Hx, Wx, Cx = x.shape
    Ny, D, Ho, Wo, Cy = y.shape
    assert Ny == N and (D, Ho, Wo) == (2 * Dx, 2 * Hx, 2 * Wx)
    k = params["w1"].shape[0]
    half = k // 2
    C1 = Cx + Cy
    cout = params["w1"].shape[-1]
    cd = compute_dtype

    # Nearest x2 upsample of x + channel concat with y: x and the concat are the
    # cheap, low-channel tensors (one small XLA pass; no 27x im2col anywhere).
    up = jnp.repeat(jnp.repeat(jnp.repeat(x, 2, axis=1), 2, axis=2), 2, axis=3)
    inp1 = jnp.concatenate([up, y], axis=-1).astype(cd)          # (N,D,Ho,Wo,C1)
    inp1 = jnp.pad(inp1, ((0, 0), (0, 0), (half, half), (half, half), (0, 0)))
    # Pack the in-plane (kh, kw) taps into the channel axis so conv1 becomes a
    # depth-tap-only conv with a lane-dense K = k*k*C1 contraction in-kernel.
    cols = [inp1[:, :, kh:kh + Ho, kw:kw + Wo, :]
            for kh in range(k) for kw in range(k)]
    inp1_cols = jnp.concatenate(cols, axis=-1)            # (N, D, Ho, Wo, k*k*C1)

    w1 = params["w1"].astype(cd).reshape(k, k * k * C1, cout)     # tap-packed
    w2 = params["w2"].astype(cd).reshape(k, k * k * cout, cout)

    # conv1 + bias + ReLU; output stored bf16, pre-padded in H/W for conv2.
    h1 = tap_conv3d_bias_relu(
        inp1_cols, w1, params["b1"], k_d=k, k_hw=1, Ho=Ho, Wo=Wo,
        out_halo=half, out_dtype=cd)

    # conv2 + bias + ReLU -> final f32 output.
    out = tap_conv3d_bias_relu(
        h1, w2, params["b2"], k_d=k, k_hw=k, Ho=Ho, Wo=Wo,
        out_halo=0, out_dtype=jnp.float32)
    return out


# -------------------------------- reference --------------------------------- #
def _ref_forward(x, y, params, *, compute_dtype=jnp.bfloat16):
    """XLA reference mirroring the kernel's bf16-input / f32-accum numerics."""
    cd = compute_dtype
    k = params["w1"].shape[0]
    half = k // 2

    def conv(a, w, b):
        o = jax.lax.conv_general_dilated(
            a.astype(cd), w.astype(cd), window_strides=(1, 1, 1),
            padding=[(half, half)] * 3,
            dimension_numbers=("NDHWC", "DHWIO", "NDHWC"),
            preferred_element_type=jnp.float32)
        return jnp.maximum(o + b.astype(jnp.float32), 0.0)

    up = jnp.repeat(jnp.repeat(jnp.repeat(x, 2, axis=1), 2, axis=2), 2, axis=3)
    inp = jnp.concatenate([up, y], axis=-1)
    h = conv(inp, params["w1"], params["b1"]).astype(cd)   # bf16 intermediate
    return conv(h, params["w2"], params["b2"])


# ----------------------------------- main ------------------------------------ #
if __name__ == "__main__":
    key = jax.random.PRNGKey(0)
    k1, k2, k3, k4, k5, k6 = jax.random.split(key, 6)

    # Small but TPU-friendly shapes: Cout=128 keeps output stores lane-dense.
    N, Cx, Cy, C_out = 2, 8, 8, 128
    C_in = Cx + Cy
    Dx, Hx, Wx = 4, 8, 8            # x spatial; y is at 2x resolution

    x = jax.random.normal(k1, (N, Dx, Hx, Wx, Cx), jnp.float32)
    y = jax.random.normal(k2, (N, 2 * Dx, 2 * Hx, 2 * Wx, Cy), jnp.float32)
    params = {
        "w1": 0.1 * jax.random.normal(k3, (3, 3, 3, C_in, C_out), jnp.float32),
        "b1": 0.1 * jax.random.normal(k4, (C_out,), jnp.float32),
        "w2": 0.1 * jax.random.normal(k5, (3, 3, 3, C_out, C_out), jnp.float32),
        "b2": 0.1 * jax.random.normal(k6, (C_out,), jnp.float32),
    }

    fwd = jax.jit(upblock3d_forward)
    out = jax.block_until_ready(fwd(x, y, params))

    ref = _ref_forward(x, y, params)
    assert out.shape == (N, 2 * Dx, 2 * Hx, 2 * Wx, C_out), out.shape
    max_err = float(jnp.max(jnp.abs(out - ref)))
    # bf16 MXU inputs + a bf16 intermediate mean rare 1-ulp rounding differences
    # vs. the XLA reference (different accumulation order); tolerance set so.
    assert jnp.allclose(out, ref, atol=2e-2, rtol=2e-2), f"max|diff|={max_err:.3e}"

    print("KERNEL_OK")
</pallas_src>

<mosaic_0001>
module attributes {stable_mosaic.version = 11 : i64} {
  func.func @_tap_conv3d_kernel(%arg0: i32, %arg1: i32, %arg2: memref<1x1x16x16x144xbf16, #tpu.memory_space<vmem>>, %arg3: memref<1x1x16x16x144xbf16, #tpu.memory_space<vmem>>, %arg4: memref<1x1x16x16x144xbf16, #tpu.memory_space<vmem>>, %arg5: memref<3x144x128xbf16, #tpu.memory_space<vmem>>, %arg6: memref<1x128xf32, #tpu.memory_space<vmem>>, %arg7: memref<1x1x18x18x128xbf16, #tpu.memory_space<vmem>>) attributes {dimension_semantics = [#tpu.dimension_semantics<parallel>, #tpu.dimension_semantics<parallel>], iteration_bounds = array<i64: 2, 8>, scalar_prefetch = 0 : i64, scratch_operands = 0 : i64, tpu.core_type = #tpu.core_type<tc>, window_params = [{transform_indices = @transform_0, window_bounds = array<i64: 1, 1, 16, 16, 144>}, {transform_indices = @transform_1, window_bounds = array<i64: 1, 1, 16, 16, 144>}, {transform_indices = @transform_2, window_bounds = array<i64: 1, 1, 16, 16, 144>}, {pipeline_mode = #tpu.pipeline_mode<synchronous>, transform_indices = @transform_3, window_bounds = array<i64: 3, 144, 128>}, {pipeline_mode = #tpu.pipeline_mode<synchronous>, transform_indices = @transform_4, window_bounds = array<i64: 1, 128>}, {transform_indices = @transform_5, window_bounds = array<i64: 1, 1, 18, 18, 128>}]} {
    %cst = arith.constant 0.000000e+00 : f32
    %0 = vector.broadcast %cst : f32 to vector<256x128xf32>
    %c0 = arith.constant 0 : index
    %c0_0 = arith.constant 0 : index
    %c0_1 = arith.constant 0 : index
    %c0_2 = arith.constant 0 : index
    %c0_3 = arith.constant 0 : index
    %1 = vector.load %arg2[%c0, %c0_0, %c0_1, %c0_2, %c0_3] : memref<1x1x16x16x144xbf16, #tpu.memory_space<vmem>>, vector<1x1x16x16x144xbf16>
    %2 = vector.shape_cast %1 : vector<1x1x16x16x144xbf16> to vector<16x16x144xbf16>
    %c-1_i32 = arith.constant -1 : i32
    %3 = arith.addi %arg1, %c-1_i32 : i32
    %c0_i32 = arith.constant 0 : i32
    %4 = arith.cmpi sge, %3, %c0_i32 : i32
    %c8_i32 = arith.constant 8 : i32
    %5 = arith.cmpi slt, %3, %c8_i32 : i32
    %6 = arith.andi %4, %5 : i1
    %7 = arith.extui %6 : i1 to i32
    %8 = arith.sitofp %7 : i32 to f32
    %9 = arith.truncf %8 : f32 to bf16
    %10 = vector.broadcast %9 : bf16 to vector<16x16x144xbf16>
    %11 = arith.mulf %2, %10 : vector<16x16x144xbf16>
    %12 = vector.shape_cast %11 : vector<16x16x144xbf16> to vector<256x144xbf16>
    %c0_4 = arith.constant 0 : index
    %c0_5 = arith.constant 0 : index
    %c0_6 = arith.constant 0 : index
    %13 = vector.load %arg5[%c0_4, %c0_5, %c0_6] : memref<3x144x128xbf16, #tpu.memory_space<vmem>>, vector<1x144x128xbf16>
    %14 = vector.shape_cast %13 : vector<1x144x128xbf16> to vector<144x128xbf16>
    %cst_7 = arith.constant dense<0.000000e+00> : vector<256x128xf32>
    %15 = tpu.matmul %12, %14, %cst_7 {dimension_numbers = #tpu.dot_dimension_numbers<[1], [0], [0], [1], [0, 0, 1, 1], [], []>} : vector<256x144xbf16>, vector<144x128xbf16>, vector<256x128xf32> -> vector<256x128xf32>
    %16 = arith.addf %0, %15 : vector<256x128xf32>
    %c0_8 = arith.constant 0 : index
    %c0_9 = arith.constant 0 : index
    %c0_10 = arith.constant 0 : index
    %c0_11 = arith.constant 0 : index
    %c0_12 = arith.constant 0 : index
    %17 = vector.load %arg3[%c0_8, %c0_9, %c0_10, %c0_11, %c0_12] : memref<1x1x16x16x144xbf16, #tpu.memory_space<vmem>>, vector<1x1x16x16x144xbf16>
    %18 = vector.shape_cast %17 : vector<1x1x16x16x144xbf16> to vector<16x16x144xbf16>
    %19 = vector.shape_cast %18 : vector<16x16x144xbf16> to vector<256x144xbf16>
    %c1 = arith.constant 1 : index
    %c0_13 = arith.constant 0 : index
    %c0_14 = arith.constant 0 : index
    %20 = vector.load %arg5[%c1, %c0_13, %c0_14] : memref<3x144x128xbf16, #tpu.memory_space<vmem>>, vector<1x144x128xbf16>
    %21 = vector.shape_cast %20 : vector<1x144x128xbf16> to vector<144x128xbf16>
    %cst_15 = arith.constant dense<0.000000e+00> : vector<256x128xf32>
    %22 = tpu.matmul %19, %21, %cst_15 {dimension_numbers = #tpu.dot_dimension_numbers<[1], [0], [0], [1], [0, 0, 1, 1], [], []>} : vector<256x144xbf16>, vector<144x128xbf16>, vector<256x128xf32> -> vector<256x128xf32>
    %23 = arith.addf %16, %22 : vector<256x128xf32>
    %c0_16 = arith.constant 0 : index
    %c0_17 = arith.constant 0 : index
    %c0_18 = arith.constant 0 : index
    %c0_19 = arith.constant 0 : index
    %c0_20 = arith.constant 0 : index
    %24 = vector.load %arg4[%c0_16, %c0_17, %c0_18, %c0_19, %c0_20] : memref<1x1x16x16x144xbf16, #tpu.memory_space<vmem>>, vector<1x1x16x16x144xbf16>
    %25 = vector.shape_cast %24 : vector<1x1x16x16x144xbf16> to vector<16x16x144xbf16>
    %c1_i32 = arith.constant 1 : i32
    %26 = arith.addi %arg1, %c1_i32 : i32
    %c0_i32_21 = arith.constant 0 : i32
    %27 = arith.cmpi sge, %26, %c0_i32_21 : i32
    %c8_i32_22 = arith.constant 8 : i32
    %28 = arith.cmpi slt, %26, %c8_i32_22 : i32
    %29 = arith.andi %27, %28 : i1
    %30 = arith.extui %29 : i1 to i32
    %31 = arith.sitofp %30 : i32 to f32
    %32 = arith.truncf %31 : f32 to bf16
    %33 = vector.broadcast %32 : bf16 to vector<16x16x144xbf16>
    %34 = arith.mulf %25, %33 : vector<16x16x144xbf16>
    %35 = vector.shape_cast %34 : vector<16x16x144xbf16> to vector<256x144xbf16>
    %c2 = arith.constant 2 : index
    %c0_23 = arith.constant 0 : index
    %c0_24 = arith.constant 0 : index
    %36 = vector.load %arg5[%c2, %c0_23, %c0_24] : memref<3x144x128xbf16, #tpu.memory_space<vmem>>, vector<1x144x128xbf16>
    %37 = vector.shape_cast %36 : vector<1x144x128xbf16> to vector<144x128xbf16>
    %cst_25 = arith.constant dense<0.000000e+00> : vector<256x128xf32>
    %38 = tpu.matmul %35, %37, %cst_25 {dimension_numbers = #tpu.dot_dimension_numbers<[1], [0], [0], [1], [0, 0, 1, 1], [], []>} : vector<256x144xbf16>, vector<144x128xbf16>, vector<256x128xf32> -> vector<256x128xf32>
    %39 = arith.addf %23, %38 : vector<256x128xf32>
    %c0_26 = arith.constant 0 : index
    %c0_27 = arith.constant 0 : index
    %40 = vector.load %arg6[%c0_26, %c0_27] : memref<1x128xf32, #tpu.memory_space<vmem>>, vector<1x128xf32>
    %41 = vector.broadcast %40 : vector<1x128xf32> to vector<256x128xf32>
    %42 = arith.addf %39, %41 : vector<256x128xf32>
    %cst_28 = arith.constant 0.000000e+00 : f32
    %43 = vector.broadcast %cst_28 : f32 to vector<256x128xf32>
    %44 = arith.maximumf %42, %43 : vector<256x128xf32>
    %45 = arith.truncf %44 : vector<256x128xf32> to vector<256x128xbf16>
    %46 = vector.shape_cast %45 : vector<256x128xbf16> to vector<16x16x128xbf16>
    %cst_29 = arith.constant 0.000000e+00 : bf16
    %47 = vector.broadcast %cst_29 : bf16 to vector<1x16x128xbf16>
    %48 = tpu.concatenate %47, %46, %47 in 0 : vector<1x16x128xbf16>, vector<16x16x128xbf16>, vector<1x16x128xbf16> -> vector<18x16x128xbf16>
    %cst_30 = arith.constant 0.000000e+00 : bf16
    %49 = vector.broadcast %cst_30 : bf16 to vector<18x1x128xbf16>
    %50 = tpu.concatenate %49, %48, %49 in 1 : vector<18x1x128xbf16>, vector<18x16x128xbf16>, vector<18x1x128xbf16> -> vector<18x18x128xbf16>
    %c0_31 = arith.constant 0 : index
    %c0_32 = arith.constant 0 : index
    %c0_33 = arith.constant 0 : index
    %c0_34 = arith.constant 0 : index
    %c0_35 = arith.constant 0 : index
    %51 = vector.load %arg7[%c0_31, %c0_32, %c0_33, %c0_34, %c0_35] : memref<1x1x18x18x128xbf16, #tpu.memory_space<vmem>>, vector<1x1x18x18x128xbf16>
    %52 = vector.shape_cast %51 : vector<1x1x18x18x128xbf16> to vector<18x18x128xbf16>
    %53 = vector.shape_cast %50 : vector<18x18x128xbf16> to vector<1x1x18x18x128xbf16>
    tpu.vector_store %arg7[%c0_31, %c0_32, %c0_33, %c0_34, %c0_35], %53 {strides = array<i32>} : memref<1x1x18x18x128xbf16, #tpu.memory_space<vmem>>, vector<1x1x18x18x128xbf16>,
    return
  }
  func.func @transform_0(%arg0: i32, %arg1: i32) -> (i32, i32, i32, i32, i32) {
    %c0_i32 = arith.constant 0 : i32
    %0 = arith.addi %arg1, %c0_i32 : i32
    %c1_i32 = arith.constant 1 : i32
    %1 = arith.subi %0, %c1_i32 : i32
    %c0_i32_0 = arith.constant 0 : i32
    %2 = arith.maxsi %1, %c0_i32_0 : i32
    %c7_i32 = arith.constant 7 : i32
    %3 = arith.minsi %2, %c7_i32 : i32
    %c0_i32_1 = arith.constant 0 : i32
    %c0_i32_2 = arith.constant 0 : i32
    %c0_i32_3 = arith.constant 0 : i32
    %c0_i32_4 = arith.constant 0 : i32
    return %arg0, %3, %c0_i32_1, %c0_i32_2, %c0_i32_3 : i32, i32, i32, i32, i32
  }
  func.func @transform_1(%arg0: i32, %arg1: i32) -> (i32, i32, i32, i32, i32) {
    %c1_i32 = arith.constant 1 : i32
    %0 = arith.addi %arg1, %c1_i32 : i32
    %c1_i32_0 = arith.constant 1 : i32
    %1 = arith.subi %0, %c1_i32_0 : i32
    %c0_i32 = arith.constant 0 : i32
    %2 = arith.maxsi %1, %c0_i32 : i32
    %c7_i32 = arith.constant 7 : i32
    %3 = arith.minsi %2, %c7_i32 : i32
    %c0_i32_1 = arith.constant 0 : i32
    %c0_i32_2 = arith.constant 0 : i32
    %c0_i32_3 = arith.constant 0 : i32
    %c0_i32_4 = arith.constant 0 : i32
    return %arg0, %3, %c0_i32_1, %c0_i32_2, %c0_i32_3 : i32, i32, i32, i32, i32
  }
  func.func @transform_2(%arg0: i32, %arg1: i32) -> (i32, i32, i32, i32, i32) {
    %c2_i32 = arith.constant 2 : i32
    %0 = arith.addi %arg1, %c2_i32 : i32
    %c1_i32 = arith.constant 1 : i32
    %1 = arith.subi %0, %c1_i32 : i32
    %c0_i32 = arith.constant 0 : i32
    %2 = arith.maxsi %1, %c0_i32 : i32
    %c7_i32 = arith.constant 7 : i32
    %3 = arith.minsi %2, %c7_i32 : i32
    %c0_i32_0 = arith.constant 0 : i32
    %c0_i32_1 = arith.constant 0 : i32
    %c0_i32_2 = arith.constant 0 : i32
    %c0_i32_3 = arith.constant 0 : i32
    return %arg0, %3, %c0_i32_0, %c0_i32_1, %c0_i32_2 : i32, i32, i32, i32, i32
  }
  func.func @transform_3(%arg0: i32, %arg1: i32) -> (i32, i32, i32) {
    %c0_i32 = arith.constant 0 : i32
    %c0_i32_0 = arith.constant 0 : i32
    %c0_i32_1 = arith.constant 0 : i32
    %c0_i32_2 = arith.constant 0 : i32
    return %c0_i32, %c0_i32_0, %c0_i32_1 : i32, i32, i32
  }
  func.func @transform_4(%arg0: i32, %arg1: i32) -> (i32, i32) {
    %c0_i32 = arith.constant 0 : i32
    %c0_i32_0 = arith.constant 0 : i32
    %c0_i32_1 = arith.constant 0 : i32
    return %c0_i32, %c0_i32_0 : i32, i32
  }
  func.func @transform_5(%arg0: i32, %arg1: i32) -> (i32, i32, i32, i32, i32) {
    %c0_i32 = arith.constant 0 : i32
    %c0_i32_0 = arith.constant 0 : i32
    %c0_i32_1 = arith.constant 0 : i32
    %c0_i32_2 = arith.constant 0 : i32
    return %arg0, %arg1, %c0_i32, %c0_i32_0, %c0_i32_1 : i32, i32, i32, i32, i32
  }
}

module attributes {stable_mosaic.version = 11 : i64} {
  func.func @_tap_conv3d_kernel(%arg0: i32, %arg1: i32, %arg2: memref<1x1x18x18x128xbf16, #tpu.memory_space<vmem>>, %arg3: memref<1x1x18x18x128xbf16, #tpu.memory_space<vmem>>, %arg4: memref<1x1x18x18x128xbf16, #tpu.memory_space<vmem>>, %arg5: memref<3x1152x128xbf16, #tpu.memory_space<vmem>>, %arg6: memref<1x128xf32, #tpu.memory_space<vmem>>, %arg7: memref<1x1x16x16x128xf32, #tpu.memory_space<vmem>>) attributes {dimension_semantics = [#tpu.dimension_semantics<parallel>, #tpu.dimension_semantics<parallel>], iteration_bounds = array<i64: 2, 8>, scalar_prefetch = 0 : i64, scratch_operands = 0 : i64, tpu.core_type = #tpu.core_type<tc>, window_params = [{transform_indices = @transform_0, window_bounds = array<i64: 1, 1, 18, 18, 128>}, {transform_indices = @transform_1, window_bounds = array<i64: 1, 1, 18, 18, 128>}, {transform_indices = @transform_2, window_bounds = array<i64: 1, 1, 18, 18, 128>}, {pipeline_mode = #tpu.pipeline_mode<synchronous>, transform_indices = @transform_3, window_bounds = array<i64: 3, 1152, 128>}, {pipeline_mode = #tpu.pipeline_mode<synchronous>, transform_indices = @transform_4, window_bounds = array<i64: 1, 128>}, {transform_indices = @transform_5, window_bounds = array<i64: 1, 1, 16, 16, 128>}]} {
    %cst = arith.constant 0.000000e+00 : f32
    %0 = vector.broadcast %cst : f32 to vector<256x128xf32>
    %c0 = arith.constant 0 : index
    %c0_0 = arith.constant 0 : index
    %c0_1 = arith.constant 0 : index
    %c0_2 = arith.constant 0 : index
    %c0_3 = arith.constant 0 : index
    %1 = vector.load %arg2[%c0, %c0_0, %c0_1, %c0_2, %c0_3] : memref<1x1x18x18x128xbf16, #tpu.memory_space<vmem>>, vector<1x1x18x18x128xbf16>
    %2 = vector.shape_cast %1 : vector<1x1x18x18x128xbf16> to vector<18x18x128xbf16>
    %c-1_i32 = arith.constant -1 : i32
    %3 = arith.addi %arg1, %c-1_i32 : i32
    %c0_i32 = arith.constant 0 : i32
    %4 = arith.cmpi sge, %3, %c0_i32 : i32
    %c8_i32 = arith.constant 8 : i32
    %5 = arith.cmpi slt, %3, %c8_i32 : i32
    %6 = arith.andi %4, %5 : i1
    %7 = arith.extui %6 : i1 to i32
    %8 = arith.sitofp %7 : i32 to f32
    %9 = arith.truncf %8 : f32 to bf16
    %10 = vector.broadcast %9 : bf16 to vector<18x18x128xbf16>
    %11 = arith.mulf %2, %10 : vector<18x18x128xbf16>
    %12 = vector.extract_strided_slice %11 {offsets = [0, 0, 0], sizes = [16, 16, 128], strides = [1, 1, 1]} : vector<18x18x128xbf16> to vector<16x16x128xbf16>
    %13 = vector.extract_strided_slice %11 {offsets = [0, 1, 0], sizes = [16, 16, 128], strides = [1, 1, 1]} : vector<18x18x128xbf16> to vector<16x16x128xbf16>
    %14 = vector.extract_strided_slice %11 {offsets = [0, 2, 0], sizes = [16, 16, 128], strides = [1, 1, 1]} : vector<18x18x128xbf16> to vector<16x16x128xbf16>
    %15 = vector.extract_strided_slice %11 {offsets = [1, 0, 0], sizes = [16, 16, 128], strides = [1, 1, 1]} : vector<18x18x128xbf16> to vector<16x16x128xbf16>
    %16 = vector.extract_strided_slice %11 {offsets = [1, 1, 0], sizes = [16, 16, 128], strides = [1, 1, 1]} : vector<18x18x128xbf16> to vector<16x16x128xbf16>
    %17 = vector.extract_strided_slice %11 {offsets = [1, 2, 0], sizes = [16, 16, 128], strides = [1, 1, 1]} : vector<18x18x128xbf16> to vector<16x16x128xbf16>
    %18 = vector.extract_strided_slice %11 {offsets = [2, 0, 0], sizes = [16, 16, 128], strides = [1, 1, 1]} : vector<18x18x128xbf16> to vector<16x16x128xbf16>
    %19 = vector.extract_strided_slice %11 {offsets = [2, 1, 0], sizes = [16, 16, 128], strides = [1, 1, 1]} : vector<18x18x128xbf16> to vector<16x16x128xbf16>
    %20 = vector.extract_strided_slice %11 {offsets = [2, 2, 0], sizes = [16, 16, 128], strides = [1, 1, 1]} : vector<18x18x128xbf16> to vector<16x16x128xbf16>
    %21 = tpu.concatenate %12, %13, %14, %15, %16, %17, %18, %19, %20 in 2 : vector<16x16x128xbf16>, vector<16x16x128xbf16>, vector<16x16x128xbf16>, vector<16x16x128xbf16>, vector<16x16x128xbf16>, vector<16x16x128xbf16>, vector<16x16x128xbf16>, vector<16x16x128xbf16>, vector<16x16x128xbf16> -> vector<16x16x1152xbf16>
    %22 = vector.shape_cast %21 : vector<16x16x1152xbf16> to vector<256x1152xbf16>
    %c0_4 = arith.constant 0 : index
    %c0_5 = arith.constant 0 : index
    %c0_6 = arith.constant 0 : index
    %23 = vector.load %arg5[%c0_4, %c0_5, %c0_6] : memref<3x1152x128xbf16, #tpu.memory_space<vmem>>, vector<1x1152x128xbf16>
    %24 = vector.shape_cast %23 : vector<1x1152x128xbf16> to vector<1152x128xbf16>
    %cst_7 = arith.constant dense<0.000000e+00> : vector<256x128xf32>
    %25 = tpu.matmul %22, %24, %cst_7 {dimension_numbers = #tpu.dot_dimension_numbers<[1], [0], [0], [1], [0, 0, 1, 1], [], []>} : vector<256x1152xbf16>, vector<1152x128xbf16>, vector<256x128xf32> -> vector<256x128xf32>
    %26 = arith.addf %0, %25 : vector<256x128xf32>
    %c0_8 = arith.constant 0 : index
    %c0_9 = arith.constant 0 : index
    %c0_10 = arith.constant 0 : index
    %c0_11 = arith.constant 0 : index
    %c0_12 = arith.constant 0 : index
    %27 = vector.load %arg3[%c0_8, %c0_9, %c0_10, %c0_11, %c0_12] : memref<1x1x18x18x128xbf16, #tpu.memory_space<vmem>>, vector<1x1x18x18x128xbf16>
    %28 = vector.shape_cast %27 : vector<1x1x18x18x128xbf16> to vector<18x18x128xbf16>
    %29 = vector.extract_strided_slice %28 {offsets = [0, 0, 0], sizes = [16, 16, 128], strides = [1, 1, 1]} : vector<18x18x128xbf16> to vector<16x16x128xbf16>
    %30 = vector.extract_strided_slice %28 {offsets = [0, 1, 0], sizes = [16, 16, 128], strides = [1, 1, 1]} : vector<18x18x128xbf16> to vector<16x16x128xbf16>
    %31 = vector.extract_strided_slice %28 {offsets = [0, 2, 0], sizes = [16, 16, 128], strides = [1, 1, 1]} : vector<18x18x128xbf16> to vector<16x16x128xbf16>
    %32 = vector.extract_strided_slice %28 {offsets = [1, 0, 0], sizes = [16, 16, 128], strides = [1, 1, 1]} : vector<18x18x128xbf16> to vector<16x16x128xbf16>
    %33 = vector.extract_strided_slice %28 {offsets = [1, 1, 0], sizes = [16, 16, 128], strides = [1, 1, 1]} : vector<18x18x128xbf16> to vector<16x16x128xbf16>
    %34 = vector.extract_strided_slice %28 {offsets = [1, 2, 0], sizes = [16, 16, 128], strides = [1, 1, 1]} : vector<18x18x128xbf16> to vector<16x16x128xbf16>
    %35 = vector.extract_strided_slice %28 {offsets = [2, 0, 0], sizes = [16, 16, 128], strides = [1, 1, 1]} : vector<18x18x128xbf16> to vector<16x16x128xbf16>
    %36 = vector.extract_strided_slice %28 {offsets = [2, 1, 0], sizes = [16, 16, 128], strides = [1, 1, 1]} : vector<18x18x128xbf16> to vector<16x16x128xbf16>
    %37 = vector.extract_strided_slice %28 {offsets = [2, 2, 0], sizes = [16, 16, 128], strides = [1, 1, 1]} : vector<18x18x128xbf16> to vector<16x16x128xbf16>
    %38 = tpu.concatenate %29, %30, %31, %32, %33, %34, %35, %36, %37 in 2 : vector<16x16x128xbf16>, vector<16x16x128xbf16>, vector<16x16x128xbf16>, vector<16x16x128xbf16>, vector<16x16x128xbf16>, vector<16x16x128xbf16>, vector<16x16x128xbf16>, vector<16x16x128xbf16>, vector<16x16x128xbf16> -> vector<16x16x1152xbf16>
    %39 = vector.shape_cast %38 : vector<16x16x1152xbf16> to vector<256x1152xbf16>
    %c1 = arith.constant 1 : index
    %c0_13 = arith.constant 0 : index
    %c0_14 = arith.constant 0 : index
    %40 = vector.load %arg5[%c1, %c0_13, %c0_14] : memref<3x1152x128xbf16, #tpu.memory_space<vmem>>, vector<1x1152x128xbf16>
    %41 = vector.shape_cast %40 : vector<1x1152x128xbf16> to vector<1152x128xbf16>
    %cst_15 = arith.constant dense<0.000000e+00> : vector<256x128xf32>
    %42 = tpu.matmul %39, %41, %cst_15 {dimension_numbers = #tpu.dot_dimension_numbers<[1], [0], [0], [1], [0, 0, 1, 1], [], []>} : vector<256x1152xbf16>, vector<1152x128xbf16>, vector<256x128xf32> -> vector<256x128xf32>
    %43 = arith.addf %26, %42 : vector<256x128xf32>
    %c0_16 = arith.constant 0 : index
    %c0_17 = arith.constant 0 : index
    %c0_18 = arith.constant 0 : index
    %c0_19 = arith.constant 0 : index
    %c0_20 = arith.constant 0 : index
    %44 = vector.load %arg4[%c0_16, %c0_17, %c0_18, %c0_19, %c0_20] : memref<1x1x18x18x128xbf16, #tpu.memory_space<vmem>>, vector<1x1x18x18x128xbf16>
    %45 = vector.shape_cast %44 : vector<1x1x18x18x128xbf16> to vector<18x18x128xbf16>
    %c1_i32 = arith.constant 1 : i32
    %46 = arith.addi %arg1, %c1_i32 : i32
    %c0_i32_21 = arith.constant 0 : i32
    %47 = arith.cmpi sge, %46, %c0_i32_21 : i32
    %c8_i32_22 = arith.constant 8 : i32
    %48 = arith.cmpi slt, %46, %c8_i32_22 : i32
    %49 = arith.andi %47, %48 : i1
    %50 = arith.extui %49 : i1 to i32
    %51 = arith.sitofp %50 : i32 to f32
    %52 = arith.truncf %51 : f32 to bf16
    %53 = vector.broadcast %52 : bf16 to vector<18x18x128xbf16>
    %54 = arith.mulf %45, %53 : vector<18x18x128xbf16>
    %55 = vector.extract_strided_slice %54 {offsets = [0, 0, 0], sizes = [16, 16, 128], strides = [1, 1, 1]} : vector<18x18x128xbf16> to vector<16x16x128xbf16>
    %56 = vector.extract_strided_slice %54 {offsets = [0, 1, 0], sizes = [16, 16, 128], strides = [1, 1, 1]} : vector<18x18x128xbf16> to vector<16x16x128xbf16>
    %57 = vector.extract_strided_slice %54 {offsets = [0, 2, 0], sizes = [16, 16, 128], strides = [1, 1, 1]} : vector<18x18x128xbf16> to vector<16x16x128xbf16>
    %58 = vector.extract_strided_slice %54 {offsets = [1, 0, 0], sizes = [16, 16, 128], strides = [1, 1, 1]} : vector<18x18x128xbf16> to vector<16x16x128xbf16>
    %59 = vector.extract_strided_slice %54 {offsets = [1, 1, 0], sizes = [16, 16, 128], strides = [1, 1, 1]} : vector<18x18x128xbf16> to vector<16x16x128xbf16>
    %60 = vector.extract_strided_slice %54 {offsets = [1, 2, 0], sizes = [16, 16, 128], strides = [1, 1, 1]} : vector<18x18x128xbf16> to vector<16x16x128xbf16>
    %61 = vector.extract_strided_slice %54 {offsets = [2, 0, 0], sizes = [16, 16, 128], strides = [1, 1, 1]} : vector<18x18x128xbf16> to vector<16x16x128xbf16>
    %62 = vector.extract_strided_slice %54 {offsets = [2, 1, 0], sizes = [16, 16, 128], strides = [1, 1, 1]} : vector<18x18x128xbf16> to vector<16x16x128xbf16>
    %63 = vector.extract_strided_slice %54 {offsets = [2, 2, 0], sizes = [16, 16, 128], strides = [1, 1, 1]} : vector<18x18x128xbf16> to vector<16x16x128xbf16>
    %64 = tpu.concatenate %55, %56, %57, %58, %59, %60, %61, %62, %63 in 2 : vector<16x16x128xbf16>, vector<16x16x128xbf16>, vector<16x16x128xbf16>, vector<16x16x128xbf16>, vector<16x16x128xbf16>, vector<16x16x128xbf16>, vector<16x16x128xbf16>, vector<16x16x128xbf16>, vector<16x16x128xbf16> -> vector<16x16x1152xbf16>
    %65 = vector.shape_cast %64 : vector<16x16x1152xbf16> to vector<256x1152xbf16>
    %c2 = arith.constant 2 : index
    %c0_23 = arith.constant 0 : index
    %c0_24 = arith.constant 0 : index
    %66 = vector.load %arg5[%c2, %c0_23, %c0_24] : memref<3x1152x128xbf16, #tpu.memory_space<vmem>>, vector<1x1152x128xbf16>
    %67 = vector.shape_cast %66 : vector<1x1152x128xbf16> to vector<1152x128xbf16>
    %cst_25 = arith.constant dense<0.000000e+00> : vector<256x128xf32>
    %68 = tpu.matmul %65, %67, %cst_25 {dimension_numbers = #tpu.dot_dimension_numbers<[1], [0], [0], [1], [0, 0, 1, 1], [], []>} : vector<256x1152xbf16>, vector<1152x128xbf16>, vector<256x128xf32> -> vector<256x128xf32>
    %69 = arith.addf %43, %68 : vector<256x128xf32>
    %c0_26 = arith.constant 0 : index
    %c0_27 = arith.constant 0 : index
    %70 = vector.load %arg6[%c0_26, %c0_27] : memref<1x128xf32, #tpu.memory_space<vmem>>, vector<1x128xf32>
    %71 = vector.broadcast %70 : vector<1x128xf32> to vector<256x128xf32>
    %72 = arith.addf %69, %71 : vector<256x128xf32>
    %cst_28 = arith.constant 0.000000e+00 : f32
    %73 = vector.broadcast %cst_28 : f32 to vector<256x128xf32>
    %74 = arith.maximumf %72, %73 : vector<256x128xf32>
    %75 = vector.shape_cast %74 : vector<256x128xf32> to vector<16x16x128xf32>
    %c0_29 = arith.constant 0 : index
    %c0_30 = arith.constant 0 : index
    %c0_31 = arith.constant 0 : index
    %c0_32 = arith.constant 0 : index
    %c0_33 = arith.constant 0 : index
    %76 = vector.load %arg7[%c0_29, %c0_30, %c0_31, %c0_32, %c0_33] : memref<1x1x16x16x128xf32, #tpu.memory_space<vmem>>, vector<1x1x16x16x128xf32>
    %77 = vector.shape_cast %76 : vector<1x1x16x16x128xf32> to vector<16x16x128xf32>
    %78 = vector.shape_cast %75 : vector<16x16x128xf32> to vector<1x1x16x16x128xf32>
    tpu.vector_store %arg7[%c0_29, %c0_30, %c0_31, %c0_32, %c0_33], %78 {strides = array<i32>} : memref<1x1x16x16x128xf32, #tpu.memory_space<vmem>>, vector<1x1x16x16x128xf32>,
    return
  }
  func.func @transform_0(%arg0: i32, %arg1: i32) -> (i32, i32, i32, i32, i32) {
    %c0_i32 = arith.constant 0 : i32
    %0 = arith.addi %arg1, %c0_i32 : i32
    %c1_i32 = arith.constant 1 : i32
    %1 = arith.subi %0, %c1_i32 : i32
    %c0_i32_0 = arith.constant 0 : i32
    %2 = arith.maxsi %1, %c0_i32_0 : i32
    %c7_i32 = arith.constant 7 : i32
    %3 = arith.minsi %2, %c7_i32 : i32
    %c0_i32_1 = arith.constant 0 : i32
    %c0_i32_2 = arith.constant 0 : i32
    %c0_i32_3 = arith.constant 0 : i32
    %c0_i32_4 = arith.constant 0 : i32
    return %arg0, %3, %c0_i32_1, %c0_i32_2, %c0_i32_3 : i32, i32, i32, i32, i32
  }
  func.func @transform_1(%arg0: i32, %arg1: i32) -> (i32, i32, i32, i32, i32) {
    %c1_i32 = arith.constant 1 : i32
    %0 = arith.addi %arg1, %c1_i32 : i32
    %c1_i32_0 = arith.constant 1 : i32
    %1 = arith.subi %0, %c1_i32_0 : i32
    %c0_i32 = arith.constant 0 : i32
    %2 = arith.maxsi %1, %c0_i32 : i32
    %c7_i32 = arith.constant 7 : i32
    %3 = arith.minsi %2, %c7_i32 : i32
    %c0_i32_1 = arith.constant 0 : i32
    %c0_i32_2 = arith.constant 0 : i32
    %c0_i32_3 = arith.constant 0 : i32
    %c0_i32_4 = arith.constant 0 : i32
    return %arg0, %3, %c0_i32_1, %c0_i32_2, %c0_i32_3 : i32, i32, i32, i32, i32
  }
  func.func @transform_2(%arg0: i32, %arg1: i32) -> (i32, i32, i32, i32, i32) {
    %c2_i32 = arith.constant 2 : i32
    %0 = arith.addi %arg1, %c2_i32 : i32
    %c1_i32 = arith.constant 1 : i32
    %1 = arith.subi %0, %c1_i32 : i32
    %c0_i32 = arith.constant 0 : i32
    %2 = arith.maxsi %1, %c0_i32 : i32
    %c7_i32 = arith.constant 7 : i32
    %3 = arith.minsi %2, %c7_i32 : i32
    %c0_i32_0 = arith.constant 0 : i32
    %c0_i32_1 = arith.constant 0 : i32
    %c0_i32_2 = arith.constant 0 : i32
    %c0_i32_3 = arith.constant 0 : i32
    return %arg0, %3, %c0_i32_0, %c0_i32_1, %c0_i32_2 : i32, i32, i32, i32, i32
  }
  func.func @transform_3(%arg0: i32, %arg1: i32) -> (i32, i32, i32) {
    %c0_i32 = arith.constant 0 : i32
    %c0_i32_0 = arith.constant 0 : i32
    %c0_i32_1 = arith.constant 0 : i32
    %c0_i32_2 = arith.constant 0 : i32
    return %c0_i32, %c0_i32_0, %c0_i32_1 : i32, i32, i32
  }
  func.func @transform_4(%arg0: i32, %arg1: i32) -> (i32, i32) {
    %c0_i32 = arith.constant 0 : i32
    %c0_i32_0 = arith.constant 0 : i32
    %c0_i32_1 = arith.constant 0 : i32
    return %c0_i32, %c0_i32_0 : i32, i32
  }
  func.func @transform_5(%arg0: i32, %arg1: i32) -> (i32, i32, i32, i32, i32) {
    %c0_i32 = arith.constant 0 : i32
    %c0_i32_0 = arith.constant 0 : i32
    %c0_i32_1 = arith.constant 0 : i32
    %c0_i32_2 = arith.constant 0 : i32
    return %arg0, %arg1, %c0_i32, %c0_i32_0, %c0_i32_1 : i32, i32, i32, i32, i32
  }
}

</mosaic_0001>

<llo_original>
// kernel: upblock3d_forward.2
$region0: #{upblock3d_forward.2}
  #allocation0 [shape = 'u32[]', space=smem, size = 0x4, offset = 0x4, fixed_abs, tag = 'smem constant byte address 0x4 - core index']
  #allocation1 [shape = 'u32[72,128]{1,0:T(1,128)}', space=vmem, size = 0x9000, scoped, tag = 'internal scratch']
  %s0 = inlined_call_operand.vmem [shape: bf16[2,8,16,16,144], index: 0, kind: input, shape index: {}, may-alias: {0,1,2}]
  %s1 = inlined_call_operand.vmem [shape: bf16[2,8,16,16,144], index: 1, kind: input, shape index: {}, may-alias: {0,1,2}]
  %s2 = inlined_call_operand.vmem [shape: bf16[2,8,16,16,144], index: 2, kind: input, shape index: {}, may-alias: {0,1,2}]
  %s3 = inlined_call_operand.vmem [shape: bf16[3,144,128], index: 3, kind: input, shape index: {}]
  %s4 = inlined_call_operand.vmem [shape: f32[1,128], index: 4, kind: input, shape index: {}]
  %s5 = inlined_call_operand.vmem [shape: bf16[2,8,18,18,128], index: 5, kind: output, shape index: {}]
  %s6 = sld [smem:[#allocation0]]
  $region53: #{upblock3d_forward.2} parent=0
    _
  %s8 = ssub.s32 1, %s6
  %s9 = scalar_select 0, %s8, %s6
  loop: start=0, step=1, limit=18
  $region2: #{upblock3d_forward.2} parent=0 // loop_pre_header
    _
  $region3: #{upblock3d_forward.2} parent=0 // loop_header
    %s11 = sphi 0, %s15
    %p12 = scmp.ge.s32.totalorder %s11, 18
    %s18 = sphi 0, %s30
    %s19 = sphi 0, %s26
    %s20 = sphi 0, %s18
    %s21 = sphi 0, %s19
    %s22 = sphi 0, %s20
    %s23 = sphi 0, %s21
    %s45 = sphi 0, %s47
    %s48 = sphi 0, %s45
    %s49 = sphi 0, %s48
    %s65 = sphi 0, %s49
    %s81 = sphi 0, %s83
    %s84 = sphi 0, %s81
    %s85 = sphi 0, %s84
    %s101 = sphi 0, %s85
    %s119 = sphi 0, %s121
    %s122 = sphi 0, %s119
    %s123 = sphi 0, %s122
    %s139 = sphi 0, %s123
    %s143 = sphi 0, %s143
    %s145 = sphi 0, %s143
    %s146 = sphi 0, %s145
    %s160 = sphi 0, %s146
    %s164 = sphi 0, %s164
    %s166 = sphi 0, %s164
    %s167 = sphi 0, %s166
    %s181 = sphi 0, %s167
    %s189 = sphi 0, %s191
    %s192 = sphi 0, %s189
    %s193 = sphi 0, %s192
    %s209 = sphi 0, %s193
  $region4: #{upblock3d_forward.2} parent=0 // loop_header_branch
    %14 = sbr.rel (%p12) target = $region8
  $region5: #{upblock3d_forward.2} parent=0 // loop_body
    %s16 = ssub.s32 %s11, 1
    %s17 = ssub.s32 %s11, 2
    %s24 = sadd.s32 1, %s19
    %p25 = scmp.ge.s32.totalorder %s24, 8
    %s26 = scalar_select %p25, 0, %s24
    %s27 = sadd.s32 1, %s18
    %s28 = scalar_select %p25, %s27, %s18
    %p29 = scmp.ge.s32.totalorder %s28, 2
    %s30 = scalar_select %p29, 0, %s28
    %s31 = sadd.s32 %s19, 4294967295
    %p32 = scmp.gt.s32.totalorder %s31, 0
    %s33 = scalar_select %p32, %s31, 0
    %p34 = scmp.lt.s32.totalorder %s33, 7
    %s35 = scalar_select %p34, %s33, 7
    %s36 = sadd.s32 %s26, 4294967295
    %p37 = scmp.gt.s32.totalorder %s36, 0
    %s38 = scalar_select %p37, %s36, 0
    %p39 = scmp.lt.s32.totalorder %s38, 7
    %s40 = scalar_select %p39, %s38, 7
    %s41 = ssub.s32 %s18, %s30
    %s42 = ssub.s32 %s35, %s40
    %s43 = sor.u32 %s41, %s42
    %p44 = scmp.eq.s32.totalorder %s43, 0
    %s46 = sadd.s32 %s45, 1
    %s47 = scalar_select %p44, %s45, %s46
    %p50 = pneg %p44
    %p51 = scmp.eq.s32.totalorder %s11, 15
    %p52 = por %p50, %p51
    %p53 = scmp.ne.s32.totalorder %s45, %s48
    %p54 = scmp.eq.s32.totalorder %s11, 0
    %p55 = por %p53, %p54
    %p56 = scmp.ne.s32.totalorder %s45, %s48
    %p57 = scmp.eq.s32.totalorder %s16, 15
    %p58 = por %p56, %p57
    %p59 = scmp.ne.s32.totalorder %s48, %s49
    %p60 = scmp.eq.s32.totalorder %s16, 0
    %p61 = por %p59, %p60
    %p62 = scmp.ne.s32.totalorder %s48, %s49
    %p63 = scmp.eq.s32.totalorder %s17, 15
    %p64 = por %p62, %p63
    %p66 = scmp.ne.s32.totalorder %s49, %s65
    %p67 = scmp.eq.s32.totalorder %s17, 0
    %p68 = por %p66, %p67
    %p69 = scmp.gt.s32.totalorder %s19, 0
    %s70 = scalar_select %p69, %s19, 0
    %p71 = scmp.lt.s32.totalorder %s70, 7
    %s72 = scalar_select %p71, %s70, 7
    %p73 = scmp.gt.s32.totalorder %s26, 0
    %s74 = scalar_select %p73, %s26, 0
    %p75 = scmp.lt.s32.totalorder %s74, 7
    %s76 = scalar_select %p75, %s74, 7
    %s77 = ssub.s32 %s18, %s30
    %s78 = ssub.s32 %s72, %s76
    %s79 = sor.u32 %s77, %s78
    %p80 = scmp.eq.s32.totalorder %s79, 0
    %s82 = sadd.s32 %s81, 1
    %s83 = scalar_select %p80, %s81, %s82
    %p86 = pneg %p80
    %p87 = scmp.eq.s32.totalorder %s11, 15
    %p88 = por %p86, %p87
    %p89 = scmp.ne.s32.totalorder %s81, %s84
    %p90 = scmp.eq.s32.totalorder %s11, 0
    %p91 = por %p89, %p90
    %p92 = scmp.ne.s32.totalorder %s81, %s84
    %p93 = scmp.eq.s32.totalorder %s16, 15
    %p94 = por %p92, %p93
    %p95 = scmp.ne.s32.totalorder %s84, %s85
    %p96 = scmp.eq.s32.totalorder %s16, 0
    %p97 = por %p95, %p96
    %p98 = scmp.ne.s32.totalorder %s84, %s85
    %p99 = scmp.eq.s32.totalorder %s17, 15
    %p100 = por %p98, %p99
    %p102 = scmp.ne.s32.totalorder %s85, %s101
    %p103 = scmp.eq.s32.totalorder %s17, 0
    %p104 = por %p102, %p103
    %s105 = sadd.s32 %s19, 1
    %p106 = scmp.gt.s32.totalorder %s105, 0
    %s107 = scalar_select %p106, %s105, 0
    %p108 = scmp.lt.s32.totalorder %s107, 7
    %s109 = scalar_select %p108, %s107, 7
    %s110 = sadd.s32 %s26, 1
    %p111 = scmp.gt.s32.totalorder %s110, 0
    %s112 = scalar_select %p111, %s110, 0
    %p113 = scmp.lt.s32.totalorder %s112, 7
    %s114 = scalar_select %p113, %s112, 7
    %s115 = ssub.s32 %s18, %s30
    %s116 = ssub.s32 %s109, %s114
    %s117 = sor.u32 %s115, %s116
    %p118 = scmp.eq.s32.totalorder %s117, 0
    %s120 = sadd.s32 %s119, 1
    %s121 = scalar_select %p118, %s119, %s120
    %p124 = pneg %p118
    %p125 = scmp.eq.s32.totalorder %s11, 15
    %p126 = por %p124, %p125
    %p127 = scmp.ne.s32.totalorder %s119, %s122
    %p128 = scmp.eq.s32.totalorder %s11, 0
    %p129 = por %p127, %p128
    %p130 = scmp.ne.s32.totalorder %s119, %s122
    %p131 = scmp.eq.s32.totalorder %s16, 15
    %p132 = por %p130, %p131
    %p133 = scmp.ne.s32.totalorder %s122, %s123
    %p134 = scmp.eq.s32.totalorder %s16, 0
    %p135 = por %p133, %p134
    %p136 = scmp.ne.s32.totalorder %s122, %s123
    %p137 = scmp.eq.s32.totalorder %s17, 15
    %p138 = por %p136, %p137
    %p140 = scmp.ne.s32.totalorder %s123, %s139
    %p141 = scmp.eq.s32.totalorder %s17, 0
    %p142 = por %p140, %p141
    %s144 = sadd.s32 %s143, 1
    %p147 = scmp.eq.s32.totalorder %s11, 15
    %p148 = scmp.ne.s32.totalorder %s143, %s145
    %p149 = scmp.eq.s32.totalorder %s11, 0
    %p150 = por %p148, %p149
    %p151 = scmp.ne.s32.totalorder %s143, %s145
    %p152 = scmp.eq.s32.totalorder %s16, 15
    %p153 = por %p151, %p152
    %p154 = scmp.ne.s32.totalorder %s145, %s146
    %p155 = scmp.eq.s32.totalorder %s16, 0
    %p156 = por %p154, %p155
    %p157 = scmp.ne.s32.totalorder %s145, %s146
    %p158 = scmp.eq.s32.totalorder %s17, 15
    %p159 = por %p157, %p158
    %p161 = scmp.ne.s32.totalorder %s146, %s160
    %p162 = scmp.eq.s32.totalorder %s17, 0
    %p163 = por %p161, %p162
    %s165 = sadd.s32 %s164, 1
    %p168 = scmp.eq.s32.totalorder %s11, 15
    %p169 = scmp.ne.s32.totalorder %s164, %s166
    %p170 = scmp.eq.s32.totalorder %s11, 0
    %p171 = por %p169, %p170
    %p172 = scmp.ne.s32.totalorder %s164, %s166
    %p173 = scmp.eq.s32.totalorder %s16, 15
    %p174 = por %p172, %p173
    %p175 = scmp.ne.s32.totalorder %s166, %s167
    %p176 = scmp.eq.s32.totalorder %s16, 0
    %p177 = por %p175, %p176
    %p178 = scmp.ne.s32.totalorder %s166, %s167
    %p179 = scmp.eq.s32.totalorder %s17, 15
    %p180 = por %p178, %p179
    %p182 = scmp.ne.s32.totalorder %s167, %s181
    %p183 = scmp.eq.s32.totalorder %s17, 0
    %p184 = por %p182, %p183
    %s185 = ssub.s32 %s18, %s30
    %s186 = ssub.s32 %s19, %s26
    %s187 = sor.u32 %s185, %s186
    %p188 = scmp.eq.s32.totalorder %s187, 0
    %s190 = sadd.s32 %s189, 1
    %s191 = scalar_select %p188, %s189, %s190
    %p194 = pneg %p188
    %p195 = scmp.eq.s32.totalorder %s11, 15
    %p196 = por %p194, %p195
    %p197 = scmp.ne.s32.totalorder %s189, %s192
    %p198 = scmp.eq.s32.totalorder %s11, 0
    %p199 = por %p197, %p198
    %p200 = scmp.ne.s32.totalorder %s189, %s192
    %p201 = scmp.eq.s32.totalorder %s16, 15
    %p202 = por %p200, %p201
    %p203 = scmp.ne.s32.totalorder %s192, %s193
    %p204 = scmp.eq.s32.totalorder %s16, 0
    %p205 = por %p203, %p204
    %p206 = scmp.ne.s32.totalorder %s192, %s193
    %p207 = scmp.eq.s32.totalorder %s17, 15
    %p208 = por %p206, %p207
    %p210 = scmp.ne.s32.totalorder %s193, %s209
    %p211 = scmp.eq.s32.totalorder %s17, 0
    %p212 = por %p210, %p211
    %p213 = scmp.le.s32.totalorder 1, %s11
    %p214 = scmp.lt.s32.totalorder %s11, 17
    %p215 = pnand %p213, %p214
    %p216 = pneg %p215
    // Predicated region
    $region9: #{upblock3d_forward.2} parent=5 // pred_check
      _
    $region10: #{upblock3d_forward.2} parent=5 // pred_check_branch
      %218 = sbr.rel (%p215) target = $region12
    $region11: #{upblock3d_forward.2} parent=5 // pred_region
      %s219 = ssub.s32 %s11, 1
      // Predicated region
      $region13: #{upblock3d_forward.2} parent=11 // pred_check
        %p220 = pneg %p156
      $region14: #{upblock3d_forward.2} parent=11 // pred_check_branch
        %222 = sbr.rel (%p220) target = $region16
      $region15: #{upblock3d_forward.2} parent=11 // pred_region
        _
      $region16: #{upblock3d_forward.2} parent=11 // pred_fallthru
        _
      // Predicated region
      $region17: #{upblock3d_forward.2} parent=11 // pred_check
        %p223 = pneg %p177
      $region18: #{upblock3d_forward.2} parent=11 // pred_check_branch
        %225 = sbr.rel (%p223) target = $region20
      $region19: #{upblock3d_forward.2} parent=11 // pred_region
        _
      $region20: #{upblock3d_forward.2} parent=11 // pred_fallthru
        _
    $region12: #{upblock3d_forward.2} parent=5 // pred_fallthru
      _
    %p226 = scmp.lt.s32.totalorder %s11, 16
    // Predicated region
    $region21: #{upblock3d_forward.2} parent=5 // pred_check
      %p227 = pneg %p226
    $region22: #{upblock3d_forward.2} parent=5 // pred_check_branch
      %229 = sbr.rel (%p227) target = $region24
    $region23: #{upblock3d_forward.2} parent=5 // pred_region
      // Predicated region
      $region25: #{upblock3d_forward.2} parent=23 // pred_check
        %p230 = pneg %p55
      $region26: #{upblock3d_forward.2} parent=23 // pred_check_branch
        %232 = sbr.rel (%p230) target = $region28
      $region27: #{upblock3d_forward.2} parent=23 // pred_region
        %s233 = sadd.s32 %s19, 4294967295
        %p234 = scmp.gt.s32.totalorder %s233, 0
        %s235 = scalar_select %p234, %s233, 0
        %p236 = scmp.lt.s32.totalorder %s235, 7
        %s237 = scalar_select %p236, %s235, 7
        %p238 = scmp.lt.s32.totalorder %s18, 1
        %s239 = scalar_select %p238, %s18, 1
        %p240 = scmp.lt.s32.totalorder %s237, 7
        %s241 = scalar_select %p240, %s237, 7
        %s242 = smul.addr %s241, 64
        %s243 = smul.addr %s239, 512
        %s244 = sadd.s32 %s242, %s243
        %s245 = smul.addr %s244, 4
        %s246 = scalar_lea.vmem %s0, %s245
        %s247 = sadd.s32 %s19, 4294967295
        %p248 = scmp.gt.s32.totalorder %s247, 0
        %s249 = scalar_select %p248, %s247, 0
        %p250 = scmp.lt.s32.totalorder %s249, 7
        %s251 = scalar_select %p250, %s249, 7
      $region28: #{upblock3d_forward.2} parent=23 // pred_fallthru
        _
      // Predicated region
      $region29: #{upblock3d_forward.2} parent=23 // pred_check
        %p252 = pneg %p91
      $region30: #{upblock3d_forward.2} parent=23 // pred_check_branch
        %254 = sbr.rel (%p252) target = $region32
      $region31: #{upblock3d_forward.2} parent=23 // pred_region
        %p255 = scmp.gt.s32.totalorder %s19, 0
        %s256 = scalar_select %p255, %s19, 0
        %p257 = scmp.lt.s32.totalorder %s256, 7
        %s258 = scalar_select %p257, %s256, 7
        %p259 = scmp.lt.s32.totalorder %s18, 1
        %s260 = scalar_select %p259, %s18, 1
        %p261 = scmp.lt.s32.totalorder %s258, 7
        %s262 = scalar_select %p261, %s258, 7
        %s263 = smul.addr %s262, 64
        %s264 = smul.addr %s260, 512
        %s265 = sadd.s32 %s263, %s264
        %s266 = smul.addr %s265, 4
        %s267 = scalar_lea.vmem %s1, %s266
        %p268 = scmp.gt.s32.totalorder %s19, 0
        %s269 = scalar_select %p268, %s19, 0
        %p270 = scmp.lt.s32.totalorder %s269, 7
        %s271 = scalar_select %p270, %s269, 7
      $region32: #{upblock3d_forward.2} parent=23 // pred_fallthru
        _
      // Predicated region
      $region33: #{upblock3d_forward.2} parent=23 // pred_check
        %p272 = pneg %p129
      $region34: #{upblock3d_forward.2} parent=23 // pred_check_branch
        %274 = sbr.rel (%p272) target = $region36
      $region35: #{upblock3d_forward.2} parent=23 // pred_region
        %s275 = sadd.s32 %s19, 1
        %p276 = scmp.gt.s32.totalorder %s275, 0
        %s277 = scalar_select %p276, %s275, 0
        %p278 = scmp.lt.s32.totalorder %s277, 7
        %s279 = scalar_select %p278, %s277, 7
        %p280 = scmp.lt.s32.totalorder %s18, 1
        %s281 = scalar_select %p280, %s18, 1
        %p282 = scmp.lt.s32.totalorder %s279, 7
        %s283 = scalar_select %p282, %s279, 7
        %s284 = smul.addr %s283, 64
        %s285 = smul.addr %s281, 512
        %s286 = sadd.s32 %s284, %s285
        %s287 = smul.addr %s286, 4
        %s288 = scalar_lea.vmem %s2, %s287
        %s289 = sadd.s32 %s19, 1
        %p290 = scmp.gt.s32.totalorder %s289, 0
        %s291 = scalar_select %p290, %s289, 0
        %p292 = scmp.lt.s32.totalorder %s291, 7
        %s293 = scalar_select %p292, %s291, 7
      $region36: #{upblock3d_forward.2} parent=23 // pred_fallthru
        _
    $region24: #{upblock3d_forward.2} parent=5 // pred_fallthru
      _
    %p294 = scmp.le.s32.totalorder 1, %s11
    %p295 = scmp.lt.s32.totalorder %s11, 17
    %p296 = pnand %p294, %p295
    %p297 = pneg %p296
    // Predicated region
    $region37: #{upblock3d_forward.2} parent=5 // pred_check
      _
    $region38: #{upblock3d_forward.2} parent=5 // pred_check_branch
      %299 = sbr.rel (%p296) target = $region40
    $region39: #{upblock3d_forward.2} parent=5 // pred_region
      %s300 = ssub.s32 %s11, 1
      %s301 = sadd.s32 %s21, 4294967295
      %p302 = scmp.gt.s32.totalorder %s301, 0
      %s303 = scalar_select %p302, %s301, 0
      %p304 = scmp.lt.s32.totalorder %s303, 7
      %s305 = scalar_select %p304, %s303, 7
      %p306 = scmp.lt.s32.totalorder %s20, 1
      %s307 = scalar_select %p306, %s20, 1
      %p308 = scmp.lt.s32.totalorder %s305, 7
      %s309 = scalar_select %p308, %s305, 7
      %s310 = smul.addr %s309, 64
      %s311 = smul.addr %s307, 512
      %s312 = sadd.s32 %s310, %s311
      %s313 = smul.addr %s312, 4
      %s314 = scalar_lea.vmem %s0, %s313
      %p315 = pneg %p61
      %p316 = pneg %p58
      %p317 = scmp.gt.s32.totalorder %s21, 0
      %s318 = scalar_select %p317, %s21, 0
      %p319 = scmp.lt.s32.totalorder %s318, 7
      %s320 = scalar_select %p319, %s318, 7
      %p321 = scmp.lt.s32.totalorder %s20, 1
      %s322 = scalar_select %p321, %s20, 1
      %p323 = scmp.lt.s32.totalorder %s320, 7
      %s324 = scalar_select %p323, %s320, 7
      %s325 = smul.addr %s324, 64
      %s326 = smul.addr %s322, 512
      %s327 = sadd.s32 %s325, %s326
      %s328 = smul.addr %s327, 4
      %s329 = scalar_lea.vmem %s1, %s328
      %p330 = pneg %p97
      %p331 = pneg %p94
      %s332 = sadd.s32 %s21, 1
      %p333 = scmp.gt.s32.totalorder %s332, 0
      %s334 = scalar_select %p333, %s332, 0
      %p335 = scmp.lt.s32.totalorder %s334, 7
      %s336 = scalar_select %p335, %s334, 7
      %p337 = scmp.lt.s32.totalorder %s20, 1
      %s338 = scalar_select %p337, %s20, 1
      %p339 = scmp.lt.s32.totalorder %s336, 7
      %s340 = scalar_select %p339, %s336, 7
      %s341 = smul.addr %s340, 64
      %s342 = smul.addr %s338, 512
      %s343 = sadd.s32 %s341, %s342
      %s344 = smul.addr %s343, 4
      %s345 = scalar_lea.vmem %s2, %s344
      %p346 = pneg %p135
      %p347 = pneg %p132
      %p348 = pneg %p156
      %p349 = pneg %p153
      %p350 = pneg %p177
      %p351 = pneg %p174
      %p352 = pneg %p205
      %p353 = pneg %p202
      %p354 = scmp.lt.s32.totalorder %s20, 1
      %s355 = scalar_select %p354, %s20, 1
      %p356 = scmp.lt.s32.totalorder %s21, 7
      %s357 = scalar_select %p356, %s21, 7
      %s358 = smul.addr %s357, 54
      %s359 = smul.addr %s355, 432
      %s360 = sadd.s32 %s358, %s359
      %s361 = smul.addr %s360, 4
      %s362 = scalar_lea.vmem %s5, %s361
      %s363 = sadd.s32 %s21, 4294967295
      %p364 = scmp.gt.s32.totalorder %s363, 0
      %s365 = scalar_select %p364, %s363, 0
      %p366 = scmp.lt.s32.totalorder %s365, 7
      %s367 = scalar_select %p366, %s365, 7
      %p368 = scmp.lt.s32.totalorder %s20, 1
      %s369 = scalar_select %p368, %s20, 1
      %p370 = scmp.lt.s32.totalorder %s367, 7
      %s371 = scalar_select %p370, %s367, 7
      %s372 = smul.addr %s371, 64
      %s373 = smul.addr %s369, 512
      %s374 = sadd.s32 %s372, %s373
      %s375 = smul.addr %s374, 4
      %s376 = scalar_lea.vmem %s0, %s375
      %s377 = sadd.s32 %s21, 4294967295
      %p378 = scmp.gt.s32.totalorder %s377, 0
      %s379 = scalar_select %p378, %s377, 0
      %p380 = scmp.lt.s32.totalorder %s379, 7
      %s381 = scalar_select %p380, %s379, 7
      %p382 = scmp.gt.s32.totalorder %s21, 0
      %s383 = scalar_select %p382, %s21, 0
      %p384 = scmp.lt.s32.totalorder %s383, 7
      %s385 = scalar_select %p384, %s383, 7
      %p386 = scmp.lt.s32.totalorder %s20, 1
      %s387 = scalar_select %p386, %s20, 1
      %p388 = scmp.lt.s32.totalorder %s385, 7
      %s389 = scalar_select %p388, %s385, 7
      %s390 = smul.addr %s389, 64
      %s391 = smul.addr %s387, 512
      %s392 = sadd.s32 %s390, %s391
      %s393 = smul.addr %s392, 4
      %s394 = scalar_lea.vmem %s1, %s393
      %p395 = scmp.gt.s32.totalorder %s21, 0
      %s396 = scalar_select %p395, %s21, 0
      %p397 = scmp.lt.s32.totalorder %s396, 7
      %s398 = scalar_select %p397, %s396, 7
      %s399 = sadd.s32 %s21, 1
      %p400 = scmp.gt.s32.totalorder %s399, 0
      %s401 = scalar_select %p400, %s399, 0
      %p402 = scmp.lt.s32.totalorder %s401, 7
      %s403 = scalar_select %p402, %s401, 7
      %p404 = scmp.lt.s32.totalorder %s20, 1
      %s405 = scalar_select %p404, %s20, 1
      %p406 = scmp.lt.s32.totalorder %s403, 7
      %s407 = scalar_select %p406, %s403, 7
      %s408 = smul.addr %s407, 64
      %s409 = smul.addr %s405, 512
      %s410 = sadd.s32 %s408, %s409
      %s411 = smul.addr %s410, 4
      %s412 = scalar_lea.vmem %s2, %s411
      %s413 = sadd.s32 %s21, 1
      %p414 = scmp.gt.s32.totalorder %s413, 0
      %s415 = scalar_select %p414, %s413, 0
      %p416 = scmp.lt.s32.totalorder %s415, 7
      %s417 = scalar_select %p416, %s415, 7
      %p418 = scmp.lt.s32.totalorder %s20, 1
      %s419 = scalar_select %p418, %s20, 1
      %p420 = scmp.lt.s32.totalorder %s21, 7
      %s421 = scalar_select %p420, %s21, 7
      %s422 = smul.addr %s421, 54
      %s423 = smul.addr %s419, 432
      %s424 = sadd.s32 %s422, %s423
      %s425 = smul.addr %s424, 4
      %s426 = scalar_lea.vmem %s5, %s425
      %v428 = vld [vmem:[%s376] sm:$0xff]
      %v429 = vld [vmem:[%s376 + $0x8] sm:$0xff]
      %v430 = vld [vmem:[%s376 + $0x10] sm:$0xff]
      %v431 = vld [vmem:[%s376 + $0x18] sm:$0xff]
      %v432 = vld [vmem:[%s376 + $0x20] sm:$0xff]
      %v433 = vld [vmem:[%s376 + $0x28] sm:$0xff]
      %v434 = vld [vmem:[%s376 + $0x30] sm:$0xff]
      %v435 = vld [vmem:[%s376 + $0x38] sm:$0xff]
      %v436 = vld [vmem:[%s376 + $0x40] sm:$0xff]
      %v437 = vld [vmem:[%s376 + $0x48] sm:$0xff]
      %v438 = vld [vmem:[%s376 + $0x50] sm:$0xff]
      %v439 = vld [vmem:[%s376 + $0x58] sm:$0xff]
      %v440 = vld [vmem:[%s376 + $0x60] sm:$0xff]
      %v441 = vld [vmem:[%s376 + $0x68] sm:$0xff]
      %v442 = vld [vmem:[%s376 + $0x70] sm:$0xff]
      %v443 = vld [vmem:[%s376 + $0x78] sm:$0xff]
      %v444 = vld [vmem:[%s376 + $0x80] sm:$0xff]
      %v445 = vld [vmem:[%s376 + $0x88] sm:$0xff]
      %v446 = vld [vmem:[%s376 + $0x90] sm:$0xff]
      %v447 = vld [vmem:[%s376 + $0x98] sm:$0xff]
      %v448 = vld [vmem:[%s376 + $0xa0] sm:$0xff]
      %v449 = vld [vmem:[%s376 + $0xa8] sm:$0xff]
      %v450 = vld [vmem:[%s376 + $0xb0] sm:$0xff]
      %v451 = vld [vmem:[%s376 + $0xb8] sm:$0xff]
      %v452 = vld [vmem:[%s376 + $0xc0] sm:$0xff]
      %v453 = vld [vmem:[%s376 + $0xc8] sm:$0xff]
      %v454 = vld [vmem:[%s376 + $0xd0] sm:$0xff]
      %v455 = vld [vmem:[%s376 + $0xd8] sm:$0xff]
      %v456 = vld [vmem:[%s376 + $0xe0] sm:$0xff]
      %v457 = vld [vmem:[%s376 + $0xe8] sm:$0xff]
      %v458 = vld [vmem:[%s376 + $0xf0] sm:$0xff]
      %v459 = vld [vmem:[%s376 + $0xf8] sm:$0xff]
      %s460 = sadd.s32 %s21, 4294967295
      %p461 = scmp.ge.s32.totalorder %s460, 0
      %p462 = scmp.lt.s32.totalorder %s460, 8
      %p463 = pnand %p461, %p462
      %p464 = pneg %p463
      %s465 = scalar_select %p464, 1, 0
      %s466 = scvt.s32.f32 %s465
      %p468 = scmp.ne.f32.partialorder %s466, %s466
      %s469 = sshrl.u32 %s466, 16
      %s470 = sand.u32 %s469, 1
      %s471 = sadd.s32 32767, %s470
      %s472 = sadd.s32 %s466, %s471
      %s473 = sand.u32 %s472, 4294901760
      %s474 = scalar_select %p468, 2143289344, %s473
      %s476 = sshrl.u32 %s474, 16
      %s477 = sshll.u32 %s476, 16
      %s478 = sor.u32 %s476, %s477
      %v479 = vstv %s478
      %v481 = vunpack.c.l.bf16 %v428
      %v482 = vunpack.c.h.bf16 %v428
      %v483 = vunpack.c.l.bf16 %v429
      %v484 = vunpack.c.h.bf16 %v429
      %v485 = vunpack.c.l.bf16 %v430
      %v486 = vunpack.c.h.bf16 %v430
      %v487 = vunpack.c.l.bf16 %v431
      %v488 = vunpack.c.h.bf16 %v431
      %v489 = vunpack.c.l.bf16 %v432
      %v490 = vunpack.c.h.bf16 %v432
      %v491 = vunpack.c.l.bf16 %v433
      %v492 = vunpack.c.h.bf16 %v433
      %v493 = vunpack.c.l.bf16 %v434
      %v494 = vunpack.c.h.bf16 %v434
      %v495 = vunpack.c.l.bf16 %v435
      %v496 = vunpack.c.h.bf16 %v435
      %v497 = vunpack.c.l.bf16 %v436
      %v498 = vunpack.c.h.bf16 %v436
      %v499 = vunpack.c.l.bf16 %v437
      %v500 = vunpack.c.h.bf16 %v437
      %v501 = vunpack.c.l.bf16 %v438
      %v502 = vunpack.c.h.bf16 %v438
      %v503 = vunpack.c.l.bf16 %v439
      %v504 = vunpack.c.h.bf16 %v439
      %v505 = vunpack.c.l.bf16 %v440
      %v506 = vunpack.c.h.bf16 %v440
      %v507 = vunpack.c.l.bf16 %v441
      %v508 = vunpack.c.h.bf16 %v441
      %v509 = vunpack.c.l.bf16 %v442
      %v510 = vunpack.c.h.bf16 %v442
      %v511 = vunpack.c.l.bf16 %v443
      %v512 = vunpack.c.h.bf16 %v443
      %v513 = vunpack.c.l.bf16 %v444
      %v514 = vunpack.c.h.bf16 %v444
      %v515 = vunpack.c.l.bf16 %v445
      %v516 = vunpack.c.h.bf16 %v445
      %v517 = vunpack.c.l.bf16 %v446
      %v518 = vunpack.c.h.bf16 %v446
      %v519 = vunpack.c.l.bf16 %v447
      %v520 = vunpack.c.h.bf16 %v447
      %v521 = vunpack.c.l.bf16 %v448
      %v522 = vunpack.c.h.bf16 %v448
      %v523 = vunpack.c.l.bf16 %v449
      %v524 = vunpack.c.h.bf16 %v449
      %v525 = vunpack.c.l.bf16 %v450
      %v526 = vunpack.c.h.bf16 %v450
      %v527 = vunpack.c.l.bf16 %v451
      %v528 = vunpack.c.h.bf16 %v451
      %v529 = vunpack.c.l.bf16 %v452
      %v530 = vunpack.c.h.bf16 %v452
      %v531 = vunpack.c.l.bf16 %v453
      %v532 = vunpack.c.h.bf16 %v453
      %v533 = vunpack.c.l.bf16 %v454
      %v534 = vunpack.c.h.bf16 %v454
      %v535 = vunpack.c.l.bf16 %v455
      %v536 = vunpack.c.h.bf16 %v455
      %v537 = vunpack.c.l.bf16 %v456
      %v538 = vunpack.c.h.bf16 %v456
      %v539 = vunpack.c.l.bf16 %v457
      %v540 = vunpack.c.h.bf16 %v457
      %v541 = vunpack.c.l.bf16 %v458
      %v542 = vunpack.c.h.bf16 %v458
      %v543 = vunpack.c.l.bf16 %v459
      %v544 = vunpack.c.h.bf16 %v459
      %v545 = vunpack.c.l.bf16 %v479
      %v546 = vmul.f32 %v481, %v545
      %v547 = vmul.f32 %v482, %v545
      %v548 = vmul.f32 %v483, %v545
      %v549 = vmul.f32 %v484, %v545
      %v550 = vmul.f32 %v485, %v545
      %v551 = vmul.f32 %v486, %v545
      %v552 = vmul.f32 %v487, %v545
      %v553 = vmul.f32 %v488, %v545
      %v554 = vmul.f32 %v489, %v545
      %v555 = vmul.f32 %v490, %v545
      %v556 = vmul.f32 %v491, %v545
      %v557 = vmul.f32 %v492, %v545
      %v558 = vmul.f32 %v493, %v545
      %v559 = vmul.f32 %v494, %v545
      %v560 = vmul.f32 %v495, %v545
      %v561 = vmul.f32 %v496, %v545
      %v562 = vmul.f32 %v497, %v545
      %v563 = vmul.f32 %v498, %v545
      %v564 = vmul.f32 %v499, %v545
      %v565 = vmul.f32 %v500, %v545
      %v566 = vmul.f32 %v501, %v545
      %v567 = vmul.f32 %v502, %v545
      %v568 = vmul.f32 %v503, %v545
      %v569 = vmul.f32 %v504, %v545
      %v570 = vmul.f32 %v505, %v545
      %v571 = vmul.f32 %v506, %v545
      %v572 = vmul.f32 %v507, %v545
      %v573 = vmul.f32 %v508, %v545
      %v574 = vmul.f32 %v509, %v545
      %v575 = vmul.f32 %v510, %v545
      %v576 = vmul.f32 %v511, %v545
      %v577 = vmul.f32 %v512, %v545
      %v578 = vmul.f32 %v513, %v545
      %v579 = vmul.f32 %v514, %v545
      %v580 = vmul.f32 %v515, %v545
      %v581 = vmul.f32 %v516, %v545
      %v582 = vmul.f32 %v517, %v545
      %v583 = vmul.f32 %v518, %v545
      %v584 = vmul.f32 %v519, %v545
      %v585 = vmul.f32 %v520, %v545
      %v586 = vmul.f32 %v521, %v545
      %v587 = vmul.f32 %v522, %v545
      %v588 = vmul.f32 %v523, %v545
      %v589 = vmul.f32 %v524, %v545
      %v590 = vmul.f32 %v525, %v545
      %v591 = vmul.f32 %v526, %v545
      %v592 = vmul.f32 %v527, %v545
      %v593 = vmul.f32 %v528, %v545
      %v594 = vmul.f32 %v529, %v545
      %v595 = vmul.f32 %v530, %v545
      %v596 = vmul.f32 %v531, %v545
      %v597 = vmul.f32 %v532, %v545
      %v598 = vmul.f32 %v533, %v545
      %v599 = vmul.f32 %v534, %v545
      %v600 = vmul.f32 %v535, %v545
      %v601 = vmul.f32 %v536, %v545
      %v602 = vmul.f32 %v537, %v545
      %v603 = vmul.f32 %v538, %v545
      %v604 = vmul.f32 %v539, %v545
      %v605 = vmul.f32 %v540, %v545
      %v606 = vmul.f32 %v541, %v545
      %v607 = vmul.f32 %v542, %v545
      %v608 = vmul.f32 %v543, %v545
      %v609 = vmul.f32 %v544, %v545
      %v610 = vpack.c.bf16 %v547, %v546
      %v611 = vpack.c.bf16 %v549, %v548
      %v612 = vpack.c.bf16 %v551, %v550
      %v613 = vpack.c.bf16 %v553, %v552
      %v614 = vpack.c.bf16 %v555, %v554
      %v615 = vpack.c.bf16 %v557, %v556
      %v616 = vpack.c.bf16 %v559, %v558
      %v617 = vpack.c.bf16 %v561, %v560
      %v618 = vpack.c.bf16 %v563, %v562
      %v619 = vpack.c.bf16 %v565, %v564
      %v620 = vpack.c.bf16 %v567, %v566
      %v621 = vpack.c.bf16 %v569, %v568
      %v622 = vpack.c.bf16 %v571, %v570
      %v623 = vpack.c.bf16 %v573, %v572
      %v624 = vpack.c.bf16 %v575, %v574
      %v625 = vpack.c.bf16 %v577, %v576
      %v626 = vpack.c.bf16 %v579, %v578
      %v627 = vpack.c.bf16 %v581, %v580
      %v628 = vpack.c.bf16 %v583, %v582
      %v629 = vpack.c.bf16 %v585, %v584
      %v630 = vpack.c.bf16 %v587, %v586
      %v631 = vpack.c.bf16 %v589, %v588
      %v632 = vpack.c.bf16 %v591, %v590
      %v633 = vpack.c.bf16 %v593, %v592
      %v634 = vpack.c.bf16 %v595, %v594
      %v635 = vpack.c.bf16 %v597, %v596
      %v636 = vpack.c.bf16 %v599, %v598
      %v637 = vpack.c.bf16 %v601, %v600
      %v638 = vpack.c.bf16 %v603, %v602
      %v639 = vpack.c.bf16 %v605, %v604
      %v640 = vpack.c.bf16 %v607, %v606
      %v641 = vpack.c.bf16 %v609, %v608
      %v642 = vld [vmem:[%s3] sm:$0xf]
      %v643 = vld [vmem:[%s3 + $0x4] sm:$0xf]
      %v644 = vld [vmem:[%s3 + $0x8] sm:$0xf]
      %v645 = vld [vmem:[%s3 + $0xc] sm:$0xf]
      %v646 = vld [vmem:[%s3 + $0x10] sm:$0xf]
      %v647 = vld [vmem:[%s3 + $0x14] sm:$0xf]
      %v648 = vld [vmem:[%s3 + $0x18] sm:$0xf]
      %v649 = vld [vmem:[%s3 + $0x1c] sm:$0xf]
      %v650 = vld [vmem:[%s3 + $0x20] sm:$0xf]
      %v651 = vld [vmem:[%s3 + $0x24] sm:$0xf]
      %v652 = vld [vmem:[%s3 + $0x28] sm:$0xf]
      %v653 = vld [vmem:[%s3 + $0x2c] sm:$0xf]
      %v654 = vld [vmem:[%s3 + $0x30] sm:$0xf]
      %v655 = vld [vmem:[%s3 + $0x34] sm:$0xf]
      %v656 = vld [vmem:[%s3 + $0x38] sm:$0xf]
      %v657 = vld [vmem:[%s3 + $0x3c] sm:$0xf]
      %v658 = vld [vmem:[%s3 + $0x40] sm:$0xf]
      %v659 = vld [vmem:[%s3 + $0x44] sm:$0xf]
      %v660 = vld [vmem:[%s394] sm:$0xff]
      %v661 = vld [vmem:[%s394 + $0x8] sm:$0xff]
      %v662 = vld [vmem:[%s394 + $0x10] sm:$0xff]
      %v663 = vld [vmem:[%s394 + $0x18] sm:$0xff]
      %v664 = vld [vmem:[%s394 + $0x20] sm:$0xff]
      %v665 = vld [vmem:[%s394 + $0x28] sm:$0xff]
      %v666 = vld [vmem:[%s394 + $0x30] sm:$0xff]
      %v667 = vld [vmem:[%s394 + $0x38] sm:$0xff]
      %v668 = vld [vmem:[%s394 + $0x40] sm:$0xff]
      %v669 = vld [vmem:[%s394 + $0x48] sm:$0xff]
      %v670 = vld [vmem:[%s394 + $0x50] sm:$0xff]
      %v671 = vld [vmem:[%s394 + $0x58] sm:$0xff]
      %v672 = vld [vmem:[%s394 + $0x60] sm:$0xff]
      %v673 = vld [vmem:[%s394 + $0x68] sm:$0xff]
      %v674 = vld [vmem:[%s394 + $0x70] sm:$0xff]
      %v675 = vld [vmem:[%s394 + $0x78] sm:$0xff]
      %v676 = vld [vmem:[%s394 + $0x80] sm:$0xff]
      %v677 = vld [vmem:[%s394 + $0x88] sm:$0xff]
      %v678 = vld [vmem:[%s394 + $0x90] sm:$0xff]
      %v679 = vld [vmem:[%s394 + $0x98] sm:$0xff]
      %v680 = vld [vmem:[%s394 + $0xa0] sm:$0xff]
      %v681 = vld [vmem:[%s394 + $0xa8] sm:$0xff]
      %v682 = vld [vmem:[%s394 + $0xb0] sm:$0xff]
      %v683 = vld [vmem:[%s394 + $0xb8] sm:$0xff]
      %v684 = vld [vmem:[%s394 + $0xc0] sm:$0xff]
      %v685 = vld [vmem:[%s394 + $0xc8] sm:$0xff]
      %v686 = vld [vmem:[%s394 + $0xd0] sm:$0xff]
      %v687 = vld [vmem:[%s394 + $0xd8] sm:$0xff]
      %v688 = vld [vmem:[%s394 + $0xe0] sm:$0xff]
      %v689 = vld [vmem:[%s394 + $0xe8] sm:$0xff]
      %v690 = vld [vmem:[%s394 + $0xf0] sm:$0xff]
      %v691 = vld [vmem:[%s394 + $0xf8] sm:$0xff]
      %s692 = scalar_lea.vmem %s3, 72
      %v693 = vld [vmem:[%s692] sm:$0xf]
      %v694 = vld [vmem:[%s692 + $0x4] sm:$0xf]
      %v695 = vld [vmem:[%s692 + $0x8] sm:$0xf]
      %v696 = vld [vmem:[%s692 + $0xc] sm:$0xf]
      %v697 = vld [vmem:[%s692 + $0x10] sm:$0xf]
      %v698 = vld [vmem:[%s692 + $0x14] sm:$0xf]
      %v699 = vld [vmem:[%s692 + $0x18] sm:$0xf]
      %v700 = vld [vmem:[%s692 + $0x1c] sm:$0xf]
      %v701 = vld [vmem:[%s692 + $0x20] sm:$0xf]
      %v702 = vld [vmem:[%s692 + $0x24] sm:$0xf]
      %v703 = vld [vmem:[%s692 + $0x28] sm:$0xf]
      %v704 = vld [vmem:[%s692 + $0x2c] sm:$0xf]
      %v705 = vld [vmem:[%s692 + $0x30] sm:$0xf]
      %v706 = vld [vmem:[%s692 + $0x34] sm:$0xf]
      %v707 = vld [vmem:[%s692 + $0x38] sm:$0xf]
      %v708 = vld [vmem:[%s692 + $0x3c] sm:$0xf]
      %v709 = vld [vmem:[%s692 + $0x40] sm:$0xf]
      %v710 = vld [vmem:[%s692 + $0x44] sm:$0xf]
      %v743 = vunpack.c.l.b16 %v660
      %v744 = vunpack.c.h.b16 %v660
      %v745 = vunpack.c.l.b16 %v661
      %v746 = vunpack.c.h.b16 %v661
      %v747 = vunpack.c.l.b16 %v662
      %v748 = vunpack.c.h.b16 %v662
      %v749 = vunpack.c.l.b16 %v663
      %v750 = vunpack.c.h.b16 %v663
      %v751 = vunpack.c.l.b16 %v664
      %v752 = vunpack.c.h.b16 %v664
      %v753 = vunpack.c.l.b16 %v665
      %v754 = vunpack.c.h.b16 %v665
      %v755 = vunpack.c.l.b16 %v666
      %v756 = vunpack.c.h.b16 %v666
      %v757 = vunpack.c.l.b16 %v667
      %v758 = vunpack.c.h.b16 %v667
      %v759 = vunpack.c.l.b16 %v668
      %v760 = vunpack.c.h.b16 %v668
      %v761 = vunpack.c.l.b16 %v669
      %v762 = vunpack.c.h.b16 %v669
      %v763 = vunpack.c.l.b16 %v670
      %v764 = vunpack.c.h.b16 %v670
      %v765 = vunpack.c.l.b16 %v671
      %v766 = vunpack.c.h.b16 %v671
      %v767 = vunpack.c.l.b16 %v672
      %v768 = vunpack.c.h.b16 %v672
      %v769 = vunpack.c.l.b16 %v673
      %v770 = vunpack.c.h.b16 %v673
      %v771 = vunpack.c.l.b16 %v674
      %v772 = vunpack.c.h.b16 %v674
      %v773 = vunpack.c.l.b16 %v675
      %v774 = vunpack.c.h.b16 %v675
      %v775 = vunpack.c.l.b16 %v676
      %v776 = vunpack.c.h.b16 %v676
      %v777 = vunpack.c.l.b16 %v677
      %v778 = vunpack.c.h.b16 %v677
      %v779 = vunpack.c.l.b16 %v678
      %v780 = vunpack.c.h.b16 %v678
      %v781 = vunpack.c.l.b16 %v679
      %v782 = vunpack.c.h.b16 %v679
      %v783 = vunpack.c.l.b16 %v680
      %v784 = vunpack.c.h.b16 %v680
      %v785 = vunpack.c.l.b16 %v681
      %v786 = vunpack.c.h.b16 %v681
      %v787 = vunpack.c.l.b16 %v682
      %v788 = vunpack.c.h.b16 %v682
      %v789 = vunpack.c.l.b16 %v683
      %v790 = vunpack.c.h.b16 %v683
      %v791 = vunpack.c.l.b16 %v684
      %v792 = vunpack.c.h.b16 %v684
      %v793 = vunpack.c.l.b16 %v685
      %v794 = vunpack.c.h.b16 %v685
      %v795 = vunpack.c.l.b16 %v686
      %v796 = vunpack.c.h.b16 %v686
      %v797 = vunpack.c.l.b16 %v687
      %v798 = vunpack.c.h.b16 %v687
      %v799 = vunpack.c.l.b16 %v688
      %v800 = vunpack.c.h.b16 %v688
      %v801 = vunpack.c.l.b16 %v689
      %v802 = vunpack.c.h.b16 %v689
      %v803 = vunpack.c.l.b16 %v690
      %v804 = vunpack.c.h.b16 %v690
      %v805 = vunpack.c.l.b16 %v691
      %v806 = vunpack.c.h.b16 %v691
      %v807 = vpack.c.b16 %v745, %v743
      %v808 = vpack.c.b16 %v746, %v744
      %v809 = vpack.c.b16 %v749, %v747
      %v810 = vpack.c.b16 %v750, %v748
      %v811 = vpack.c.b16 %v753, %v751
      %v812 = vpack.c.b16 %v754, %v752
      %v813 = vpack.c.b16 %v757, %v755
      %v814 = vpack.c.b16 %v758, %v756
      %v815 = vpack.c.b16 %v761, %v759
      %v816 = vpack.c.b16 %v762, %v760
      %v817 = vpack.c.b16 %v765, %v763
      %v818 = vpack.c.b16 %v766, %v764
      %v819 = vpack.c.b16 %v769, %v767
      %v820 = vpack.c.b16 %v770, %v768
      %v821 = vpack.c.b16 %v773, %v771
      %v822 = vpack.c.b16 %v774, %v772
      %v823 = vpack.c.b16 %v777, %v775
      %v824 = vpack.c.b16 %v778, %v776
      %v825 = vpack.c.b16 %v781, %v779
      %v826 = vpack.c.b16 %v782, %v780
      %v827 = vpack.c.b16 %v785, %v783
      %v828 = vpack.c.b16 %v786, %v784
      %v829 = vpack.c.b16 %v789, %v787
      %v830 = vpack.c.b16 %v790, %v788
      %v831 = vpack.c.b16 %v793, %v791
      %v832 = vpack.c.b16 %v794, %v792
      %v833 = vpack.c.b16 %v797, %v795
      %v834 = vpack.c.b16 %v798, %v796
      %v835 = vpack.c.b16 %v801, %v799
      %v836 = vpack.c.b16 %v802, %v800
      %v837 = vpack.c.b16 %v805, %v803
      %v838 = vpack.c.b16 %v806, %v804
      %v873 = vunpack.c.l.b16 %v693
      %v874 = vunpack.c.l.b16 %v694
      %v875 = vunpack.c.l.b16 %v695
      %v876 = vunpack.c.l.b16 %v696
      %v877 = vunpack.c.l.b16 %v697
      %v878 = vunpack.c.l.b16 %v698
      %v879 = vunpack.c.l.b16 %v699
      %v880 = vunpack.c.l.b16 %v700
      %v881 = vunpack.c.l.b16 %v701
      %v882 = vunpack.c.l.b16 %v702
      %v883 = vunpack.c.l.b16 %v703
      %v884 = vunpack.c.l.b16 %v704
      %v885 = vunpack.c.l.b16 %v705
      %v886 = vunpack.c.l.b16 %v706
      %v887 = vunpack.c.l.b16 %v707
      %v888 = vunpack.c.l.b16 %v708
      %v889 = vunpack.c.l.b16 %v709
      %v890 = vunpack.c.l.b16 %v710
      %v891 = vpack.c.b16 %v874, %v873
      %v892 = vpack.c.b16 %v876, %v875
      %v893 = vpack.c.b16 %v878, %v877
      %v894 = vpack.c.b16 %v880, %v879
      %v895 = vpack.c.b16 %v882, %v881
      %v896 = vpack.c.b16 %v884, %v883
      %v897 = vpack.c.b16 %v886, %v885
      %v898 = vpack.c.b16 %v888, %v887
      %v899 = vpack.c.b16 %v890, %v889
      %vm909 = vcmask 130048
      %v911 = vsel %vm909, %v808, 0
      %v914 = vsel %vm909, %v810, 0
      %v917 = vsel %vm909, %v812, 0
      %v920 = vsel %vm909, %v814, 0
      %v923 = vsel %vm909, %v816, 0
      %v926 = vsel %vm909, %v818, 0
      %v929 = vsel %vm909, %v820, 0
      %v932 = vsel %vm909, %v822, 0
      %v935 = vsel %vm909, %v824, 0
      %v938 = vsel %vm909, %v826, 0
      %v941 = vsel %vm909, %v828, 0
      %v944 = vsel %vm909, %v830, 0
      %v947 = vsel %vm909, %v832, 0
      %v950 = vsel %vm909, %v834, 0
      %v953 = vsel %vm909, %v836, 0
      %v956 = vsel %vm909, %v838, 0
      %958 = vmatpush.bf16.msra.mxu0 %v898
      %959 = vmatpush.bf16.msra.mxu0 %v897
      %960 = vmatpush.bf16.msra.mxu0 %v896
      %961 = vmatpush.bf16.msra.mxu0 %v895
      %962 = vmatpush.bf16.msra.mxu0 %v894
      %963 = vmatpush.bf16.msra.mxu0 %v893
      %964 = vmatpush.bf16.msra.mxu0 %v892
      %965 = vmatpush.bf16.msra.mxu0 %v891
      %966 = vmatmul.bf16.gmra.mxu0 %v807
      %v967 = vpop.f32.mrf.mxu0
      %v968 = vadd.f32 0.0, %v967
      %v969 = vpop.f32.mrf.mxu0
      %v970 = vadd.f32 0.0, %v969
      %971 = vmatmul.bf16.gmra.mxu0 %v809
      %v972 = vpop.f32.mrf.mxu0
      %v973 = vadd.f32 0.0, %v972
      %v974 = vpop.f32.mrf.mxu0
      %v975 = vadd.f32 0.0, %v974
      %976 = vmatmul.bf16.gmra.mxu0 %v811
      %v977 = vpop.f32.mrf.mxu0
      %v978 = vadd.f32 0.0, %v977
      %v979 = vpop.f32.mrf.mxu0
      %v980 = vadd.f32 0.0, %v979
      %981 = vmatmul.bf16.gmra.mxu0 %v813
      %v982 = vpop.f32.mrf.mxu0
      %v983 = vadd.f32 0.0, %v982
      %v984 = vpop.f32.mrf.mxu0
      %v985 = vadd.f32 0.0, %v984
      %986 = vmatmul.bf16.gmra.mxu0 %v815
      %v987 = vpop.f32.mrf.mxu0
      %v988 = vadd.f32 0.0, %v987
      %v989 = vpop.f32.mrf.mxu0
      %v990 = vadd.f32 0.0, %v989
      %991 = vmatmul.bf16.gmra.mxu0 %v817
      %v992 = vpop.f32.mrf.mxu0
      %v993 = vadd.f32 0.0, %v992
      %v994 = vpop.f32.mrf.mxu0
      %v995 = vadd.f32 0.0, %v994
      %996 = vmatmul.bf16.gmra.mxu0 %v819
      %v997 = vpop.f32.mrf.mxu0
      %v998 = vadd.f32 0.0, %v997
      %v999 = vpop.f32.mrf.mxu0
      %v1000 = vadd.f32 0.0, %v999
      %1001 = vmatmul.bf16.gmra.mxu0 %v821
      %v1002 = vpop.f32.mrf.mxu0
      %v1003 = vadd.f32 0.0, %v1002
      %v1004 = vpop.f32.mrf.mxu0
      %v1005 = vadd.f32 0.0, %v1004
      %1006 = vmatmul.bf16.gmra.mxu0 %v823
      %v1007 = vpop.f32.mrf.mxu0
      %v1008 = vadd.f32 0.0, %v1007
      %v1009 = vpop.f32.mrf.mxu0
      %v1010 = vadd.f32 0.0, %v1009
      %1011 = vmatmul.bf16.gmra.mxu0 %v825
      %v1012 = vpop.f32.mrf.mxu0
      %v1013 = vadd.f32 0.0, %v1012
      %v1014 = vpop.f32.mrf.mxu0
      %v1015 = vadd.f32 0.0, %v1014
      %1016 = vmatmul.bf16.gmra.mxu0 %v827
      %v1017 = vpop.f32.mrf.mxu0
      %v1018 = vadd.f32 0.0, %v1017
      %v1019 = vpop.f32.mrf.mxu0
      %v1020 = vadd.f32 0.0, %v1019
      %1021 = vmatmul.bf16.gmra.mxu0 %v829
      %v1022 = vpop.f32.mrf.mxu0
      %v1023 = vadd.f32 0.0, %v1022
      %v1024 = vpop.f32.mrf.mxu0
      %v1025 = vadd.f32 0.0, %v1024
      %1026 = vmatmul.bf16.gmra.mxu0 %v831
      %v1027 = vpop.f32.mrf.mxu0
      %v1028 = vadd.f32 0.0, %v1027
      %v1029 = vpop.f32.mrf.mxu0
      %v1030 = vadd.f32 0.0, %v1029
      %1031 = vmatmul.bf16.gmra.mxu0 %v833
      %v1032 = vpop.f32.mrf.mxu0
      %v1033 = vadd.f32 0.0, %v1032
      %v1034 = vpop.f32.mrf.mxu0
      %v1035 = vadd.f32 0.0, %v1034
      %1036 = vmatmul.bf16.gmra.mxu0 %v835
      %v1037 = vpop.f32.mrf.mxu0
      %v1038 = vadd.f32 0.0, %v1037
      %v1039 = vpop.f32.mrf.mxu0
      %v1040 = vadd.f32 0.0, %v1039
      %1041 = vmatmul.bf16.gmra.mxu0 %v837
      %v1042 = vpop.f32.mrf.mxu0
      %v1043 = vadd.f32 0.0, %v1042
      %v1044 = vpop.f32.mrf.mxu0
      %v1045 = vadd.f32 0.0, %v1044
      %1046 = vdwg.mxu0
      %1047 = vmatpush.bf16.msra.mxu0 0
      %1048 = vmatpush.bf16.msra.mxu0 0
      %1049 = vmatpush.bf16.msra.mxu0 0
      %1050 = vmatpush.bf16.msra.mxu0 0
      %1051 = vmatpush.bf16.msra.mxu0 0
      %1052 = vmatpush.bf16.msra.mxu0 0
      %1053 = vmatpush.bf16.msra.mxu0 0
      %1054 = vmatpush.bf16.msra.mxu0 %v899
      %1055 = vmatmul.bf16.gmra.mxu0 %v911
      %v1056 = vpop.f32.mrf.mxu0
      %v1057 = vadd.f32 %v968, %v1056
      %v1058 = vpop.f32.mrf.mxu0
      %v1059 = vadd.f32 %v970, %v1058
      %1060 = vmatmul.bf16.gmra.mxu0 %v914
      %v1061 = vpop.f32.mrf.mxu0
      %v1062 = vadd.f32 %v973, %v1061
      %v1063 = vpop.f32.mrf.mxu0
      %v1064 = vadd.f32 %v975, %v1063
      %1065 = vmatmul.bf16.gmra.mxu0 %v917
      %v1066 = vpop.f32.mrf.mxu0
      %v1067 = vadd.f32 %v978, %v1066
      %v1068 = vpop.f32.mrf.mxu0
      %v1069 = vadd.f32 %v980, %v1068
      %1070 = vmatmul.bf16.gmra.mxu0 %v920
      %v1071 = vpop.f32.mrf.mxu0
      %v1072 = vadd.f32 %v983, %v1071
      %v1073 = vpop.f32.mrf.mxu0
      %v1074 = vadd.f32 %v985, %v1073
      %1075 = vmatmul.bf16.gmra.mxu0 %v923
      %v1076 = vpop.f32.mrf.mxu0
      %v1077 = vadd.f32 %v988, %v1076
      %v1078 = vpop.f32.mrf.mxu0
      %v1079 = vadd.f32 %v990, %v1078
      %1080 = vmatmul.bf16.gmra.mxu0 %v926
      %v1081 = vpop.f32.mrf.mxu0
      %v1082 = vadd.f32 %v993, %v1081
      %v1083 = vpop.f32.mrf.mxu0
      %v1084 = vadd.f32 %v995, %v1083
      %1085 = vmatmul.bf16.gmra.mxu0 %v929
      %v1086 = vpop.f32.mrf.mxu0
      %v1087 = vadd.f32 %v998, %v1086
      %v1088 = vpop.f32.mrf.mxu0
      %v1089 = vadd.f32 %v1000, %v1088
      %1090 = vmatmul.bf16.gmra.mxu0 %v932
      %v1091 = vpop.f32.mrf.mxu0
      %v1092 = vadd.f32 %v1003, %v1091
      %v1093 = vpop.f32.mrf.mxu0
      %v1094 = vadd.f32 %v1005, %v1093
      %1095 = vmatmul.bf16.gmra.mxu0 %v935
      %v1096 = vpop.f32.mrf.mxu0
      %v1097 = vadd.f32 %v1008, %v1096
      %v1098 = vpop.f32.mrf.mxu0
      %v1099 = vadd.f32 %v1010, %v1098
      %1100 = vmatmul.bf16.gmra.mxu0 %v938
      %v1101 = vpop.f32.mrf.mxu0
      %v1102 = vadd.f32 %v1013, %v1101
      %v1103 = vpop.f32.mrf.mxu0
      %v1104 = vadd.f32 %v1015, %v1103
      %1105 = vmatmul.bf16.gmra.mxu0 %v941
      %v1106 = vpop.f32.mrf.mxu0
      %v1107 = vadd.f32 %v1018, %v1106
      %v1108 = vpop.f32.mrf.mxu0
      %v1109 = vadd.f32 %v1020, %v1108
      %1110 = vmatmul.bf16.gmra.mxu0 %v944
      %v1111 = vpop.f32.mrf.mxu0
      %v1112 = vadd.f32 %v1023, %v1111
      %v1113 = vpop.f32.mrf.mxu0
      %v1114 = vadd.f32 %v1025, %v1113
      %1115 = vmatmul.bf16.gmra.mxu0 %v947
      %v1116 = vpop.f32.mrf.mxu0
      %v1117 = vadd.f32 %v1028, %v1116
      %v1118 = vpop.f32.mrf.mxu0
      %v1119 = vadd.f32 %v1030, %v1118
      %1120 = vmatmul.bf16.gmra.mxu0 %v950
      %v1121 = vpop.f32.mrf.mxu0
      %v1122 = vadd.f32 %v1033, %v1121
      %v1123 = vpop.f32.mrf.mxu0
      %v1124 = vadd.f32 %v1035, %v1123
      %1125 = vmatmul.bf16.gmra.mxu0 %v953
      %v1126 = vpop.f32.mrf.mxu0
      %v1127 = vadd.f32 %v1038, %v1126
      %v1128 = vpop.f32.mrf.mxu0
      %v1129 = vadd.f32 %v1040, %v1128
      %1130 = vmatmul.bf16.gmra.mxu0 %v956
      %v1131 = vpop.f32.mrf.mxu0
      %v1132 = vadd.f32 %v1043, %v1131
      %v1133 = vpop.f32.mrf.mxu0
      %v1134 = vadd.f32 %v1045, %v1133
      %1135 = vdwg.mxu0
      %v1168 = vunpack.c.l.b16 %v610
      %v1169 = vunpack.c.h.b16 %v610
      %v1170 = vunpack.c.l.b16 %v611
      %v1171 = vunpack.c.h.b16 %v611
      %v1172 = vunpack.c.l.b16 %v612
      %v1173 = vunpack.c.h.b16 %v612
      %v1174 = vunpack.c.l.b16 %v613
      %v1175 = vunpack.c.h.b16 %v613
      %v1176 = vunpack.c.l.b16 %v614
      %v1177 = vunpack.c.h.b16 %v614
      %v1178 = vunpack.c.l.b16 %v615
      %v1179 = vunpack.c.h.b16 %v615
      %v1180 = vunpack.c.l.b16 %v616
      %v1181 = vunpack.c.h.b16 %v616
      %v1182 = vunpack.c.l.b16 %v617
      %v1183 = vunpack.c.h.b16 %v617
      %v1184 = vunpack.c.l.b16 %v618
      %v1185 = vunpack.c.h.b16 %v618
      %v1186 = vunpack.c.l.b16 %v619
      %v1187 = vunpack.c.h.b16 %v619
      %v1188 = vunpack.c.l.b16 %v620
      %v1189 = vunpack.c.h.b16 %v620
      %v1190 = vunpack.c.l.b16 %v621
      %v1191 = vunpack.c.h.b16 %v621
      %v1192 = vunpack.c.l.b16 %v622
      %v1193 = vunpack.c.h.b16 %v622
      %v1194 = vunpack.c.l.b16 %v623
      %v1195 = vunpack.c.h.b16 %v623
      %v1196 = vunpack.c.l.b16 %v624
      %v1197 = vunpack.c.h.b16 %v624
      %v1198 = vunpack.c.l.b16 %v625
      %v1199 = vunpack.c.h.b16 %v625
      %v1200 = vunpack.c.l.b16 %v626
      %v1201 = vunpack.c.h.b16 %v626
      %v1202 = vunpack.c.l.b16 %v627
      %v1203 = vunpack.c.h.b16 %v627
      %v1204 = vunpack.c.l.b16 %v628
      %v1205 = vunpack.c.h.b16 %v628
      %v1206 = vunpack.c.l.b16 %v629
      %v1207 = vunpack.c.h.b16 %v629
      %v1208 = vunpack.c.l.b16 %v630
      %v1209 = vunpack.c.h.b16 %v630
      %v1210 = vunpack.c.l.b16 %v631
      %v1211 = vunpack.c.h.b16 %v631
      %v1212 = vunpack.c.l.b16 %v632
      %v1213 = vunpack.c.h.b16 %v632
      %v1214 = vunpack.c.l.b16 %v633
      %v1215 = vunpack.c.h.b16 %v633
      %v1216 = vunpack.c.l.b16 %v634
      %v1217 = vunpack.c.h.b16 %v634
      %v1218 = vunpack.c.l.b16 %v635
      %v1219 = vunpack.c.h.b16 %v635
      %v1220 = vunpack.c.l.b16 %v636
      %v1221 = vunpack.c.h.b16 %v636
      %v1222 = vunpack.c.l.b16 %v637
      %v1223 = vunpack.c.h.b16 %v637
      %v1224 = vunpack.c.l.b16 %v638
      %v1225 = vunpack.c.h.b16 %v638
      %v1226 = vunpack.c.l.b16 %v639
      %v1227 = vunpack.c.h.b16 %v639
      %v1228 = vunpack.c.l.b16 %v640
      %v1229 = vunpack.c.h.b16 %v640
      %v1230 = vunpack.c.l.b16 %v641
      %v1231 = vunpack.c.h.b16 %v641
      %v1232 = vpack.c.b16 %v1170, %v1168
      %v1233 = vpack.c.b16 %v1171, %v1169
      %v1234 = vpack.c.b16 %v1174, %v1172
      %v1235 = vpack.c.b16 %v1175, %v1173
      %v1236 = vpack.c.b16 %v1178, %v1176
      %v1237 = vpack.c.b16 %v1179, %v1177
      %v1238 = vpack.c.b16 %v1182, %v1180
      %v1239 = vpack.c.b16 %v1183, %v1181
      %v1240 = vpack.c.b16 %v1186, %v1184
      %v1241 = vpack.c.b16 %v1187, %v1185
      %v1242 = vpack.c.b16 %v1190, %v1188
      %v1243 = vpack.c.b16 %v1191, %v1189
      %v1244 = vpack.c.b16 %v1194, %v1192
      %v1245 = vpack.c.b16 %v1195, %v1193
      %v1246 = vpack.c.b16 %v1198, %v1196
      %v1247 = vpack.c.b16 %v1199, %v1197
      %v1248 = vpack.c.b16 %v1202, %v1200
      %v1249 = vpack.c.b16 %v1203, %v1201
      %v1250 = vpack.c.b16 %v1206, %v1204
      %v1251 = vpack.c.b16 %v1207, %v1205
      %v1252 = vpack.c.b16 %v1210, %v1208
      %v1253 = vpack.c.b16 %v1211, %v1209
      %v1254 = vpack.c.b16 %v1214, %v1212
      %v1255 = vpack.c.b16 %v1215, %v1213
      %v1256 = vpack.c.b16 %v1218, %v1216
      %v1257 = vpack.c.b16 %v1219, %v1217
      %v1258 = vpack.c.b16 %v1222, %v1220
      %v1259 = vpack.c.b16 %v1223, %v1221
      %v1260 = vpack.c.b16 %v1226, %v1224
      %v1261 = vpack.c.b16 %v1227, %v1225
      %v1262 = vpack.c.b16 %v1230, %v1228
      %v1263 = vpack.c.b16 %v1231, %v1229
      %v1298 = vunpack.c.l.b16 %v642
      %v1299 = vunpack.c.l.b16 %v643
      %v1300 = vunpack.c.l.b16 %v644
      %v1301 = vunpack.c.l.b16 %v645
      %v1302 = vunpack.c.l.b16 %v646
      %v1303 = vunpack.c.l.b16 %v647
      %v1304 = vunpack.c.l.b16 %v648
      %v1305 = vunpack.c.l.b16 %v649
      %v1306 = vunpack.c.l.b16 %v650
      %v1307 = vunpack.c.l.b16 %v651
      %v1308 = vunpack.c.l.b16 %v652
      %v1309 = vunpack.c.l.b16 %v653
      %v1310 = vunpack.c.l.b16 %v654
      %v1311 = vunpack.c.l.b16 %v655
      %v1312 = vunpack.c.l.b16 %v656
      %v1313 = vunpack.c.l.b16 %v657
      %v1314 = vunpack.c.l.b16 %v658
      %v1315 = vunpack.c.l.b16 %v659
      %v1316 = vpack.c.b16 %v1299, %v1298
      %v1317 = vpack.c.b16 %v1301, %v1300
      %v1318 = vpack.c.b16 %v1303, %v1302
      %v1319 = vpack.c.b16 %v1305, %v1304
      %v1320 = vpack.c.b16 %v1307, %v1306
      %v1321 = vpack.c.b16 %v1309, %v1308
      %v1322 = vpack.c.b16 %v1311, %v1310
      %v1323 = vpack.c.b16 %v1313, %v1312
      %v1324 = vpack.c.b16 %v1315, %v1314
      %v1335 = vsel %vm909, %v1233, 0
      %v1338 = vsel %vm909, %v1235, 0
      %v1341 = vsel %vm909, %v1237, 0
      %v1344 = vsel %vm909, %v1239, 0
      %v1347 = vsel %vm909, %v1241, 0
      %v1350 = vsel %vm909, %v1243, 0
      %v1353 = vsel %vm909, %v1245, 0
      %v1356 = vsel %vm909, %v1247, 0
      %v1359 = vsel %vm909, %v1249, 0
      %v1362 = vsel %vm909, %v1251, 0
      %v1365 = vsel %vm909, %v1253, 0
      %v1368 = vsel %vm909, %v1255, 0
      %v1371 = vsel %vm909, %v1257, 0
      %v1374 = vsel %vm909, %v1259, 0
      %v1377 = vsel %vm909, %v1261, 0
      %v1380 = vsel %vm909, %v1263, 0
      %1382 = vmatpush.bf16.msra.mxu0 %v1323
      %1383 = vmatpush.bf16.msra.mxu0 %v1322
      %1384 = vmatpush.bf16.msra.mxu0 %v1321
      %1385 = vmatpush.bf16.msra.mxu0 %v1320
      %1386 = vmatpush.bf16.msra.mxu0 %v1319
      %1387 = vmatpush.bf16.msra.mxu0 %v1318
      %1388 = vmatpush.bf16.msra.mxu0 %v1317
      %1389 = vmatpush.bf16.msra.mxu0 %v1316
      %1390 = vmatmul.bf16.gmra.mxu0 %v1232
      %v1391 = vpop.f32.mrf.mxu0
      %v1392 = vadd.f32 %v1057, %v1391
      %v1393 = vpop.f32.mrf.mxu0
      %v1394 = vadd.f32 %v1059, %v1393
      %1395 = vmatmul.bf16.gmra.mxu0 %v1234
      %v1396 = vpop.f32.mrf.mxu0
      %v1397 = vadd.f32 %v1062, %v1396
      %v1398 = vpop.f32.mrf.mxu0
      %v1399 = vadd.f32 %v1064, %v1398
      %1400 = vmatmul.bf16.gmra.mxu0 %v1236
      %v1401 = vpop.f32.mrf.mxu0
      %v1402 = vadd.f32 %v1067, %v1401
      %v1403 = vpop.f32.mrf.mxu0
      %v1404 = vadd.f32 %v1069, %v1403
      %1405 = vmatmul.bf16.gmra.mxu0 %v1238
      %v1406 = vpop.f32.mrf.mxu0
      %v1407 = vadd.f32 %v1072, %v1406
      %v1408 = vpop.f32.mrf.mxu0
      %v1409 = vadd.f32 %v1074, %v1408
      %1410 = vmatmul.bf16.gmra.mxu0 %v1240
      %v1411 = vpop.f32.mrf.mxu0
      %v1412 = vadd.f32 %v1077, %v1411
      %v1413 = vpop.f32.mrf.mxu0
      %v1414 = vadd.f32 %v1079, %v1413
      %1415 = vmatmul.bf16.gmra.mxu0 %v1242
      %v1416 = vpop.f32.mrf.mxu0
      %v1417 = vadd.f32 %v1082, %v1416
      %v1418 = vpop.f32.mrf.mxu0
      %v1419 = vadd.f32 %v1084, %v1418
      %1420 = vmatmul.bf16.gmra.mxu0 %v1244
      %v1421 = vpop.f32.mrf.mxu0
      %v1422 = vadd.f32 %v1087, %v1421
      %v1423 = vpop.f32.mrf.mxu0
      %v1424 = vadd.f32 %v1089, %v1423
      %1425 = vmatmul.bf16.gmra.mxu0 %v1246
      %v1426 = vpop.f32.mrf.mxu0
      %v1427 = vadd.f32 %v1092, %v1426
      %v1428 = vpop.f32.mrf.mxu0
      %v1429 = vadd.f32 %v1094, %v1428
      %1430 = vmatmul.bf16.gmra.mxu0 %v1248
      %v1431 = vpop.f32.mrf.mxu0
      %v1432 = vadd.f32 %v1097, %v1431
      %v1433 = vpop.f32.mrf.mxu0
      %v1434 = vadd.f32 %v1099, %v1433
      %1435 = vmatmul.bf16.gmra.mxu0 %v1250
      %v1436 = vpop.f32.mrf.mxu0
      %v1437 = vadd.f32 %v1102, %v1436
      %v1438 = vpop.f32.mrf.mxu0
      %v1439 = vadd.f32 %v1104, %v1438
      %1440 = vmatmul.bf16.gmra.mxu0 %v1252
      %v1441 = vpop.f32.mrf.mxu0
      %v1442 = vadd.f32 %v1107, %v1441
      %v1443 = vpop.f32.mrf.mxu0
      %v1444 = vadd.f32 %v1109, %v1443
      %1445 = vmatmul.bf16.gmra.mxu0 %v1254
      %v1446 = vpop.f32.mrf.mxu0
      %v1447 = vadd.f32 %v1112, %v1446
      %v1448 = vpop.f32.mrf.mxu0
      %v1449 = vadd.f32 %v1114, %v1448
      %1450 = vmatmul.bf16.gmra.mxu0 %v1256
      %v1451 = vpop.f32.mrf.mxu0
      %v1452 = vadd.f32 %v1117, %v1451
      %v1453 = vpop.f32.mrf.mxu0
      %v1454 = vadd.f32 %v1119, %v1453
      %1455 = vmatmul.bf16.gmra.mxu0 %v1258
      %v1456 = vpop.f32.mrf.mxu0
      %v1457 = vadd.f32 %v1122, %v1456
      %v1458 = vpop.f32.mrf.mxu0
      %v1459 = vadd.f32 %v1124, %v1458
      %1460 = vmatmul.bf16.gmra.mxu0 %v1260
      %v1461 = vpop.f32.mrf.mxu0
      %v1462 = vadd.f32 %v1127, %v1461
      %v1463 = vpop.f32.mrf.mxu0
      %v1464 = vadd.f32 %v1129, %v1463
      %1465 = vmatmul.bf16.gmra.mxu0 %v1262
      %v1466 = vpop.f32.mrf.mxu0
      %v1467 = vadd.f32 %v1132, %v1466
      %v1468 = vpop.f32.mrf.mxu0
      %v1469 = vadd.f32 %v1134, %v1468
      %1470 = vdwg.mxu0
      %1471 = vmatpush.bf16.msra.mxu0 0
      %1472 = vmatpush.bf16.msra.mxu0 0
      %1473 = vmatpush.bf16.msra.mxu0 0
      %1474 = vmatpush.bf16.msra.mxu0 0
      %1475 = vmatpush.bf16.msra.mxu0 0
      %1476 = vmatpush.bf16.msra.mxu0 0
      %1477 = vmatpush.bf16.msra.mxu0 0
      %1478 = vmatpush.bf16.msra.mxu0 %v1324
      %1479 = vmatmul.bf16.gmra.mxu0 %v1335
      %v1480 = vpop.f32.mrf.mxu0
      %v1481 = vadd.f32 %v1392, %v1480
      %v1482 = vpop.f32.mrf.mxu0
      %v1483 = vadd.f32 %v1394, %v1482
      %1484 = vmatmul.bf16.gmra.mxu0 %v1338
      %v1485 = vpop.f32.mrf.mxu0
      %v1486 = vadd.f32 %v1397, %v1485
      %v1487 = vpop.f32.mrf.mxu0
      %v1488 = vadd.f32 %v1399, %v1487
      %1489 = vmatmul.bf16.gmra.mxu0 %v1341
      %v1490 = vpop.f32.mrf.mxu0
      %v1491 = vadd.f32 %v1402, %v1490
      %v1492 = vpop.f32.mrf.mxu0
      %v1493 = vadd.f32 %v1404, %v1492
      %1494 = vmatmul.bf16.gmra.mxu0 %v1344
      %v1495 = vpop.f32.mrf.mxu0
      %v1496 = vadd.f32 %v1407, %v1495
      %v1497 = vpop.f32.mrf.mxu0
      %v1498 = vadd.f32 %v1409, %v1497
      %1499 = vmatmul.bf16.gmra.mxu0 %v1347
      %v1500 = vpop.f32.mrf.mxu0
      %v1501 = vadd.f32 %v1412, %v1500
      %v1502 = vpop.f32.mrf.mxu0
      %v1503 = vadd.f32 %v1414, %v1502
      %1504 = vmatmul.bf16.gmra.mxu0 %v1350
      %v1505 = vpop.f32.mrf.mxu0
      %v1506 = vadd.f32 %v1417, %v1505
      %v1507 = vpop.f32.mrf.mxu0
      %v1508 = vadd.f32 %v1419, %v1507
      %1509 = vmatmul.bf16.gmra.mxu0 %v1353
      %v1510 = vpop.f32.mrf.mxu0
      %v1511 = vadd.f32 %v1422, %v1510
      %v1512 = vpop.f32.mrf.mxu0
      %v1513 = vadd.f32 %v1424, %v1512
      %1514 = vmatmul.bf16.gmra.mxu0 %v1356
      %v1515 = vpop.f32.mrf.mxu0
      %v1516 = vadd.f32 %v1427, %v1515
      %v1517 = vpop.f32.mrf.mxu0
      %v1518 = vadd.f32 %v1429, %v1517
      %1519 = vmatmul.bf16.gmra.mxu0 %v1359
      %v1520 = vpop.f32.mrf.mxu0
      %v1521 = vadd.f32 %v1432, %v1520
      %v1522 = vpop.f32.mrf.mxu0
      %v1523 = vadd.f32 %v1434, %v1522
      %1524 = vmatmul.bf16.gmra.mxu0 %v1362
      %v1525 = vpop.f32.mrf.mxu0
      %v1526 = vadd.f32 %v1437, %v1525
      %v1527 = vpop.f32.mrf.mxu0
      %v1528 = vadd.f32 %v1439, %v1527
      %1529 = vmatmul.bf16.gmra.mxu0 %v1365
      %v1530 = vpop.f32.mrf.mxu0
      %v1531 = vadd.f32 %v1442, %v1530
      %v1532 = vpop.f32.mrf.mxu0
      %v1533 = vadd.f32 %v1444, %v1532
      %1534 = vmatmul.bf16.gmra.mxu0 %v1368
      %v1535 = vpop.f32.mrf.mxu0
      %v1536 = vadd.f32 %v1447, %v1535
      %v1537 = vpop.f32.mrf.mxu0
      %v1538 = vadd.f32 %v1449, %v1537
      %1539 = vmatmul.bf16.gmra.mxu0 %v1371
      %v1540 = vpop.f32.mrf.mxu0
      %v1541 = vadd.f32 %v1452, %v1540
      %v1542 = vpop.f32.mrf.mxu0
      %v1543 = vadd.f32 %v1454, %v1542
      %1544 = vmatmul.bf16.gmra.mxu0 %v1374
      %v1545 = vpop.f32.mrf.mxu0
      %v1546 = vadd.f32 %v1457, %v1545
      %v1547 = vpop.f32.mrf.mxu0
      %v1548 = vadd.f32 %v1459, %v1547
      %1549 = vmatmul.bf16.gmra.mxu0 %v1377
      %v1550 = vpop.f32.mrf.mxu0
      %v1551 = vadd.f32 %v1462, %v1550
      %v1552 = vpop.f32.mrf.mxu0
      %v1553 = vadd.f32 %v1464, %v1552
      %1554 = vmatmul.bf16.gmra.mxu0 %v1380
      %v1555 = vpop.f32.mrf.mxu0
      %v1556 = vadd.f32 %v1467, %v1555
      %v1557 = vpop.f32.mrf.mxu0
      %v1558 = vadd.f32 %v1469, %v1557
      %1559 = vdwg.mxu0
      %v1560 = vld [vmem:[%s412] sm:$0xff]
      %v1561 = vld [vmem:[%s412 + $0x8] sm:$0xff]
      %v1562 = vld [vmem:[%s412 + $0x10] sm:$0xff]
      %v1563 = vld [vmem:[%s412 + $0x18] sm:$0xff]
      %v1564 = vld [vmem:[%s412 + $0x20] sm:$0xff]
      %v1565 = vld [vmem:[%s412 + $0x28] sm:$0xff]
      %v1566 = vld [vmem:[%s412 + $0x30] sm:$0xff]
      %v1567 = vld [vmem:[%s412 + $0x38] sm:$0xff]
      %v1568 = vld [vmem:[%s412 + $0x40] sm:$0xff]
      %v1569 = vld [vmem:[%s412 + $0x48] sm:$0xff]
      %v1570 = vld [vmem:[%s412 + $0x50] sm:$0xff]
      %v1571 = vld [vmem:[%s412 + $0x58] sm:$0xff]
      %v1572 = vld [vmem:[%s412 + $0x60] sm:$0xff]
      %v1573 = vld [vmem:[%s412 + $0x68] sm:$0xff]
      %v1574 = vld [vmem:[%s412 + $0x70] sm:$0xff]
      %v1575 = vld [vmem:[%s412 + $0x78] sm:$0xff]
      %v1576 = vld [vmem:[%s412 + $0x80] sm:$0xff]
      %v1577 = vld [vmem:[%s412 + $0x88] sm:$0xff]
      %v1578 = vld [vmem:[%s412 + $0x90] sm:$0xff]
      %v1579 = vld [vmem:[%s412 + $0x98] sm:$0xff]
      %v1580 = vld [vmem:[%s412 + $0xa0] sm:$0xff]
      %v1581 = vld [vmem:[%s412 + $0xa8] sm:$0xff]
      %v1582 = vld [vmem:[%s412 + $0xb0] sm:$0xff]
      %v1583 = vld [vmem:[%s412 + $0xb8] sm:$0xff]
      %v1584 = vld [vmem:[%s412 + $0xc0] sm:$0xff]
      %v1585 = vld [vmem:[%s412 + $0xc8] sm:$0xff]
      %v1586 = vld [vmem:[%s412 + $0xd0] sm:$0xff]
      %v1587 = vld [vmem:[%s412 + $0xd8] sm:$0xff]
      %v1588 = vld [vmem:[%s412 + $0xe0] sm:$0xff]
      %v1589 = vld [vmem:[%s412 + $0xe8] sm:$0xff]
      %v1590 = vld [vmem:[%s412 + $0xf0] sm:$0xff]
      %v1591 = vld [vmem:[%s412 + $0xf8] sm:$0xff]
      %s1592 = sadd.s32 %s21, 1
      %p1593 = scmp.ge.s32.totalorder %s1592, 0
      %p1594 = scmp.lt.s32.totalorder %s1592, 8
      %p1595 = pnand %p1593, %p1594
      %p1596 = pneg %p1595
      %s1597 = scalar_select %p1596, 1, 0
      %s1598 = scvt.s32.f32 %s1597
      %p1600 = scmp.ne.f32.partialorder %s1598, %s1598
      %s1601 = sshrl.u32 %s1598, 16
      %s1602 = sand.u32 %s1601, 1
      %s1603 = sadd.s32 32767, %s1602
      %s1604 = sadd.s32 %s1598, %s1603
      %s1605 = sand.u32 %s1604, 4294901760
      %s1606 = scalar_select %p1600, 2143289344, %s1605
      %s1608 = sshrl.u32 %s1606, 16
      %s1609 = sshll.u32 %s1608, 16
      %s1610 = sor.u32 %s1608, %s1609
      %v1611 = vstv %s1610
      %v1613 = vunpack.c.l.bf16 %v1560
      %v1614 = vunpack.c.h.bf16 %v1560
      %v1615 = vunpack.c.l.bf16 %v1561
      %v1616 = vunpack.c.h.bf16 %v1561
      %v1617 = vunpack.c.l.bf16 %v1562
      %v1618 = vunpack.c.h.bf16 %v1562
      %v1619 = vunpack.c.l.bf16 %v1563
      %v1620 = vunpack.c.h.bf16 %v1563
      %v1621 = vunpack.c.l.bf16 %v1564
      %v1622 = vunpack.c.h.bf16 %v1564
      %v1623 = vunpack.c.l.bf16 %v1565
      %v1624 = vunpack.c.h.bf16 %v1565
      %v1625 = vunpack.c.l.bf16 %v1566
      %v1626 = vunpack.c.h.bf16 %v1566
      %v1627 = vunpack.c.l.bf16 %v1567
      %v1628 = vunpack.c.h.bf16 %v1567
      %v1629 = vunpack.c.l.bf16 %v1568
      %v1630 = vunpack.c.h.bf16 %v1568
      %v1631 = vunpack.c.l.bf16 %v1569
      %v1632 = vunpack.c.h.bf16 %v1569
      %v1633 = vunpack.c.l.bf16 %v1570
      %v1634 = vunpack.c.h.bf16 %v1570
      %v1635 = vunpack.c.l.bf16 %v1571
      %v1636 = vunpack.c.h.bf16 %v1571
      %v1637 = vunpack.c.l.bf16 %v1572
      %v1638 = vunpack.c.h.bf16 %v1572
      %v1639 = vunpack.c.l.bf16 %v1573
      %v1640 = vunpack.c.h.bf16 %v1573
      %v1641 = vunpack.c.l.bf16 %v1574
      %v1642 = vunpack.c.h.bf16 %v1574
      %v1643 = vunpack.c.l.bf16 %v1575
      %v1644 = vunpack.c.h.bf16 %v1575
      %v1645 = vunpack.c.l.bf16 %v1576
      %v1646 = vunpack.c.h.bf16 %v1576
      %v1647 = vunpack.c.l.bf16 %v1577
      %v1648 = vunpack.c.h.bf16 %v1577
      %v1649 = vunpack.c.l.bf16 %v1578
      %v1650 = vunpack.c.h.bf16 %v1578
      %v1651 = vunpack.c.l.bf16 %v1579
      %v1652 = vunpack.c.h.bf16 %v1579
      %v1653 = vunpack.c.l.bf16 %v1580
      %v1654 = vunpack.c.h.bf16 %v1580
      %v1655 = vunpack.c.l.bf16 %v1581
      %v1656 = vunpack.c.h.bf16 %v1581
      %v1657 = vunpack.c.l.bf16 %v1582
      %v1658 = vunpack.c.h.bf16 %v1582
      %v1659 = vunpack.c.l.bf16 %v1583
      %v1660 = vunpack.c.h.bf16 %v1583
      %v1661 = vunpack.c.l.bf16 %v1584
      %v1662 = vunpack.c.h.bf16 %v1584
      %v1663 = vunpack.c.l.bf16 %v1585
      %v1664 = vunpack.c.h.bf16 %v1585
      %v1665 = vunpack.c.l.bf16 %v1586
      %v1666 = vunpack.c.h.bf16 %v1586
      %v1667 = vunpack.c.l.bf16 %v1587
      %v1668 = vunpack.c.h.bf16 %v1587
      %v1669 = vunpack.c.l.bf16 %v1588
      %v1670 = vunpack.c.h.bf16 %v1588
      %v1671 = vunpack.c.l.bf16 %v1589
      %v1672 = vunpack.c.h.bf16 %v1589
      %v1673 = vunpack.c.l.bf16 %v1590
      %v1674 = vunpack.c.h.bf16 %v1590
      %v1675 = vunpack.c.l.bf16 %v1591
      %v1676 = vunpack.c.h.bf16 %v1591
      %v1677 = vunpack.c.l.bf16 %v1611
      %v1678 = vmul.f32 %v1613, %v1677
      %v1679 = vmul.f32 %v1614, %v1677
      %v1680 = vmul.f32 %v1615, %v1677
      %v1681 = vmul.f32 %v1616, %v1677
      %v1682 = vmul.f32 %v1617, %v1677
      %v1683 = vmul.f32 %v1618, %v1677
      %v1684 = vmul.f32 %v1619, %v1677
      %v1685 = vmul.f32 %v1620, %v1677
      %v1686 = vmul.f32 %v1621, %v1677
      %v1687 = vmul.f32 %v1622, %v1677
      %v1688 = vmul.f32 %v1623, %v1677
      %v1689 = vmul.f32 %v1624, %v1677
      %v1690 = vmul.f32 %v1625, %v1677
      %v1691 = vmul.f32 %v1626, %v1677
      %v1692 = vmul.f32 %v1627, %v1677
      %v1693 = vmul.f32 %v1628, %v1677
      %v1694 = vmul.f32 %v1629, %v1677
      %v1695 = vmul.f32 %v1630, %v1677
      %v1696 = vmul.f32 %v1631, %v1677
      %v1697 = vmul.f32 %v1632, %v1677
      %v1698 = vmul.f32 %v1633, %v1677
      %v1699 = vmul.f32 %v1634, %v1677
      %v1700 = vmul.f32 %v1635, %v1677
      %v1701 = vmul.f32 %v1636, %v1677
      %v1702 = vmul.f32 %v1637, %v1677
      %v1703 = vmul.f32 %v1638, %v1677
      %v1704 = vmul.f32 %v1639, %v1677
      %v1705 = vmul.f32 %v1640, %v1677
      %v1706 = vmul.f32 %v1641, %v1677
      %v1707 = vmul.f32 %v1642, %v1677
      %v1708 = vmul.f32 %v1643, %v1677
      %v1709 = vmul.f32 %v1644, %v1677
      %v1710 = vmul.f32 %v1645, %v1677
      %v1711 = vmul.f32 %v1646, %v1677
      %v1712 = vmul.f32 %v1647, %v1677
      %v1713 = vmul.f32 %v1648, %v1677
      %v1714 = vmul.f32 %v1649, %v1677
      %v1715 = vmul.f32 %v1650, %v1677
      %v1716 = vmul.f32 %v1651, %v1677
      %v1717 = vmul.f32 %v1652, %v1677
      %v1718 = vmul.f32 %v1653, %v1677
      %v1719 = vmul.f32 %v1654, %v1677
      %v1720 = vmul.f32 %v1655, %v1677
      %v1721 = vmul.f32 %v1656, %v1677
      %v1722 = vmul.f32 %v1657, %v1677
      %v1723 = vmul.f32 %v1658, %v1677
      %v1724 = vmul.f32 %v1659, %v1677
      %v1725 = vmul.f32 %v1660, %v1677
      %v1726 = vmul.f32 %v1661, %v1677
      %v1727 = vmul.f32 %v1662, %v1677
      %v1728 = vmul.f32 %v1663, %v1677
      %v1729 = vmul.f32 %v1664, %v1677
      %v1730 = vmul.f32 %v1665, %v1677
      %v1731 = vmul.f32 %v1666, %v1677
      %v1732 = vmul.f32 %v1667, %v1677
      %v1733 = vmul.f32 %v1668, %v1677
      %v1734 = vmul.f32 %v1669, %v1677
      %v1735 = vmul.f32 %v1670, %v1677
      %v1736 = vmul.f32 %v1671, %v1677
      %v1737 = vmul.f32 %v1672, %v1677
      %v1738 = vmul.f32 %v1673, %v1677
      %v1739 = vmul.f32 %v1674, %v1677
      %v1740 = vmul.f32 %v1675, %v1677
      %v1741 = vmul.f32 %v1676, %v1677
      %v1742 = vpack.c.bf16 %v1679, %v1678
      %v1743 = vpack.c.bf16 %v1681, %v1680
      %v1744 = vpack.c.bf16 %v1683, %v1682
      %v1745 = vpack.c.bf16 %v1685, %v1684
      %v1746 = vpack.c.bf16 %v1687, %v1686
      %v1747 = vpack.c.bf16 %v1689, %v1688
      %v1748 = vpack.c.bf16 %v1691, %v1690
      %v1749 = vpack.c.bf16 %v1693, %v1692
      %v1750 = vpack.c.bf16 %v1695, %v1694
      %v1751 = vpack.c.bf16 %v1697, %v1696
      %v1752 = vpack.c.bf16 %v1699, %v1698
      %v1753 = vpack.c.bf16 %v1701, %v1700
      %v1754 = vpack.c.bf16 %v1703, %v1702
      %v1755 = vpack.c.bf16 %v1705, %v1704
      %v1756 = vpack.c.bf16 %v1707, %v1706
      %v1757 = vpack.c.bf16 %v1709, %v1708
      %v1758 = vpack.c.bf16 %v1711, %v1710
      %v1759 = vpack.c.bf16 %v1713, %v1712
      %v1760 = vpack.c.bf16 %v1715, %v1714
      %v1761 = vpack.c.bf16 %v1717, %v1716
      %v1762 = vpack.c.bf16 %v1719, %v1718
      %v1763 = vpack.c.bf16 %v1721, %v1720
      %v1764 = vpack.c.bf16 %v1723, %v1722
      %v1765 = vpack.c.bf16 %v1725, %v1724
      %v1766 = vpack.c.bf16 %v1727, %v1726
      %v1767 = vpack.c.bf16 %v1729, %v1728
      %v1768 = vpack.c.bf16 %v1731, %v1730
      %v1769 = vpack.c.bf16 %v1733, %v1732
      %v1770 = vpack.c.bf16 %v1735, %v1734
      %v1771 = vpack.c.bf16 %v1737, %v1736
      %v1772 = vpack.c.bf16 %v1739, %v1738
      %v1773 = vpack.c.bf16 %v1741, %v1740
      %s1774 = scalar_lea.vmem %s3, 144
      %v1775 = vld [vmem:[%s1774] sm:$0xf]
      %v1776 = vld [vmem:[%s1774 + $0x4] sm:$0xf]
      %v1777 = vld [vmem:[%s1774 + $0x8] sm:$0xf]
      %v1778 = vld [vmem:[%s1774 + $0xc] sm:$0xf]
      %v1779 = vld [vmem:[%s1774 + $0x10] sm:$0xf]
      %v1780 = vld [vmem:[%s1774 + $0x14] sm:$0xf]
      %v1781 = vld [vmem:[%s1774 + $0x18] sm:$0xf]
      %v1782 = vld [vmem:[%s1774 + $0x1c] sm:$0xf]
      %v1783 = vld [vmem:[%s1774 + $0x20] sm:$0xf]
      %v1784 = vld [vmem:[%s1774 + $0x24] sm:$0xf]
      %v1785 = vld [vmem:[%s1774 + $0x28] sm:$0xf]
      %v1786 = vld [vmem:[%s1774 + $0x2c] sm:$0xf]
      %v1787 = vld [vmem:[%s1774 + $0x30] sm:$0xf]
      %v1788 = vld [vmem:[%s1774 + $0x34] sm:$0xf]
      %v1789 = vld [vmem:[%s1774 + $0x38] sm:$0xf]
      %v1790 = vld [vmem:[%s1774 + $0x3c] sm:$0xf]
      %v1791 = vld [vmem:[%s1774 + $0x40] sm:$0xf]
      %v1792 = vld [vmem:[%s1774 + $0x44] sm:$0xf]
      %v1825 = vunpack.c.l.b16 %v1742
      %v1826 = vunpack.c.h.b16 %v1742
      %v1827 = vunpack.c.l.b16 %v1743
      %v1828 = vunpack.c.h.b16 %v1743
      %v1829 = vunpack.c.l.b16 %v1744
      %v1830 = vunpack.c.h.b16 %v1744
      %v1831 = vunpack.c.l.b16 %v1745
      %v1832 = vunpack.c.h.b16 %v1745
      %v1833 = vunpack.c.l.b16 %v1746
      %v1834 = vunpack.c.h.b16 %v1746
      %v1835 = vunpack.c.l.b16 %v1747
      %v1836 = vunpack.c.h.b16 %v1747
      %v1837 = vunpack.c.l.b16 %v1748
      %v1838 = vunpack.c.h.b16 %v1748
      %v1839 = vunpack.c.l.b16 %v1749
      %v1840 = vunpack.c.h.b16 %v1749
      %v1841 = vunpack.c.l.b16 %v1750
      %v1842 = vunpack.c.h.b16 %v1750
      %v1843 = vunpack.c.l.b16 %v1751
      %v1844 = vunpack.c.h.b16 %v1751
      %v1845 = vunpack.c.l.b16 %v1752
      %v1846 = vunpack.c.h.b16 %v1752
      %v1847 = vunpack.c.l.b16 %v1753
      %v1848 = vunpack.c.h.b16 %v1753
      %v1849 = vunpack.c.l.b16 %v1754
      %v1850 = vunpack.c.h.b16 %v1754
      %v1851 = vunpack.c.l.b16 %v1755
      %v1852 = vunpack.c.h.b16 %v1755
      %v1853 = vunpack.c.l.b16 %v1756
      %v1854 = vunpack.c.h.b16 %v1756
      %v1855 = vunpack.c.l.b16 %v1757
      %v1856 = vunpack.c.h.b16 %v1757
      %v1857 = vunpack.c.l.b16 %v1758
      %v1858 = vunpack.c.h.b16 %v1758
      %v1859 = vunpack.c.l.b16 %v1759
      %v1860 = vunpack.c.h.b16 %v1759
      %v1861 = vunpack.c.l.b16 %v1760
      %v1862 = vunpack.c.h.b16 %v1760
      %v1863 = vunpack.c.l.b16 %v1761
      %v1864 = vunpack.c.h.b16 %v1761
      %v1865 = vunpack.c.l.b16 %v1762
      %v1866 = vunpack.c.h.b16 %v1762
      %v1867 = vunpack.c.l.b16 %v1763
      %v1868 = vunpack.c.h.b16 %v1763
      %v1869 = vunpack.c.l.b16 %v1764
      %v1870 = vunpack.c.h.b16 %v1764
      %v1871 = vunpack.c.l.b16 %v1765
      %v1872 = vunpack.c.h.b16 %v1765
      %v1873 = vunpack.c.l.b16 %v1766
      %v1874 = vunpack.c.h.b16 %v1766
      %v1875 = vunpack.c.l.b16 %v1767
      %v1876 = vunpack.c.h.b16 %v1767
      %v1877 = vunpack.c.l.b16 %v1768
      %v1878 = vunpack.c.h.b16 %v1768
      %v1879 = vunpack.c.l.b16 %v1769
      %v1880 = vunpack.c.h.b16 %v1769
      %v1881 = vunpack.c.l.b16 %v1770
      %v1882 = vunpack.c.h.b16 %v1770
      %v1883 = vunpack.c.l.b16 %v1771
      %v1884 = vunpack.c.h.b16 %v1771
      %v1885 = vunpack.c.l.b16 %v1772
      %v1886 = vunpack.c.h.b16 %v1772
      %v1887 = vunpack.c.l.b16 %v1773
      %v1888 = vunpack.c.h.b16 %v1773
      %v1889 = vpack.c.b16 %v1827, %v1825
      %v1890 = vpack.c.b16 %v1828, %v1826
      %v1891 = vpack.c.b16 %v1831, %v1829
      %v1892 = vpack.c.b16 %v1832, %v1830
      %v1893 = vpack.c.b16 %v1835, %v1833
      %v1894 = vpack.c.b16 %v1836, %v1834
      %v1895 = vpack.c.b16 %v1839, %v1837
      %v1896 = vpack.c.b16 %v1840, %v1838
      %v1897 = vpack.c.b16 %v1843, %v1841
      %v1898 = vpack.c.b16 %v1844, %v1842
      %v1899 = vpack.c.b16 %v1847, %v1845
      %v1900 = vpack.c.b16 %v1848, %v1846
      %v1901 = vpack.c.b16 %v1851, %v1849
      %v1902 = vpack.c.b16 %v1852, %v1850
      %v1903 = vpack.c.b16 %v1855, %v1853
      %v1904 = vpack.c.b16 %v1856, %v1854
      %v1905 = vpack.c.b16 %v1859, %v1857
      %v1906 = vpack.c.b16 %v1860, %v1858
      %v1907 = vpack.c.b16 %v1863, %v1861
      %v1908 = vpack.c.b16 %v1864, %v1862
      %v1909 = vpack.c.b16 %v1867, %v1865
      %v1910 = vpack.c.b16 %v1868, %v1866
      %v1911 = vpack.c.b16 %v1871, %v1869
      %v1912 = vpack.c.b16 %v1872, %v1870
      %v1913 = vpack.c.b16 %v1875, %v1873
      %v1914 = vpack.c.b16 %v1876, %v1874
      %v1915 = vpack.c.b16 %v1879, %v1877
      %v1916 = vpack.c.b16 %v1880, %v1878
      %v1917 = vpack.c.b16 %v1883, %v1881
      %v1918 = vpack.c.b16 %v1884, %v1882
      %v1919 = vpack.c.b16 %v1887, %v1885
      %v1920 = vpack.c.b16 %v1888, %v1886
      %v1955 = vunpack.c.l.b16 %v1775
      %v1956 = vunpack.c.l.b16 %v1776
      %v1957 = vunpack.c.l.b16 %v1777
      %v1958 = vunpack.c.l.b16 %v1778
      %v1959 = vunpack.c.l.b16 %v1779
      %v1960 = vunpack.c.l.b16 %v1780
      %v1961 = vunpack.c.l.b16 %v1781
      %v1962 = vunpack.c.l.b16 %v1782
      %v1963 = vunpack.c.l.b16 %v1783
      %v1964 = vunpack.c.l.b16 %v1784
      %v1965 = vunpack.c.l.b16 %v1785
      %v1966 = vunpack.c.l.b16 %v1786
      %v1967 = vunpack.c.l.b16 %v1787
      %v1968 = vunpack.c.l.b16 %v1788
      %v1969 = vunpack.c.l.b16 %v1789
      %v1970 = vunpack.c.l.b16 %v1790
      %v1971 = vunpack.c.l.b16 %v1791
      %v1972 = vunpack.c.l.b16 %v1792
      %v1973 = vpack.c.b16 %v1956, %v1955
      %v1974 = vpack.c.b16 %v1958, %v1957
      %v1975 = vpack.c.b16 %v1960, %v1959
      %v1976 = vpack.c.b16 %v1962, %v1961
      %v1977 = vpack.c.b16 %v1964, %v1963
      %v1978 = vpack.c.b16 %v1966, %v1965
      %v1979 = vpack.c.b16 %v1968, %v1967
      %v1980 = vpack.c.b16 %v1970, %v1969
      %v1981 = vpack.c.b16 %v1972, %v1971
      %v1992 = vsel %vm909, %v1890, 0
      %v1995 = vsel %vm909, %v1892, 0
      %v1998 = vsel %vm909, %v1894, 0
      %v2001 = vsel %vm909, %v1896, 0
      %v2004 = vsel %vm909, %v1898, 0
      %v2007 = vsel %vm909, %v1900, 0
      %v2010 = vsel %vm909, %v1902, 0
      %v2013 = vsel %vm909, %v1904, 0
      %v2016 = vsel %vm909, %v1906, 0
      %v2019 = vsel %vm909, %v1908, 0
      %v2022 = vsel %vm909, %v1910, 0
      %v2025 = vsel %vm909, %v1912, 0
      %v2028 = vsel %vm909, %v1914, 0
      %v2031 = vsel %vm909, %v1916, 0
      %v2034 = vsel %vm909, %v1918, 0
      %v2037 = vsel %vm909, %v1920, 0
      %2039 = vmatpush.bf16.msra.mxu0 %v1980
      %2040 = vmatpush.bf16.msra.mxu0 %v1979
      %2041 = vmatpush.bf16.msra.mxu0 %v1978
      %2042 = vmatpush.bf16.msra.mxu0 %v1977
      %2043 = vmatpush.bf16.msra.mxu0 %v1976
      %2044 = vmatpush.bf16.msra.mxu0 %v1975
      %2045 = vmatpush.bf16.msra.mxu0 %v1974
      %2046 = vmatpush.bf16.msra.mxu0 %v1973
      %2047 = vmatmul.bf16.gmra.mxu0 %v1889
      %v2048 = vpop.f32.mrf.mxu0
      %v2049 = vadd.f32 0.0, %v2048
      %v2050 = vpop.f32.mrf.mxu0
      %v2051 = vadd.f32 0.0, %v2050
      %2052 = vmatmul.bf16.gmra.mxu0 %v1891
      %v2053 = vpop.f32.mrf.mxu0
      %v2054 = vadd.f32 0.0, %v2053
      %v2055 = vpop.f32.mrf.mxu0
      %v2056 = vadd.f32 0.0, %v2055
      %2057 = vmatmul.bf16.gmra.mxu0 %v1893
      %v2058 = vpop.f32.mrf.mxu0
      %v2059 = vadd.f32 0.0, %v2058
      %v2060 = vpop.f32.mrf.mxu0
      %v2061 = vadd.f32 0.0, %v2060
      %2062 = vmatmul.bf16.gmra.mxu0 %v1895
      %v2063 = vpop.f32.mrf.mxu0
      %v2064 = vadd.f32 0.0, %v2063
      %v2065 = vpop.f32.mrf.mxu0
      %v2066 = vadd.f32 0.0, %v2065
      %2067 = vmatmul.bf16.gmra.mxu0 %v1897
      %v2068 = vpop.f32.mrf.mxu0
      %v2069 = vadd.f32 0.0, %v2068
      %v2070 = vpop.f32.mrf.mxu0
      %v2071 = vadd.f32 0.0, %v2070
      %2072 = vmatmul.bf16.gmra.mxu0 %v1899
      %v2073 = vpop.f32.mrf.mxu0
      %v2074 = vadd.f32 0.0, %v2073
      %v2075 = vpop.f32.mrf.mxu0
      %v2076 = vadd.f32 0.0, %v2075
      %2077 = vmatmul.bf16.gmra.mxu0 %v1901
      %v2078 = vpop.f32.mrf.mxu0
      %v2079 = vadd.f32 0.0, %v2078
      %v2080 = vpop.f32.mrf.mxu0
      %v2081 = vadd.f32 0.0, %v2080
      %2082 = vmatmul.bf16.gmra.mxu0 %v1903
      %v2083 = vpop.f32.mrf.mxu0
      %v2084 = vadd.f32 0.0, %v2083
      %v2085 = vpop.f32.mrf.mxu0
      %v2086 = vadd.f32 0.0, %v2085
      %2087 = vmatmul.bf16.gmra.mxu0 %v1905
      %v2088 = vpop.f32.mrf.mxu0
      %v2089 = vadd.f32 0.0, %v2088
      %v2090 = vpop.f32.mrf.mxu0
      %v2091 = vadd.f32 0.0, %v2090
      %2092 = vmatmul.bf16.gmra.mxu0 %v1907
      %v2093 = vpop.f32.mrf.mxu0
      %v2094 = vadd.f32 0.0, %v2093
      %v2095 = vpop.f32.mrf.mxu0
      %v2096 = vadd.f32 0.0, %v2095
      %2097 = vmatmul.bf16.gmra.mxu0 %v1909
      %v2098 = vpop.f32.mrf.mxu0
      %v2099 = vadd.f32 0.0, %v2098
      %v2100 = vpop.f32.mrf.mxu0
      %v2101 = vadd.f32 0.0, %v2100
      %2102 = vmatmul.bf16.gmra.mxu0 %v1911
      %v2103 = vpop.f32.mrf.mxu0
      %v2104 = vadd.f32 0.0, %v2103
      %v2105 = vpop.f32.mrf.mxu0
      %v2106 = vadd.f32 0.0, %v2105
      %2107 = vmatmul.bf16.gmra.mxu0 %v1913
      %v2108 = vpop.f32.mrf.mxu0
      %v2109 = vadd.f32 0.0, %v2108
      %v2110 = vpop.f32.mrf.mxu0
      %v2111 = vadd.f32 0.0, %v2110
      %2112 = vmatmul.bf16.gmra.mxu0 %v1915
      %v2113 = vpop.f32.mrf.mxu0
      %v2114 = vadd.f32 0.0, %v2113
      %v2115 = vpop.f32.mrf.mxu0
      %v2116 = vadd.f32 0.0, %v2115
      %2117 = vmatmul.bf16.gmra.mxu0 %v1917
      %v2118 = vpop.f32.mrf.mxu0
      %v2119 = vadd.f32 0.0, %v2118
      %v2120 = vpop.f32.mrf.mxu0
      %v2121 = vadd.f32 0.0, %v2120
      %2122 = vmatmul.bf16.gmra.mxu0 %v1919
      %v2123 = vpop.f32.mrf.mxu0
      %v2124 = vadd.f32 0.0, %v2123
      %v2125 = vpop.f32.mrf.mxu0
      %v2126 = vadd.f32 0.0, %v2125
      %2127 = vdwg.mxu0
      %2128 = vmatpush.bf16.msra.mxu0 0
      %2129 = vmatpush.bf16.msra.mxu0 0
      %2130 = vmatpush.bf16.msra.mxu0 0
      %2131 = vmatpush.bf16.msra.mxu0 0
      %2132 = vmatpush.bf16.msra.mxu0 0
      %2133 = vmatpush.bf16.msra.mxu0 0
      %2134 = vmatpush.bf16.msra.mxu0 0
      %2135 = vmatpush.bf16.msra.mxu0 %v1981
      %2136 = vmatmul.bf16.gmra.mxu0 %v1992
      %v2137 = vpop.f32.mrf.mxu0
      %v2138 = vadd.f32 %v2049, %v2137
      %v2139 = vpop.f32.mrf.mxu0
      %v2140 = vadd.f32 %v2051, %v2139
      %2141 = vmatmul.bf16.gmra.mxu0 %v1995
      %v2142 = vpop.f32.mrf.mxu0
      %v2143 = vadd.f32 %v2054, %v2142
      %v2144 = vpop.f32.mrf.mxu0
      %v2145 = vadd.f32 %v2056, %v2144
      %2146 = vmatmul.bf16.gmra.mxu0 %v1998
      %v2147 = vpop.f32.mrf.mxu0
      %v2148 = vadd.f32 %v2059, %v2147
      %v2149 = vpop.f32.mrf.mxu0
      %v2150 = vadd.f32 %v2061, %v2149
      %2151 = vmatmul.bf16.gmra.mxu0 %v2001
      %v2152 = vpop.f32.mrf.mxu0
      %v2153 = vadd.f32 %v2064, %v2152
      %v2154 = vpop.f32.mrf.mxu0
      %v2155 = vadd.f32 %v2066, %v2154
      %2156 = vmatmul.bf16.gmra.mxu0 %v2004
      %v2157 = vpop.f32.mrf.mxu0
      %v2158 = vadd.f32 %v2069, %v2157
      %v2159 = vpop.f32.mrf.mxu0
      %v2160 = vadd.f32 %v2071, %v2159
      %2161 = vmatmul.bf16.gmra.mxu0 %v2007
      %v2162 = vpop.f32.mrf.mxu0
      %v2163 = vadd.f32 %v2074, %v2162
      %v2164 = vpop.f32.mrf.mxu0
      %v2165 = vadd.f32 %v2076, %v2164
      %2166 = vmatmul.bf16.gmra.mxu0 %v2010
      %v2167 = vpop.f32.mrf.mxu0
      %v2168 = vadd.f32 %v2079, %v2167
      %v2169 = vpop.f32.mrf.mxu0
      %v2170 = vadd.f32 %v2081, %v2169
      %2171 = vmatmul.bf16.gmra.mxu0 %v2013
      %v2172 = vpop.f32.mrf.mxu0
      %v2173 = vadd.f32 %v2084, %v2172
      %v2174 = vpop.f32.mrf.mxu0
      %v2175 = vadd.f32 %v2086, %v2174
      %2176 = vmatmul.bf16.gmra.mxu0 %v2016
      %v2177 = vpop.f32.mrf.mxu0
      %v2178 = vadd.f32 %v2089, %v2177
      %v2179 = vpop.f32.mrf.mxu0
      %v2180 = vadd.f32 %v2091, %v2179
      %2181 = vmatmul.bf16.gmra.mxu0 %v2019
      %v2182 = vpop.f32.mrf.mxu0
      %v2183 = vadd.f32 %v2094, %v2182
      %v2184 = vpop.f32.mrf.mxu0
      %v2185 = vadd.f32 %v2096, %v2184
      %2186 = vmatmul.bf16.gmra.mxu0 %v2022
      %v2187 = vpop.f32.mrf.mxu0
      %v2188 = vadd.f32 %v2099, %v2187
      %v2189 = vpop.f32.mrf.mxu0
      %v2190 = vadd.f32 %v2101, %v2189
      %2191 = vmatmul.bf16.gmra.mxu0 %v2025
      %v2192 = vpop.f32.mrf.mxu0
      %v2193 = vadd.f32 %v2104, %v2192
      %v2194 = vpop.f32.mrf.mxu0
      %v2195 = vadd.f32 %v2106, %v2194
      %2196 = vmatmul.bf16.gmra.mxu0 %v2028
      %v2197 = vpop.f32.mrf.mxu0
      %v2198 = vadd.f32 %v2109, %v2197
      %v2199 = vpop.f32.mrf.mxu0
      %v2200 = vadd.f32 %v2111, %v2199
      %2201 = vmatmul.bf16.gmra.mxu0 %v2031
      %v2202 = vpop.f32.mrf.mxu0
      %v2203 = vadd.f32 %v2114, %v2202
      %v2204 = vpop.f32.mrf.mxu0
      %v2205 = vadd.f32 %v2116, %v2204
      %2206 = vmatmul.bf16.gmra.mxu0 %v2034
      %v2207 = vpop.f32.mrf.mxu0
      %v2208 = vadd.f32 %v2119, %v2207
      %v2209 = vpop.f32.mrf.mxu0
      %v2210 = vadd.f32 %v2121, %v2209
      %2211 = vmatmul.bf16.gmra.mxu0 %v2037
      %v2212 = vpop.f32.mrf.mxu0
      %v2213 = vadd.f32 %v2124, %v2212
      %v2214 = vpop.f32.mrf.mxu0
      %v2215 = vadd.f32 %v2126, %v2214
      %2216 = vdwg.mxu0
      %v2217 = vadd.f32 %v1481, %v2138
      %v2218 = vadd.f32 %v1483, %v2140
      %v2219 = vadd.f32 %v1486, %v2143
      %v2220 = vadd.f32 %v1488, %v2145
      %v2221 = vadd.f32 %v1491, %v2148
      %v2222 = vadd.f32 %v1493, %v2150
      %v2223 = vadd.f32 %v1496, %v2153
      %v2224 = vadd.f32 %v1498, %v2155
      %v2225 = vadd.f32 %v1501, %v2158
      %v2226 = vadd.f32 %v1503, %v2160
      %v2227 = vadd.f32 %v1506, %v2163
      %v2228 = vadd.f32 %v1508, %v2165
      %v2229 = vadd.f32 %v1511, %v2168
      %v2230 = vadd.f32 %v1513, %v2170
      %v2231 = vadd.f32 %v1516, %v2173
      %v2232 = vadd.f32 %v1518, %v2175
      %v2233 = vadd.f32 %v1521, %v2178
      %v2234 = vadd.f32 %v1523, %v2180
      %v2235 = vadd.f32 %v1526, %v2183
      %v2236 = vadd.f32 %v1528, %v2185
      %v2237 = vadd.f32 %v1531, %v2188
      %v2238 = vadd.f32 %v1533, %v2190
      %v2239 = vadd.f32 %v1536, %v2193
      %v2240 = vadd.f32 %v1538, %v2195
      %v2241 = vadd.f32 %v1541, %v2198
      %v2242 = vadd.f32 %v1543, %v2200
      %v2243 = vadd.f32 %v1546, %v2203
      %v2244 = vadd.f32 %v1548, %v2205
      %v2245 = vadd.f32 %v1551, %v2208
      %v2246 = vadd.f32 %v1553, %v2210
      %v2247 = vadd.f32 %v1556, %v2213
      %v2248 = vadd.f32 %v1558, %v2215
      %v2249 = vld [vmem:[%s4] sm:$0x1]
      %v2251 = vperm.slane %v2249, 0
      %v2253 = vadd.f32 %v2217, %v2251
      %v2254 = vadd.f32 %v2218, %v2251
      %v2255 = vadd.f32 %v2219, %v2251
      %v2256 = vadd.f32 %v2220, %v2251
      %v2257 = vadd.f32 %v2221, %v2251
      %v2258 = vadd.f32 %v2222, %v2251
      %v2259 = vadd.f32 %v2223, %v2251
      %v2260 = vadd.f32 %v2224, %v2251
      %v2261 = vadd.f32 %v2225, %v2251
      %v2262 = vadd.f32 %v2226, %v2251
      %v2263 = vadd.f32 %v2227, %v2251
      %v2264 = vadd.f32 %v2228, %v2251
      %v2265 = vadd.f32 %v2229, %v2251
      %v2266 = vadd.f32 %v2230, %v2251
      %v2267 = vadd.f32 %v2231, %v2251
      %v2268 = vadd.f32 %v2232, %v2251
      %v2269 = vadd.f32 %v2233, %v2251
      %v2270 = vadd.f32 %v2234, %v2251
      %v2271 = vadd.f32 %v2235, %v2251
      %v2272 = vadd.f32 %v2236, %v2251
      %v2273 = vadd.f32 %v2237, %v2251
      %v2274 = vadd.f32 %v2238, %v2251
      %v2275 = vadd.f32 %v2239, %v2251
      %v2276 = vadd.f32 %v2240, %v2251
      %v2277 = vadd.f32 %v2241, %v2251
      %v2278 = vadd.f32 %v2242, %v2251
      %v2279 = vadd.f32 %v2243, %v2251
      %v2280 = vadd.f32 %v2244, %v2251
      %v2281 = vadd.f32 %v2245, %v2251
      %v2282 = vadd.f32 %v2246, %v2251
      %v2283 = vadd.f32 %v2247, %v2251
      %v2284 = vadd.f32 %v2248, %v2251
      %v2285 = vmax.f32 %v2253, 0.0
      %v2286 = vmax.f32 %v2254, 0.0
      %v2287 = vmax.f32 %v2255, 0.0
      %v2288 = vmax.f32 %v2256, 0.0
      %v2289 = vmax.f32 %v2257, 0.0
      %v2290 = vmax.f32 %v2258, 0.0
      %v2291 = vmax.f32 %v2259, 0.0
      %v2292 = vmax.f32 %v2260, 0.0
      %v2293 = vmax.f32 %v2261, 0.0
      %v2294 = vmax.f32 %v2262, 0.0
      %v2295 = vmax.f32 %v2263, 0.0
      %v2296 = vmax.f32 %v2264, 0.0
      %v2297 = vmax.f32 %v2265, 0.0
      %v2298 = vmax.f32 %v2266, 0.0
      %v2299 = vmax.f32 %v2267, 0.0
      %v2300 = vmax.f32 %v2268, 0.0
      %v2301 = vmax.f32 %v2269, 0.0
      %v2302 = vmax.f32 %v2270, 0.0
      %v2303 = vmax.f32 %v2271, 0.0
      %v2304 = vmax.f32 %v2272, 0.0
      %v2305 = vmax.f32 %v2273, 0.0
      %v2306 = vmax.f32 %v2274, 0.0
      %v2307 = vmax.f32 %v2275, 0.0
      %v2308 = vmax.f32 %v2276, 0.0
      %v2309 = vmax.f32 %v2277, 0.0
      %v2310 = vmax.f32 %v2278, 0.0
      %v2311 = vmax.f32 %v2279, 0.0
      %v2312 = vmax.f32 %v2280, 0.0
      %v2313 = vmax.f32 %v2281, 0.0
      %v2314 = vmax.f32 %v2282, 0.0
      %v2315 = vmax.f32 %v2283, 0.0
      %v2316 = vmax.f32 %v2284, 0.0
      %v2317 = vpack.c.bf16 %v2285, %v2285
      %v2318 = vpack.c.bf16 %v2286, %v2286
      %v2319 = vpack.c.bf16 %v2287, %v2287
      %v2320 = vpack.c.bf16 %v2288, %v2288
      %v2321 = vpack.c.bf16 %v2289, %v2289
      %v2322 = vpack.c.bf16 %v2290, %v2290
      %v2323 = vpack.c.bf16 %v2291, %v2291
      %v2324 = vpack.c.bf16 %v2292, %v2292
      %v2325 = vpack.c.bf16 %v2293, %v2293
      %v2326 = vpack.c.bf16 %v2294, %v2294
      %v2327 = vpack.c.bf16 %v2295, %v2295
      %v2328 = vpack.c.bf16 %v2296, %v2296
      %v2329 = vpack.c.bf16 %v2297, %v2297
      %v2330 = vpack.c.bf16 %v2298, %v2298
      %v2331 = vpack.c.bf16 %v2299, %v2299
      %v2332 = vpack.c.bf16 %v2300, %v2300
      %v2333 = vpack.c.bf16 %v2301, %v2301
      %v2334 = vpack.c.bf16 %v2302, %v2302
      %v2335 = vpack.c.bf16 %v2303, %v2303
      %v2336 = vpack.c.bf16 %v2304, %v2304
      %v2337 = vpack.c.bf16 %v2305, %v2305
      %v2338 = vpack.c.bf16 %v2306, %v2306
      %v2339 = vpack.c.bf16 %v2307, %v2307
      %v2340 = vpack.c.bf16 %v2308, %v2308
      %v2341 = vpack.c.bf16 %v2309, %v2309
      %v2342 = vpack.c.bf16 %v2310, %v2310
      %v2343 = vpack.c.bf16 %v2311, %v2311
      %v2344 = vpack.c.bf16 %v2312, %v2312
      %v2345 = vpack.c.bf16 %v2313, %v2313
      %v2346 = vpack.c.bf16 %v2314, %v2314
      %v2347 = vpack.c.bf16 %v2315, %v2315
      %v2348 = vpack.c.bf16 %v2316, %v2316
      %v2381 = vunpack.c.l.b16 %v2317
      %v2382 = vunpack.c.l.b16 %v2318
      %v2383 = vunpack.c.l.b16 %v2319
      %v2384 = vunpack.c.l.b16 %v2320
      %v2385 = vunpack.c.l.b16 %v2321
      %v2386 = vunpack.c.l.b16 %v2322
      %v2387 = vunpack.c.l.b16 %v2323
      %v2388 = vunpack.c.l.b16 %v2324
      %v2389 = vunpack.c.l.b16 %v2325
      %v2390 = vunpack.c.l.b16 %v2326
      %v2391 = vunpack.c.l.b16 %v2327
      %v2392 = vunpack.c.l.b16 %v2328
      %v2393 = vunpack.c.l.b16 %v2329
      %v2394 = vunpack.c.l.b16 %v2330
      %v2395 = vunpack.c.l.b16 %v2331
      %v2396 = vunpack.c.l.b16 %v2332
      %v2397 = vunpack.c.l.b16 %v2333
      %v2398 = vunpack.c.l.b16 %v2334
      %v2399 = vunpack.c.l.b16 %v2335
      %v2400 = vunpack.c.l.b16 %v2336
      %v2401 = vunpack.c.l.b16 %v2337
      %v2402 = vunpack.c.l.b16 %v2338
      %v2403 = vunpack.c.l.b16 %v2339
      %v2404 = vunpack.c.l.b16 %v2340
      %v2405 = vunpack.c.l.b16 %v2341
      %v2406 = vunpack.c.l.b16 %v2342
      %v2407 = vunpack.c.l.b16 %v2343
      %v2408 = vunpack.c.l.b16 %v2344
      %v2409 = vunpack.c.l.b16 %v2345
      %v2410 = vunpack.c.l.b16 %v2346
      %v2411 = vunpack.c.l.b16 %v2347
      %v2412 = vunpack.c.l.b16 %v2348
      %v2413 = vpack.c.b16 %v2382, %v2381
      %v2414 = vpack.c.b16 %v2384, %v2383
      %v2415 = vpack.c.b16 %v2386, %v2385
      %v2416 = vpack.c.b16 %v2388, %v2387
      %v2417 = vpack.c.b16 %v2390, %v2389
      %v2418 = vpack.c.b16 %v2392, %v2391
      %v2419 = vpack.c.b16 %v2394, %v2393
      %v2420 = vpack.c.b16 %v2396, %v2395
      %v2421 = vpack.c.b16 %v2398, %v2397
      %v2422 = vpack.c.b16 %v2400, %v2399
      %v2423 = vpack.c.b16 %v2402, %v2401
      %v2424 = vpack.c.b16 %v2404, %v2403
      %v2425 = vpack.c.b16 %v2406, %v2405
      %v2426 = vpack.c.b16 %v2408, %v2407
      %v2427 = vpack.c.b16 %v2410, %v2409
      %v2428 = vpack.c.b16 %v2412, %v2411
      %v2430 = vshrl.u32 0, 16
      %v2432 = vrot.slane %v2430, 7
      %v2433 = vshll.u32 0, 16
      %v2435 = vor.u32 %v2432, %v2433
      %v2437 = vshrl.u32 %v2413, 16
      %v2439 = vrot.slane %v2437, 7
      %v2440 = vshll.u32 %v2413, 16
      %v2442 = vor.u32 %v2439, %v2440
      %v2444 = vshrl.u32 %v2414, 16
      %v2446 = vrot.slane %v2444, 7
      %v2447 = vshll.u32 %v2414, 16
      %v2449 = vor.u32 %v2446, %v2447
      %v2451 = vshrl.u32 %v2415, 16
      %v2453 = vrot.slane %v2451, 7
      %v2454 = vshll.u32 %v2415, 16
      %v2456 = vor.u32 %v2453, %v2454
      %v2458 = vshrl.u32 %v2416, 16
      %v2460 = vrot.slane %v2458, 7
      %v2461 = vshll.u32 %v2416, 16
      %v2463 = vor.u32 %v2460, %v2461
      %v2465 = vshrl.u32 %v2417, 16
      %v2467 = vrot.slane %v2465, 7
      %v2468 = vshll.u32 %v2417, 16
      %v2470 = vor.u32 %v2467, %v2468
      %v2472 = vshrl.u32 %v2418, 16
      %v2474 = vrot.slane %v2472, 7
      %v2475 = vshll.u32 %v2418, 16
      %v2477 = vor.u32 %v2474, %v2475
      %v2479 = vshrl.u32 %v2419, 16
      %v2481 = vrot.slane %v2479, 7
      %v2482 = vshll.u32 %v2419, 16
      %v2484 = vor.u32 %v2481, %v2482
      %v2486 = vshrl.u32 %v2420, 16
      %v2488 = vrot.slane %v2486, 7
      %v2489 = vshll.u32 %v2420, 16
      %v2491 = vor.u32 %v2488, %v2489
      %v2493 = vshrl.u32 %v2421, 16
      %v2495 = vrot.slane %v2493, 7
      %v2496 = vshll.u32 %v2421, 16
      %v2498 = vor.u32 %v2495, %v2496
      %v2500 = vshrl.u32 %v2422, 16
      %v2502 = vrot.slane %v2500, 7
      %v2503 = vshll.u32 %v2422, 16
      %v2505 = vor.u32 %v2502, %v2503
      %v2507 = vshrl.u32 %v2423, 16
      %v2509 = vrot.slane %v2507, 7
      %v2510 = vshll.u32 %v2423, 16
      %v2512 = vor.u32 %v2509, %v2510
      %v2514 = vshrl.u32 %v2424, 16
      %v2516 = vrot.slane %v2514, 7
      %v2517 = vshll.u32 %v2424, 16
      %v2519 = vor.u32 %v2516, %v2517
      %v2521 = vshrl.u32 %v2425, 16
      %v2523 = vrot.slane %v2521, 7
      %v2524 = vshll.u32 %v2425, 16
      %v2526 = vor.u32 %v2523, %v2524
      %v2528 = vshrl.u32 %v2426, 16
      %v2530 = vrot.slane %v2528, 7
      %v2531 = vshll.u32 %v2426, 16
      %v2533 = vor.u32 %v2530, %v2531
      %v2535 = vshrl.u32 %v2427, 16
      %v2537 = vrot.slane %v2535, 7
      %v2538 = vshll.u32 %v2427, 16
      %v2540 = vor.u32 %v2537, %v2538
      %v2542 = vshrl.u32 %v2428, 16
      %v2544 = vrot.slane %v2542, 7
      %v2545 = vshll.u32 %v2428, 16
      %v2547 = vor.u32 %v2544, %v2545
      %vm2582 = vcmask 1040384
      %vm2583 = vsmask.f32 256
      %vm2584 = vmand %vm2582, %vm2583
      %v2585 = vsel %vm2584, 0, %v2435
      %v2586 = vsel %vm2584, 0, %v2442
      %v2587 = vsel %vm2584, 0, %v2449
      %v2588 = vsel %vm2584, 0, %v2456
      %v2589 = vsel %vm2584, 0, %v2463
      %v2590 = vsel %vm2584, 0, %v2470
      %v2591 = vsel %vm2584, 0, %v2477
      %v2592 = vsel %vm2584, 0, %v2484
      %v2593 = vsel %vm2584, 0, %v2491
      %v2594 = vsel %vm2584, 0, %v2498
      %v2595 = vsel %vm2584, 0, %v2505
      %v2596 = vsel %vm2584, 0, %v2512
      %v2597 = vsel %vm2584, 0, %v2519
      %v2598 = vsel %vm2584, 0, %v2526
      %v2599 = vsel %vm2584, 0, %v2533
      %v2600 = vsel %vm2584, 0, %v2540
      %v2601 = vsel %vm2584, 0, %v2547
      %v2602 = vsel %vm2584, %v2432, 0
      %v2603 = vsel %vm2584, %v2439, 0
      %v2604 = vsel %vm2584, %v2446, 0
      %v2605 = vsel %vm2584, %v2453, 0
      %v2606 = vsel %vm2584, %v2460, 0
      %v2607 = vsel %vm2584, %v2467, 0
      %v2608 = vsel %vm2584, %v2474, 0
      %v2609 = vsel %vm2584, %v2481, 0
      %v2610 = vsel %vm2584, %v2488, 0
      %v2611 = vsel %vm2584, %v2495, 0
      %v2612 = vsel %vm2584, %v2502, 0
      %v2613 = vsel %vm2584, %v2509, 0
      %v2614 = vsel %vm2584, %v2516, 0
      %v2615 = vsel %vm2584, %v2523, 0
      %v2616 = vsel %vm2584, %v2530, 0
      %v2617 = vsel %vm2584, %v2537, 0
      %v2618 = vsel %vm2584, %v2544, 0
      %v2653 = vunpack.c.l.b16 %v2585
      %v2654 = vunpack.c.h.b16 %v2585
      %v2655 = vunpack.c.l.b16 %v2602
      %v2656 = vunpack.c.l.b16 %v2586
      %v2657 = vunpack.c.h.b16 %v2586
      %v2658 = vunpack.c.l.b16 %v2603
      %v2659 = vunpack.c.l.b16 %v2587
      %v2660 = vunpack.c.h.b16 %v2587
      %v2661 = vunpack.c.l.b16 %v2604
      %v2662 = vunpack.c.l.b16 %v2588
      %v2663 = vunpack.c.h.b16 %v2588
      %v2664 = vunpack.c.l.b16 %v2605
      %v2665 = vunpack.c.l.b16 %v2589
      %v2666 = vunpack.c.h.b16 %v2589
      %v2667 = vunpack.c.l.b16 %v2606
      %v2668 = vunpack.c.l.b16 %v2590
      %v2669 = vunpack.c.h.b16 %v2590
      %v2670 = vunpack.c.l.b16 %v2607
      %v2671 = vunpack.c.l.b16 %v2591
      %v2672 = vunpack.c.h.b16 %v2591
      %v2673 = vunpack.c.l.b16 %v2608
      %v2674 = vunpack.c.l.b16 %v2592
      %v2675 = vunpack.c.h.b16 %v2592
      %v2676 = vunpack.c.l.b16 %v2609
      %v2677 = vunpack.c.l.b16 %v2593
      %v2678 = vunpack.c.h.b16 %v2593
      %v2679 = vunpack.c.l.b16 %v2610
      %v2680 = vunpack.c.l.b16 %v2594
      %v2681 = vunpack.c.h.b16 %v2594
      %v2682 = vunpack.c.l.b16 %v2611
      %v2683 = vunpack.c.l.b16 %v2595
      %v2684 = vunpack.c.h.b16 %v2595
      %v2685 = vunpack.c.l.b16 %v2612
      %v2686 = vunpack.c.l.b16 %v2596
      %v2687 = vunpack.c.h.b16 %v2596
      %v2688 = vunpack.c.l.b16 %v2613
      %v2689 = vunpack.c.l.b16 %v2597
      %v2690 = vunpack.c.h.b16 %v2597
      %v2691 = vunpack.c.l.b16 %v2614
      %v2692 = vunpack.c.l.b16 %v2598
      %v2693 = vunpack.c.h.b16 %v2598
      %v2694 = vunpack.c.l.b16 %v2615
      %v2695 = vunpack.c.l.b16 %v2599
      %v2696 = vunpack.c.h.b16 %v2599
      %v2697 = vunpack.c.l.b16 %v2616
      %v2698 = vunpack.c.l.b16 %v2600
      %v2699 = vunpack.c.h.b16 %v2600
      %v2700 = vunpack.c.l.b16 %v2617
      %v2701 = vunpack.c.l.b16 %v2601
      %v2702 = vunpack.c.h.b16 %v2601
      %v2703 = vunpack.c.l.b16 %v2618
      %v2704 = vpack.c.b16 %v2653, %v2653
      %v2705 = vpack.c.b16 %v2654, %v2654
      %v2706 = vpack.c.b16 %v2655, %v2655
      %v2707 = vpack.c.b16 %v2656, %v2656
      %v2708 = vpack.c.b16 %v2657, %v2657
      %v2709 = vpack.c.b16 %v2658, %v2658
      %v2710 = vpack.c.b16 %v2659, %v2659
      %v2711 = vpack.c.b16 %v2660, %v2660
      %v2712 = vpack.c.b16 %v2661, %v2661
      %v2713 = vpack.c.b16 %v2662, %v2662
      %v2714 = vpack.c.b16 %v2663, %v2663
      %v2715 = vpack.c.b16 %v2664, %v2664
      %v2716 = vpack.c.b16 %v2665, %v2665
      %v2717 = vpack.c.b16 %v2666, %v2666
      %v2718 = vpack.c.b16 %v2667, %v2667
      %v2719 = vpack.c.b16 %v2668, %v2668
      %v2720 = vpack.c.b16 %v2669, %v2669
      %v2721 = vpack.c.b16 %v2670, %v2670
      %v2722 = vpack.c.b16 %v2671, %v2671
      %v2723 = vpack.c.b16 %v2672, %v2672
      %v2724 = vpack.c.b16 %v2673, %v2673
      %v2725 = vpack.c.b16 %v2674, %v2674
      %v2726 = vpack.c.b16 %v2675, %v2675
      %v2727 = vpack.c.b16 %v2676, %v2676
      %v2728 = vpack.c.b16 %v2677, %v2677
      %v2729 = vpack.c.b16 %v2678, %v2678
      %v2730 = vpack.c.b16 %v2679, %v2679
      %v2731 = vpack.c.b16 %v2680, %v2680
      %v2732 = vpack.c.b16 %v2681, %v2681
      %v2733 = vpack.c.b16 %v2682, %v2682
      %v2734 = vpack.c.b16 %v2683, %v2683
      %v2735 = vpack.c.b16 %v2684, %v2684
      %v2736 = vpack.c.b16 %v2685, %v2685
      %v2737 = vpack.c.b16 %v2686, %v2686
      %v2738 = vpack.c.b16 %v2687, %v2687
      %v2739 = vpack.c.b16 %v2688, %v2688
      %v2740 = vpack.c.b16 %v2689, %v2689
      %v2741 = vpack.c.b16 %v2690, %v2690
      %v2742 = vpack.c.b16 %v2691, %v2691
      %v2743 = vpack.c.b16 %v2692, %v2692
      %v2744 = vpack.c.b16 %v2693, %v2693
      %v2745 = vpack.c.b16 %v2694, %v2694
      %v2746 = vpack.c.b16 %v2695, %v2695
      %v2747 = vpack.c.b16 %v2696, %v2696
      %v2748 = vpack.c.b16 %v2697, %v2697
      %v2749 = vpack.c.b16 %v2698, %v2698
      %v2750 = vpack.c.b16 %v2699, %v2699
      %v2751 = vpack.c.b16 %v2700, %v2700
      %v2752 = vpack.c.b16 %v2701, %v2701
      %v2753 = vpack.c.b16 %v2702, %v2702
      %v2754 = vpack.c.b16 %v2703, %v2703
      %2806 = vst [vmem:[%s426] sm:$0xf] %v2704
      %2807 = vst [vmem:[%s426 + $0x4] sm:$0xf] %v2705
      %2808 = vst [vmem:[%s426 + $0x8] sm:$0x1] %v2706
      %2809 = vst [vmem:[%s426 + $0xc] sm:$0xf] %v2707
      %2810 = vst [vmem:[%s426 + $0x10] sm:$0xf] %v2708
      %2811 = vst [vmem:[%s426 + $0x14] sm:$0x1] %v2709
      %2812 = vst [vmem:[%s426 + $0x18] sm:$0xf] %v2710
      %2813 = vst [vmem:[%s426 + $0x1c] sm:$0xf] %v2711
      %2814 = vst [vmem:[%s426 + $0x20] sm:$0x1] %v2712
      %2815 = vst [vmem:[%s426 + $0x24] sm:$0xf] %v2713
      %2816 = vst [vmem:[%s426 + $0x28] sm:$0xf] %v2714
      %2817 = vst [vmem:[%s426 + $0x2c] sm:$0x1] %v2715
      %2818 = vst [vmem:[%s426 + $0x30] sm:$0xf] %v2716
      %2819 = vst [vmem:[%s426 + $0x34] sm:$0xf] %v2717
      %2820 = vst [vmem:[%s426 + $0x38] sm:$0x1] %v2718
      %2821 = vst [vmem:[%s426 + $0x3c] sm:$0xf] %v2719
      %2822 = vst [vmem:[%s426 + $0x40] sm:$0xf] %v2720
      %2823 = vst [vmem:[%s426 + $0x44] sm:$0x1] %v2721
      %2824 = vst [vmem:[%s426 + $0x48] sm:$0xf] %v2722
      %2825 = vst [vmem:[%s426 + $0x4c] sm:$0xf] %v2723
      %2826 = vst [vmem:[%s426 + $0x50] sm:$0x1] %v2724
      %2827 = vst [vmem:[%s426 + $0x54] sm:$0xf] %v2725
      %2828 = vst [vmem:[%s426 + $0x58] sm:$0xf] %v2726
      %2829 = vst [vmem:[%s426 + $0x5c] sm:$0x1] %v2727
      %2830 = vst [vmem:[%s426 + $0x60] sm:$0xf] %v2728
      %2831 = vst [vmem:[%s426 + $0x64] sm:$0xf] %v2729
      %2832 = vst [vmem:[%s426 + $0x68] sm:$0x1] %v2730
      %2833 = vst [vmem:[%s426 + $0x6c] sm:$0xf] %v2731
      %2834 = vst [vmem:[%s426 + $0x70] sm:$0xf] %v2732
      %2835 = vst [vmem:[%s426 + $0x74] sm:$0x1] %v2733
      %2836 = vst [vmem:[%s426 + $0x78] sm:$0xf] %v2734
      %2837 = vst [vmem:[%s426 + $0x7c] sm:$0xf] %v2735
      %2838 = vst [vmem:[%s426 + $0x80] sm:$0x1] %v2736
      %2839 = vst [vmem:[%s426 + $0x84] sm:$0xf] %v2737
      %2840 = vst [vmem:[%s426 + $0x88] sm:$0xf] %v2738
      %2841 = vst [vmem:[%s426 + $0x8c] sm:$0x1] %v2739
      %2842 = vst [vmem:[%s426 + $0x90] sm:$0xf] %v2740
      %2843 = vst [vmem:[%s426 + $0x94] sm:$0xf] %v2741
      %2844 = vst [vmem:[%s426 + $0x98] sm:$0x1] %v2742
      %2845 = vst [vmem:[%s426 + $0x9c] sm:$0xf] %v2743
      %2846 = vst [vmem:[%s426 + $0xa0] sm:$0xf] %v2744
      %2847 = vst [vmem:[%s426 + $0xa4] sm:$0x1] %v2745
      %2848 = vst [vmem:[%s426 + $0xa8] sm:$0xf] %v2746
      %2849 = vst [vmem:[%s426 + $0xac] sm:$0xf] %v2747
      %2850 = vst [vmem:[%s426 + $0xb0] sm:$0x1] %v2748
      %2851 = vst [vmem:[%s426 + $0xb4] sm:$0xf] %v2749
      %2852 = vst [vmem:[%s426 + $0xb8] sm:$0xf] %v2750
      %2853 = vst [vmem:[%s426 + $0xbc] sm:$0x1] %v2751
      %2854 = vst [vmem:[%s426 + $0xc0] sm:$0xf] %v2752
      %2855 = vst [vmem:[%s426 + $0xc4] sm:$0xf] %v2753
      %2856 = vst [vmem:[%s426 + $0xc8] sm:$0x1] %v2754
      %2857 = vst [vmem:[%s426 + $0xcc] sm:$0xf] %v2704
      %2858 = vst [vmem:[%s426 + $0xd0] sm:$0xf] %v2705
      %2859 = vst [vmem:[%s426 + $0xd4] sm:$0x1] %v2706
      %p2860 = scmp.lt.s32.totalorder %s20, 1
      %s2861 = scalar_select %p2860, %s20, 1
      %p2862 = scmp.lt.s32.totalorder %s21, 7
      %s2863 = scalar_select %p2862, %s21, 7
      %s2864 = smul.addr %s2863, 54
      %s2865 = smul.addr %s2861, 432
      %s2866 = sadd.s32 %s2864, %s2865
      %s2867 = smul.addr %s2866, 4
      %s2868 = scalar_lea.vmem %s5, %s2867
      // Predicated region
      $region41: #{upblock3d_forward.2} parent=39 // pred_check
        %p2869 = pneg %p202
      $region42: #{upblock3d_forward.2} parent=39 // pred_check_branch
        %2871 = sbr.rel (%p2869) target = $region44
      $region43: #{upblock3d_forward.2} parent=39 // pred_region
        _
      $region44: #{upblock3d_forward.2} parent=39 // pred_fallthru
        _
    $region40: #{upblock3d_forward.2} parent=5 // pred_fallthru
      _
    %p2872 = scmp.le.s32.totalorder 2, %s11
    // Predicated region
    $region45: #{upblock3d_forward.2} parent=5 // pred_check
      %p2873 = pneg %p2872
    $region46: #{upblock3d_forward.2} parent=5 // pred_check_branch
      %2875 = sbr.rel (%p2873) target = $region48
    $region47: #{upblock3d_forward.2} parent=5 // pred_region
      %s2876 = ssub.s32 %s11, 2
      // Predicated region
      $region49: #{upblock3d_forward.2} parent=47 // pred_check
        %p2877 = pneg %p208
      $region50: #{upblock3d_forward.2} parent=47 // pred_check_branch
        %2879 = sbr.rel (%p2877) target = $region52
      $region51: #{upblock3d_forward.2} parent=47 // pred_region
        %p2880 = scmp.lt.s32.totalorder %s22, 1
        %s2881 = scalar_select %p2880, %s22, 1
        %p2882 = scmp.lt.s32.totalorder %s23, 7
        %s2883 = scalar_select %p2882, %s23, 7
        %s2884 = smul.addr %s2883, 54
        %s2885 = smul.addr %s2881, 432
        %s2886 = sadd.s32 %s2884, %s2885
        %s2887 = smul.addr %s2886, 4
        %s2888 = scalar_lea.vmem %s5, %s2887
      $region52: #{upblock3d_forward.2} parent=47 // pred_fallthru
        _
    $region48: #{upblock3d_forward.2} parent=5 // pred_fallthru
      _
  $region6: #{upblock3d_forward.2} parent=0 // loop_footer
    %s15 = sadd.s32 1, %s11
  $region7: #{upblock3d_forward.2} parent=0 // loop_footer_branch
    %10 = sbr.rel target = $region3
  $region8: #{upblock3d_forward.2} parent=0 // loop_exit
    _

// kernel: upblock3d_forward.3
$region0: #{upblock3d_forward.3}
  #allocation0 [shape = 'u32[]', space=smem, size = 0x4, offset = 0x4, fixed_abs, tag = 'smem constant byte address 0x4 - core index']
  #allocation1 [shape = 'u32[72,128]{1,0:T(1,128)}', space=vmem, size = 0x9000, scoped, tag = 'internal scratch']
  %s0 = inlined_call_operand.vmem [shape: bf16[2,8,18,18,128], index: 0, kind: input, shape index: {}, may-alias: {0,1,2}]
  %s1 = inlined_call_operand.vmem [shape: bf16[2,8,18,18,128], index: 1, kind: input, shape index: {}, may-alias: {0,1,2}]
  %s2 = inlined_call_operand.vmem [shape: bf16[2,8,18,18,128], index: 2, kind: input, shape index: {}, may-alias: {0,1,2}]
  %s3 = inlined_call_operand.vmem [shape: bf16[3,1152,128], index: 3, kind: input, shape index: {}]
  %s4 = inlined_call_operand.vmem [shape: f32[1,128], index: 4, kind: input, shape index: {}]
  %s5 = inlined_call_operand.hbm [shape: f32[2,8,16,16,128], index: 5, kind: output, shape index: {}]
  %s6 = sld [smem:[#allocation0]]
  $region53: #{upblock3d_forward.3} parent=0
    _
  %s8 = ssub.s32 1, %s6
  %s9 = scalar_select 0, %s8, %s6
  $region1: #{upblock3d_forward.3} parent=0
    #allocation2 [shape = 'u8[262144]{0}', space=vmem, size = 0x40000, scoped, tag = 'output window, operand 0']
    #allocation3 [shape = 's32[2]{0}', space=sflag, size = 0x8, scoped, tag = 'scoped memory for upblock3d_forward.3']
    %10 = vsyncpa [#allocation3], 0
    %s11 = scalar_lea.sflag [#allocation3], 1
    %12 = vsyncpa %s11, 0
    loop: start=0, step=1, limit=18
    $region2: #{upblock3d_forward.3} parent=1 // loop_pre_header
      _
    $region3: #{upblock3d_forward.3} parent=1 // loop_header
      %s14 = sphi 0, %s18
      %p15 = scmp.ge.s32.totalorder %s14, 18
      %s21 = sphi 0, %s33
      %s22 = sphi 0, %s29
      %s23 = sphi 0, %s21
      %s24 = sphi 0, %s22
      %s25 = sphi 0, %s23
      %s26 = sphi 0, %s24
      %s48 = sphi 0, %s50
      %s51 = sphi 0, %s48
      %s52 = sphi 0, %s51
      %s68 = sphi 0, %s52
      %s84 = sphi 0, %s86
      %s87 = sphi 0, %s84
      %s88 = sphi 0, %s87
      %s104 = sphi 0, %s88
      %s122 = sphi 0, %s124
      %s125 = sphi 0, %s122
      %s126 = sphi 0, %s125
      %s142 = sphi 0, %s126
      %s146 = sphi 0, %s146
      %s148 = sphi 0, %s146
      %s149 = sphi 0, %s148
      %s163 = sphi 0, %s149
      %s167 = sphi 0, %s167
      %s169 = sphi 0, %s167
      %s170 = sphi 0, %s169
      %s184 = sphi 0, %s170
      %s192 = sphi 0, %s194
      %s195 = sphi 0, %s192
      %s196 = sphi 0, %s195
      %s212 = sphi 0, %s196
    $region4: #{upblock3d_forward.3} parent=1 // loop_header_branch
      %17 = sbr.rel (%p15) target = $region8
    $region5: #{upblock3d_forward.3} parent=1 // loop_body
      %s19 = ssub.s32 %s14, 1
      %s20 = ssub.s32 %s14, 2
      %s27 = sadd.s32 1, %s22
      %p28 = scmp.ge.s32.totalorder %s27, 8
      %s29 = scalar_select %p28, 0, %s27
      %s30 = sadd.s32 1, %s21
      %s31 = scalar_select %p28, %s30, %s21
      %p32 = scmp.ge.s32.totalorder %s31, 2
      %s33 = scalar_select %p32, 0, %s31
      %s34 = sadd.s32 %s22, 4294967295
      %p35 = scmp.gt.s32.totalorder %s34, 0
      %s36 = scalar_select %p35, %s34, 0
      %p37 = scmp.lt.s32.totalorder %s36, 7
      %s38 = scalar_select %p37, %s36, 7
      %s39 = sadd.s32 %s29, 4294967295
      %p40 = scmp.gt.s32.totalorder %s39, 0
      %s41 = scalar_select %p40, %s39, 0
      %p42 = scmp.lt.s32.totalorder %s41, 7
      %s43 = scalar_select %p42, %s41, 7
      %s44 = ssub.s32 %s21, %s33
      %s45 = ssub.s32 %s38, %s43
      %s46 = sor.u32 %s44, %s45
      %p47 = scmp.eq.s32.totalorder %s46, 0
      %s49 = sadd.s32 %s48, 1
      %s50 = scalar_select %p47, %s48, %s49
      %p53 = pneg %p47
      %p54 = scmp.eq.s32.totalorder %s14, 15
      %p55 = por %p53, %p54
      %p56 = scmp.ne.s32.totalorder %s48, %s51
      %p57 = scmp.eq.s32.totalorder %s14, 0
      %p58 = por %p56, %p57
      %p59 = scmp.ne.s32.totalorder %s48, %s51
      %p60 = scmp.eq.s32.totalorder %s19, 15
      %p61 = por %p59, %p60
      %p62 = scmp.ne.s32.totalorder %s51, %s52
      %p63 = scmp.eq.s32.totalorder %s19, 0
      %p64 = por %p62, %p63
      %p65 = scmp.ne.s32.totalorder %s51, %s52
      %p66 = scmp.eq.s32.totalorder %s20, 15
      %p67 = por %p65, %p66
      %p69 = scmp.ne.s32.totalorder %s52, %s68
      %p70 = scmp.eq.s32.totalorder %s20, 0
      %p71 = por %p69, %p70
      %p72 = scmp.gt.s32.totalorder %s22, 0
      %s73 = scalar_select %p72, %s22, 0
      %p74 = scmp.lt.s32.totalorder %s73, 7
      %s75 = scalar_select %p74, %s73, 7
      %p76 = scmp.gt.s32.totalorder %s29, 0
      %s77 = scalar_select %p76, %s29, 0
      %p78 = scmp.lt.s32.totalorder %s77, 7
      %s79 = scalar_select %p78, %s77, 7
      %s80 = ssub.s32 %s21, %s33
      %s81 = ssub.s32 %s75, %s79
      %s82 = sor.u32 %s80, %s81
      %p83 = scmp.eq.s32.totalorder %s82, 0
      %s85 = sadd.s32 %s84, 1
      %s86 = scalar_select %p83, %s84, %s85
      %p89 = pneg %p83
      %p90 = scmp.eq.s32.totalorder %s14, 15
      %p91 = por %p89, %p90
      %p92 = scmp.ne.s32.totalorder %s84, %s87
      %p93 = scmp.eq.s32.totalorder %s14, 0
      %p94 = por %p92, %p93
      %p95 = scmp.ne.s32.totalorder %s84, %s87
      %p96 = scmp.eq.s32.totalorder %s19, 15
      %p97 = por %p95, %p96
      %p98 = scmp.ne.s32.totalorder %s87, %s88
      %p99 = scmp.eq.s32.totalorder %s19, 0
      %p100 = por %p98, %p99
      %p101 = scmp.ne.s32.totalorder %s87, %s88
      %p102 = scmp.eq.s32.totalorder %s20, 15
      %p103 = por %p101, %p102
      %p105 = scmp.ne.s32.totalorder %s88, %s104
      %p106 = scmp.eq.s32.totalorder %s20, 0
      %p107 = por %p105, %p106
      %s108 = sadd.s32 %s22, 1
      %p109 = scmp.gt.s32.totalorder %s108, 0
      %s110 = scalar_select %p109, %s108, 0
      %p111 = scmp.lt.s32.totalorder %s110, 7
      %s112 = scalar_select %p111, %s110, 7
      %s113 = sadd.s32 %s29, 1
      %p114 = scmp.gt.s32.totalorder %s113, 0
      %s115 = scalar_select %p114, %s113, 0
      %p116 = scmp.lt.s32.totalorder %s115, 7
      %s117 = scalar_select %p116, %s115, 7
      %s118 = ssub.s32 %s21, %s33
      %s119 = ssub.s32 %s112, %s117
      %s120 = sor.u32 %s118, %s119
      %p121 = scmp.eq.s32.totalorder %s120, 0
      %s123 = sadd.s32 %s122, 1
      %s124 = scalar_select %p121, %s122, %s123
      %p127 = pneg %p121
      %p128 = scmp.eq.s32.totalorder %s14, 15
      %p129 = por %p127, %p128
      %p130 = scmp.ne.s32.totalorder %s122, %s125
      %p131 = scmp.eq.s32.totalorder %s14, 0
      %p132 = por %p130, %p131
      %p133 = scmp.ne.s32.totalorder %s122, %s125
      %p134 = scmp.eq.s32.totalorder %s19, 15
      %p135 = por %p133, %p134
      %p136 = scmp.ne.s32.totalorder %s125, %s126
      %p137 = scmp.eq.s32.totalorder %s19, 0
      %p138 = por %p136, %p137
      %p139 = scmp.ne.s32.totalorder %s125, %s126
      %p140 = scmp.eq.s32.totalorder %s20, 15
      %p141 = por %p139, %p140
      %p143 = scmp.ne.s32.totalorder %s126, %s142
      %p144 = scmp.eq.s32.totalorder %s20, 0
      %p145 = por %p143, %p144
      %s147 = sadd.s32 %s146, 1
      %p150 = scmp.eq.s32.totalorder %s14, 15
      %p151 = scmp.ne.s32.totalorder %s146, %s148
      %p152 = scmp.eq.s32.totalorder %s14, 0
      %p153 = por %p151, %p152
      %p154 = scmp.ne.s32.totalorder %s146, %s148
      %p155 = scmp.eq.s32.totalorder %s19, 15
      %p156 = por %p154, %p155
      %p157 = scmp.ne.s32.totalorder %s148, %s149
      %p158 = scmp.eq.s32.totalorder %s19, 0
      %p159 = por %p157, %p158
      %p160 = scmp.ne.s32.totalorder %s148, %s149
      %p161 = scmp.eq.s32.totalorder %s20, 15
      %p162 = por %p160, %p161
      %p164 = scmp.ne.s32.totalorder %s149, %s163
      %p165 = scmp.eq.s32.totalorder %s20, 0
      %p166 = por %p164, %p165
      %s168 = sadd.s32 %s167, 1
      %p171 = scmp.eq.s32.totalorder %s14, 15
      %p172 = scmp.ne.s32.totalorder %s167, %s169
      %p173 = scmp.eq.s32.totalorder %s14, 0
      %p174 = por %p172, %p173
      %p175 = scmp.ne.s32.totalorder %s167, %s169
      %p176 = scmp.eq.s32.totalorder %s19, 15
      %p177 = por %p175, %p176
      %p178 = scmp.ne.s32.totalorder %s169, %s170
      %p179 = scmp.eq.s32.totalorder %s19, 0
      %p180 = por %p178, %p179
      %p181 = scmp.ne.s32.totalorder %s169, %s170
      %p182 = scmp.eq.s32.totalorder %s20, 15
      %p183 = por %p181, %p182
      %p185 = scmp.ne.s32.totalorder %s170, %s184
      %p186 = scmp.eq.s32.totalorder %s20, 0
      %p187 = por %p185, %p186
      %s188 = ssub.s32 %s21, %s33
      %s189 = ssub.s32 %s22, %s29
      %s190 = sor.u32 %s188, %s189
      %p191 = scmp.eq.s32.totalorder %s190, 0
      %s193 = sadd.s32 %s192, 1
      %s194 = scalar_select %p191, %s192, %s193
      %p197 = pneg %p191
      %p198 = scmp.eq.s32.totalorder %s14, 15
      %p199 = por %p197, %p198
      %p200 = scmp.ne.s32.totalorder %s192, %s195
      %p201 = scmp.eq.s32.totalorder %s14, 0
      %p202 = por %p200, %p201
      %p203 = scmp.ne.s32.totalorder %s192, %s195
      %p204 = scmp.eq.s32.totalorder %s19, 15
      %p205 = por %p203, %p204
      %p206 = scmp.ne.s32.totalorder %s195, %s196
      %p207 = scmp.eq.s32.totalorder %s19, 0
      %p208 = por %p206, %p207
      %p209 = scmp.ne.s32.totalorder %s195, %s196
      %p210 = scmp.eq.s32.totalorder %s20, 15
      %p211 = por %p209, %p210
      %p213 = scmp.ne.s32.totalorder %s196, %s212
      %p214 = scmp.eq.s32.totalorder %s20, 0
      %p215 = por %p213, %p214
      %p216 = scmp.le.s32.totalorder 1, %s14
      %p217 = scmp.lt.s32.totalorder %s14, 17
      %p218 = pnand %p216, %p217
      %p219 = pneg %p218
      // Predicated region
      $region9: #{upblock3d_forward.3} parent=5 // pred_check
        _
      $region10: #{upblock3d_forward.3} parent=5 // pred_check_branch
        %221 = sbr.rel (%p218) target = $region12
      $region11: #{upblock3d_forward.3} parent=5 // pred_region
        %s222 = ssub.s32 %s14, 1
        // Predicated region
        $region13: #{upblock3d_forward.3} parent=11 // pred_check
          %p223 = pneg %p159
        $region14: #{upblock3d_forward.3} parent=11 // pred_check_branch
          %225 = sbr.rel (%p223) target = $region16
        $region15: #{upblock3d_forward.3} parent=11 // pred_region
          _
        $region16: #{upblock3d_forward.3} parent=11 // pred_fallthru
          _
        // Predicated region
        $region17: #{upblock3d_forward.3} parent=11 // pred_check
          %p226 = pneg %p180
        $region18: #{upblock3d_forward.3} parent=11 // pred_check_branch
          %228 = sbr.rel (%p226) target = $region20
        $region19: #{upblock3d_forward.3} parent=11 // pred_region
          _
        $region20: #{upblock3d_forward.3} parent=11 // pred_fallthru
          _
      $region12: #{upblock3d_forward.3} parent=5 // pred_fallthru
        _
      %p229 = scmp.lt.s32.totalorder %s14, 16
      // Predicated region
      $region21: #{upblock3d_forward.3} parent=5 // pred_check
        %p230 = pneg %p229
      $region22: #{upblock3d_forward.3} parent=5 // pred_check_branch
        %232 = sbr.rel (%p230) target = $region24
      $region23: #{upblock3d_forward.3} parent=5 // pred_region
        // Predicated region
        $region25: #{upblock3d_forward.3} parent=23 // pred_check
          %p233 = pneg %p58
        $region26: #{upblock3d_forward.3} parent=23 // pred_check_branch
          %235 = sbr.rel (%p233) target = $region28
        $region27: #{upblock3d_forward.3} parent=23 // pred_region
          %s236 = sadd.s32 %s22, 4294967295
          %p237 = scmp.gt.s32.totalorder %s236, 0
          %s238 = scalar_select %p237, %s236, 0
          %p239 = scmp.lt.s32.totalorder %s238, 7
          %s240 = scalar_select %p239, %s238, 7
          %p241 = scmp.lt.s32.totalorder %s21, 1
          %s242 = scalar_select %p241, %s21, 1
          %p243 = scmp.lt.s32.totalorder %s240, 7
          %s244 = scalar_select %p243, %s240, 7
          %s245 = smul.addr %s244, 54
          %s246 = smul.addr %s242, 432
          %s247 = sadd.s32 %s245, %s246
          %s248 = smul.addr %s247, 4
          %s249 = scalar_lea.vmem %s0, %s248
          %s250 = sadd.s32 %s22, 4294967295
          %p251 = scmp.gt.s32.totalorder %s250, 0
          %s252 = scalar_select %p251, %s250, 0
          %p253 = scmp.lt.s32.totalorder %s252, 7
          %s254 = scalar_select %p253, %s252, 7
        $region28: #{upblock3d_forward.3} parent=23 // pred_fallthru
          _
        // Predicated region
        $region29: #{upblock3d_forward.3} parent=23 // pred_check
          %p255 = pneg %p94
        $region30: #{upblock3d_forward.3} parent=23 // pred_check_branch
          %257 = sbr.rel (%p255) target = $region32
        $region31: #{upblock3d_forward.3} parent=23 // pred_region
          %p258 = scmp.gt.s32.totalorder %s22, 0
          %s259 = scalar_select %p258, %s22, 0
          %p260 = scmp.lt.s32.totalorder %s259, 7
          %s261 = scalar_select %p260, %s259, 7
          %p262 = scmp.lt.s32.totalorder %s21, 1
          %s263 = scalar_select %p262, %s21, 1
          %p264 = scmp.lt.s32.totalorder %s261, 7
          %s265 = scalar_select %p264, %s261, 7
          %s266 = smul.addr %s265, 54
          %s267 = smul.addr %s263, 432
          %s268 = sadd.s32 %s266, %s267
          %s269 = smul.addr %s268, 4
          %s270 = scalar_lea.vmem %s1, %s269
          %p271 = scmp.gt.s32.totalorder %s22, 0
          %s272 = scalar_select %p271, %s22, 0
          %p273 = scmp.lt.s32.totalorder %s272, 7
          %s274 = scalar_select %p273, %s272, 7
        $region32: #{upblock3d_forward.3} parent=23 // pred_fallthru
          _
        // Predicated region
        $region33: #{upblock3d_forward.3} parent=23 // pred_check
          %p275 = pneg %p132
        $region34: #{upblock3d_forward.3} parent=23 // pred_check_branch
          %277 = sbr.rel (%p275) target = $region36
        $region35: #{upblock3d_forward.3} parent=23 // pred_region
          %s278 = sadd.s32 %s22, 1
          %p279 = scmp.gt.s32.totalorder %s278, 0
          %s280 = scalar_select %p279, %s278, 0
          %p281 = scmp.lt.s32.totalorder %s280, 7
          %s282 = scalar_select %p281, %s280, 7
          %p283 = scmp.lt.s32.totalorder %s21, 1
          %s284 = scalar_select %p283, %s21, 1
          %p285 = scmp.lt.s32.totalorder %s282, 7
          %s286 = scalar_select %p285, %s282, 7
          %s287 = smul.addr %s286, 54
          %s288 = smul.addr %s284, 432
          %s289 = sadd.s32 %s287, %s288
          %s290 = smul.addr %s289, 4
          %s291 = scalar_lea.vmem %s2, %s290
          %s292 = sadd.s32 %s22, 1
          %p293 = scmp.gt.s32.totalorder %s292, 0
          %s294 = scalar_select %p293, %s292, 0
          %p295 = scmp.lt.s32.totalorder %s294, 7
          %s296 = scalar_select %p295, %s294, 7
        $region36: #{upblock3d_forward.3} parent=23 // pred_fallthru
          _
      $region24: #{upblock3d_forward.3} parent=5 // pred_fallthru
        _
      %p297 = scmp.le.s32.totalorder 1, %s14
      %p298 = scmp.lt.s32.totalorder %s14, 17
      %p299 = pnand %p297, %p298
      %p300 = pneg %p299
      // Predicated region
      $region37: #{upblock3d_forward.3} parent=5 // pred_check
        _
      $region38: #{upblock3d_forward.3} parent=5 // pred_check_branch
        %302 = sbr.rel (%p299) target = $region40
      $region39: #{upblock3d_forward.3} parent=5 // pred_region
        %s303 = ssub.s32 %s14, 1
        %s304 = sadd.s32 %s24, 4294967295
        %p305 = scmp.gt.s32.totalorder %s304, 0
        %s306 = scalar_select %p305, %s304, 0
        %p307 = scmp.lt.s32.totalorder %s306, 7
        %s308 = scalar_select %p307, %s306, 7
        %p309 = scmp.lt.s32.totalorder %s23, 1
        %s310 = scalar_select %p309, %s23, 1
        %p311 = scmp.lt.s32.totalorder %s308, 7
        %s312 = scalar_select %p311, %s308, 7
        %s313 = smul.addr %s312, 54
        %s314 = smul.addr %s310, 432
        %s315 = sadd.s32 %s313, %s314
        %s316 = smul.addr %s315, 4
        %s317 = scalar_lea.vmem %s0, %s316
        %p318 = pneg %p64
        %p319 = pneg %p61
        %p320 = scmp.gt.s32.totalorder %s24, 0
        %s321 = scalar_select %p320, %s24, 0
        %p322 = scmp.lt.s32.totalorder %s321, 7
        %s323 = scalar_select %p322, %s321, 7
        %p324 = scmp.lt.s32.totalorder %s23, 1
        %s325 = scalar_select %p324, %s23, 1
        %p326 = scmp.lt.s32.totalorder %s323, 7
        %s327 = scalar_select %p326, %s323, 7
        %s328 = smul.addr %s327, 54
        %s329 = smul.addr %s325, 432
        %s330 = sadd.s32 %s328, %s329
        %s331 = smul.addr %s330, 4
        %s332 = scalar_lea.vmem %s1, %s331
        %p333 = pneg %p100
        %p334 = pneg %p97
        %s335 = sadd.s32 %s24, 1
        %p336 = scmp.gt.s32.totalorder %s335, 0
        %s337 = scalar_select %p336, %s335, 0
        %p338 = scmp.lt.s32.totalorder %s337, 7
        %s339 = scalar_select %p338, %s337, 7
        %p340 = scmp.lt.s32.totalorder %s23, 1
        %s341 = scalar_select %p340, %s23, 1
        %p342 = scmp.lt.s32.totalorder %s339, 7
        %s343 = scalar_select %p342, %s339, 7
        %s344 = smul.addr %s343, 54
        %s345 = smul.addr %s341, 432
        %s346 = sadd.s32 %s344, %s345
        %s347 = smul.addr %s346, 4
        %s348 = scalar_lea.vmem %s2, %s347
        %p349 = pneg %p138
        %p350 = pneg %p135
        %p351 = pneg %p159
        %p352 = pneg %p156
        %p353 = pneg %p180
        %p354 = pneg %p177
        %p355 = pneg %p208
        %p356 = pneg %p205
        %s357 = sand.u32 %s195, 1
        %s358 = scalar_lea.sflag [#allocation3], %s357
        %s359 = sand.u32 %s195, 1
        %s360 = smul.addr %s359, 256
        %s361 = scalar_lea.vmem [#allocation2], %s360
        %s362 = sadd.s32 %s24, 4294967295
        %p363 = scmp.gt.s32.totalorder %s362, 0
        %s364 = scalar_select %p363, %s362, 0
        %p365 = scmp.lt.s32.totalorder %s364, 7
        %s366 = scalar_select %p365, %s364, 7
        %p367 = scmp.lt.s32.totalorder %s23, 1
        %s368 = scalar_select %p367, %s23, 1
        %p369 = scmp.lt.s32.totalorder %s366, 7
        %s370 = scalar_select %p369, %s366, 7
        %s371 = smul.addr %s370, 54
        %s372 = smul.addr %s368, 432
        %s373 = sadd.s32 %s371, %s372
        %s374 = smul.addr %s373, 4
        %s375 = scalar_lea.vmem %s0, %s374
        %s376 = sadd.s32 %s24, 4294967295
        %p377 = scmp.gt.s32.totalorder %s376, 0
        %s378 = scalar_select %p377, %s376, 0
        %p379 = scmp.lt.s32.totalorder %s378, 7
        %s380 = scalar_select %p379, %s378, 7
        %p381 = scmp.gt.s32.totalorder %s24, 0
        %s382 = scalar_select %p381, %s24, 0
        %p383 = scmp.lt.s32.totalorder %s382, 7
        %s384 = scalar_select %p383, %s382, 7
        %p385 = scmp.lt.s32.totalorder %s23, 1
        %s386 = scalar_select %p385, %s23, 1
        %p387 = scmp.lt.s32.totalorder %s384, 7
        %s388 = scalar_select %p387, %s384, 7
        %s389 = smul.addr %s388, 54
        %s390 = smul.addr %s386, 432
        %s391 = sadd.s32 %s389, %s390
        %s392 = smul.addr %s391, 4
        %s393 = scalar_lea.vmem %s1, %s392
        %p394 = scmp.gt.s32.totalorder %s24, 0
        %s395 = scalar_select %p394, %s24, 0
        %p396 = scmp.lt.s32.totalorder %s395, 7
        %s397 = scalar_select %p396, %s395, 7
        %s398 = sadd.s32 %s24, 1
        %p399 = scmp.gt.s32.totalorder %s398, 0
        %s400 = scalar_select %p399, %s398, 0
        %p401 = scmp.lt.s32.totalorder %s400, 7
        %s402 = scalar_select %p401, %s400, 7
        %p403 = scmp.lt.s32.totalorder %s23, 1
        %s404 = scalar_select %p403, %s23, 1
        %p405 = scmp.lt.s32.totalorder %s402, 7
        %s406 = scalar_select %p405, %s402, 7
        %s407 = smul.addr %s406, 54
        %s408 = smul.addr %s404, 432
        %s409 = sadd.s32 %s407, %s408
        %s410 = smul.addr %s409, 4
        %s411 = scalar_lea.vmem %s2, %s410
        %s412 = sadd.s32 %s24, 1
        %p413 = scmp.gt.s32.totalorder %s412, 0
        %s414 = scalar_select %p413, %s412, 0
        %p415 = scmp.lt.s32.totalorder %s414, 7
        %s416 = scalar_select %p415, %s414, 7
        %v417 = vld [vmem:[%s375] sm:$0xf]
        %v418 = vld [vmem:[%s375 + $0x4] sm:$0xf]
        %v419 = vld [vmem:[%s375 + $0x8] sm:$0x1]
        %v420 = vld [vmem:[%s375 + $0xc] sm:$0xf]
        %v421 = vld [vmem:[%s375 + $0x10] sm:$0xf]
        %v422 = vld [vmem:[%s375 + $0x14] sm:$0x1]
        %v423 = vld [vmem:[%s375 + $0x18] sm:$0xf]
        %v424 = vld [vmem:[%s375 + $0x1c] sm:$0xf]
        %v425 = vld [vmem:[%s375 + $0x20] sm:$0x1]
        %v426 = vld [vmem:[%s375 + $0x24] sm:$0xf]
        %v427 = vld [vmem:[%s375 + $0x28] sm:$0xf]
        %v428 = vld [vmem:[%s375 + $0x2c] sm:$0x1]
        %v429 = vld [vmem:[%s375 + $0x30] sm:$0xf]
        %v430 = vld [vmem:[%s375 + $0x34] sm:$0xf]
        %v431 = vld [vmem:[%s375 + $0x38] sm:$0x1]
        %v432 = vld [vmem:[%s375 + $0x3c] sm:$0xf]
        %v433 = vld [vmem:[%s375 + $0x40] sm:$0xf]
        %v434 = vld [vmem:[%s375 + $0x44] sm:$0x1]
        %v435 = vld [vmem:[%s375 + $0x48] sm:$0xf]
        %v436 = vld [vmem:[%s375 + $0x4c] sm:$0xf]
        %v437 = vld [vmem:[%s375 + $0x50] sm:$0x1]
        %v438 = vld [vmem:[%s375 + $0x54] sm:$0xf]
        %v439 = vld [vmem:[%s375 + $0x58] sm:$0xf]
        %v440 = vld [vmem:[%s375 + $0x5c] sm:$0x1]
        %v441 = vld [vmem:[%s375 + $0x60] sm:$0xf]
        %v442 = vld [vmem:[%s375 + $0x64] sm:$0xf]
        %v443 = vld [vmem:[%s375 + $0x68] sm:$0x1]
        %v444 = vld [vmem:[%s375 + $0x6c] sm:$0xf]
        %v445 = vld [vmem:[%s375 + $0x70] sm:$0xf]
        %v446 = vld [vmem:[%s375 + $0x74] sm:$0x1]
        %v447 = vld [vmem:[%s375 + $0x78] sm:$0xf]
        %v448 = vld [vmem:[%s375 + $0x7c] sm:$0xf]
        %v449 = vld [vmem:[%s375 + $0x80] sm:$0x1]
        %v450 = vld [vmem:[%s375 + $0x84] sm:$0xf]
        %v451 = vld [vmem:[%s375 + $0x88] sm:$0xf]
        %v452 = vld [vmem:[%s375 + $0x8c] sm:$0x1]
        %v453 = vld [vmem:[%s375 + $0x90] sm:$0xf]
        %v454 = vld [vmem:[%s375 + $0x94] sm:$0xf]
        %v455 = vld [vmem:[%s375 + $0x98] sm:$0x1]
        %v456 = vld [vmem:[%s375 + $0x9c] sm:$0xf]
        %v457 = vld [vmem:[%s375 + $0xa0] sm:$0xf]
        %v458 = vld [vmem:[%s375 + $0xa4] sm:$0x1]
        %v459 = vld [vmem:[%s375 + $0xa8] sm:$0xf]
        %v460 = vld [vmem:[%s375 + $0xac] sm:$0xf]
        %v461 = vld [vmem:[%s375 + $0xb0] sm:$0x1]
        %v462 = vld [vmem:[%s375 + $0xb4] sm:$0xf]
        %v463 = vld [vmem:[%s375 + $0xb8] sm:$0xf]
        %v464 = vld [vmem:[%s375 + $0xbc] sm:$0x1]
        %v465 = vld [vmem:[%s375 + $0xc0] sm:$0xf]
        %v466 = vld [vmem:[%s375 + $0xc4] sm:$0xf]
        %v467 = vld [vmem:[%s375 + $0xc8] sm:$0x1]
        %v468 = vld [vmem:[%s375 + $0xcc] sm:$0xf]
        %v469 = vld [vmem:[%s375 + $0xd0] sm:$0xf]
        %v470 = vld [vmem:[%s375 + $0xd4] sm:$0x1]
        %s471 = sadd.s32 %s24, 4294967295
        %p472 = scmp.ge.s32.totalorder %s471, 0
        %p473 = scmp.lt.s32.totalorder %s471, 8
        %p474 = pnand %p472, %p473
        %p475 = pneg %p474
        %s476 = scalar_select %p475, 1, 0
        %s477 = scvt.s32.f32 %s476
        %p479 = scmp.ne.f32.partialorder %s477, %s477
        %s480 = sshrl.u32 %s477, 16
        %s481 = sand.u32 %s480, 1
        %s482 = sadd.s32 32767, %s481
        %s483 = sadd.s32 %s477, %s482
        %s484 = sand.u32 %s483, 4294901760
        %s485 = scalar_select %p479, 2143289344, %s484
        %s487 = sshrl.u32 %s485, 16
        %s488 = sshll.u32 %s487, 16
        %s489 = sor.u32 %s487, %s488
        %v490 = vstv %s489
        %v492 = vunpack.c.l.bf16 %v417
        %v493 = vunpack.c.l.bf16 %v418
        %v494 = vunpack.c.l.bf16 %v419
        %v495 = vunpack.c.l.bf16 %v420
        %v496 = vunpack.c.l.bf16 %v421
        %v497 = vunpack.c.l.bf16 %v422
        %v498 = vunpack.c.l.bf16 %v423
        %v499 = vunpack.c.l.bf16 %v424
        %v500 = vunpack.c.l.bf16 %v425
        %v501 = vunpack.c.l.bf16 %v426
        %v502 = vunpack.c.l.bf16 %v427
        %v503 = vunpack.c.l.bf16 %v428
        %v504 = vunpack.c.l.bf16 %v429
        %v505 = vunpack.c.l.bf16 %v430
        %v506 = vunpack.c.l.bf16 %v431
        %v507 = vunpack.c.l.bf16 %v432
        %v508 = vunpack.c.l.bf16 %v433
        %v509 = vunpack.c.l.bf16 %v434
        %v510 = vunpack.c.l.bf16 %v435
        %v511 = vunpack.c.l.bf16 %v436
        %v512 = vunpack.c.l.bf16 %v437
        %v513 = vunpack.c.l.bf16 %v438
        %v514 = vunpack.c.l.bf16 %v439
        %v515 = vunpack.c.l.bf16 %v440
        %v516 = vunpack.c.l.bf16 %v441
        %v517 = vunpack.c.l.bf16 %v442
        %v518 = vunpack.c.l.bf16 %v443
        %v519 = vunpack.c.l.bf16 %v444
        %v520 = vunpack.c.l.bf16 %v445
        %v521 = vunpack.c.l.bf16 %v446
        %v522 = vunpack.c.l.bf16 %v447
        %v523 = vunpack.c.l.bf16 %v448
        %v524 = vunpack.c.l.bf16 %v449
        %v525 = vunpack.c.l.bf16 %v450
        %v526 = vunpack.c.l.bf16 %v451
        %v527 = vunpack.c.l.bf16 %v452
        %v528 = vunpack.c.l.bf16 %v453
        %v529 = vunpack.c.l.bf16 %v454
        %v530 = vunpack.c.l.bf16 %v455
        %v531 = vunpack.c.l.bf16 %v456
        %v532 = vunpack.c.l.bf16 %v457
        %v533 = vunpack.c.l.bf16 %v458
        %v534 = vunpack.c.l.bf16 %v459
        %v535 = vunpack.c.l.bf16 %v460
        %v536 = vunpack.c.l.bf16 %v461
        %v537 = vunpack.c.l.bf16 %v462
        %v538 = vunpack.c.l.bf16 %v463
        %v539 = vunpack.c.l.bf16 %v464
        %v540 = vunpack.c.l.bf16 %v465
        %v541 = vunpack.c.l.bf16 %v466
        %v542 = vunpack.c.l.bf16 %v467
        %v543 = vunpack.c.l.bf16 %v468
        %v544 = vunpack.c.l.bf16 %v469
        %v545 = vunpack.c.l.bf16 %v470
        %v546 = vunpack.c.l.bf16 %v490
        %v547 = vmul.f32 %v492, %v546
        %v548 = vmul.f32 %v493, %v546
        %v549 = vmul.f32 %v494, %v546
        %v550 = vmul.f32 %v495, %v546
        %v551 = vmul.f32 %v496, %v546
        %v552 = vmul.f32 %v497, %v546
        %v553 = vmul.f32 %v498, %v546
        %v554 = vmul.f32 %v499, %v546
        %v555 = vmul.f32 %v500, %v546
        %v556 = vmul.f32 %v501, %v546
        %v557 = vmul.f32 %v502, %v546
        %v558 = vmul.f32 %v503, %v546
        %v559 = vmul.f32 %v504, %v546
        %v560 = vmul.f32 %v505, %v546
        %v561 = vmul.f32 %v506, %v546
        %v562 = vmul.f32 %v507, %v546
        %v563 = vmul.f32 %v508, %v546
        %v564 = vmul.f32 %v509, %v546
        %v565 = vmul.f32 %v510, %v546
        %v566 = vmul.f32 %v511, %v546
        %v567 = vmul.f32 %v512, %v546
        %v568 = vmul.f32 %v513, %v546
        %v569 = vmul.f32 %v514, %v546
        %v570 = vmul.f32 %v515, %v546
        %v571 = vmul.f32 %v516, %v546
        %v572 = vmul.f32 %v517, %v546
        %v573 = vmul.f32 %v518, %v546
        %v574 = vmul.f32 %v519, %v546
        %v575 = vmul.f32 %v520, %v546
        %v576 = vmul.f32 %v521, %v546
        %v577 = vmul.f32 %v522, %v546
        %v578 = vmul.f32 %v523, %v546
        %v579 = vmul.f32 %v524, %v546
        %v580 = vmul.f32 %v525, %v546
        %v581 = vmul.f32 %v526, %v546
        %v582 = vmul.f32 %v527, %v546
        %v583 = vmul.f32 %v528, %v546
        %v584 = vmul.f32 %v529, %v546
        %v585 = vmul.f32 %v530, %v546
        %v586 = vmul.f32 %v531, %v546
        %v587 = vmul.f32 %v532, %v546
        %v588 = vmul.f32 %v533, %v546
        %v589 = vmul.f32 %v534, %v546
        %v590 = vmul.f32 %v535, %v546
        %v591 = vmul.f32 %v536, %v546
        %v592 = vmul.f32 %v537, %v546
        %v593 = vmul.f32 %v538, %v546
        %v594 = vmul.f32 %v539, %v546
        %v595 = vmul.f32 %v540, %v546
        %v596 = vmul.f32 %v541, %v546
        %v597 = vmul.f32 %v542, %v546
        %v598 = vmul.f32 %v543, %v546
        %v599 = vmul.f32 %v544, %v546
        %v600 = vmul.f32 %v545, %v546
        %v601 = vpack.c.bf16 %v547, %v547
        %v602 = vpack.c.bf16 %v548, %v548
        %v603 = vpack.c.bf16 %v549, %v549
        %v604 = vpack.c.bf16 %v550, %v550
        %v605 = vpack.c.bf16 %v551, %v551
        %v606 = vpack.c.bf16 %v552, %v552
        %v607 = vpack.c.bf16 %v553, %v553
        %v608 = vpack.c.bf16 %v554, %v554
        %v609 = vpack.c.bf16 %v555, %v555
        %v610 = vpack.c.bf16 %v556, %v556
        %v611 = vpack.c.bf16 %v557, %v557
        %v612 = vpack.c.bf16 %v558, %v558
        %v613 = vpack.c.bf16 %v559, %v559
        %v614 = vpack.c.bf16 %v560, %v560
        %v615 = vpack.c.bf16 %v561, %v561
        %v616 = vpack.c.bf16 %v562, %v562
        %v617 = vpack.c.bf16 %v563, %v563
        %v618 = vpack.c.bf16 %v564, %v564
        %v619 = vpack.c.bf16 %v565, %v565
        %v620 = vpack.c.bf16 %v566, %v566
        %v621 = vpack.c.bf16 %v567, %v567
        %v622 = vpack.c.bf16 %v568, %v568
        %v623 = vpack.c.bf16 %v569, %v569
        %v624 = vpack.c.bf16 %v570, %v570
        %v625 = vpack.c.bf16 %v571, %v571
        %v626 = vpack.c.bf16 %v572, %v572
        %v627 = vpack.c.bf16 %v573, %v573
        %v628 = vpack.c.bf16 %v574, %v574
        %v629 = vpack.c.bf16 %v575, %v575
        %v630 = vpack.c.bf16 %v576, %v576
        %v631 = vpack.c.bf16 %v577, %v577
        %v632 = vpack.c.bf16 %v578, %v578
        %v633 = vpack.c.bf16 %v579, %v579
        %v634 = vpack.c.bf16 %v580, %v580
        %v635 = vpack.c.bf16 %v581, %v581
        %v636 = vpack.c.bf16 %v582, %v582
        %v637 = vpack.c.bf16 %v583, %v583
        %v638 = vpack.c.bf16 %v584, %v584
        %v639 = vpack.c.bf16 %v585, %v585
        %v640 = vpack.c.bf16 %v586, %v586
        %v641 = vpack.c.bf16 %v587, %v587
        %v642 = vpack.c.bf16 %v588, %v588
        %v643 = vpack.c.bf16 %v589, %v589
        %v644 = vpack.c.bf16 %v590, %v590
        %v645 = vpack.c.bf16 %v591, %v591
        %v646 = vpack.c.bf16 %v592, %v592
        %v647 = vpack.c.bf16 %v593, %v593
        %v648 = vpack.c.bf16 %v594, %v594
        %v649 = vpack.c.bf16 %v595, %v595
        %v650 = vpack.c.bf16 %v596, %v596
        %v651 = vpack.c.bf16 %v597, %v597
        %v652 = vpack.c.bf16 %v598, %v598
        %v653 = vpack.c.bf16 %v599, %v599
        %v654 = vpack.c.bf16 %v600, %v600
        %v687 = vunpack.c.l.b16 %v601
        %v688 = vunpack.c.l.b16 %v602
        %v689 = vunpack.c.l.b16 %v604
        %v690 = vunpack.c.l.b16 %v605
        %v691 = vunpack.c.l.b16 %v607
        %v692 = vunpack.c.l.b16 %v608
        %v693 = vunpack.c.l.b16 %v610
        %v694 = vunpack.c.l.b16 %v611
        %v695 = vunpack.c.l.b16 %v613
        %v696 = vunpack.c.l.b16 %v614
        %v697 = vunpack.c.l.b16 %v616
        %v698 = vunpack.c.l.b16 %v617
        %v699 = vunpack.c.l.b16 %v619
        %v700 = vunpack.c.l.b16 %v620
        %v701 = vunpack.c.l.b16 %v622
        %v702 = vunpack.c.l.b16 %v623
        %v703 = vunpack.c.l.b16 %v625
        %v704 = vunpack.c.l.b16 %v626
        %v705 = vunpack.c.l.b16 %v628
        %v706 = vunpack.c.l.b16 %v629
        %v707 = vunpack.c.l.b16 %v631
        %v708 = vunpack.c.l.b16 %v632
        %v709 = vunpack.c.l.b16 %v634
        %v710 = vunpack.c.l.b16 %v635
        %v711 = vunpack.c.l.b16 %v637
        %v712 = vunpack.c.l.b16 %v638
        %v713 = vunpack.c.l.b16 %v640
        %v714 = vunpack.c.l.b16 %v641
        %v715 = vunpack.c.l.b16 %v643
        %v716 = vunpack.c.l.b16 %v644
        %v717 = vunpack.c.l.b16 %v646
        %v718 = vunpack.c.l.b16 %v647
        %v719 = vpack.c.b16 %v688, %v687
        %v720 = vpack.c.b16 %v690, %v689
        %v721 = vpack.c.b16 %v692, %v691
        %v722 = vpack.c.b16 %v694, %v693
        %v723 = vpack.c.b16 %v696, %v695
        %v724 = vpack.c.b16 %v698, %v697
        %v725 = vpack.c.b16 %v700, %v699
        %v726 = vpack.c.b16 %v702, %v701
        %v727 = vpack.c.b16 %v704, %v703
        %v728 = vpack.c.b16 %v706, %v705
        %v729 = vpack.c.b16 %v708, %v707
        %v730 = vpack.c.b16 %v710, %v709
        %v731 = vpack.c.b16 %v712, %v711
        %v732 = vpack.c.b16 %v714, %v713
        %v733 = vpack.c.b16 %v716, %v715
        %v734 = vpack.c.b16 %v718, %v717
        %v767 = vunpack.c.l.b16 %v603
        %v768 = vunpack.c.l.b16 %v606
        %v769 = vunpack.c.l.b16 %v609
        %v770 = vunpack.c.l.b16 %v612
        %v771 = vunpack.c.l.b16 %v615
        %v772 = vunpack.c.l.b16 %v618
        %v773 = vunpack.c.l.b16 %v621
        %v774 = vunpack.c.l.b16 %v624
        %v775 = vunpack.c.l.b16 %v627
        %v776 = vunpack.c.l.b16 %v630
        %v777 = vunpack.c.l.b16 %v633
        %v778 = vunpack.c.l.b16 %v636
        %v779 = vunpack.c.l.b16 %v639
        %v780 = vunpack.c.l.b16 %v642
        %v781 = vunpack.c.l.b16 %v645
        %v782 = vunpack.c.l.b16 %v648
        %v783 = vpack.c.b16 %v767, %v767
        %v784 = vpack.c.b16 %v768, %v768
        %v785 = vpack.c.b16 %v769, %v769
        %v786 = vpack.c.b16 %v770, %v770
        %v787 = vpack.c.b16 %v771, %v771
        %v788 = vpack.c.b16 %v772, %v772
        %v789 = vpack.c.b16 %v773, %v773
        %v790 = vpack.c.b16 %v774, %v774
        %v791 = vpack.c.b16 %v775, %v775
        %v792 = vpack.c.b16 %v776, %v776
        %v793 = vpack.c.b16 %v777, %v777
        %v794 = vpack.c.b16 %v778, %v778
        %v795 = vpack.c.b16 %v779, %v779
        %v796 = vpack.c.b16 %v780, %v780
        %v797 = vpack.c.b16 %v781, %v781
        %v798 = vpack.c.b16 %v782, %v782
        %vm799 = vsmask.f32 7424
        %v801 = vshrl.u32 %v719, 16
        %v803 = vshll.u32 %v719, 16
        %v805 = vrot.slane %v803, 1
        %v806 = vor.u32 %v801, %v805
        %v808 = vshll.u32 %v783, 16
        %v810 = vrot.slane %v808, 1
        %v811 = vsel %vm799, %v806, %v810
        %v813 = vshrl.u32 %v720, 16
        %v815 = vshll.u32 %v720, 16
        %v817 = vrot.slane %v815, 1
        %v818 = vor.u32 %v813, %v817
        %v820 = vshll.u32 %v784, 16
        %v822 = vrot.slane %v820, 1
        %v823 = vsel %vm799, %v818, %v822
        %v825 = vshrl.u32 %v721, 16
        %v827 = vshll.u32 %v721, 16
        %v829 = vrot.slane %v827, 1
        %v830 = vor.u32 %v825, %v829
        %v832 = vshll.u32 %v785, 16
        %v834 = vrot.slane %v832, 1
        %v835 = vsel %vm799, %v830, %v834
        %v837 = vshrl.u32 %v722, 16
        %v839 = vshll.u32 %v722, 16
        %v841 = vrot.slane %v839, 1
        %v842 = vor.u32 %v837, %v841
        %v844 = vshll.u32 %v786, 16
        %v846 = vrot.slane %v844, 1
        %v847 = vsel %vm799, %v842, %v846
        %v849 = vshrl.u32 %v723, 16
        %v851 = vshll.u32 %v723, 16
        %v853 = vrot.slane %v851, 1
        %v854 = vor.u32 %v849, %v853
        %v856 = vshll.u32 %v787, 16
        %v858 = vrot.slane %v856, 1
        %v859 = vsel %vm799, %v854, %v858
        %v861 = vshrl.u32 %v724, 16
        %v863 = vshll.u32 %v724, 16
        %v865 = vrot.slane %v863, 1
        %v866 = vor.u32 %v861, %v865
        %v868 = vshll.u32 %v788, 16
        %v870 = vrot.slane %v868, 1
        %v871 = vsel %vm799, %v866, %v870
        %v873 = vshrl.u32 %v725, 16
        %v875 = vshll.u32 %v725, 16
        %v877 = vrot.slane %v875, 1
        %v878 = vor.u32 %v873, %v877
        %v880 = vshll.u32 %v789, 16
        %v882 = vrot.slane %v880, 1
        %v883 = vsel %vm799, %v878, %v882
        %v885 = vshrl.u32 %v726, 16
        %v887 = vshll.u32 %v726, 16
        %v889 = vrot.slane %v887, 1
        %v890 = vor.u32 %v885, %v889
        %v892 = vshll.u32 %v790, 16
        %v894 = vrot.slane %v892, 1
        %v895 = vsel %vm799, %v890, %v894
        %v897 = vshrl.u32 %v727, 16
        %v899 = vshll.u32 %v727, 16
        %v901 = vrot.slane %v899, 1
        %v902 = vor.u32 %v897, %v901
        %v904 = vshll.u32 %v791, 16
        %v906 = vrot.slane %v904, 1
        %v907 = vsel %vm799, %v902, %v906
        %v909 = vshrl.u32 %v728, 16
        %v911 = vshll.u32 %v728, 16
        %v913 = vrot.slane %v911, 1
        %v914 = vor.u32 %v909, %v913
        %v916 = vshll.u32 %v792, 16
        %v918 = vrot.slane %v916, 1
        %v919 = vsel %vm799, %v914, %v918
        %v921 = vshrl.u32 %v729, 16
        %v923 = vshll.u32 %v729, 16
        %v925 = vrot.slane %v923, 1
        %v926 = vor.u32 %v921, %v925
        %v928 = vshll.u32 %v793, 16
        %v930 = vrot.slane %v928, 1
        %v931 = vsel %vm799, %v926, %v930
        %v933 = vshrl.u32 %v730, 16
        %v935 = vshll.u32 %v730, 16
        %v937 = vrot.slane %v935, 1
        %v938 = vor.u32 %v933, %v937
        %v940 = vshll.u32 %v794, 16
        %v942 = vrot.slane %v940, 1
        %v943 = vsel %vm799, %v938, %v942
        %v945 = vshrl.u32 %v731, 16
        %v947 = vshll.u32 %v731, 16
        %v949 = vrot.slane %v947, 1
        %v950 = vor.u32 %v945, %v949
        %v952 = vshll.u32 %v795, 16
        %v954 = vrot.slane %v952, 1
        %v955 = vsel %vm799, %v950, %v954
        %v957 = vshrl.u32 %v732, 16
        %v959 = vshll.u32 %v732, 16
        %v961 = vrot.slane %v959, 1
        %v962 = vor.u32 %v957, %v961
        %v964 = vshll.u32 %v796, 16
        %v966 = vrot.slane %v964, 1
        %v967 = vsel %vm799, %v962, %v966
        %v969 = vshrl.u32 %v733, 16
        %v971 = vshll.u32 %v733, 16
        %v973 = vrot.slane %v971, 1
        %v974 = vor.u32 %v969, %v973
        %v976 = vshll.u32 %v797, 16
        %v978 = vrot.slane %v976, 1
        %v979 = vsel %vm799, %v974, %v978
        %v981 = vshrl.u32 %v734, 16
        %v983 = vshll.u32 %v734, 16
        %v985 = vrot.slane %v983, 1
        %v986 = vor.u32 %v981, %v985
        %v988 = vshll.u32 %v798, 16
        %v990 = vrot.slane %v988, 1
        %v991 = vsel %vm799, %v986, %v990
        %vm1008 = vcmask 1046528
        %v1009 = vrot.slane %v719, 1
        %v1010 = vrot.slane %v783, 1
        %v1011 = vsel %vm1008, %v1009, %v1010
        %v1012 = vrot.slane %v720, 1
        %v1013 = vrot.slane %v784, 1
        %v1014 = vsel %vm1008, %v1012, %v1013
        %v1015 = vrot.slane %v721, 1
        %v1016 = vrot.slane %v785, 1
        %v1017 = vsel %vm1008, %v1015, %v1016
        %v1018 = vrot.slane %v722, 1
        %v1019 = vrot.slane %v786, 1
        %v1020 = vsel %vm1008, %v1018, %v1019
        %v1021 = vrot.slane %v723, 1
        %v1022 = vrot.slane %v787, 1
        %v1023 = vsel %vm1008, %v1021, %v1022
        %v1024 = vrot.slane %v724, 1
        %v1025 = vrot.slane %v788, 1
        %v1026 = vsel %vm1008, %v1024, %v1025
        %v1027 = vrot.slane %v725, 1
        %v1028 = vrot.slane %v789, 1
        %v1029 = vsel %vm1008, %v1027, %v1028
        %v1030 = vrot.slane %v726, 1
        %v1031 = vrot.slane %v790, 1
        %v1032 = vsel %vm1008, %v1030, %v1031
        %v1033 = vrot.slane %v727, 1
        %v1034 = vrot.slane %v791, 1
        %v1035 = vsel %vm1008, %v1033, %v1034
        %v1036 = vrot.slane %v728, 1
        %v1037 = vrot.slane %v792, 1
        %v1038 = vsel %vm1008, %v1036, %v1037
        %v1039 = vrot.slane %v729, 1
        %v1040 = vrot.slane %v793, 1
        %v1041 = vsel %vm1008, %v1039, %v1040
        %v1042 = vrot.slane %v730, 1
        %v1043 = vrot.slane %v794, 1
        %v1044 = vsel %vm1008, %v1042, %v1043
        %v1045 = vrot.slane %v731, 1
        %v1046 = vrot.slane %v795, 1
        %v1047 = vsel %vm1008, %v1045, %v1046
        %v1048 = vrot.slane %v732, 1
        %v1049 = vrot.slane %v796, 1
        %v1050 = vsel %vm1008, %v1048, %v1049
        %v1051 = vrot.slane %v733, 1
        %v1052 = vrot.slane %v797, 1
        %v1053 = vsel %vm1008, %v1051, %v1052
        %v1054 = vrot.slane %v734, 1
        %v1055 = vrot.slane %v798, 1
        %v1056 = vsel %vm1008, %v1054, %v1055
        %v1075 = vunpack.c.l.b16 %v649
        %v1076 = vunpack.c.l.b16 %v650
        %v1077 = vpack.c.b16 %v1076, %v1075
        %v1080 = vunpack.c.l.b16 %v651
        %v1081 = vpack.c.b16 %v1080, %v1080
        %v1083 = vshrl.u32 %v1077, 16
        %v1085 = vshll.u32 %v1077, 16
        %v1087 = vrot.slane %v1085, 1
        %v1088 = vor.u32 %v1083, %v1087
        %v1090 = vshll.u32 %v1081, 16
        %v1092 = vrot.slane %v1090, 1
        %v1093 = vsel %vm799, %v1088, %v1092
        %v1095 = vrot.slane %v1077, 1
        %v1096 = vrot.slane %v1081, 1
        %v1097 = vsel %vm1008, %v1095, %v1096
        %v1101 = vunpack.c.l.b16 %v652
        %v1102 = vunpack.c.l.b16 %v653
        %v1103 = vpack.c.b16 %v1102, %v1101
        %v1106 = vunpack.c.l.b16 %v654
        %v1107 = vpack.c.b16 %v1106, %v1106
        %v1109 = vshrl.u32 %v1103, 16
        %v1111 = vshll.u32 %v1103, 16
        %v1113 = vrot.slane %v1111, 1
        %v1114 = vor.u32 %v1109, %v1113
        %v1116 = vshll.u32 %v1107, 16
        %v1118 = vrot.slane %v1116, 1
        %v1119 = vsel %vm799, %v1114, %v1118
        %v1121 = vrot.slane %v1103, 1
        %v1122 = vrot.slane %v1107, 1
        %v1123 = vsel %vm1008, %v1121, %v1122
        %v1125 = vld [vmem:[%s3] sm:$0xf]
        %v1126 = vld [vmem:[%s3 + $0x4] sm:$0xf]
        %v1127 = vld [vmem:[%s3 + $0x8] sm:$0xf]
        %v1128 = vld [vmem:[%s3 + $0xc] sm:$0xf]
        %v1129 = vld [vmem:[%s3 + $0x10] sm:$0xf]
        %v1130 = vld [vmem:[%s3 + $0x14] sm:$0xf]
        %v1131 = vld [vmem:[%s3 + $0x18] sm:$0xf]
        %v1132 = vld [vmem:[%s3 + $0x1c] sm:$0xf]
        %v1133 = vld [vmem:[%s3 + $0x20] sm:$0xf]
        %v1134 = vld [vmem:[%s3 + $0x24] sm:$0xf]
        %v1135 = vld [vmem:[%s3 + $0x28] sm:$0xf]
        %v1136 = vld [vmem:[%s3 + $0x2c] sm:$0xf]
        %v1137 = vld [vmem:[%s3 + $0x30] sm:$0xf]
        %v1138 = vld [vmem:[%s3 + $0x34] sm:$0xf]
        %v1139 = vld [vmem:[%s3 + $0x38] sm:$0xf]
        %v1140 = vld [vmem:[%s3 + $0x3c] sm:$0xf]
        %v1141 = vld [vmem:[%s3 + $0x40] sm:$0xf]
        %v1142 = vld [vmem:[%s3 + $0x44] sm:$0xf]
        %v1143 = vld [vmem:[%s3 + $0x48] sm:$0xf]
        %v1144 = vld [vmem:[%s3 + $0x4c] sm:$0xf]
        %v1145 = vld [vmem:[%s3 + $0x50] sm:$0xf]
        %v1146 = vld [vmem:[%s3 + $0x54] sm:$0xf]
        %v1147 = vld [vmem:[%s3 + $0x58] sm:$0xf]
        %v1148 = vld [vmem:[%s3 + $0x5c] sm:$0xf]
        %v1149 = vld [vmem:[%s3 + $0x60] sm:$0xf]
        %v1150 = vld [vmem:[%s3 + $0x64] sm:$0xf]
        %v1151 = vld [vmem:[%s3 + $0x68] sm:$0xf]
        %v1152 = vld [vmem:[%s3 + $0x6c] sm:$0xf]
        %v1153 = vld [vmem:[%s3 + $0x70] sm:$0xf]
        %v1154 = vld [vmem:[%s3 + $0x74] sm:$0xf]
        %v1155 = vld [vmem:[%s3 + $0x78] sm:$0xf]
        %v1156 = vld [vmem:[%s3 + $0x7c] sm:$0xf]
        %v1157 = vld [vmem:[%s3 + $0x80] sm:$0xf]
        %v1158 = vld [vmem:[%s3 + $0x84] sm:$0xf]
        %v1159 = vld [vmem:[%s3 + $0x88] sm:$0xf]
        %v1160 = vld [vmem:[%s3 + $0x8c] sm:$0xf]
        %v1161 = vld [vmem:[%s3 + $0x90] sm:$0xf]
        %v1162 = vld [vmem:[%s3 + $0x94] sm:$0xf]
        %v1163 = vld [vmem:[%s3 + $0x98] sm:$0xf]
        %v1164 = vld [vmem:[%s3 + $0x9c] sm:$0xf]
        %v1165 = vld [vmem:[%s3 + $0xa0] sm:$0xf]
        %v1166 = vld [vmem:[%s3 + $0xa4] sm:$0xf]
        %v1167 = vld [vmem:[%s3 + $0xa8] sm:$0xf]
        %v1168 = vld [vmem:[%s3 + $0xac] sm:$0xf]
        %v1169 = vld [vmem:[%s3 + $0xb0] sm:$0xf]
        %v1170 = vld [vmem:[%s3 + $0xb4] sm:$0xf]
        %v1171 = vld [vmem:[%s3 + $0xb8] sm:$0xf]
        %v1172 = vld [vmem:[%s3 + $0xbc] sm:$0xf]
        %v1173 = vld [vmem:[%s3 + $0xc0] sm:$0xf]
        %v1174 = vld [vmem:[%s3 + $0xc4] sm:$0xf]
        %v1175 = vld [vmem:[%s3 + $0xc8] sm:$0xf]
        %v1176 = vld [vmem:[%s3 + $0xcc] sm:$0xf]
        %v1177 = vld [vmem:[%s3 + $0xd0] sm:$0xf]
        %v1178 = vld [vmem:[%s3 + $0xd4] sm:$0xf]
        %v1179 = vld [vmem:[%s3 + $0xd8] sm:$0xf]
        %v1180 = vld [vmem:[%s3 + $0xdc] sm:$0xf]
        %v1181 = vld [vmem:[%s3 + $0xe0] sm:$0xf]
        %v1182 = vld [vmem:[%s3 + $0xe4] sm:$0xf]
        %v1183 = vld [vmem:[%s3 + $0xe8] sm:$0xf]
        %v1184 = vld [vmem:[%s3 + $0xec] sm:$0xf]
        %v1185 = vld [vmem:[%s3 + $0xf0] sm:$0xf]
        %v1186 = vld [vmem:[%s3 + $0xf4] sm:$0xf]
        %v1187 = vld [vmem:[%s3 + $0xf8] sm:$0xf]
        %v1188 = vld [vmem:[%s3 + $0xfc] sm:$0xf]
        %v1189 = vld [vmem:[%s3 + $0x100] sm:$0xf]
        %v1190 = vld [vmem:[%s3 + $0x104] sm:$0xf]
        %v1191 = vld [vmem:[%s3 + $0x108] sm:$0xf]
        %v1192 = vld [vmem:[%s3 + $0x10c] sm:$0xf]
        %v1193 = vld [vmem:[%s3 + $0x110] sm:$0xf]
        %v1194 = vld [vmem:[%s3 + $0x114] sm:$0xf]
        %v1195 = vld [vmem:[%s3 + $0x118] sm:$0xf]
        %v1196 = vld [vmem:[%s3 + $0x11c] sm:$0xf]
        %v1197 = vld [vmem:[%s3 + $0x120] sm:$0xf]
        %v1198 = vld [vmem:[%s3 + $0x124] sm:$0xf]
        %v1199 = vld [vmem:[%s3 + $0x128] sm:$0xf]
        %v1200 = vld [vmem:[%s3 + $0x12c] sm:$0xf]
        %v1201 = vld [vmem:[%s3 + $0x130] sm:$0xf]
        %v1202 = vld [vmem:[%s3 + $0x134] sm:$0xf]
        %v1203 = vld [vmem:[%s3 + $0x138] sm:$0xf]
        %v1204 = vld [vmem:[%s3 + $0x13c] sm:$0xf]
        %v1205 = vld [vmem:[%s3 + $0x140] sm:$0xf]
        %v1206 = vld [vmem:[%s3 + $0x144] sm:$0xf]
        %v1207 = vld [vmem:[%s3 + $0x148] sm:$0xf]
        %v1208 = vld [vmem:[%s3 + $0x14c] sm:$0xf]
        %v1209 = vld [vmem:[%s3 + $0x150] sm:$0xf]
        %v1210 = vld [vmem:[%s3 + $0x154] sm:$0xf]
        %v1211 = vld [vmem:[%s3 + $0x158] sm:$0xf]
        %v1212 = vld [vmem:[%s3 + $0x15c] sm:$0xf]
        %v1213 = vld [vmem:[%s3 + $0x160] sm:$0xf]
        %v1214 = vld [vmem:[%s3 + $0x164] sm:$0xf]
        %v1215 = vld [vmem:[%s3 + $0x168] sm:$0xf]
        %v1216 = vld [vmem:[%s3 + $0x16c] sm:$0xf]
        %v1217 = vld [vmem:[%s3 + $0x170] sm:$0xf]
        %v1218 = vld [vmem:[%s3 + $0x174] sm:$0xf]
        %v1219 = vld [vmem:[%s3 + $0x178] sm:$0xf]
        %v1220 = vld [vmem:[%s3 + $0x17c] sm:$0xf]
        %v1221 = vld [vmem:[%s3 + $0x180] sm:$0xf]
        %v1222 = vld [vmem:[%s3 + $0x184] sm:$0xf]
        %v1223 = vld [vmem:[%s3 + $0x188] sm:$0xf]
        %v1224 = vld [vmem:[%s3 + $0x18c] sm:$0xf]
        %v1225 = vld [vmem:[%s3 + $0x190] sm:$0xf]
        %v1226 = vld [vmem:[%s3 + $0x194] sm:$0xf]
        %v1227 = vld [vmem:[%s3 + $0x198] sm:$0xf]
        %v1228 = vld [vmem:[%s3 + $0x19c] sm:$0xf]
        %v1229 = vld [vmem:[%s3 + $0x1a0] sm:$0xf]
        %v1230 = vld [vmem:[%s3 + $0x1a4] sm:$0xf]
        %v1231 = vld [vmem:[%s3 + $0x1a8] sm:$0xf]
        %v1232 = vld [vmem:[%s3 + $0x1ac] sm:$0xf]
        %v1233 = vld [vmem:[%s3 + $0x1b0] sm:$0xf]
        %v1234 = vld [vmem:[%s3 + $0x1b4] sm:$0xf]
        %v1235 = vld [vmem:[%s3 + $0x1b8] sm:$0xf]
        %v1236 = vld [vmem:[%s3 + $0x1bc] sm:$0xf]
        %v1237 = vld [vmem:[%s3 + $0x1c0] sm:$0xf]
        %v1238 = vld [vmem:[%s3 + $0x1c4] sm:$0xf]
        %v1239 = vld [vmem:[%s3 + $0x1c8] sm:$0xf]
        %v1240 = vld [vmem:[%s3 + $0x1cc] sm:$0xf]
        %v1241 = vld [vmem:[%s3 + $0x1d0] sm:$0xf]
        %v1242 = vld [vmem:[%s3 + $0x1d4] sm:$0xf]
        %v1243 = vld [vmem:[%s3 + $0x1d8] sm:$0xf]
        %v1244 = vld [vmem:[%s3 + $0x1dc] sm:$0xf]
        %v1245 = vld [vmem:[%s3 + $0x1e0] sm:$0xf]
        %v1246 = vld [vmem:[%s3 + $0x1e4] sm:$0xf]
        %v1247 = vld [vmem:[%s3 + $0x1e8] sm:$0xf]
        %v1248 = vld [vmem:[%s3 + $0x1ec] sm:$0xf]
        %v1249 = vld [vmem:[%s3 + $0x1f0] sm:$0xf]
        %v1250 = vld [vmem:[%s3 + $0x1f4] sm:$0xf]
        %v1251 = vld [vmem:[%s3 + $0x1f8] sm:$0xf]
        %v1252 = vld [vmem:[%s3 + $0x1fc] sm:$0xf]
        %v1253 = vld [vmem:[%s3 + $0x200] sm:$0xf]
        %v1254 = vld [vmem:[%s3 + $0x204] sm:$0xf]
        %v1255 = vld [vmem:[%s3 + $0x208] sm:$0xf]
        %v1256 = vld [vmem:[%s3 + $0x20c] sm:$0xf]
        %v1257 = vld [vmem:[%s3 + $0x210] sm:$0xf]
        %v1258 = vld [vmem:[%s3 + $0x214] sm:$0xf]
        %v1259 = vld [vmem:[%s3 + $0x218] sm:$0xf]
        %v1260 = vld [vmem:[%s3 + $0x21c] sm:$0xf]
        %v1261 = vld [vmem:[%s3 + $0x220] sm:$0xf]
        %v1262 = vld [vmem:[%s3 + $0x224] sm:$0xf]
        %v1263 = vld [vmem:[%s3 + $0x228] sm:$0xf]
        %v1264 = vld [vmem:[%s3 + $0x22c] sm:$0xf]
        %v1265 = vld [vmem:[%s3 + $0x230] sm:$0xf]
        %v1266 = vld [vmem:[%s3 + $0x234] sm:$0xf]
        %v1267 = vld [vmem:[%s3 + $0x238] sm:$0xf]
        %v1268 = vld [vmem:[%s3 + $0x23c] sm:$0xf]
        %v1269 = vld [vmem:[%s393] sm:$0xf]
        %v1270 = vld [vmem:[%s393 + $0x4] sm:$0xf]
        %v1271 = vld [vmem:[%s393 + $0x8] sm:$0x1]
        %v1272 = vld [vmem:[%s393 + $0xc] sm:$0xf]
        %v1273 = vld [vmem:[%s393 + $0x10] sm:$0xf]
        %v1274 = vld [vmem:[%s393 + $0x14] sm:$0x1]
        %v1275 = vld [vmem:[%s393 + $0x18] sm:$0xf]
        %v1276 = vld [vmem:[%s393 + $0x1c] sm:$0xf]
        %v1277 = vld [vmem:[%s393 + $0x20] sm:$0x1]
        %v1278 = vld [vmem:[%s393 + $0x24] sm:$0xf]
        %v1279 = vld [vmem:[%s393 + $0x28] sm:$0xf]
        %v1280 = vld [vmem:[%s393 + $0x2c] sm:$0x1]
        %v1281 = vld [vmem:[%s393 + $0x30] sm:$0xf]
        %v1282 = vld [vmem:[%s393 + $0x34] sm:$0xf]
        %v1283 = vld [vmem:[%s393 + $0x38] sm:$0x1]
        %v1284 = vld [vmem:[%s393 + $0x3c] sm:$0xf]
        %v1285 = vld [vmem:[%s393 + $0x40] sm:$0xf]
        %v1286 = vld [vmem:[%s393 + $0x44] sm:$0x1]
        %v1287 = vld [vmem:[%s393 + $0x48] sm:$0xf]
        %v1288 = vld [vmem:[%s393 + $0x4c] sm:$0xf]
        %v1289 = vld [vmem:[%s393 + $0x50] sm:$0x1]
        %v1290 = vld [vmem:[%s393 + $0x54] sm:$0xf]
        %v1291 = vld [vmem:[%s393 + $0x58] sm:$0xf]
        %v1292 = vld [vmem:[%s393 + $0x5c] sm:$0x1]
        %v1293 = vld [vmem:[%s393 + $0x60] sm:$0xf]
        %v1294 = vld [vmem:[%s393 + $0x64] sm:$0xf]
        %v1295 = vld [vmem:[%s393 + $0x68] sm:$0x1]
        %v1296 = vld [vmem:[%s393 + $0x6c] sm:$0xf]
        %v1297 = vld [vmem:[%s393 + $0x70] sm:$0xf]
        %v1298 = vld [vmem:[%s393 + $0x74] sm:$0x1]
        %v1299 = vld [vmem:[%s393 + $0x78] sm:$0xf]
        %v1300 = vld [vmem:[%s393 + $0x7c] sm:$0xf]
        %v1301 = vld [vmem:[%s393 + $0x80] sm:$0x1]
        %v1302 = vld [vmem:[%s393 + $0x84] sm:$0xf]
        %v1303 = vld [vmem:[%s393 + $0x88] sm:$0xf]
        %v1304 = vld [vmem:[%s393 + $0x8c] sm:$0x1]
        %v1305 = vld [vmem:[%s393 + $0x90] sm:$0xf]
        %v1306 = vld [vmem:[%s393 + $0x94] sm:$0xf]
        %v1307 = vld [vmem:[%s393 + $0x98] sm:$0x1]
        %v1308 = vld [vmem:[%s393 + $0x9c] sm:$0xf]
        %v1309 = vld [vmem:[%s393 + $0xa0] sm:$0xf]
        %v1310 = vld [vmem:[%s393 + $0xa4] sm:$0x1]
        %v1311 = vld [vmem:[%s393 + $0xa8] sm:$0xf]
        %v1312 = vld [vmem:[%s393 + $0xac] sm:$0xf]
        %v1313 = vld [vmem:[%s393 + $0xb0] sm:$0x1]
        %v1314 = vld [vmem:[%s393 + $0xb4] sm:$0xf]
        %v1315 = vld [vmem:[%s393 + $0xb8] sm:$0xf]
        %v1316 = vld [vmem:[%s393 + $0xbc] sm:$0x1]
        %v1317 = vld [vmem:[%s393 + $0xc0] sm:$0xf]
        %v1318 = vld [vmem:[%s393 + $0xc4] sm:$0xf]
        %v1319 = vld [vmem:[%s393 + $0xc8] sm:$0x1]
        %v1320 = vld [vmem:[%s393 + $0xcc] sm:$0xf]
        %v1321 = vld [vmem:[%s393 + $0xd0] sm:$0xf]
        %v1322 = vld [vmem:[%s393 + $0xd4] sm:$0x1]
        %v1355 = vunpack.c.l.b16 %v1269
        %v1356 = vunpack.c.l.b16 %v1270
        %v1357 = vunpack.c.l.b16 %v1272
        %v1358 = vunpack.c.l.b16 %v1273
        %v1359 = vunpack.c.l.b16 %v1275
        %v1360 = vunpack.c.l.b16 %v1276
        %v1361 = vunpack.c.l.b16 %v1278
        %v1362 = vunpack.c.l.b16 %v1279
        %v1363 = vunpack.c.l.b16 %v1281
        %v1364 = vunpack.c.l.b16 %v1282
        %v1365 = vunpack.c.l.b16 %v1284
        %v1366 = vunpack.c.l.b16 %v1285
        %v1367 = vunpack.c.l.b16 %v1287
        %v1368 = vunpack.c.l.b16 %v1288
        %v1369 = vunpack.c.l.b16 %v1290
        %v1370 = vunpack.c.l.b16 %v1291
        %v1371 = vunpack.c.l.b16 %v1293
        %v1372 = vunpack.c.l.b16 %v1294
        %v1373 = vunpack.c.l.b16 %v1296
        %v1374 = vunpack.c.l.b16 %v1297
        %v1375 = vunpack.c.l.b16 %v1299
        %v1376 = vunpack.c.l.b16 %v1300
        %v1377 = vunpack.c.l.b16 %v1302
        %v1378 = vunpack.c.l.b16 %v1303
        %v1379 = vunpack.c.l.b16 %v1305
        %v1380 = vunpack.c.l.b16 %v1306
        %v1381 = vunpack.c.l.b16 %v1308
        %v1382 = vunpack.c.l.b16 %v1309
        %v1383 = vunpack.c.l.b16 %v1311
        %v1384 = vunpack.c.l.b16 %v1312
        %v1385 = vunpack.c.l.b16 %v1314
        %v1386 = vunpack.c.l.b16 %v1315
        %v1387 = vpack.c.b16 %v1356, %v1355
        %v1388 = vpack.c.b16 %v1358, %v1357
        %v1389 = vpack.c.b16 %v1360, %v1359
        %v1390 = vpack.c.b16 %v1362, %v1361
        %v1391 = vpack.c.b16 %v1364, %v1363
        %v1392 = vpack.c.b16 %v1366, %v1365
        %v1393 = vpack.c.b16 %v1368, %v1367
        %v1394 = vpack.c.b16 %v1370, %v1369
        %v1395 = vpack.c.b16 %v1372, %v1371
        %v1396 = vpack.c.b16 %v1374, %v1373
        %v1397 = vpack.c.b16 %v1376, %v1375
        %v1398 = vpack.c.b16 %v1378, %v1377
        %v1399 = vpack.c.b16 %v1380, %v1379
        %v1400 = vpack.c.b16 %v1382, %v1381
        %v1401 = vpack.c.b16 %v1384, %v1383
        %v1402 = vpack.c.b16 %v1386, %v1385
        %v1435 = vunpack.c.l.b16 %v1271
        %v1436 = vunpack.c.l.b16 %v1274
        %v1437 = vunpack.c.l.b16 %v1277
        %v1438 = vunpack.c.l.b16 %v1280
        %v1439 = vunpack.c.l.b16 %v1283
        %v1440 = vunpack.c.l.b16 %v1286
        %v1441 = vunpack.c.l.b16 %v1289
        %v1442 = vunpack.c.l.b16 %v1292
        %v1443 = vunpack.c.l.b16 %v1295
        %v1444 = vunpack.c.l.b16 %v1298
        %v1445 = vunpack.c.l.b16 %v1301
        %v1446 = vunpack.c.l.b16 %v1304
        %v1447 = vunpack.c.l.b16 %v1307
        %v1448 = vunpack.c.l.b16 %v1310
        %v1449 = vunpack.c.l.b16 %v1313
        %v1450 = vunpack.c.l.b16 %v1316
        %v1451 = vpack.c.b16 %v1435, %v1435
        %v1452 = vpack.c.b16 %v1436, %v1436
        %v1453 = vpack.c.b16 %v1437, %v1437
        %v1454 = vpack.c.b16 %v1438, %v1438
        %v1455 = vpack.c.b16 %v1439, %v1439
        %v1456 = vpack.c.b16 %v1440, %v1440
        %v1457 = vpack.c.b16 %v1441, %v1441
        %v1458 = vpack.c.b16 %v1442, %v1442
        %v1459 = vpack.c.b16 %v1443, %v1443
        %v1460 = vpack.c.b16 %v1444, %v1444
        %v1461 = vpack.c.b16 %v1445, %v1445
        %v1462 = vpack.c.b16 %v1446, %v1446
        %v1463 = vpack.c.b16 %v1447, %v1447
        %v1464 = vpack.c.b16 %v1448, %v1448
        %v1465 = vpack.c.b16 %v1449, %v1449
        %v1466 = vpack.c.b16 %v1450, %v1450
        %v1468 = vshrl.u32 %v1387, 16
        %v1470 = vshll.u32 %v1387, 16
        %v1472 = vrot.slane %v1470, 1
        %v1473 = vor.u32 %v1468, %v1472
        %v1475 = vshll.u32 %v1451, 16
        %v1477 = vrot.slane %v1475, 1
        %v1478 = vsel %vm799, %v1473, %v1477
        %v1480 = vshrl.u32 %v1388, 16
        %v1482 = vshll.u32 %v1388, 16
        %v1484 = vrot.slane %v1482, 1
        %v1485 = vor.u32 %v1480, %v1484
        %v1487 = vshll.u32 %v1452, 16
        %v1489 = vrot.slane %v1487, 1
        %v1490 = vsel %vm799, %v1485, %v1489
        %v1492 = vshrl.u32 %v1389, 16
        %v1494 = vshll.u32 %v1389, 16
        %v1496 = vrot.slane %v1494, 1
        %v1497 = vor.u32 %v1492, %v1496
        %v1499 = vshll.u32 %v1453, 16
        %v1501 = vrot.slane %v1499, 1
        %v1502 = vsel %vm799, %v1497, %v1501
        %v1504 = vshrl.u32 %v1390, 16
        %v1506 = vshll.u32 %v1390, 16
        %v1508 = vrot.slane %v1506, 1
        %v1509 = vor.u32 %v1504, %v1508
        %v1511 = vshll.u32 %v1454, 16
        %v1513 = vrot.slane %v1511, 1
        %v1514 = vsel %vm799, %v1509, %v1513
        %v1516 = vshrl.u32 %v1391, 16
        %v1518 = vshll.u32 %v1391, 16
        %v1520 = vrot.slane %v1518, 1
        %v1521 = vor.u32 %v1516, %v1520
        %v1523 = vshll.u32 %v1455, 16
        %v1525 = vrot.slane %v1523, 1
        %v1526 = vsel %vm799, %v1521, %v1525
        %v1528 = vshrl.u32 %v1392, 16
        %v1530 = vshll.u32 %v1392, 16
        %v1532 = vrot.slane %v1530, 1
        %v1533 = vor.u32 %v1528, %v1532
        %v1535 = vshll.u32 %v1456, 16
        %v1537 = vrot.slane %v1535, 1
        %v1538 = vsel %vm799, %v1533, %v1537
        %v1540 = vshrl.u32 %v1393, 16
        %v1542 = vshll.u32 %v1393, 16
        %v1544 = vrot.slane %v1542, 1
        %v1545 = vor.u32 %v1540, %v1544
        %v1547 = vshll.u32 %v1457, 16
        %v1549 = vrot.slane %v1547, 1
        %v1550 = vsel %vm799, %v1545, %v1549
        %v1552 = vshrl.u32 %v1394, 16
        %v1554 = vshll.u32 %v1394, 16
        %v1556 = vrot.slane %v1554, 1
        %v1557 = vor.u32 %v1552, %v1556
        %v1559 = vshll.u32 %v1458, 16
        %v1561 = vrot.slane %v1559, 1
        %v1562 = vsel %vm799, %v1557, %v1561
        %v1564 = vshrl.u32 %v1395, 16
        %v1566 = vshll.u32 %v1395, 16
        %v1568 = vrot.slane %v1566, 1
        %v1569 = vor.u32 %v1564, %v1568
        %v1571 = vshll.u32 %v1459, 16
        %v1573 = vrot.slane %v1571, 1
        %v1574 = vsel %vm799, %v1569, %v1573
        %v1576 = vshrl.u32 %v1396, 16
        %v1578 = vshll.u32 %v1396, 16
        %v1580 = vrot.slane %v1578, 1
        %v1581 = vor.u32 %v1576, %v1580
        %v1583 = vshll.u32 %v1460, 16
        %v1585 = vrot.slane %v1583, 1
        %v1586 = vsel %vm799, %v1581, %v1585
        %v1588 = vshrl.u32 %v1397, 16
        %v1590 = vshll.u32 %v1397, 16
        %v1592 = vrot.slane %v1590, 1
        %v1593 = vor.u32 %v1588, %v1592
        %v1595 = vshll.u32 %v1461, 16
        %v1597 = vrot.slane %v1595, 1
        %v1598 = vsel %vm799, %v1593, %v1597
        %v1600 = vshrl.u32 %v1398, 16
        %v1602 = vshll.u32 %v1398, 16
        %v1604 = vrot.slane %v1602, 1
        %v1605 = vor.u32 %v1600, %v1604
        %v1607 = vshll.u32 %v1462, 16
        %v1609 = vrot.slane %v1607, 1
        %v1610 = vsel %vm799, %v1605, %v1609
        %v1612 = vshrl.u32 %v1399, 16
        %v1614 = vshll.u32 %v1399, 16
        %v1616 = vrot.slane %v1614, 1
        %v1617 = vor.u32 %v1612, %v1616
        %v1619 = vshll.u32 %v1463, 16
        %v1621 = vrot.slane %v1619, 1
        %v1622 = vsel %vm799, %v1617, %v1621
        %v1624 = vshrl.u32 %v1400, 16
        %v1626 = vshll.u32 %v1400, 16
        %v1628 = vrot.slane %v1626, 1
        %v1629 = vor.u32 %v1624, %v1628
        %v1631 = vshll.u32 %v1464, 16
        %v1633 = vrot.slane %v1631, 1
        %v1634 = vsel %vm799, %v1629, %v1633
        %v1636 = vshrl.u32 %v1401, 16
        %v1638 = vshll.u32 %v1401, 16
        %v1640 = vrot.slane %v1638, 1
        %v1641 = vor.u32 %v1636, %v1640
        %v1643 = vshll.u32 %v1465, 16
        %v1645 = vrot.slane %v1643, 1
        %v1646 = vsel %vm799, %v1641, %v1645
        %v1648 = vshrl.u32 %v1402, 16
        %v1650 = vshll.u32 %v1402, 16
        %v1652 = vrot.slane %v1650, 1
        %v1653 = vor.u32 %v1648, %v1652
        %v1655 = vshll.u32 %v1466, 16
        %v1657 = vrot.slane %v1655, 1
        %v1658 = vsel %vm799, %v1653, %v1657
        %v1675 = vrot.slane %v1387, 1
        %v1676 = vrot.slane %v1451, 1
        %v1677 = vsel %vm1008, %v1675, %v1676
        %v1678 = vrot.slane %v1388, 1
        %v1679 = vrot.slane %v1452, 1
        %v1680 = vsel %vm1008, %v1678, %v1679
        %v1681 = vrot.slane %v1389, 1
        %v1682 = vrot.slane %v1453, 1
        %v1683 = vsel %vm1008, %v1681, %v1682
        %v1684 = vrot.slane %v1390, 1
        %v1685 = vrot.slane %v1454, 1
        %v1686 = vsel %vm1008, %v1684, %v1685
        %v1687 = vrot.slane %v1391, 1
        %v1688 = vrot.slane %v1455, 1
        %v1689 = vsel %vm1008, %v1687, %v1688
        %v1690 = vrot.slane %v1392, 1
        %v1691 = vrot.slane %v1456, 1
        %v1692 = vsel %vm1008, %v1690, %v1691
        %v1693 = vrot.slane %v1393, 1
        %v1694 = vrot.slane %v1457, 1
        %v1695 = vsel %vm1008, %v1693, %v1694
        %v1696 = vrot.slane %v1394, 1
        %v1697 = vrot.slane %v1458, 1
        %v1698 = vsel %vm1008, %v1696, %v1697
        %v1699 = vrot.slane %v1395, 1
        %v1700 = vrot.slane %v1459, 1
        %v1701 = vsel %vm1008, %v1699, %v1700
        %v1702 = vrot.slane %v1396, 1
        %v1703 = vrot.slane %v1460, 1
        %v1704 = vsel %vm1008, %v1702, %v1703
        %v1705 = vrot.slane %v1397, 1
        %v1706 = vrot.slane %v1461, 1
        %v1707 = vsel %vm1008, %v1705, %v1706
        %v1708 = vrot.slane %v1398, 1
        %v1709 = vrot.slane %v1462, 1
        %v1710 = vsel %vm1008, %v1708, %v1709
        %v1711 = vrot.slane %v1399, 1
        %v1712 = vrot.slane %v1463, 1
        %v1713 = vsel %vm1008, %v1711, %v1712
        %v1714 = vrot.slane %v1400, 1
        %v1715 = vrot.slane %v1464, 1
        %v1716 = vsel %vm1008, %v1714, %v1715
        %v1717 = vrot.slane %v1401, 1
        %v1718 = vrot.slane %v1465, 1
        %v1719 = vsel %vm1008, %v1717, %v1718
        %v1720 = vrot.slane %v1402, 1
        %v1721 = vrot.slane %v1466, 1
        %v1722 = vsel %vm1008, %v1720, %v1721
        %v1741 = vunpack.c.l.b16 %v1317
        %v1742 = vunpack.c.l.b16 %v1318
        %v1743 = vpack.c.b16 %v1742, %v1741
        %v1746 = vunpack.c.l.b16 %v1319
        %v1747 = vpack.c.b16 %v1746, %v1746
        %v1749 = vshrl.u32 %v1743, 16
        %v1751 = vshll.u32 %v1743, 16
        %v1753 = vrot.slane %v1751, 1
        %v1754 = vor.u32 %v1749, %v1753
        %v1756 = vshll.u32 %v1747, 16
        %v1758 = vrot.slane %v1756, 1
        %v1759 = vsel %vm799, %v1754, %v1758
        %v1761 = vrot.slane %v1743, 1
        %v1762 = vrot.slane %v1747, 1
        %v1763 = vsel %vm1008, %v1761, %v1762
        %v1767 = vunpack.c.l.b16 %v1320
        %v1768 = vunpack.c.l.b16 %v1321
        %v1769 = vpack.c.b16 %v1768, %v1767
        %v1772 = vunpack.c.l.b16 %v1322
        %v1773 = vpack.c.b16 %v1772, %v1772
        %v1775 = vshrl.u32 %v1769, 16
        %v1777 = vshll.u32 %v1769, 16
        %v1779 = vrot.slane %v1777, 1
        %v1780 = vor.u32 %v1775, %v1779
        %v1782 = vshll.u32 %v1773, 16
        %v1784 = vrot.slane %v1782, 1
        %v1785 = vsel %vm799, %v1780, %v1784
        %v1787 = vrot.slane %v1769, 1
        %v1788 = vrot.slane %v1773, 1
        %v1789 = vsel %vm1008, %v1787, %v1788
        %s1791 = scalar_lea.vmem %s3, 576
        %v1792 = vld [vmem:[%s1791] sm:$0xf]
        %v1793 = vld [vmem:[%s1791 + $0x4] sm:$0xf]
        %v1794 = vld [vmem:[%s1791 + $0x8] sm:$0xf]
        %v1795 = vld [vmem:[%s1791 + $0xc] sm:$0xf]
        %v1796 = vld [vmem:[%s1791 + $0x10] sm:$0xf]
        %v1797 = vld [vmem:[%s1791 + $0x14] sm:$0xf]
        %v1798 = vld [vmem:[%s1791 + $0x18] sm:$0xf]
        %v1799 = vld [vmem:[%s1791 + $0x1c] sm:$0xf]
        %v1800 = vld [vmem:[%s1791 + $0x20] sm:$0xf]
        %v1801 = vld [vmem:[%s1791 + $0x24] sm:$0xf]
        %v1802 = vld [vmem:[%s1791 + $0x28] sm:$0xf]
        %v1803 = vld [vmem:[%s1791 + $0x2c] sm:$0xf]
        %v1804 = vld [vmem:[%s1791 + $0x30] sm:$0xf]
        %v1805 = vld [vmem:[%s1791 + $0x34] sm:$0xf]
        %v1806 = vld [vmem:[%s1791 + $0x38] sm:$0xf]
        %v1807 = vld [vmem:[%s1791 + $0x3c] sm:$0xf]
        %v1808 = vld [vmem:[%s1791 + $0x40] sm:$0xf]
        %v1809 = vld [vmem:[%s1791 + $0x44] sm:$0xf]
        %v1810 = vld [vmem:[%s1791 + $0x48] sm:$0xf]
        %v1811 = vld [vmem:[%s1791 + $0x4c] sm:$0xf]
        %v1812 = vld [vmem:[%s1791 + $0x50] sm:$0xf]
        %v1813 = vld [vmem:[%s1791 + $0x54] sm:$0xf]
        %v1814 = vld [vmem:[%s1791 + $0x58] sm:$0xf]
        %v1815 = vld [vmem:[%s1791 + $0x5c] sm:$0xf]
        %v1816 = vld [vmem:[%s1791 + $0x60] sm:$0xf]
        %v1817 = vld [vmem:[%s1791 + $0x64] sm:$0xf]
        %v1818 = vld [vmem:[%s1791 + $0x68] sm:$0xf]
        %v1819 = vld [vmem:[%s1791 + $0x6c] sm:$0xf]
        %v1820 = vld [vmem:[%s1791 + $0x70] sm:$0xf]
        %v1821 = vld [vmem:[%s1791 + $0x74] sm:$0xf]
        %v1822 = vld [vmem:[%s1791 + $0x78] sm:$0xf]
        %v1823 = vld [vmem:[%s1791 + $0x7c] sm:$0xf]
        %v1824 = vld [vmem:[%s1791 + $0x80] sm:$0xf]
        %v1825 = vld [vmem:[%s1791 + $0x84] sm:$0xf]
        %v1826 = vld [vmem:[%s1791 + $0x88] sm:$0xf]
        %v1827 = vld [vmem:[%s1791 + $0x8c] sm:$0xf]
        %v1828 = vld [vmem:[%s1791 + $0x90] sm:$0xf]
        %v1829 = vld [vmem:[%s1791 + $0x94] sm:$0xf]
        %v1830 = vld [vmem:[%s1791 + $0x98] sm:$0xf]
        %v1831 = vld [vmem:[%s1791 + $0x9c] sm:$0xf]
        %v1832 = vld [vmem:[%s1791 + $0xa0] sm:$0xf]
        %v1833 = vld [vmem:[%s1791 + $0xa4] sm:$0xf]
        %v1834 = vld [vmem:[%s1791 + $0xa8] sm:$0xf]
        %v1835 = vld [vmem:[%s1791 + $0xac] sm:$0xf]
        %v1836 = vld [vmem:[%s1791 + $0xb0] sm:$0xf]
        %v1837 = vld [vmem:[%s1791 + $0xb4] sm:$0xf]
        %v1838 = vld [vmem:[%s1791 + $0xb8] sm:$0xf]
        %v1839 = vld [vmem:[%s1791 + $0xbc] sm:$0xf]
        %v1840 = vld [vmem:[%s1791 + $0xc0] sm:$0xf]
        %v1841 = vld [vmem:[%s1791 + $0xc4] sm:$0xf]
        %v1842 = vld [vmem:[%s1791 + $0xc8] sm:$0xf]
        %v1843 = vld [vmem:[%s1791 + $0xcc] sm:$0xf]
        %v1844 = vld [vmem:[%s1791 + $0xd0] sm:$0xf]
        %v1845 = vld [vmem:[%s1791 + $0xd4] sm:$0xf]
        %v1846 = vld [vmem:[%s1791 + $0xd8] sm:$0xf]
        %v1847 = vld [vmem:[%s1791 + $0xdc] sm:$0xf]
        %v1848 = vld [vmem:[%s1791 + $0xe0] sm:$0xf]
        %v1849 = vld [vmem:[%s1791 + $0xe4] sm:$0xf]
        %v1850 = vld [vmem:[%s1791 + $0xe8] sm:$0xf]
        %v1851 = vld [vmem:[%s1791 + $0xec] sm:$0xf]
        %v1852 = vld [vmem:[%s1791 + $0xf0] sm:$0xf]
        %v1853 = vld [vmem:[%s1791 + $0xf4] sm:$0xf]
        %v1854 = vld [vmem:[%s1791 + $0xf8] sm:$0xf]
        %v1855 = vld [vmem:[%s1791 + $0xfc] sm:$0xf]
        %v1856 = vld [vmem:[%s1791 + $0x100] sm:$0xf]
        %v1857 = vld [vmem:[%s1791 + $0x104] sm:$0xf]
        %v1858 = vld [vmem:[%s1791 + $0x108] sm:$0xf]
        %v1859 = vld [vmem:[%s1791 + $0x10c] sm:$0xf]
        %v1860 = vld [vmem:[%s1791 + $0x110] sm:$0xf]
        %v1861 = vld [vmem:[%s1791 + $0x114] sm:$0xf]
        %v1862 = vld [vmem:[%s1791 + $0x118] sm:$0xf]
        %v1863 = vld [vmem:[%s1791 + $0x11c] sm:$0xf]
        %v1864 = vld [vmem:[%s1791 + $0x120] sm:$0xf]
        %v1865 = vld [vmem:[%s1791 + $0x124] sm:$0xf]
        %v1866 = vld [vmem:[%s1791 + $0x128] sm:$0xf]
        %v1867 = vld [vmem:[%s1791 + $0x12c] sm:$0xf]
        %v1868 = vld [vmem:[%s1791 + $0x130] sm:$0xf]
        %v1869 = vld [vmem:[%s1791 + $0x134] sm:$0xf]
        %v1870 = vld [vmem:[%s1791 + $0x138] sm:$0xf]
        %v1871 = vld [vmem:[%s1791 + $0x13c] sm:$0xf]
        %v1872 = vld [vmem:[%s1791 + $0x140] sm:$0xf]
        %v1873 = vld [vmem:[%s1791 + $0x144] sm:$0xf]
        %v1874 = vld [vmem:[%s1791 + $0x148] sm:$0xf]
        %v1875 = vld [vmem:[%s1791 + $0x14c] sm:$0xf]
        %v1876 = vld [vmem:[%s1791 + $0x150] sm:$0xf]
        %v1877 = vld [vmem:[%s1791 + $0x154] sm:$0xf]
        %v1878 = vld [vmem:[%s1791 + $0x158] sm:$0xf]
        %v1879 = vld [vmem:[%s1791 + $0x15c] sm:$0xf]
        %v1880 = vld [vmem:[%s1791 + $0x160] sm:$0xf]
        %v1881 = vld [vmem:[%s1791 + $0x164] sm:$0xf]
        %v1882 = vld [vmem:[%s1791 + $0x168] sm:$0xf]
        %v1883 = vld [vmem:[%s1791 + $0x16c] sm:$0xf]
        %v1884 = vld [vmem:[%s1791 + $0x170] sm:$0xf]
        %v1885 = vld [vmem:[%s1791 + $0x174] sm:$0xf]
        %v1886 = vld [vmem:[%s1791 + $0x178] sm:$0xf]
        %v1887 = vld [vmem:[%s1791 + $0x17c] sm:$0xf]
        %v1888 = vld [vmem:[%s1791 + $0x180] sm:$0xf]
        %v1889 = vld [vmem:[%s1791 + $0x184] sm:$0xf]
        %v1890 = vld [vmem:[%s1791 + $0x188] sm:$0xf]
        %v1891 = vld [vmem:[%s1791 + $0x18c] sm:$0xf]
        %v1892 = vld [vmem:[%s1791 + $0x190] sm:$0xf]
        %v1893 = vld [vmem:[%s1791 + $0x194] sm:$0xf]
        %v1894 = vld [vmem:[%s1791 + $0x198] sm:$0xf]
        %v1895 = vld [vmem:[%s1791 + $0x19c] sm:$0xf]
        %v1896 = vld [vmem:[%s1791 + $0x1a0] sm:$0xf]
        %v1897 = vld [vmem:[%s1791 + $0x1a4] sm:$0xf]
        %v1898 = vld [vmem:[%s1791 + $0x1a8] sm:$0xf]
        %v1899 = vld [vmem:[%s1791 + $0x1ac] sm:$0xf]
        %v1900 = vld [vmem:[%s1791 + $0x1b0] sm:$0xf]
        %v1901 = vld [vmem:[%s1791 + $0x1b4] sm:$0xf]
        %v1902 = vld [vmem:[%s1791 + $0x1b8] sm:$0xf]
        %v1903 = vld [vmem:[%s1791 + $0x1bc] sm:$0xf]
        %v1904 = vld [vmem:[%s1791 + $0x1c0] sm:$0xf]
        %v1905 = vld [vmem:[%s1791 + $0x1c4] sm:$0xf]
        %v1906 = vld [vmem:[%s1791 + $0x1c8] sm:$0xf]
        %v1907 = vld [vmem:[%s1791 + $0x1cc] sm:$0xf]
        %v1908 = vld [vmem:[%s1791 + $0x1d0] sm:$0xf]
        %v1909 = vld [vmem:[%s1791 + $0x1d4] sm:$0xf]
        %v1910 = vld [vmem:[%s1791 + $0x1d8] sm:$0xf]
        %v1911 = vld [vmem:[%s1791 + $0x1dc] sm:$0xf]
        %v1912 = vld [vmem:[%s1791 + $0x1e0] sm:$0xf]
        %v1913 = vld [vmem:[%s1791 + $0x1e4] sm:$0xf]
        %v1914 = vld [vmem:[%s1791 + $0x1e8] sm:$0xf]
        %v1915 = vld [vmem:[%s1791 + $0x1ec] sm:$0xf]
        %v1916 = vld [vmem:[%s1791 + $0x1f0] sm:$0xf]
        %v1917 = vld [vmem:[%s1791 + $0x1f4] sm:$0xf]
        %v1918 = vld [vmem:[%s1791 + $0x1f8] sm:$0xf]
        %v1919 = vld [vmem:[%s1791 + $0x1fc] sm:$0xf]
        %v1920 = vld [vmem:[%s1791 + $0x200] sm:$0xf]
        %v1921 = vld [vmem:[%s1791 + $0x204] sm:$0xf]
        %v1922 = vld [vmem:[%s1791 + $0x208] sm:$0xf]
        %v1923 = vld [vmem:[%s1791 + $0x20c] sm:$0xf]
        %v1924 = vld [vmem:[%s1791 + $0x210] sm:$0xf]
        %v1925 = vld [vmem:[%s1791 + $0x214] sm:$0xf]
        %v1926 = vld [vmem:[%s1791 + $0x218] sm:$0xf]
        %v1927 = vld [vmem:[%s1791 + $0x21c] sm:$0xf]
        %v1928 = vld [vmem:[%s1791 + $0x220] sm:$0xf]
        %v1929 = vld [vmem:[%s1791 + $0x224] sm:$0xf]
        %v1930 = vld [vmem:[%s1791 + $0x228] sm:$0xf]
        %v1931 = vld [vmem:[%s1791 + $0x22c] sm:$0xf]
        %v1932 = vld [vmem:[%s1791 + $0x230] sm:$0xf]
        %v1933 = vld [vmem:[%s1791 + $0x234] sm:$0xf]
        %v1934 = vld [vmem:[%s1791 + $0x238] sm:$0xf]
        %v1935 = vld [vmem:[%s1791 + $0x23c] sm:$0xf]
        %v2080 = vunpack.c.l.b16 %v1792
        %v2081 = vunpack.c.l.b16 %v1793
        %v2082 = vunpack.c.l.b16 %v1794
        %v2083 = vunpack.c.l.b16 %v1795
        %v2084 = vunpack.c.l.b16 %v1796
        %v2085 = vunpack.c.l.b16 %v1797
        %v2086 = vunpack.c.l.b16 %v1798
        %v2087 = vunpack.c.l.b16 %v1799
        %v2088 = vunpack.c.l.b16 %v1800
        %v2089 = vunpack.c.l.b16 %v1801
        %v2090 = vunpack.c.l.b16 %v1802
        %v2091 = vunpack.c.l.b16 %v1803
        %v2092 = vunpack.c.l.b16 %v1804
        %v2093 = vunpack.c.l.b16 %v1805
        %v2094 = vunpack.c.l.b16 %v1806
        %v2095 = vunpack.c.l.b16 %v1807
        %v2096 = vunpack.c.l.b16 %v1808
        %v2097 = vunpack.c.l.b16 %v1809
        %v2098 = vunpack.c.l.b16 %v1810
        %v2099 = vunpack.c.l.b16 %v1811
        %v2100 = vunpack.c.l.b16 %v1812
        %v2101 = vunpack.c.l.b16 %v1813
        %v2102 = vunpack.c.l.b16 %v1814
        %v2103 = vunpack.c.l.b16 %v1815
        %v2104 = vunpack.c.l.b16 %v1816
        %v2105 = vunpack.c.l.b16 %v1817
        %v2106 = vunpack.c.l.b16 %v1818
        %v2107 = vunpack.c.l.b16 %v1819
        %v2108 = vunpack.c.l.b16 %v1820
        %v2109 = vunpack.c.l.b16 %v1821
        %v2110 = vunpack.c.l.b16 %v1822
        %v2111 = vunpack.c.l.b16 %v1823
        %v2112 = vunpack.c.l.b16 %v1824
        %v2113 = vunpack.c.l.b16 %v1825
        %v2114 = vunpack.c.l.b16 %v1826
        %v2115 = vunpack.c.l.b16 %v1827
        %v2116 = vunpack.c.l.b16 %v1828
        %v2117 = vunpack.c.l.b16 %v1829
        %v2118 = vunpack.c.l.b16 %v1830
        %v2119 = vunpack.c.l.b16 %v1831
        %v2120 = vunpack.c.l.b16 %v1832
        %v2121 = vunpack.c.l.b16 %v1833
        %v2122 = vunpack.c.l.b16 %v1834
        %v2123 = vunpack.c.l.b16 %v1835
        %v2124 = vunpack.c.l.b16 %v1836
        %v2125 = vunpack.c.l.b16 %v1837
        %v2126 = vunpack.c.l.b16 %v1838
        %v2127 = vunpack.c.l.b16 %v1839
        %v2128 = vunpack.c.l.b16 %v1840
        %v2129 = vunpack.c.l.b16 %v1841
        %v2130 = vunpack.c.l.b16 %v1842
        %v2131 = vunpack.c.l.b16 %v1843
        %v2132 = vunpack.c.l.b16 %v1844
        %v2133 = vunpack.c.l.b16 %v1845
        %v2134 = vunpack.c.l.b16 %v1846
        %v2135 = vunpack.c.l.b16 %v1847
        %v2136 = vunpack.c.l.b16 %v1848
        %v2137 = vunpack.c.l.b16 %v1849
        %v2138 = vunpack.c.l.b16 %v1850
        %v2139 = vunpack.c.l.b16 %v1851
        %v2140 = vunpack.c.l.b16 %v1852
        %v2141 = vunpack.c.l.b16 %v1853
        %v2142 = vunpack.c.l.b16 %v1854
        %v2143 = vunpack.c.l.b16 %v1855
        %v2144 = vunpack.c.l.b16 %v1856
        %v2145 = vunpack.c.l.b16 %v1857
        %v2146 = vunpack.c.l.b16 %v1858
        %v2147 = vunpack.c.l.b16 %v1859
        %v2148 = vunpack.c.l.b16 %v1860
        %v2149 = vunpack.c.l.b16 %v1861
        %v2150 = vunpack.c.l.b16 %v1862
        %v2151 = vunpack.c.l.b16 %v1863
        %v2152 = vunpack.c.l.b16 %v1864
        %v2153 = vunpack.c.l.b16 %v1865
        %v2154 = vunpack.c.l.b16 %v1866
        %v2155 = vunpack.c.l.b16 %v1867
        %v2156 = vunpack.c.l.b16 %v1868
        %v2157 = vunpack.c.l.b16 %v1869
        %v2158 = vunpack.c.l.b16 %v1870
        %v2159 = vunpack.c.l.b16 %v1871
        %v2160 = vunpack.c.l.b16 %v1872
        %v2161 = vunpack.c.l.b16 %v1873
        %v2162 = vunpack.c.l.b16 %v1874
        %v2163 = vunpack.c.l.b16 %v1875
        %v2164 = vunpack.c.l.b16 %v1876
        %v2165 = vunpack.c.l.b16 %v1877
        %v2166 = vunpack.c.l.b16 %v1878
        %v2167 = vunpack.c.l.b16 %v1879
        %v2168 = vunpack.c.l.b16 %v1880
        %v2169 = vunpack.c.l.b16 %v1881
        %v2170 = vunpack.c.l.b16 %v1882
        %v2171 = vunpack.c.l.b16 %v1883
        %v2172 = vunpack.c.l.b16 %v1884
        %v2173 = vunpack.c.l.b16 %v1885
        %v2174 = vunpack.c.l.b16 %v1886
        %v2175 = vunpack.c.l.b16 %v1887
        %v2176 = vunpack.c.l.b16 %v1888
        %v2177 = vunpack.c.l.b16 %v1889
        %v2178 = vunpack.c.l.b16 %v1890
        %v2179 = vunpack.c.l.b16 %v1891
        %v2180 = vunpack.c.l.b16 %v1892
        %v2181 = vunpack.c.l.b16 %v1893
        %v2182 = vunpack.c.l.b16 %v1894
        %v2183 = vunpack.c.l.b16 %v1895
        %v2184 = vunpack.c.l.b16 %v1896
        %v2185 = vunpack.c.l.b16 %v1897
        %v2186 = vunpack.c.l.b16 %v1898
        %v2187 = vunpack.c.l.b16 %v1899
        %v2188 = vunpack.c.l.b16 %v1900
        %v2189 = vunpack.c.l.b16 %v1901
        %v2190 = vunpack.c.l.b16 %v1902
        %v2191 = vunpack.c.l.b16 %v1903
        %v2192 = vunpack.c.l.b16 %v1904
        %v2193 = vunpack.c.l.b16 %v1905
        %v2194 = vunpack.c.l.b16 %v1906
        %v2195 = vunpack.c.l.b16 %v1907
        %v2196 = vunpack.c.l.b16 %v1908
        %v2197 = vunpack.c.l.b16 %v1909
        %v2198 = vunpack.c.l.b16 %v1910
        %v2199 = vunpack.c.l.b16 %v1911
        %v2200 = vunpack.c.l.b16 %v1912
        %v2201 = vunpack.c.l.b16 %v1913
        %v2202 = vunpack.c.l.b16 %v1914
        %v2203 = vunpack.c.l.b16 %v1915
        %v2204 = vunpack.c.l.b16 %v1916
        %v2205 = vunpack.c.l.b16 %v1917
        %v2206 = vunpack.c.l.b16 %v1918
        %v2207 = vunpack.c.l.b16 %v1919
        %v2208 = vunpack.c.l.b16 %v1920
        %v2209 = vunpack.c.l.b16 %v1921
        %v2210 = vunpack.c.l.b16 %v1922
        %v2211 = vunpack.c.l.b16 %v1923
        %v2212 = vunpack.c.l.b16 %v1924
        %v2213 = vunpack.c.l.b16 %v1925
        %v2214 = vunpack.c.l.b16 %v1926
        %v2215 = vunpack.c.l.b16 %v1927
        %v2216 = vunpack.c.l.b16 %v1928
        %v2217 = vunpack.c.l.b16 %v1929
        %v2218 = vunpack.c.l.b16 %v1930
        %v2219 = vunpack.c.l.b16 %v1931
        %v2220 = vunpack.c.l.b16 %v1932
        %v2221 = vunpack.c.l.b16 %v1933
        %v2222 = vunpack.c.l.b16 %v1934
        %v2223 = vunpack.c.l.b16 %v1935
        %v2224 = vpack.c.b16 %v2081, %v2080
        %v2225 = vpack.c.b16 %v2083, %v2082
        %v2226 = vpack.c.b16 %v2085, %v2084
        %v2227 = vpack.c.b16 %v2087, %v2086
        %v2228 = vpack.c.b16 %v2089, %v2088
        %v2229 = vpack.c.b16 %v2091, %v2090
        %v2230 = vpack.c.b16 %v2093, %v2092
        %v2231 = vpack.c.b16 %v2095, %v2094
        %v2232 = vpack.c.b16 %v2097, %v2096
        %v2233 = vpack.c.b16 %v2099, %v2098
        %v2234 = vpack.c.b16 %v2101, %v2100
        %v2235 = vpack.c.b16 %v2103, %v2102
        %v2236 = vpack.c.b16 %v2105, %v2104
        %v2237 = vpack.c.b16 %v2107, %v2106
        %v2238 = vpack.c.b16 %v2109, %v2108
        %v2239 = vpack.c.b16 %v2111, %v2110
        %v2240 = vpack.c.b16 %v2113, %v2112
        %v2241 = vpack.c.b16 %v2115, %v2114
        %v2242 = vpack.c.b16 %v2117, %v2116
        %v2243 = vpack.c.b16 %v2119, %v2118
        %v2244 = vpack.c.b16 %v2121, %v2120
        %v2245 = vpack.c.b16 %v2123, %v2122
        %v2246 = vpack.c.b16 %v2125, %v2124
        %v2247 = vpack.c.b16 %v2127, %v2126
        %v2248 = vpack.c.b16 %v2129, %v2128
        %v2249 = vpack.c.b16 %v2131, %v2130
        %v2250 = vpack.c.b16 %v2133, %v2132
        %v2251 = vpack.c.b16 %v2135, %v2134
        %v2252 = vpack.c.b16 %v2137, %v2136
        %v2253 = vpack.c.b16 %v2139, %v2138
        %v2254 = vpack.c.b16 %v2141, %v2140
        %v2255 = vpack.c.b16 %v2143, %v2142
        %v2256 = vpack.c.b16 %v2145, %v2144
        %v2257 = vpack.c.b16 %v2147, %v2146
        %v2258 = vpack.c.b16 %v2149, %v2148
        %v2259 = vpack.c.b16 %v2151, %v2150
        %v2260 = vpack.c.b16 %v2153, %v2152
        %v2261 = vpack.c.b16 %v2155, %v2154
        %v2262 = vpack.c.b16 %v2157, %v2156
        %v2263 = vpack.c.b16 %v2159, %v2158
        %v2264 = vpack.c.b16 %v2161, %v2160
        %v2265 = vpack.c.b16 %v2163, %v2162
        %v2266 = vpack.c.b16 %v2165, %v2164
        %v2267 = vpack.c.b16 %v2167, %v2166
        %v2268 = vpack.c.b16 %v2169, %v2168
        %v2269 = vpack.c.b16 %v2171, %v2170
        %v2270 = vpack.c.b16 %v2173, %v2172
        %v2271 = vpack.c.b16 %v2175, %v2174
        %v2272 = vpack.c.b16 %v2177, %v2176
        %v2273 = vpack.c.b16 %v2179, %v2178
        %v2274 = vpack.c.b16 %v2181, %v2180
        %v2275 = vpack.c.b16 %v2183, %v2182
        %v2276 = vpack.c.b16 %v2185, %v2184
        %v2277 = vpack.c.b16 %v2187, %v2186
        %v2278 = vpack.c.b16 %v2189, %v2188
        %v2279 = vpack.c.b16 %v2191, %v2190
        %v2280 = vpack.c.b16 %v2193, %v2192
        %v2281 = vpack.c.b16 %v2195, %v2194
        %v2282 = vpack.c.b16 %v2197, %v2196
        %v2283 = vpack.c.b16 %v2199, %v2198
        %v2284 = vpack.c.b16 %v2201, %v2200
        %v2285 = vpack.c.b16 %v2203, %v2202
        %v2286 = vpack.c.b16 %v2205, %v2204
        %v2287 = vpack.c.b16 %v2207, %v2206
        %v2288 = vpack.c.b16 %v2209, %v2208
        %v2289 = vpack.c.b16 %v2211, %v2210
        %v2290 = vpack.c.b16 %v2213, %v2212
        %v2291 = vpack.c.b16 %v2215, %v2214
        %v2292 = vpack.c.b16 %v2217, %v2216
        %v2293 = vpack.c.b16 %v2219, %v2218
        %v2294 = vpack.c.b16 %v2221, %v2220
        %v2295 = vpack.c.b16 %v2223, %v2222
        %2368 = vmatpush.bf16.msra.mxu0 %v2231
        %2369 = vmatpush.bf16.msra.mxu0 %v2230
        %2370 = vmatpush.bf16.msra.mxu0 %v2229
        %2371 = vmatpush.bf16.msra.mxu0 %v2228
        %2372 = vmatpush.bf16.msra.mxu0 %v2227
        %2373 = vmatpush.bf16.msra.mxu0 %v2226
        %2374 = vmatpush.bf16.msra.mxu0 %v2225
        %2375 = vmatpush.bf16.msra.mxu0 %v2224
        %2376 = vmatmul.bf16.gmra.mxu0 %v1387
        %v2377 = vpop.f32.mrf.mxu0
        %v2378 = vadd.f32 0.0, %v2377
        %v2379 = vpop.f32.mrf.mxu0
        %v2380 = vadd.f32 0.0, %v2379
        %2381 = vmatmul.bf16.gmra.mxu0 %v1388
        %v2382 = vpop.f32.mrf.mxu0
        %v2383 = vadd.f32 0.0, %v2382
        %v2384 = vpop.f32.mrf.mxu0
        %v2385 = vadd.f32 0.0, %v2384
        %2386 = vmatmul.bf16.gmra.mxu0 %v1389
        %v2387 = vpop.f32.mrf.mxu0
        %v2388 = vadd.f32 0.0, %v2387
        %v2389 = vpop.f32.mrf.mxu0
        %v2390 = vadd.f32 0.0, %v2389
        %2391 = vmatmul.bf16.gmra.mxu0 %v1390
        %v2392 = vpop.f32.mrf.mxu0
        %v2393 = vadd.f32 0.0, %v2392
        %v2394 = vpop.f32.mrf.mxu0
        %v2395 = vadd.f32 0.0, %v2394
        %2396 = vmatmul.bf16.gmra.mxu0 %v1391
        %v2397 = vpop.f32.mrf.mxu0
        %v2398 = vadd.f32 0.0, %v2397
        %v2399 = vpop.f32.mrf.mxu0
        %v2400 = vadd.f32 0.0, %v2399
        %2401 = vmatmul.bf16.gmra.mxu0 %v1392
        %v2402 = vpop.f32.mrf.mxu0
        %v2403 = vadd.f32 0.0, %v2402
        %v2404 = vpop.f32.mrf.mxu0
        %v2405 = vadd.f32 0.0, %v2404
        %2406 = vmatmul.bf16.gmra.mxu0 %v1393
        %v2407 = vpop.f32.mrf.mxu0
        %v2408 = vadd.f32 0.0, %v2407
        %v2409 = vpop.f32.mrf.mxu0
        %v2410 = vadd.f32 0.0, %v2409
        %2411 = vmatmul.bf16.gmra.mxu0 %v1394
        %v2412 = vpop.f32.mrf.mxu0
        %v2413 = vadd.f32 0.0, %v2412
        %v2414 = vpop.f32.mrf.mxu0
        %v2415 = vadd.f32 0.0, %v2414
        %2416 = vmatmul.bf16.gmra.mxu0 %v1395
        %v2417 = vpop.f32.mrf.mxu0
        %v2418 = vadd.f32 0.0, %v2417
        %v2419 = vpop.f32.mrf.mxu0
        %v2420 = vadd.f32 0.0, %v2419
        %2421 = vmatmul.bf16.gmra.mxu0 %v1396
        %v2422 = vpop.f32.mrf.mxu0
        %v2423 = vadd.f32 0.0, %v2422
        %v2424 = vpop.f32.mrf.mxu0
        %v2425 = vadd.f32 0.0, %v2424
        %2426 = vmatmul.bf16.gmra.mxu0 %v1397
        %v2427 = vpop.f32.mrf.mxu0
        %v2428 = vadd.f32 0.0, %v2427
        %v2429 = vpop.f32.mrf.mxu0
        %v2430 = vadd.f32 0.0, %v2429
        %2431 = vmatmul.bf16.gmra.mxu0 %v1398
        %v2432 = vpop.f32.mrf.mxu0
        %v2433 = vadd.f32 0.0, %v2432
        %v2434 = vpop.f32.mrf.mxu0
        %v2435 = vadd.f32 0.0, %v2434
        %2436 = vmatmul.bf16.gmra.mxu0 %v1399
        %v2437 = vpop.f32.mrf.mxu0
        %v2438 = vadd.f32 0.0, %v2437
        %v2439 = vpop.f32.mrf.mxu0
        %v2440 = vadd.f32 0.0, %v2439
        %2441 = vmatmul.bf16.gmra.mxu0 %v1400
        %v2442 = vpop.f32.mrf.mxu0
        %v2443 = vadd.f32 0.0, %v2442
        %v2444 = vpop.f32.mrf.mxu0
        %v2445 = vadd.f32 0.0, %v2444
        %2446 = vmatmul.bf16.gmra.mxu0 %v1401
        %v2447 = vpop.f32.mrf.mxu0
        %v2448 = vadd.f32 0.0, %v2447
        %v2449 = vpop.f32.mrf.mxu0
        %v2450 = vadd.f32 0.0, %v2449
        %2451 = vmatmul.bf16.gmra.mxu0 %v1402
        %v2452 = vpop.f32.mrf.mxu0
        %v2453 = vadd.f32 0.0, %v2452
        %v2454 = vpop.f32.mrf.mxu0
        %v2455 = vadd.f32 0.0, %v2454
        %2456 = vdwg.mxu0
        %2457 = vmatpush.bf16.msra.mxu0 %v2239
        %2458 = vmatpush.bf16.msra.mxu0 %v2238
        %2459 = vmatpush.bf16.msra.mxu0 %v2237
        %2460 = vmatpush.bf16.msra.mxu0 %v2236
        %2461 = vmatpush.bf16.msra.mxu0 %v2235
        %2462 = vmatpush.bf16.msra.mxu0 %v2234
        %2463 = vmatpush.bf16.msra.mxu0 %v2233
        %2464 = vmatpush.bf16.msra.mxu0 %v2232
        %2465 = vmatmul.bf16.gmra.mxu0 %v1478
        %v2466 = vpop.f32.mrf.mxu0
        %v2467 = vadd.f32 %v2378, %v2466
        %v2468 = vpop.f32.mrf.mxu0
        %v2469 = vadd.f32 %v2380, %v2468
        %2470 = vmatmul.bf16.gmra.mxu0 %v1490
        %v2471 = vpop.f32.mrf.mxu0
        %v2472 = vadd.f32 %v2383, %v2471
        %v2473 = vpop.f32.mrf.mxu0
        %v2474 = vadd.f32 %v2385, %v2473
        %2475 = vmatmul.bf16.gmra.mxu0 %v1502
        %v2476 = vpop.f32.mrf.mxu0
        %v2477 = vadd.f32 %v2388, %v2476
        %v2478 = vpop.f32.mrf.mxu0
        %v2479 = vadd.f32 %v2390, %v2478
        %2480 = vmatmul.bf16.gmra.mxu0 %v1514
        %v2481 = vpop.f32.mrf.mxu0
        %v2482 = vadd.f32 %v2393, %v2481
        %v2483 = vpop.f32.mrf.mxu0
        %v2484 = vadd.f32 %v2395, %v2483
        %2485 = vmatmul.bf16.gmra.mxu0 %v1526
        %v2486 = vpop.f32.mrf.mxu0
        %v2487 = vadd.f32 %v2398, %v2486
        %v2488 = vpop.f32.mrf.mxu0
        %v2489 = vadd.f32 %v2400, %v2488
        %2490 = vmatmul.bf16.gmra.mxu0 %v1538
        %v2491 = vpop.f32.mrf.mxu0
        %v2492 = vadd.f32 %v2403, %v2491
        %v2493 = vpop.f32.mrf.mxu0
        %v2494 = vadd.f32 %v2405, %v2493
        %2495 = vmatmul.bf16.gmra.mxu0 %v1550
        %v2496 = vpop.f32.mrf.mxu0
        %v2497 = vadd.f32 %v2408, %v2496
        %v2498 = vpop.f32.mrf.mxu0
        %v2499 = vadd.f32 %v2410, %v2498
        %2500 = vmatmul.bf16.gmra.mxu0 %v1562
        %v2501 = vpop.f32.mrf.mxu0
        %v2502 = vadd.f32 %v2413, %v2501
        %v2503 = vpop.f32.mrf.mxu0
        %v2504 = vadd.f32 %v2415, %v2503
        %2505 = vmatmul.bf16.gmra.mxu0 %v1574
        %v2506 = vpop.f32.mrf.mxu0
        %v2507 = vadd.f32 %v2418, %v2506
        %v2508 = vpop.f32.mrf.mxu0
        %v2509 = vadd.f32 %v2420, %v2508
        %2510 = vmatmul.bf16.gmra.mxu0 %v1586
        %v2511 = vpop.f32.mrf.mxu0
        %v2512 = vadd.f32 %v2423, %v2511
        %v2513 = vpop.f32.mrf.mxu0
        %v2514 = vadd.f32 %v2425, %v2513
        %2515 = vmatmul.bf16.gmra.mxu0 %v1598
        %v2516 = vpop.f32.mrf.mxu0
        %v2517 = vadd.f32 %v2428, %v2516
        %v2518 = vpop.f32.mrf.mxu0
        %v2519 = vadd.f32 %v2430, %v2518
        %2520 = vmatmul.bf16.gmra.mxu0 %v1610
        %v2521 = vpop.f32.mrf.mxu0
        %v2522 = vadd.f32 %v2433, %v2521
        %v2523 = vpop.f32.mrf.mxu0
        %v2524 = vadd.f32 %v2435, %v2523
        %2525 = vmatmul.bf16.gmra.mxu0 %v1622
        %v2526 = vpop.f32.mrf.mxu0
        %v2527 = vadd.f32 %v2438, %v2526
        %v2528 = vpop.f32.mrf.mxu0
        %v2529 = vadd.f32 %v2440, %v2528
        %2530 = vmatmul.bf16.gmra.mxu0 %v1634
        %v2531 = vpop.f32.mrf.mxu0
        %v2532 = vadd.f32 %v2443, %v2531
        %v2533 = vpop.f32.mrf.mxu0
        %v2534 = vadd.f32 %v2445, %v2533
        %2535 = vmatmul.bf16.gmra.mxu0 %v1646
        %v2536 = vpop.f32.mrf.mxu0
        %v2537 = vadd.f32 %v2448, %v2536
        %v2538 = vpop.f32.mrf.mxu0
        %v2539 = vadd.f32 %v2450, %v2538
        %2540 = vmatmul.bf16.gmra.mxu0 %v1658
        %v2541 = vpop.f32.mrf.mxu0
        %v2542 = vadd.f32 %v2453, %v2541
        %v2543 = vpop.f32.mrf.mxu0
        %v2544 = vadd.f32 %v2455, %v2543
        %2545 = vdwg.mxu0
        %2546 = vmatpush.bf16.msra.mxu0 %v2247
        %2547 = vmatpush.bf16.msra.mxu0 %v2246
        %2548 = vmatpush.bf16.msra.mxu0 %v2245
        %2549 = vmatpush.bf16.msra.mxu0 %v2244
        %2550 = vmatpush.bf16.msra.mxu0 %v2243
        %2551 = vmatpush.bf16.msra.mxu0 %v2242
        %2552 = vmatpush.bf16.msra.mxu0 %v2241
        %2553 = vmatpush.bf16.msra.mxu0 %v2240
        %2554 = vmatmul.bf16.gmra.mxu0 %v1677
        %v2555 = vpop.f32.mrf.mxu0
        %v2556 = vadd.f32 %v2467, %v2555
        %v2557 = vpop.f32.mrf.mxu0
        %v2558 = vadd.f32 %v2469, %v2557
        %2559 = vmatmul.bf16.gmra.mxu0 %v1680
        %v2560 = vpop.f32.mrf.mxu0
        %v2561 = vadd.f32 %v2472, %v2560
        %v2562 = vpop.f32.mrf.mxu0
        %v2563 = vadd.f32 %v2474, %v2562
        %2564 = vmatmul.bf16.gmra.mxu0 %v1683
        %v2565 = vpop.f32.mrf.mxu0
        %v2566 = vadd.f32 %v2477, %v2565
        %v2567 = vpop.f32.mrf.mxu0
        %v2568 = vadd.f32 %v2479, %v2567
        %2569 = vmatmul.bf16.gmra.mxu0 %v1686
        %v2570 = vpop.f32.mrf.mxu0
        %v2571 = vadd.f32 %v2482, %v2570
        %v2572 = vpop.f32.mrf.mxu0
        %v2573 = vadd.f32 %v2484, %v2572
        %2574 = vmatmul.bf16.gmra.mxu0 %v1689
        %v2575 = vpop.f32.mrf.mxu0
        %v2576 = vadd.f32 %v2487, %v2575
        %v2577 = vpop.f32.mrf.mxu0
        %v2578 = vadd.f32 %v2489, %v2577
        %2579 = vmatmul.bf16.gmra.mxu0 %v1692
        %v2580 = vpop.f32.mrf.mxu0
        %v2581 = vadd.f32 %v2492, %v2580
        %v2582 = vpop.f32.mrf.mxu0
        %v2583 = vadd.f32 %v2494, %v2582
        %2584 = vmatmul.bf16.gmra.mxu0 %v1695
        %v2585 = vpop.f32.mrf.mxu0
        %v2586 = vadd.f32 %v2497, %v2585
        %v2587 = vpop.f32.mrf.mxu0
        %v2588 = vadd.f32 %v2499, %v2587
        %2589 = vmatmul.bf16.gmra.mxu0 %v1698
        %v2590 = vpop.f32.mrf.mxu0
        %v2591 = vadd.f32 %v2502, %v2590
        %v2592 = vpop.f32.mrf.mxu0
        %v2593 = vadd.f32 %v2504, %v2592
        %2594 = vmatmul.bf16.gmra.mxu0 %v1701
        %v2595 = vpop.f32.mrf.mxu0
        %v2596 = vadd.f32 %v2507, %v2595
        %v2597 = vpop.f32.mrf.mxu0
        %v2598 = vadd.f32 %v2509, %v2597
        %2599 = vmatmul.bf16.gmra.mxu0 %v1704
        %v2600 = vpop.f32.mrf.mxu0
        %v2601 = vadd.f32 %v2512, %v2600
        %v2602 = vpop.f32.mrf.mxu0
        %v2603 = vadd.f32 %v2514, %v2602
        %2604 = vmatmul.bf16.gmra.mxu0 %v1707
        %v2605 = vpop.f32.mrf.mxu0
        %v2606 = vadd.f32 %v2517, %v2605
        %v2607 = vpop.f32.mrf.mxu0
        %v2608 = vadd.f32 %v2519, %v2607
        %2609 = vmatmul.bf16.gmra.mxu0 %v1710
        %v2610 = vpop.f32.mrf.mxu0
        %v2611 = vadd.f32 %v2522, %v2610
        %v2612 = vpop.f32.mrf.mxu0
        %v2613 = vadd.f32 %v2524, %v2612
        %2614 = vmatmul.bf16.gmra.mxu0 %v1713
        %v2615 = vpop.f32.mrf.mxu0
        %v2616 = vadd.f32 %v2527, %v2615
        %v2617 = vpop.f32.mrf.mxu0
        %v2618 = vadd.f32 %v2529, %v2617
        %2619 = vmatmul.bf16.gmra.mxu0 %v1716
        %v2620 = vpop.f32.mrf.mxu0
        %v2621 = vadd.f32 %v2532, %v2620
        %v2622 = vpop.f32.mrf.mxu0
        %v2623 = vadd.f32 %v2534, %v2622
        %2624 = vmatmul.bf16.gmra.mxu0 %v1719
        %v2625 = vpop.f32.mrf.mxu0
        %v2626 = vadd.f32 %v2537, %v2625
        %v2627 = vpop.f32.mrf.mxu0
        %v2628 = vadd.f32 %v2539, %v2627
        %2629 = vmatmul.bf16.gmra.mxu0 %v1722
        %v2630 = vpop.f32.mrf.mxu0
        %v2631 = vadd.f32 %v2542, %v2630
        %v2632 = vpop.f32.mrf.mxu0
        %v2633 = vadd.f32 %v2544, %v2632
        %2634 = vdwg.mxu0
        %2635 = vmatpush.bf16.msra.mxu0 %v2255
        %2636 = vmatpush.bf16.msra.mxu0 %v2254
        %2637 = vmatpush.bf16.msra.mxu0 %v2253
        %2638 = vmatpush.bf16.msra.mxu0 %v2252
        %2639 = vmatpush.bf16.msra.mxu0 %v2251
        %2640 = vmatpush.bf16.msra.mxu0 %v2250
        %2641 = vmatpush.bf16.msra.mxu0 %v2249
        %2642 = vmatpush.bf16.msra.mxu0 %v2248
        %2643 = vmatmul.bf16.gmra.mxu0 %v1388
        %v2644 = vpop.f32.mrf.mxu0
        %v2645 = vadd.f32 %v2556, %v2644
        %v2646 = vpop.f32.mrf.mxu0
        %v2647 = vadd.f32 %v2558, %v2646
        %2648 = vmatmul.bf16.gmra.mxu0 %v1389
        %v2649 = vpop.f32.mrf.mxu0
        %v2650 = vadd.f32 %v2561, %v2649
        %v2651 = vpop.f32.mrf.mxu0
        %v2652 = vadd.f32 %v2563, %v2651
        %2653 = vmatmul.bf16.gmra.mxu0 %v1390
        %v2654 = vpop.f32.mrf.mxu0
        %v2655 = vadd.f32 %v2566, %v2654
        %v2656 = vpop.f32.mrf.mxu0
        %v2657 = vadd.f32 %v2568, %v2656
        %2658 = vmatmul.bf16.gmra.mxu0 %v1391
        %v2659 = vpop.f32.mrf.mxu0
        %v2660 = vadd.f32 %v2571, %v2659
        %v2661 = vpop.f32.mrf.mxu0
        %v2662 = vadd.f32 %v2573, %v2661
        %2663 = vmatmul.bf16.gmra.mxu0 %v1392
        %v2664 = vpop.f32.mrf.mxu0
        %v2665 = vadd.f32 %v2576, %v2664
        %v2666 = vpop.f32.mrf.mxu0
        %v2667 = vadd.f32 %v2578, %v2666
        %2668 = vmatmul.bf16.gmra.mxu0 %v1393
        %v2669 = vpop.f32.mrf.mxu0
        %v2670 = vadd.f32 %v2581, %v2669
        %v2671 = vpop.f32.mrf.mxu0
        %v2672 = vadd.f32 %v2583, %v2671
        %2673 = vmatmul.bf16.gmra.mxu0 %v1394
        %v2674 = vpop.f32.mrf.mxu0
        %v2675 = vadd.f32 %v2586, %v2674
        %v2676 = vpop.f32.mrf.mxu0
        %v2677 = vadd.f32 %v2588, %v2676
        %2678 = vmatmul.bf16.gmra.mxu0 %v1395
        %v2679 = vpop.f32.mrf.mxu0
        %v2680 = vadd.f32 %v2591, %v2679
        %v2681 = vpop.f32.mrf.mxu0
        %v2682 = vadd.f32 %v2593, %v2681
        %2683 = vmatmul.bf16.gmra.mxu0 %v1396
        %v2684 = vpop.f32.mrf.mxu0
        %v2685 = vadd.f32 %v2596, %v2684
        %v2686 = vpop.f32.mrf.mxu0
        %v2687 = vadd.f32 %v2598, %v2686
        %2688 = vmatmul.bf16.gmra.mxu0 %v1397
        %v2689 = vpop.f32.mrf.mxu0
        %v2690 = vadd.f32 %v2601, %v2689
        %v2691 = vpop.f32.mrf.mxu0
        %v2692 = vadd.f32 %v2603, %v2691
        %2693 = vmatmul.bf16.gmra.mxu0 %v1398
        %v2694 = vpop.f32.mrf.mxu0
        %v2695 = vadd.f32 %v2606, %v2694
        %v2696 = vpop.f32.mrf.mxu0
        %v2697 = vadd.f32 %v2608, %v2696
        %2698 = vmatmul.bf16.gmra.mxu0 %v1399
        %v2699 = vpop.f32.mrf.mxu0
        %v2700 = vadd.f32 %v2611, %v2699
        %v2701 = vpop.f32.mrf.mxu0
        %v2702 = vadd.f32 %v2613, %v2701
        %2703 = vmatmul.bf16.gmra.mxu0 %v1400
        %v2704 = vpop.f32.mrf.mxu0
        %v2705 = vadd.f32 %v2616, %v2704
        %v2706 = vpop.f32.mrf.mxu0
        %v2707 = vadd.f32 %v2618, %v2706
        %2708 = vmatmul.bf16.gmra.mxu0 %v1401
        %v2709 = vpop.f32.mrf.mxu0
        %v2710 = vadd.f32 %v2621, %v2709
        %v2711 = vpop.f32.mrf.mxu0
        %v2712 = vadd.f32 %v2623, %v2711
        %2713 = vmatmul.bf16.gmra.mxu0 %v1402
        %v2714 = vpop.f32.mrf.mxu0
        %v2715 = vadd.f32 %v2626, %v2714
        %v2716 = vpop.f32.mrf.mxu0
        %v2717 = vadd.f32 %v2628, %v2716
        %2718 = vmatmul.bf16.gmra.mxu0 %v1743
        %v2719 = vpop.f32.mrf.mxu0
        %v2720 = vadd.f32 %v2631, %v2719
        %v2721 = vpop.f32.mrf.mxu0
        %v2722 = vadd.f32 %v2633, %v2721
        %2723 = vdwg.mxu0
        %2724 = vmatpush.bf16.msra.mxu0 %v2263
        %2725 = vmatpush.bf16.msra.mxu0 %v2262
        %2726 = vmatpush.bf16.msra.mxu0 %v2261
        %2727 = vmatpush.bf16.msra.mxu0 %v2260
        %2728 = vmatpush.bf16.msra.mxu0 %v2259
        %2729 = vmatpush.bf16.msra.mxu0 %v2258
        %2730 = vmatpush.bf16.msra.mxu0 %v2257
        %2731 = vmatpush.bf16.msra.mxu0 %v2256
        %2732 = vmatmul.bf16.gmra.mxu0 %v1490
        %v2733 = vpop.f32.mrf.mxu0
        %v2734 = vadd.f32 %v2645, %v2733
        %v2735 = vpop.f32.mrf.mxu0
        %v2736 = vadd.f32 %v2647, %v2735
        %2737 = vmatmul.bf16.gmra.mxu0 %v1502
        %v2738 = vpop.f32.mrf.mxu0
        %v2739 = vadd.f32 %v2650, %v2738
        %v2740 = vpop.f32.mrf.mxu0
        %v2741 = vadd.f32 %v2652, %v2740
        %2742 = vmatmul.bf16.gmra.mxu0 %v1514
        %v2743 = vpop.f32.mrf.mxu0
        %v2744 = vadd.f32 %v2655, %v2743
        %v2745 = vpop.f32.mrf.mxu0
        %v2746 = vadd.f32 %v2657, %v2745
        %2747 = vmatmul.bf16.gmra.mxu0 %v1526
        %v2748 = vpop.f32.mrf.mxu0
        %v2749 = vadd.f32 %v2660, %v2748
        %v2750 = vpop.f32.mrf.mxu0
        %v2751 = vadd.f32 %v2662, %v2750
        %2752 = vmatmul.bf16.gmra.mxu0 %v1538
        %v2753 = vpop.f32.mrf.mxu0
        %v2754 = vadd.f32 %v2665, %v2753
        %v2755 = vpop.f32.mrf.mxu0
        %v2756 = vadd.f32 %v2667, %v2755
        %2757 = vmatmul.bf16.gmra.mxu0 %v1550
        %v2758 = vpop.f32.mrf.mxu0
        %v2759 = vadd.f32 %v2670, %v2758
        %v2760 = vpop.f32.mrf.mxu0
        %v2761 = vadd.f32 %v2672, %v2760
        %2762 = vmatmul.bf16.gmra.mxu0 %v1562
        %v2763 = vpop.f32.mrf.mxu0
        %v2764 = vadd.f32 %v2675, %v2763
        %v2765 = vpop.f32.mrf.mxu0
        %v2766 = vadd.f32 %v2677, %v2765
        %2767 = vmatmul.bf16.gmra.mxu0 %v1574
        %v2768 = vpop.f32.mrf.mxu0
        %v2769 = vadd.f32 %v2680, %v2768
        %v2770 = vpop.f32.mrf.mxu0
        %v2771 = vadd.f32 %v2682, %v2770
        %2772 = vmatmul.bf16.gmra.mxu0 %v1586
        %v2773 = vpop.f32.mrf.mxu0
        %v2774 = vadd.f32 %v2685, %v2773
        %v2775 = vpop.f32.mrf.mxu0
        %v2776 = vadd.f32 %v2687, %v2775
        %2777 = vmatmul.bf16.gmra.mxu0 %v1598
        %v2778 = vpop.f32.mrf.mxu0
        %v2779 = vadd.f32 %v2690, %v2778
        %v2780 = vpop.f32.mrf.mxu0
        %v2781 = vadd.f32 %v2692, %v2780
        %2782 = vmatmul.bf16.gmra.mxu0 %v1610
        %v2783 = vpop.f32.mrf.mxu0
        %v2784 = vadd.f32 %v2695, %v2783
        %v2785 = vpop.f32.mrf.mxu0
        %v2786 = vadd.f32 %v2697, %v2785
        %2787 = vmatmul.bf16.gmra.mxu0 %v1622
        %v2788 = vpop.f32.mrf.mxu0
        %v2789 = vadd.f32 %v2700, %v2788
        %v2790 = vpop.f32.mrf.mxu0
        %v2791 = vadd.f32 %v2702, %v2790
        %2792 = vmatmul.bf16.gmra.mxu0 %v1634
        %v2793 = vpop.f32.mrf.mxu0
        %v2794 = vadd.f32 %v2705, %v2793
        %v2795 = vpop.f32.mrf.mxu0
        %v2796 = vadd.f32 %v2707, %v2795
        %2797 = vmatmul.bf16.gmra.mxu0 %v1646
        %v2798 = vpop.f32.mrf.mxu0
        %v2799 = vadd.f32 %v2710, %v2798
        %v2800 = vpop.f32.mrf.mxu0
        %v2801 = vadd.f32 %v2712, %v2800
        %2802 = vmatmul.bf16.gmra.mxu0 %v1658
        %v2803 = vpop.f32.mrf.mxu0
        %v2804 = vadd.f32 %v2715, %v2803
        %v2805 = vpop.f32.mrf.mxu0
        %v2806 = vadd.f32 %v2717, %v2805
        %2807 = vmatmul.bf16.gmra.mxu0 %v1759
        %v2808 = vpop.f32.mrf.mxu0
        %v2809 = vadd.f32 %v2720, %v2808
        %v2810 = vpop.f32.mrf.mxu0
        %v2811 = vadd.f32 %v2722, %v2810
        %2812 = vdwg.mxu0
        %2813 = vmatpush.bf16.msra.mxu0 %v2271
        %2814 = vmatpush.bf16.msra.mxu0 %v2270
        %2815 = vmatpush.bf16.msra.mxu0 %v2269
        %2816 = vmatpush.bf16.msra.mxu0 %v2268
        %2817 = vmatpush.bf16.msra.mxu0 %v2267
        %2818 = vmatpush.bf16.msra.mxu0 %v2266
        %2819 = vmatpush.bf16.msra.mxu0 %v2265
        %2820 = vmatpush.bf16.msra.mxu0 %v2264
        %2821 = vmatmul.bf16.gmra.mxu0 %v1680
        %v2822 = vpop.f32.mrf.mxu0
        %v2823 = vadd.f32 %v2734, %v2822
        %v2824 = vpop.f32.mrf.mxu0
        %v2825 = vadd.f32 %v2736, %v2824
        %2826 = vmatmul.bf16.gmra.mxu0 %v1683
        %v2827 = vpop.f32.mrf.mxu0
        %v2828 = vadd.f32 %v2739, %v2827
        %v2829 = vpop.f32.mrf.mxu0
        %v2830 = vadd.f32 %v2741, %v2829
        %2831 = vmatmul.bf16.gmra.mxu0 %v1686
        %v2832 = vpop.f32.mrf.mxu0
        %v2833 = vadd.f32 %v2744, %v2832
        %v2834 = vpop.f32.mrf.mxu0
        %v2835 = vadd.f32 %v2746, %v2834
        %2836 = vmatmul.bf16.gmra.mxu0 %v1689
        %v2837 = vpop.f32.mrf.mxu0
        %v2838 = vadd.f32 %v2749, %v2837
        %v2839 = vpop.f32.mrf.mxu0
        %v2840 = vadd.f32 %v2751, %v2839
        %2841 = vmatmul.bf16.gmra.mxu0 %v1692
        %v2842 = vpop.f32.mrf.mxu0
        %v2843 = vadd.f32 %v2754, %v2842
        %v2844 = vpop.f32.mrf.mxu0
        %v2845 = vadd.f32 %v2756, %v2844
        %2846 = vmatmul.bf16.gmra.mxu0 %v1695
        %v2847 = vpop.f32.mrf.mxu0
        %v2848 = vadd.f32 %v2759, %v2847
        %v2849 = vpop.f32.mrf.mxu0
        %v2850 = vadd.f32 %v2761, %v2849
        %2851 = vmatmul.bf16.gmra.mxu0 %v1698
        %v2852 = vpop.f32.mrf.mxu0
        %v2853 = vadd.f32 %v2764, %v2852
        %v2854 = vpop.f32.mrf.mxu0
        %v2855 = vadd.f32 %v2766, %v2854
        %2856 = vmatmul.bf16.gmra.mxu0 %v1701
        %v2857 = vpop.f32.mrf.mxu0
        %v2858 = vadd.f32 %v2769, %v2857
        %v2859 = vpop.f32.mrf.mxu0
        %v2860 = vadd.f32 %v2771, %v2859
        %2861 = vmatmul.bf16.gmra.mxu0 %v1704
        %v2862 = vpop.f32.mrf.mxu0
        %v2863 = vadd.f32 %v2774, %v2862
        %v2864 = vpop.f32.mrf.mxu0
        %v2865 = vadd.f32 %v2776, %v2864
        %2866 = vmatmul.bf16.gmra.mxu0 %v1707
        %v2867 = vpop.f32.mrf.mxu0
        %v2868 = vadd.f32 %v2779, %v2867
        %v2869 = vpop.f32.mrf.mxu0
        %v2870 = vadd.f32 %v2781, %v2869
        %2871 = vmatmul.bf16.gmra.mxu0 %v1710
        %v2872 = vpop.f32.mrf.mxu0
        %v2873 = vadd.f32 %v2784, %v2872
        %v2874 = vpop.f32.mrf.mxu0
        %v2875 = vadd.f32 %v2786, %v2874
        %2876 = vmatmul.bf16.gmra.mxu0 %v1713
        %v2877 = vpop.f32.mrf.mxu0
        %v2878 = vadd.f32 %v2789, %v2877
        %v2879 = vpop.f32.mrf.mxu0
        %v2880 = vadd.f32 %v2791, %v2879
        %2881 = vmatmul.bf16.gmra.mxu0 %v1716
        %v2882 = vpop.f32.mrf.mxu0
        %v2883 = vadd.f32 %v2794, %v2882
        %v2884 = vpop.f32.mrf.mxu0
        %v2885 = vadd.f32 %v2796, %v2884
        %2886 = vmatmul.bf16.gmra.mxu0 %v1719
        %v2887 = vpop.f32.mrf.mxu0
        %v2888 = vadd.f32 %v2799, %v2887
        %v2889 = vpop.f32.mrf.mxu0
        %v2890 = vadd.f32 %v2801, %v2889
        %2891 = vmatmul.bf16.gmra.mxu0 %v1722
        %v2892 = vpop.f32.mrf.mxu0
        %v2893 = vadd.f32 %v2804, %v2892
        %v2894 = vpop.f32.mrf.mxu0
        %v2895 = vadd.f32 %v2806, %v2894
        %2896 = vmatmul.bf16.gmra.mxu0 %v1763
        %v2897 = vpop.f32.mrf.mxu0
        %v2898 = vadd.f32 %v2809, %v2897
        %v2899 = vpop.f32.mrf.mxu0
        %v2900 = vadd.f32 %v2811, %v2899
        %2901 = vdwg.mxu0
        %2902 = vmatpush.bf16.msra.mxu0 %v2279
        %2903 = vmatpush.bf16.msra.mxu0 %v2278
        %2904 = vmatpush.bf16.msra.mxu0 %v2277
        %2905 = vmatpush.bf16.msra.mxu0 %v2276
        %2906 = vmatpush.bf16.msra.mxu0 %v2275
        %2907 = vmatpush.bf16.msra.mxu0 %v2274
        %2908 = vmatpush.bf16.msra.mxu0 %v2273
        %2909 = vmatpush.bf16.msra.mxu0 %v2272
        %2910 = vmatmul.bf16.gmra.mxu0 %v1389
        %v2911 = vpop.f32.mrf.mxu0
        %v2912 = vadd.f32 %v2823, %v2911
        %v2913 = vpop.f32.mrf.mxu0
        %v2914 = vadd.f32 %v2825, %v2913
        %2915 = vmatmul.bf16.gmra.mxu0 %v1390
        %v2916 = vpop.f32.mrf.mxu0
        %v2917 = vadd.f32 %v2828, %v2916
        %v2918 = vpop.f32.mrf.mxu0
        %v2919 = vadd.f32 %v2830, %v2918
        %2920 = vmatmul.bf16.gmra.mxu0 %v1391
        %v2921 = vpop.f32.mrf.mxu0
        %v2922 = vadd.f32 %v2833, %v2921
        %v2923 = vpop.f32.mrf.mxu0
        %v2924 = vadd.f32 %v2835, %v2923
        %2925 = vmatmul.bf16.gmra.mxu0 %v1392
        %v2926 = vpop.f32.mrf.mxu0
        %v2927 = vadd.f32 %v2838, %v2926
        %v2928 = vpop.f32.mrf.mxu0
        %v2929 = vadd.f32 %v2840, %v2928
        %2930 = vmatmul.bf16.gmra.mxu0 %v1393
        %v2931 = vpop.f32.mrf.mxu0
        %v2932 = vadd.f32 %v2843, %v2931
        %v2933 = vpop.f32.mrf.mxu0
        %v2934 = vadd.f32 %v2845, %v2933
        %2935 = vmatmul.bf16.gmra.mxu0 %v1394
        %v2936 = vpop.f32.mrf.mxu0
        %v2937 = vadd.f32 %v2848, %v2936
        %v2938 = vpop.f32.mrf.mxu0
        %v2939 = vadd.f32 %v2850, %v2938
        %2940 = vmatmul.bf16.gmra.mxu0 %v1395
        %v2941 = vpop.f32.mrf.mxu0
        %v2942 = vadd.f32 %v2853, %v2941
        %v2943 = vpop.f32.mrf.mxu0
        %v2944 = vadd.f32 %v2855, %v2943
        %2945 = vmatmul.bf16.gmra.mxu0 %v1396
        %v2946 = vpop.f32.mrf.mxu0
        %v2947 = vadd.f32 %v2858, %v2946
        %v2948 = vpop.f32.mrf.mxu0
        %v2949 = vadd.f32 %v2860, %v2948
        %2950 = vmatmul.bf16.gmra.mxu0 %v1397
        %v2951 = vpop.f32.mrf.mxu0
        %v2952 = vadd.f32 %v2863, %v2951
        %v2953 = vpop.f32.mrf.mxu0
        %v2954 = vadd.f32 %v2865, %v2953
        %2955 = vmatmul.bf16.gmra.mxu0 %v1398
        %v2956 = vpop.f32.mrf.mxu0
        %v2957 = vadd.f32 %v2868, %v2956
        %v2958 = vpop.f32.mrf.mxu0
        %v2959 = vadd.f32 %v2870, %v2958
        %2960 = vmatmul.bf16.gmra.mxu0 %v1399
        %v2961 = vpop.f32.mrf.mxu0
        %v2962 = vadd.f32 %v2873, %v2961
        %v2963 = vpop.f32.mrf.mxu0
        %v2964 = vadd.f32 %v2875, %v2963
        %2965 = vmatmul.bf16.gmra.mxu0 %v1400
        %v2966 = vpop.f32.mrf.mxu0
        %v2967 = vadd.f32 %v2878, %v2966
        %v2968 = vpop.f32.mrf.mxu0
        %v2969 = vadd.f32 %v2880, %v2968
        %2970 = vmatmul.bf16.gmra.mxu0 %v1401
        %v2971 = vpop.f32.mrf.mxu0
        %v2972 = vadd.f32 %v2883, %v2971
        %v2973 = vpop.f32.mrf.mxu0
        %v2974 = vadd.f32 %v2885, %v2973
        %2975 = vmatmul.bf16.gmra.mxu0 %v1402
        %v2976 = vpop.f32.mrf.mxu0
        %v2977 = vadd.f32 %v2888, %v2976
        %v2978 = vpop.f32.mrf.mxu0
        %v2979 = vadd.f32 %v2890, %v2978
        %2980 = vmatmul.bf16.gmra.mxu0 %v1743
        %v2981 = vpop.f32.mrf.mxu0
        %v2982 = vadd.f32 %v2893, %v2981
        %v2983 = vpop.f32.mrf.mxu0
        %v2984 = vadd.f32 %v2895, %v2983
        %2985 = vmatmul.bf16.gmra.mxu0 %v1769
        %v2986 = vpop.f32.mrf.mxu0
        %v2987 = vadd.f32 %v2898, %v2986
        %v2988 = vpop.f32.mrf.mxu0
        %v2989 = vadd.f32 %v2900, %v2988
        %2990 = vdwg.mxu0
        %2991 = vmatpush.bf16.msra.mxu0 %v2287
        %2992 = vmatpush.bf16.msra.mxu0 %v2286
        %2993 = vmatpush.bf16.msra.mxu0 %v2285
        %2994 = vmatpush.bf16.msra.mxu0 %v2284
        %2995 = vmatpush.bf16.msra.mxu0 %v2283
        %2996 = vmatpush.bf16.msra.mxu0 %v2282
        %2997 = vmatpush.bf16.msra.mxu0 %v2281
        %2998 = vmatpush.bf16.msra.mxu0 %v2280
        %2999 = vmatmul.bf16.gmra.mxu0 %v1502
        %v3000 = vpop.f32.mrf.mxu0
        %v3001 = vadd.f32 %v2912, %v3000
        %v3002 = vpop.f32.mrf.mxu0
        %v3003 = vadd.f32 %v2914, %v3002
        %3004 = vmatmul.bf16.gmra.mxu0 %v1514
        %v3005 = vpop.f32.mrf.mxu0
        %v3006 = vadd.f32 %v2917, %v3005
        %v3007 = vpop.f32.mrf.mxu0
        %v3008 = vadd.f32 %v2919, %v3007
        %3009 = vmatmul.bf16.gmra.mxu0 %v1526
        %v3010 = vpop.f32.mrf.mxu0
        %v3011 = vadd.f32 %v2922, %v3010
        %v3012 = vpop.f32.mrf.mxu0
        %v3013 = vadd.f32 %v2924, %v3012
        %3014 = vmatmul.bf16.gmra.mxu0 %v1538
        %v3015 = vpop.f32.mrf.mxu0
        %v3016 = vadd.f32 %v2927, %v3015
        %v3017 = vpop.f32.mrf.mxu0
        %v3018 = vadd.f32 %v2929, %v3017
        %3019 = vmatmul.bf16.gmra.mxu0 %v1550
        %v3020 = vpop.f32.mrf.mxu0
        %v3021 = vadd.f32 %v2932, %v3020
        %v3022 = vpop.f32.mrf.mxu0
        %v3023 = vadd.f32 %v2934, %v3022
        %3024 = vmatmul.bf16.gmra.mxu0 %v1562
        %v3025 = vpop.f32.mrf.mxu0
        %v3026 = vadd.f32 %v2937, %v3025
        %v3027 = vpop.f32.mrf.mxu0
        %v3028 = vadd.f32 %v2939, %v3027
        %3029 = vmatmul.bf16.gmra.mxu0 %v1574
        %v3030 = vpop.f32.mrf.mxu0
        %v3031 = vadd.f32 %v2942, %v3030
        %v3032 = vpop.f32.mrf.mxu0
        %v3033 = vadd.f32 %v2944, %v3032
        %3034 = vmatmul.bf16.gmra.mxu0 %v1586
        %v3035 = vpop.f32.mrf.mxu0
        %v3036 = vadd.f32 %v2947, %v3035
        %v3037 = vpop.f32.mrf.mxu0
        %v3038 = vadd.f32 %v2949, %v3037
        %3039 = vmatmul.bf16.gmra.mxu0 %v1598
        %v3040 = vpop.f32.mrf.mxu0
        %v3041 = vadd.f32 %v2952, %v3040
        %v3042 = vpop.f32.mrf.mxu0
        %v3043 = vadd.f32 %v2954, %v3042
        %3044 = vmatmul.bf16.gmra.mxu0 %v1610
        %v3045 = vpop.f32.mrf.mxu0
        %v3046 = vadd.f32 %v2957, %v3045
        %v3047 = vpop.f32.mrf.mxu0
        %v3048 = vadd.f32 %v2959, %v3047
        %3049 = vmatmul.bf16.gmra.mxu0 %v1622
        %v3050 = vpop.f32.mrf.mxu0
        %v3051 = vadd.f32 %v2962, %v3050
        %v3052 = vpop.f32.mrf.mxu0
        %v3053 = vadd.f32 %v2964, %v3052
        %3054 = vmatmul.bf16.gmra.mxu0 %v1634
        %v3055 = vpop.f32.mrf.mxu0
        %v3056 = vadd.f32 %v2967, %v3055
        %v3057 = vpop.f32.mrf.mxu0
        %v3058 = vadd.f32 %v2969, %v3057
        %3059 = vmatmul.bf16.gmra.mxu0 %v1646
        %v3060 = vpop.f32.mrf.mxu0
        %v3061 = vadd.f32 %v2972, %v3060
        %v3062 = vpop.f32.mrf.mxu0
        %v3063 = vadd.f32 %v2974, %v3062
        %3064 = vmatmul.bf16.gmra.mxu0 %v1658
        %v3065 = vpop.f32.mrf.mxu0
        %v3066 = vadd.f32 %v2977, %v3065
        %v3067 = vpop.f32.mrf.mxu0
        %v3068 = vadd.f32 %v2979, %v3067
        %3069 = vmatmul.bf16.gmra.mxu0 %v1759
        %v3070 = vpop.f32.mrf.mxu0
        %v3071 = vadd.f32 %v2982, %v3070
        %v3072 = vpop.f32.mrf.mxu0
        %v3073 = vadd.f32 %v2984, %v3072
        %3074 = vmatmul.bf16.gmra.mxu0 %v1785
        %v3075 = vpop.f32.mrf.mxu0
        %v3076 = vadd.f32 %v2987, %v3075
        %v3077 = vpop.f32.mrf.mxu0
        %v3078 = vadd.f32 %v2989, %v3077
        %3079 = vdwg.mxu0
        %3080 = vmatpush.bf16.msra.mxu0 %v2295
        %3081 = vmatpush.bf16.msra.mxu0 %v2294
        %3082 = vmatpush.bf16.msra.mxu0 %v2293
        %3083 = vmatpush.bf16.msra.mxu0 %v2292
        %3084 = vmatpush.bf16.msra.mxu0 %v2291
        %3085 = vmatpush.bf16.msra.mxu0 %v2290
        %3086 = vmatpush.bf16.msra.mxu0 %v2289
        %3087 = vmatpush.bf16.msra.mxu0 %v2288
        %3088 = vmatmul.bf16.gmra.mxu0 %v1683
        %v3089 = vpop.f32.mrf.mxu0
        %v3090 = vadd.f32 %v3001, %v3089
        %v3091 = vpop.f32.mrf.mxu0
        %v3092 = vadd.f32 %v3003, %v3091
        %3093 = vmatmul.bf16.gmra.mxu0 %v1686
        %v3094 = vpop.f32.mrf.mxu0
        %v3095 = vadd.f32 %v3006, %v3094
        %v3096 = vpop.f32.mrf.mxu0
        %v3097 = vadd.f32 %v3008, %v3096
        %3098 = vmatmul.bf16.gmra.mxu0 %v1689
        %v3099 = vpop.f32.mrf.mxu0
        %v3100 = vadd.f32 %v3011, %v3099
        %v3101 = vpop.f32.mrf.mxu0
        %v3102 = vadd.f32 %v3013, %v3101
        %3103 = vmatmul.bf16.gmra.mxu0 %v1692
        %v3104 = vpop.f32.mrf.mxu0
        %v3105 = vadd.f32 %v3016, %v3104
        %v3106 = vpop.f32.mrf.mxu0
        %v3107 = vadd.f32 %v3018, %v3106
        %3108 = vmatmul.bf16.gmra.mxu0 %v1695
        %v3109 = vpop.f32.mrf.mxu0
        %v3110 = vadd.f32 %v3021, %v3109
        %v3111 = vpop.f32.mrf.mxu0
        %v3112 = vadd.f32 %v3023, %v3111
        %3113 = vmatmul.bf16.gmra.mxu0 %v1698
        %v3114 = vpop.f32.mrf.mxu0
        %v3115 = vadd.f32 %v3026, %v3114
        %v3116 = vpop.f32.mrf.mxu0
        %v3117 = vadd.f32 %v3028, %v3116
        %3118 = vmatmul.bf16.gmra.mxu0 %v1701
        %v3119 = vpop.f32.mrf.mxu0
        %v3120 = vadd.f32 %v3031, %v3119
        %v3121 = vpop.f32.mrf.mxu0
        %v3122 = vadd.f32 %v3033, %v3121
        %3123 = vmatmul.bf16.gmra.mxu0 %v1704
        %v3124 = vpop.f32.mrf.mxu0
        %v3125 = vadd.f32 %v3036, %v3124
        %v3126 = vpop.f32.mrf.mxu0
        %v3127 = vadd.f32 %v3038, %v3126
        %3128 = vmatmul.bf16.gmra.mxu0 %v1707
        %v3129 = vpop.f32.mrf.mxu0
        %v3130 = vadd.f32 %v3041, %v3129
        %v3131 = vpop.f32.mrf.mxu0
        %v3132 = vadd.f32 %v3043, %v3131
        %3133 = vmatmul.bf16.gmra.mxu0 %v1710
        %v3134 = vpop.f32.mrf.mxu0
        %v3135 = vadd.f32 %v3046, %v3134
        %v3136 = vpop.f32.mrf.mxu0
        %v3137 = vadd.f32 %v3048, %v3136
        %3138 = vmatmul.bf16.gmra.mxu0 %v1713
        %v3139 = vpop.f32.mrf.mxu0
        %v3140 = vadd.f32 %v3051, %v3139
        %v3141 = vpop.f32.mrf.mxu0
        %v3142 = vadd.f32 %v3053, %v3141
        %3143 = vmatmul.bf16.gmra.mxu0 %v1716
        %v3144 = vpop.f32.mrf.mxu0
        %v3145 = vadd.f32 %v3056, %v3144
        %v3146 = vpop.f32.mrf.mxu0
        %v3147 = vadd.f32 %v3058, %v3146
        %3148 = vmatmul.bf16.gmra.mxu0 %v1719
        %v3149 = vpop.f32.mrf.mxu0
        %v3150 = vadd.f32 %v3061, %v3149
        %v3151 = vpop.f32.mrf.mxu0
        %v3152 = vadd.f32 %v3063, %v3151
        %3153 = vmatmul.bf16.gmra.mxu0 %v1722
        %v3154 = vpop.f32.mrf.mxu0
        %v3155 = vadd.f32 %v3066, %v3154
        %v3156 = vpop.f32.mrf.mxu0
        %v3157 = vadd.f32 %v3068, %v3156
        %3158 = vmatmul.bf16.gmra.mxu0 %v1763
        %v3159 = vpop.f32.mrf.mxu0
        %v3160 = vadd.f32 %v3071, %v3159
        %v3161 = vpop.f32.mrf.mxu0
        %v3162 = vadd.f32 %v3073, %v3161
        %3163 = vmatmul.bf16.gmra.mxu0 %v1789
        %v3164 = vpop.f32.mrf.mxu0
        %v3165 = vadd.f32 %v3076, %v3164
        %v3166 = vpop.f32.mrf.mxu0
        %v3167 = vadd.f32 %v3078, %v3166
        %3168 = vdwg.mxu0
        %v3313 = vunpack.c.l.b16 %v1125
        %v3314 = vunpack.c.l.b16 %v1126
        %v3315 = vunpack.c.l.b16 %v1127
        %v3316 = vunpack.c.l.b16 %v1128
        %v3317 = vunpack.c.l.b16 %v1129
        %v3318 = vunpack.c.l.b16 %v1130
        %v3319 = vunpack.c.l.b16 %v1131
        %v3320 = vunpack.c.l.b16 %v1132
        %v3321 = vunpack.c.l.b16 %v1133
        %v3322 = vunpack.c.l.b16 %v1134
        %v3323 = vunpack.c.l.b16 %v1135
        %v3324 = vunpack.c.l.b16 %v1136
        %v3325 = vunpack.c.l.b16 %v1137
        %v3326 = vunpack.c.l.b16 %v1138
        %v3327 = vunpack.c.l.b16 %v1139
        %v3328 = vunpack.c.l.b16 %v1140
        %v3329 = vunpack.c.l.b16 %v1141
        %v3330 = vunpack.c.l.b16 %v1142
        %v3331 = vunpack.c.l.b16 %v1143
        %v3332 = vunpack.c.l.b16 %v1144
        %v3333 = vunpack.c.l.b16 %v1145
        %v3334 = vunpack.c.l.b16 %v1146
        %v3335 = vunpack.c.l.b16 %v1147
        %v3336 = vunpack.c.l.b16 %v1148
        %v3337 = vunpack.c.l.b16 %v1149
        %v3338 = vunpack.c.l.b16 %v1150
        %v3339 = vunpack.c.l.b16 %v1151
        %v3340 = vunpack.c.l.b16 %v1152
        %v3341 = vunpack.c.l.b16 %v1153
        %v3342 = vunpack.c.l.b16 %v1154
        %v3343 = vunpack.c.l.b16 %v1155
        %v3344 = vunpack.c.l.b16 %v1156
        %v3345 = vunpack.c.l.b16 %v1157
        %v3346 = vunpack.c.l.b16 %v1158
        %v3347 = vunpack.c.l.b16 %v1159
        %v3348 = vunpack.c.l.b16 %v1160
        %v3349 = vunpack.c.l.b16 %v1161
        %v3350 = vunpack.c.l.b16 %v1162
        %v3351 = vunpack.c.l.b16 %v1163
        %v3352 = vunpack.c.l.b16 %v1164
        %v3353 = vunpack.c.l.b16 %v1165
        %v3354 = vunpack.c.l.b16 %v1166
        %v3355 = vunpack.c.l.b16 %v1167
        %v3356 = vunpack.c.l.b16 %v1168
        %v3357 = vunpack.c.l.b16 %v1169
        %v3358 = vunpack.c.l.b16 %v1170
        %v3359 = vunpack.c.l.b16 %v1171
        %v3360 = vunpack.c.l.b16 %v1172
        %v3361 = vunpack.c.l.b16 %v1173
        %v3362 = vunpack.c.l.b16 %v1174
        %v3363 = vunpack.c.l.b16 %v1175
        %v3364 = vunpack.c.l.b16 %v1176
        %v3365 = vunpack.c.l.b16 %v1177
        %v3366 = vunpack.c.l.b16 %v1178
        %v3367 = vunpack.c.l.b16 %v1179
        %v3368 = vunpack.c.l.b16 %v1180
        %v3369 = vunpack.c.l.b16 %v1181
        %v3370 = vunpack.c.l.b16 %v1182
        %v3371 = vunpack.c.l.b16 %v1183
        %v3372 = vunpack.c.l.b16 %v1184
        %v3373 = vunpack.c.l.b16 %v1185
        %v3374 = vunpack.c.l.b16 %v1186
        %v3375 = vunpack.c.l.b16 %v1187
        %v3376 = vunpack.c.l.b16 %v1188
        %v3377 = vunpack.c.l.b16 %v1189
        %v3378 = vunpack.c.l.b16 %v1190
        %v3379 = vunpack.c.l.b16 %v1191
        %v3380 = vunpack.c.l.b16 %v1192
        %v3381 = vunpack.c.l.b16 %v1193
        %v3382 = vunpack.c.l.b16 %v1194
        %v3383 = vunpack.c.l.b16 %v1195
        %v3384 = vunpack.c.l.b16 %v1196
        %v3385 = vunpack.c.l.b16 %v1197
        %v3386 = vunpack.c.l.b16 %v1198
        %v3387 = vunpack.c.l.b16 %v1199
        %v3388 = vunpack.c.l.b16 %v1200
        %v3389 = vunpack.c.l.b16 %v1201
        %v3390 = vunpack.c.l.b16 %v1202
        %v3391 = vunpack.c.l.b16 %v1203
        %v3392 = vunpack.c.l.b16 %v1204
        %v3393 = vunpack.c.l.b16 %v1205
        %v3394 = vunpack.c.l.b16 %v1206
        %v3395 = vunpack.c.l.b16 %v1207
        %v3396 = vunpack.c.l.b16 %v1208
        %v3397 = vunpack.c.l.b16 %v1209
        %v3398 = vunpack.c.l.b16 %v1210
        %v3399 = vunpack.c.l.b16 %v1211
        %v3400 = vunpack.c.l.b16 %v1212
        %v3401 = vunpack.c.l.b16 %v1213
        %v3402 = vunpack.c.l.b16 %v1214
        %v3403 = vunpack.c.l.b16 %v1215
        %v3404 = vunpack.c.l.b16 %v1216
        %v3405 = vunpack.c.l.b16 %v1217
        %v3406 = vunpack.c.l.b16 %v1218
        %v3407 = vunpack.c.l.b16 %v1219
        %v3408 = vunpack.c.l.b16 %v1220
        %v3409 = vunpack.c.l.b16 %v1221
        %v3410 = vunpack.c.l.b16 %v1222
        %v3411 = vunpack.c.l.b16 %v1223
        %v3412 = vunpack.c.l.b16 %v1224
        %v3413 = vunpack.c.l.b16 %v1225
        %v3414 = vunpack.c.l.b16 %v1226
        %v3415 = vunpack.c.l.b16 %v1227
        %v3416 = vunpack.c.l.b16 %v1228
        %v3417 = vunpack.c.l.b16 %v1229
        %v3418 = vunpack.c.l.b16 %v1230
        %v3419 = vunpack.c.l.b16 %v1231
        %v3420 = vunpack.c.l.b16 %v1232
        %v3421 = vunpack.c.l.b16 %v1233
        %v3422 = vunpack.c.l.b16 %v1234
        %v3423 = vunpack.c.l.b16 %v1235
        %v3424 = vunpack.c.l.b16 %v1236
        %v3425 = vunpack.c.l.b16 %v1237
        %v3426 = vunpack.c.l.b16 %v1238
        %v3427 = vunpack.c.l.b16 %v1239
        %v3428 = vunpack.c.l.b16 %v1240
        %v3429 = vunpack.c.l.b16 %v1241
        %v3430 = vunpack.c.l.b16 %v1242
        %v3431 = vunpack.c.l.b16 %v1243
        %v3432 = vunpack.c.l.b16 %v1244
        %v3433 = vunpack.c.l.b16 %v1245
        %v3434 = vunpack.c.l.b16 %v1246
        %v3435 = vunpack.c.l.b16 %v1247
        %v3436 = vunpack.c.l.b16 %v1248
        %v3437 = vunpack.c.l.b16 %v1249
        %v3438 = vunpack.c.l.b16 %v1250
        %v3439 = vunpack.c.l.b16 %v1251
        %v3440 = vunpack.c.l.b16 %v1252
        %v3441 = vunpack.c.l.b16 %v1253
        %v3442 = vunpack.c.l.b16 %v1254
        %v3443 = vunpack.c.l.b16 %v1255
        %v3444 = vunpack.c.l.b16 %v1256
        %v3445 = vunpack.c.l.b16 %v1257
        %v3446 = vunpack.c.l.b16 %v1258
        %v3447 = vunpack.c.l.b16 %v1259
        %v3448 = vunpack.c.l.b16 %v1260
        %v3449 = vunpack.c.l.b16 %v1261
        %v3450 = vunpack.c.l.b16 %v1262
        %v3451 = vunpack.c.l.b16 %v1263
        %v3452 = vunpack.c.l.b16 %v1264
        %v3453 = vunpack.c.l.b16 %v1265
        %v3454 = vunpack.c.l.b16 %v1266
        %v3455 = vunpack.c.l.b16 %v1267
        %v3456 = vunpack.c.l.b16 %v1268
        %v3457 = vpack.c.b16 %v3314, %v3313
        %v3458 = vpack.c.b16 %v3316, %v3315
        %v3459 = vpack.c.b16 %v3318, %v3317
        %v3460 = vpack.c.b16 %v3320, %v3319
        %v3461 = vpack.c.b16 %v3322, %v3321
        %v3462 = vpack.c.b16 %v3324, %v3323
        %v3463 = vpack.c.b16 %v3326, %v3325
        %v3464 = vpack.c.b16 %v3328, %v3327
        %v3465 = vpack.c.b16 %v3330, %v3329
        %v3466 = vpack.c.b16 %v3332, %v3331
        %v3467 = vpack.c.b16 %v3334, %v3333
        %v3468 = vpack.c.b16 %v3336, %v3335
        %v3469 = vpack.c.b16 %v3338, %v3337
        %v3470 = vpack.c.b16 %v3340, %v3339
        %v3471 = vpack.c.b16 %v3342, %v3341
        %v3472 = vpack.c.b16 %v3344, %v3343
        %v3473 = vpack.c.b16 %v3346, %v3345
        %v3474 = vpack.c.b16 %v3348, %v3347
        %v3475 = vpack.c.b16 %v3350, %v3349
        %v3476 = vpack.c.b16 %v3352, %v3351
        %v3477 = vpack.c.b16 %v3354, %v3353
        %v3478 = vpack.c.b16 %v3356, %v3355
        %v3479 = vpack.c.b16 %v3358, %v3357
        %v3480 = vpack.c.b16 %v3360, %v3359
        %v3481 = vpack.c.b16 %v3362, %v3361
        %v3482 = vpack.c.b16 %v3364, %v3363
        %v3483 = vpack.c.b16 %v3366, %v3365
        %v3484 = vpack.c.b16 %v3368, %v3367
        %v3485 = vpack.c.b16 %v3370, %v3369
        %v3486 = vpack.c.b16 %v3372, %v3371
        %v3487 = vpack.c.b16 %v3374, %v3373
        %v3488 = vpack.c.b16 %v3376, %v3375
        %v3489 = vpack.c.b16 %v3378, %v3377
        %v3490 = vpack.c.b16 %v3380, %v3379
        %v3491 = vpack.c.b16 %v3382, %v3381
        %v3492 = vpack.c.b16 %v3384, %v3383
        %v3493 = vpack.c.b16 %v3386, %v3385
        %v3494 = vpack.c.b16 %v3388, %v3387
        %v3495 = vpack.c.b16 %v3390, %v3389
        %v3496 = vpack.c.b16 %v3392, %v3391
        %v3497 = vpack.c.b16 %v3394, %v3393
        %v3498 = vpack.c.b16 %v3396, %v3395
        %v3499 = vpack.c.b16 %v3398, %v3397
        %v3500 = vpack.c.b16 %v3400, %v3399
        %v3501 = vpack.c.b16 %v3402, %v3401
        %v3502 = vpack.c.b16 %v3404, %v3403
        %v3503 = vpack.c.b16 %v3406, %v3405
        %v3504 = vpack.c.b16 %v3408, %v3407
        %v3505 = vpack.c.b16 %v3410, %v3409
        %v3506 = vpack.c.b16 %v3412, %v3411
        %v3507 = vpack.c.b16 %v3414, %v3413
        %v3508 = vpack.c.b16 %v3416, %v3415
        %v3509 = vpack.c.b16 %v3418, %v3417
        %v3510 = vpack.c.b16 %v3420, %v3419
        %v3511 = vpack.c.b16 %v3422, %v3421
        %v3512 = vpack.c.b16 %v3424, %v3423
        %v3513 = vpack.c.b16 %v3426, %v3425
        %v3514 = vpack.c.b16 %v3428, %v3427
        %v3515 = vpack.c.b16 %v3430, %v3429
        %v3516 = vpack.c.b16 %v3432, %v3431
        %v3517 = vpack.c.b16 %v3434, %v3433
        %v3518 = vpack.c.b16 %v3436, %v3435
        %v3519 = vpack.c.b16 %v3438, %v3437
        %v3520 = vpack.c.b16 %v3440, %v3439
        %v3521 = vpack.c.b16 %v3442, %v3441
        %v3522 = vpack.c.b16 %v3444, %v3443
        %v3523 = vpack.c.b16 %v3446, %v3445
        %v3524 = vpack.c.b16 %v3448, %v3447
        %v3525 = vpack.c.b16 %v3450, %v3449
        %v3526 = vpack.c.b16 %v3452, %v3451
        %v3527 = vpack.c.b16 %v3454, %v3453
        %v3528 = vpack.c.b16 %v3456, %v3455
        %3601 = vmatpush.bf16.msra.mxu0 %v3464
        %3602 = vmatpush.bf16.msra.mxu0 %v3463
        %3603 = vmatpush.bf16.msra.mxu0 %v3462
        %3604 = vmatpush.bf16.msra.mxu0 %v3461
        %3605 = vmatpush.bf16.msra.mxu0 %v3460
        %3606 = vmatpush.bf16.msra.mxu0 %v3459
        %3607 = vmatpush.bf16.msra.mxu0 %v3458
        %3608 = vmatpush.bf16.msra.mxu0 %v3457
        %3609 = vmatmul.bf16.gmra.mxu0 %v719
        %v3610 = vpop.f32.mrf.mxu0
        %v3611 = vadd.f32 %v3090, %v3610
        %v3612 = vpop.f32.mrf.mxu0
        %v3613 = vadd.f32 %v3092, %v3612
        %3614 = vmatmul.bf16.gmra.mxu0 %v720
        %v3615 = vpop.f32.mrf.mxu0
        %v3616 = vadd.f32 %v3095, %v3615
        %v3617 = vpop.f32.mrf.mxu0
        %v3618 = vadd.f32 %v3097, %v3617
        %3619 = vmatmul.bf16.gmra.mxu0 %v721
        %v3620 = vpop.f32.mrf.mxu0
        %v3621 = vadd.f32 %v3100, %v3620
        %v3622 = vpop.f32.mrf.mxu0
        %v3623 = vadd.f32 %v3102, %v3622
        %3624 = vmatmul.bf16.gmra.mxu0 %v722
        %v3625 = vpop.f32.mrf.mxu0
        %v3626 = vadd.f32 %v3105, %v3625
        %v3627 = vpop.f32.mrf.mxu0
        %v3628 = vadd.f32 %v3107, %v3627
        %3629 = vmatmul.bf16.gmra.mxu0 %v723
        %v3630 = vpop.f32.mrf.mxu0
        %v3631 = vadd.f32 %v3110, %v3630
        %v3632 = vpop.f32.mrf.mxu0
        %v3633 = vadd.f32 %v3112, %v3632
        %3634 = vmatmul.bf16.gmra.mxu0 %v724
        %v3635 = vpop.f32.mrf.mxu0
        %v3636 = vadd.f32 %v3115, %v3635
        %v3637 = vpop.f32.mrf.mxu0
        %v3638 = vadd.f32 %v3117, %v3637
        %3639 = vmatmul.bf16.gmra.mxu0 %v725
        %v3640 = vpop.f32.mrf.mxu0
        %v3641 = vadd.f32 %v3120, %v3640
        %v3642 = vpop.f32.mrf.mxu0
        %v3643 = vadd.f32 %v3122, %v3642
        %3644 = vmatmul.bf16.gmra.mxu0 %v726
        %v3645 = vpop.f32.mrf.mxu0
        %v3646 = vadd.f32 %v3125, %v3645
        %v3647 = vpop.f32.mrf.mxu0
        %v3648 = vadd.f32 %v3127, %v3647
        %3649 = vmatmul.bf16.gmra.mxu0 %v727
        %v3650 = vpop.f32.mrf.mxu0
        %v3651 = vadd.f32 %v3130, %v3650
        %v3652 = vpop.f32.mrf.mxu0
        %v3653 = vadd.f32 %v3132, %v3652
        %3654 = vmatmul.bf16.gmra.mxu0 %v728
        %v3655 = vpop.f32.mrf.mxu0
        %v3656 = vadd.f32 %v3135, %v3655
        %v3657 = vpop.f32.mrf.mxu0
        %v3658 = vadd.f32 %v3137, %v3657
        %3659 = vmatmul.bf16.gmra.mxu0 %v729
        %v3660 = vpop.f32.mrf.mxu0
        %v3661 = vadd.f32 %v3140, %v3660
        %v3662 = vpop.f32.mrf.mxu0
        %v3663 = vadd.f32 %v3142, %v3662
        %3664 = vmatmul.bf16.gmra.mxu0 %v730
        %v3665 = vpop.f32.mrf.mxu0
        %v3666 = vadd.f32 %v3145, %v3665
        %v3667 = vpop.f32.mrf.mxu0
        %v3668 = vadd.f32 %v3147, %v3667
        %3669 = vmatmul.bf16.gmra.mxu0 %v731
        %v3670 = vpop.f32.mrf.mxu0
        %v3671 = vadd.f32 %v3150, %v3670
        %v3672 = vpop.f32.mrf.mxu0
        %v3673 = vadd.f32 %v3152, %v3672
        %3674 = vmatmul.bf16.gmra.mxu0 %v732
        %v3675 = vpop.f32.mrf.mxu0
        %v3676 = vadd.f32 %v3155, %v3675
        %v3677 = vpop.f32.mrf.mxu0
        %v3678 = vadd.f32 %v3157, %v3677
        %3679 = vmatmul.bf16.gmra.mxu0 %v733
        %v3680 = vpop.f32.mrf.mxu0
        %v3681 = vadd.f32 %v3160, %v3680
        %v3682 = vpop.f32.mrf.mxu0
        %v3683 = vadd.f32 %v3162, %v3682
        %3684 = vmatmul.bf16.gmra.mxu0 %v734
        %v3685 = vpop.f32.mrf.mxu0
        %v3686 = vadd.f32 %v3165, %v3685
        %v3687 = vpop.f32.mrf.mxu0
        %v3688 = vadd.f32 %v3167, %v3687
        %3689 = vdwg.mxu0
        %3690 = vmatpush.bf16.msra.mxu0 %v3472
        %3691 = vmatpush.bf16.msra.mxu0 %v3471
        %3692 = vmatpush.bf16.msra.mxu0 %v3470
        %3693 = vmatpush.bf16.msra.mxu0 %v3469
        %3694 = vmatpush.bf16.msra.mxu0 %v3468
        %3695 = vmatpush.bf16.msra.mxu0 %v3467
        %3696 = vmatpush.bf16.msra.mxu0 %v3466
        %3697 = vmatpush.bf16.msra.mxu0 %v3465
        %3698 = vmatmul.bf16.gmra.mxu0 %v811
        %v3699 = vpop.f32.mrf.mxu0
        %v3700 = vadd.f32 %v3611, %v3699
        %v3701 = vpop.f32.mrf.mxu0
        %v3702 = vadd.f32 %v3613, %v3701
        %3703 = vmatmul.bf16.gmra.mxu0 %v823
        %v3704 = vpop.f32.mrf.mxu0
        %v3705 = vadd.f32 %v3616, %v3704
        %v3706 = vpop.f32.mrf.mxu0
        %v3707 = vadd.f32 %v3618, %v3706
        %3708 = vmatmul.bf16.gmra.mxu0 %v835
        %v3709 = vpop.f32.mrf.mxu0
        %v3710 = vadd.f32 %v3621, %v3709
        %v3711 = vpop.f32.mrf.mxu0
        %v3712 = vadd.f32 %v3623, %v3711
        %3713 = vmatmul.bf16.gmra.mxu0 %v847
        %v3714 = vpop.f32.mrf.mxu0
        %v3715 = vadd.f32 %v3626, %v3714
        %v3716 = vpop.f32.mrf.mxu0
        %v3717 = vadd.f32 %v3628, %v3716
        %3718 = vmatmul.bf16.gmra.mxu0 %v859
        %v3719 = vpop.f32.mrf.mxu0
        %v3720 = vadd.f32 %v3631, %v3719
        %v3721 = vpop.f32.mrf.mxu0
        %v3722 = vadd.f32 %v3633, %v3721
        %3723 = vmatmul.bf16.gmra.mxu0 %v871
        %v3724 = vpop.f32.mrf.mxu0
        %v3725 = vadd.f32 %v3636, %v3724
        %v3726 = vpop.f32.mrf.mxu0
        %v3727 = vadd.f32 %v3638, %v3726
        %3728 = vmatmul.bf16.gmra.mxu0 %v883
        %v3729 = vpop.f32.mrf.mxu0
        %v3730 = vadd.f32 %v3641, %v3729
        %v3731 = vpop.f32.mrf.mxu0
        %v3732 = vadd.f32 %v3643, %v3731
        %3733 = vmatmul.bf16.gmra.mxu0 %v895
        %v3734 = vpop.f32.mrf.mxu0
        %v3735 = vadd.f32 %v3646, %v3734
        %v3736 = vpop.f32.mrf.mxu0
        %v3737 = vadd.f32 %v3648, %v3736
        %3738 = vmatmul.bf16.gmra.mxu0 %v907
        %v3739 = vpop.f32.mrf.mxu0
        %v3740 = vadd.f32 %v3651, %v3739
        %v3741 = vpop.f32.mrf.mxu0
        %v3742 = vadd.f32 %v3653, %v3741
        %3743 = vmatmul.bf16.gmra.mxu0 %v919
        %v3744 = vpop.f32.mrf.mxu0
        %v3745 = vadd.f32 %v3656, %v3744
        %v3746 = vpop.f32.mrf.mxu0
        %v3747 = vadd.f32 %v3658, %v3746
        %3748 = vmatmul.bf16.gmra.mxu0 %v931
        %v3749 = vpop.f32.mrf.mxu0
        %v3750 = vadd.f32 %v3661, %v3749
        %v3751 = vpop.f32.mrf.mxu0
        %v3752 = vadd.f32 %v3663, %v3751
        %3753 = vmatmul.bf16.gmra.mxu0 %v943
        %v3754 = vpop.f32.mrf.mxu0
        %v3755 = vadd.f32 %v3666, %v3754
        %v3756 = vpop.f32.mrf.mxu0
        %v3757 = vadd.f32 %v3668, %v3756
        %3758 = vmatmul.bf16.gmra.mxu0 %v955
        %v3759 = vpop.f32.mrf.mxu0
        %v3760 = vadd.f32 %v3671, %v3759
        %v3761 = vpop.f32.mrf.mxu0
        %v3762 = vadd.f32 %v3673, %v3761
        %3763 = vmatmul.bf16.gmra.mxu0 %v967
        %v3764 = vpop.f32.mrf.mxu0
        %v3765 = vadd.f32 %v3676, %v3764
        %v3766 = vpop.f32.mrf.mxu0
        %v3767 = vadd.f32 %v3678, %v3766
        %3768 = vmatmul.bf16.gmra.mxu0 %v979
        %v3769 = vpop.f32.mrf.mxu0
        %v3770 = vadd.f32 %v3681, %v3769
        %v3771 = vpop.f32.mrf.mxu0
        %v3772 = vadd.f32 %v3683, %v3771
        %3773 = vmatmul.bf16.gmra.mxu0 %v991
        %v3774 = vpop.f32.mrf.mxu0
        %v3775 = vadd.f32 %v3686, %v3774
        %v3776 = vpop.f32.mrf.mxu0
        %v3777 = vadd.f32 %v3688, %v3776
        %3778 = vdwg.mxu0
        %3779 = vmatpush.bf16.msra.mxu0 %v3480
        %3780 = vmatpush.bf16.msra.mxu0 %v3479
        %3781 = vmatpush.bf16.msra.mxu0 %v3478
        %3782 = vmatpush.bf16.msra.mxu0 %v3477
        %3783 = vmatpush.bf16.msra.mxu0 %v3476
        %3784 = vmatpush.bf16.msra.mxu0 %v3475
        %3785 = vmatpush.bf16.msra.mxu0 %v3474
        %3786 = vmatpush.bf16.msra.mxu0 %v3473
        %3787 = vmatmul.bf16.gmra.mxu0 %v1011
        %v3788 = vpop.f32.mrf.mxu0
        %v3789 = vadd.f32 %v3700, %v3788
        %v3790 = vpop.f32.mrf.mxu0
        %v3791 = vadd.f32 %v3702, %v3790
        %3792 = vmatmul.bf16.gmra.mxu0 %v1014
        %v3793 = vpop.f32.mrf.mxu0
        %v3794 = vadd.f32 %v3705, %v3793
        %v3795 = vpop.f32.mrf.mxu0
        %v3796 = vadd.f32 %v3707, %v3795
        %3797 = vmatmul.bf16.gmra.mxu0 %v1017
        %v3798 = vpop.f32.mrf.mxu0
        %v3799 = vadd.f32 %v3710, %v3798
        %v3800 = vpop.f32.mrf.mxu0
        %v3801 = vadd.f32 %v3712, %v3800
        %3802 = vmatmul.bf16.gmra.mxu0 %v1020
        %v3803 = vpop.f32.mrf.mxu0
        %v3804 = vadd.f32 %v3715, %v3803
        %v3805 = vpop.f32.mrf.mxu0
        %v3806 = vadd.f32 %v3717, %v3805
        %3807 = vmatmul.bf16.gmra.mxu0 %v1023
        %v3808 = vpop.f32.mrf.mxu0
        %v3809 = vadd.f32 %v3720, %v3808
        %v3810 = vpop.f32.mrf.mxu0
        %v3811 = vadd.f32 %v3722, %v3810
        %3812 = vmatmul.bf16.gmra.mxu0 %v1026
        %v3813 = vpop.f32.mrf.mxu0
        %v3814 = vadd.f32 %v3725, %v3813
        %v3815 = vpop.f32.mrf.mxu0
        %v3816 = vadd.f32 %v3727, %v3815
        %3817 = vmatmul.bf16.gmra.mxu0 %v1029
        %v3818 = vpop.f32.mrf.mxu0
        %v3819 = vadd.f32 %v3730, %v3818
        %v3820 = vpop.f32.mrf.mxu0
        %v3821 = vadd.f32 %v3732, %v3820
        %3822 = vmatmul.bf16.gmra.mxu0 %v1032
        %v3823 = vpop.f32.mrf.mxu0
        %v3824 = vadd.f32 %v3735, %v3823
        %v3825 = vpop.f32.mrf.mxu0
        %v3826 = vadd.f32 %v3737, %v3825
        %3827 = vmatmul.bf16.gmra.mxu0 %v1035
        %v3828 = vpop.f32.mrf.mxu0
        %v3829 = vadd.f32 %v3740, %v3828
        %v3830 = vpop.f32.mrf.mxu0
        %v3831 = vadd.f32 %v3742, %v3830
        %3832 = vmatmul.bf16.gmra.mxu0 %v1038
        %v3833 = vpop.f32.mrf.mxu0
        %v3834 = vadd.f32 %v3745, %v3833
        %v3835 = vpop.f32.mrf.mxu0
        %v3836 = vadd.f32 %v3747, %v3835
        %3837 = vmatmul.bf16.gmra.mxu0 %v1041
        %v3838 = vpop.f32.mrf.mxu0
        %v3839 = vadd.f32 %v3750, %v3838
        %v3840 = vpop.f32.mrf.mxu0
        %v3841 = vadd.f32 %v3752, %v3840
        %3842 = vmatmul.bf16.gmra.mxu0 %v1044
        %v3843 = vpop.f32.mrf.mxu0
        %v3844 = vadd.f32 %v3755, %v3843
        %v3845 = vpop.f32.mrf.mxu0
        %v3846 = vadd.f32 %v3757, %v3845
        %3847 = vmatmul.bf16.gmra.mxu0 %v1047
        %v3848 = vpop.f32.mrf.mxu0
        %v3849 = vadd.f32 %v3760, %v3848
        %v3850 = vpop.f32.mrf.mxu0
        %v3851 = vadd.f32 %v3762, %v3850
        %3852 = vmatmul.bf16.gmra.mxu0 %v1050
        %v3853 = vpop.f32.mrf.mxu0
        %v3854 = vadd.f32 %v3765, %v3853
        %v3855 = vpop.f32.mrf.mxu0
        %v3856 = vadd.f32 %v3767, %v3855
        %3857 = vmatmul.bf16.gmra.mxu0 %v1053
        %v3858 = vpop.f32.mrf.mxu0
        %v3859 = vadd.f32 %v3770, %v3858
        %v3860 = vpop.f32.mrf.mxu0
        %v3861 = vadd.f32 %v3772, %v3860
        %3862 = vmatmul.bf16.gmra.mxu0 %v1056
        %v3863 = vpop.f32.mrf.mxu0
        %v3864 = vadd.f32 %v3775, %v3863
        %v3865 = vpop.f32.mrf.mxu0
        %v3866 = vadd.f32 %v3777, %v3865
        %3867 = vdwg.mxu0
        %3868 = vmatpush.bf16.msra.mxu0 %v3488
        %3869 = vmatpush.bf16.msra.mxu0 %v3487
        %3870 = vmatpush.bf16.msra.mxu0 %v3486
        %3871 = vmatpush.bf16.msra.mxu0 %v3485
        %3872 = vmatpush.bf16.msra.mxu0 %v3484
        %3873 = vmatpush.bf16.msra.mxu0 %v3483
        %3874 = vmatpush.bf16.msra.mxu0 %v3482
        %3875 = vmatpush.bf16.msra.mxu0 %v3481
        %3876 = vmatmul.bf16.gmra.mxu0 %v720
        %v3877 = vpop.f32.mrf.mxu0
        %v3878 = vadd.f32 %v3789, %v3877
        %v3879 = vpop.f32.mrf.mxu0
        %v3880 = vadd.f32 %v3791, %v3879
        %3881 = vmatmul.bf16.gmra.mxu0 %v721
        %v3882 = vpop.f32.mrf.mxu0
        %v3883 = vadd.f32 %v3794, %v3882
        %v3884 = vpop.f32.mrf.mxu0
        %v3885 = vadd.f32 %v3796, %v3884
        %3886 = vmatmul.bf16.gmra.mxu0 %v722
        %v3887 = vpop.f32.mrf.mxu0
        %v3888 = vadd.f32 %v3799, %v3887
        %v3889 = vpop.f32.mrf.mxu0
        %v3890 = vadd.f32 %v3801, %v3889
        %3891 = vmatmul.bf16.gmra.mxu0 %v723
        %v3892 = vpop.f32.mrf.mxu0
        %v3893 = vadd.f32 %v3804, %v3892
        %v3894 = vpop.f32.mrf.mxu0
        %v3895 = vadd.f32 %v3806, %v3894
        %3896 = vmatmul.bf16.gmra.mxu0 %v724
        %v3897 = vpop.f32.mrf.mxu0
        %v3898 = vadd.f32 %v3809, %v3897
        %v3899 = vpop.f32.mrf.mxu0
        %v3900 = vadd.f32 %v3811, %v3899
        %3901 = vmatmul.bf16.gmra.mxu0 %v725
        %v3902 = vpop.f32.mrf.mxu0
        %v3903 = vadd.f32 %v3814, %v3902
        %v3904 = vpop.f32.mrf.mxu0
        %v3905 = vadd.f32 %v3816, %v3904
        %3906 = vmatmul.bf16.gmra.mxu0 %v726
        %v3907 = vpop.f32.mrf.mxu0
        %v3908 = vadd.f32 %v3819, %v3907
        %v3909 = vpop.f32.mrf.mxu0
        %v3910 = vadd.f32 %v3821, %v3909
        %3911 = vmatmul.bf16.gmra.mxu0 %v727
        %v3912 = vpop.f32.mrf.mxu0
        %v3913 = vadd.f32 %v3824, %v3912
        %v3914 = vpop.f32.mrf.mxu0
        %v3915 = vadd.f32 %v3826, %v3914
        %3916 = vmatmul.bf16.gmra.mxu0 %v728
        %v3917 = vpop.f32.mrf.mxu0
        %v3918 = vadd.f32 %v3829, %v3917
        %v3919 = vpop.f32.mrf.mxu0
        %v3920 = vadd.f32 %v3831, %v3919
        %3921 = vmatmul.bf16.gmra.mxu0 %v729
        %v3922 = vpop.f32.mrf.mxu0
        %v3923 = vadd.f32 %v3834, %v3922
        %v3924 = vpop.f32.mrf.mxu0
        %v3925 = vadd.f32 %v3836, %v3924
        %3926 = vmatmul.bf16.gmra.mxu0 %v730
        %v3927 = vpop.f32.mrf.mxu0
        %v3928 = vadd.f32 %v3839, %v3927
        %v3929 = vpop.f32.mrf.mxu0
        %v3930 = vadd.f32 %v3841, %v3929
        %3931 = vmatmul.bf16.gmra.mxu0 %v731
        %v3932 = vpop.f32.mrf.mxu0
        %v3933 = vadd.f32 %v3844, %v3932
        %v3934 = vpop.f32.mrf.mxu0
        %v3935 = vadd.f32 %v3846, %v3934
        %3936 = vmatmul.bf16.gmra.mxu0 %v732
        %v3937 = vpop.f32.mrf.mxu0
        %v3938 = vadd.f32 %v3849, %v3937
        %v3939 = vpop.f32.mrf.mxu0
        %v3940 = vadd.f32 %v3851, %v3939
        %3941 = vmatmul.bf16.gmra.mxu0 %v733
        %v3942 = vpop.f32.mrf.mxu0
        %v3943 = vadd.f32 %v3854, %v3942
        %v3944 = vpop.f32.mrf.mxu0
        %v3945 = vadd.f32 %v3856, %v3944
        %3946 = vmatmul.bf16.gmra.mxu0 %v734
        %v3947 = vpop.f32.mrf.mxu0
        %v3948 = vadd.f32 %v3859, %v3947
        %v3949 = vpop.f32.mrf.mxu0
        %v3950 = vadd.f32 %v3861, %v3949
        %3951 = vmatmul.bf16.gmra.mxu0 %v1077
        %v3952 = vpop.f32.mrf.mxu0
        %v3953 = vadd.f32 %v3864, %v3952
        %v3954 = vpop.f32.mrf.mxu0
        %v3955 = vadd.f32 %v3866, %v3954
        %3956 = vdwg.mxu0
        %3957 = vmatpush.bf16.msra.mxu0 %v3496
        %3958 = vmatpush.bf16.msra.mxu0 %v3495
        %3959 = vmatpush.bf16.msra.mxu0 %v3494
        %3960 = vmatpush.bf16.msra.mxu0 %v3493
        %3961 = vmatpush.bf16.msra.mxu0 %v3492
        %3962 = vmatpush.bf16.msra.mxu0 %v3491
        %3963 = vmatpush.bf16.msra.mxu0 %v3490
        %3964 = vmatpush.bf16.msra.mxu0 %v3489
        %3965 = vmatmul.bf16.gmra.mxu0 %v823
        %v3966 = vpop.f32.mrf.mxu0
        %v3967 = vadd.f32 %v3878, %v3966
        %v3968 = vpop.f32.mrf.mxu0
        %v3969 = vadd.f32 %v3880, %v3968
        %3970 = vmatmul.bf16.gmra.mxu0 %v835
        %v3971 = vpop.f32.mrf.mxu0
        %v3972 = vadd.f32 %v3883, %v3971
        %v3973 = vpop.f32.mrf.mxu0
        %v3974 = vadd.f32 %v3885, %v3973
        %3975 = vmatmul.bf16.gmra.mxu0 %v847
        %v3976 = vpop.f32.mrf.mxu0
        %v3977 = vadd.f32 %v3888, %v3976
        %v3978 = vpop.f32.mrf.mxu0
        %v3979 = vadd.f32 %v3890, %v3978
        %3980 = vmatmul.bf16.gmra.mxu0 %v859
        %v3981 = vpop.f32.mrf.mxu0
        %v3982 = vadd.f32 %v3893, %v3981
        %v3983 = vpop.f32.mrf.mxu0
        %v3984 = vadd.f32 %v3895, %v3983
        %3985 = vmatmul.bf16.gmra.mxu0 %v871
        %v3986 = vpop.f32.mrf.mxu0
        %v3987 = vadd.f32 %v3898, %v3986
        %v3988 = vpop.f32.mrf.mxu0
        %v3989 = vadd.f32 %v3900, %v3988
        %3990 = vmatmul.bf16.gmra.mxu0 %v883
        %v3991 = vpop.f32.mrf.mxu0
        %v3992 = vadd.f32 %v3903, %v3991
        %v3993 = vpop.f32.mrf.mxu0
        %v3994 = vadd.f32 %v3905, %v3993
        %3995 = vmatmul.bf16.gmra.mxu0 %v895
        %v3996 = vpop.f32.mrf.mxu0
        %v3997 = vadd.f32 %v3908, %v3996
        %v3998 = vpop.f32.mrf.mxu0
        %v3999 = vadd.f32 %v3910, %v3998
        %4000 = vmatmul.bf16.gmra.mxu0 %v907
        %v4001 = vpop.f32.mrf.mxu0
        %v4002 = vadd.f32 %v3913, %v4001
        %v4003 = vpop.f32.mrf.mxu0
        %v4004 = vadd.f32 %v3915, %v4003
        %4005 = vmatmul.bf16.gmra.mxu0 %v919
        %v4006 = vpop.f32.mrf.mxu0
        %v4007 = vadd.f32 %v3918, %v4006
        %v4008 = vpop.f32.mrf.mxu0
        %v4009 = vadd.f32 %v3920, %v4008
        %4010 = vmatmul.bf16.gmra.mxu0 %v931
        %v4011 = vpop.f32.mrf.mxu0
        %v4012 = vadd.f32 %v3923, %v4011
        %v4013 = vpop.f32.mrf.mxu0
        %v4014 = vadd.f32 %v3925, %v4013
        %4015 = vmatmul.bf16.gmra.mxu0 %v943
        %v4016 = vpop.f32.mrf.mxu0
        %v4017 = vadd.f32 %v3928, %v4016
        %v4018 = vpop.f32.mrf.mxu0
        %v4019 = vadd.f32 %v3930, %v4018
        %4020 = vmatmul.bf16.gmra.mxu0 %v955
        %v4021 = vpop.f32.mrf.mxu0
        %v4022 = vadd.f32 %v3933, %v4021
        %v4023 = vpop.f32.mrf.mxu0
        %v4024 = vadd.f32 %v3935, %v4023
        %4025 = vmatmul.bf16.gmra.mxu0 %v967
        %v4026 = vpop.f32.mrf.mxu0
        %v4027 = vadd.f32 %v3938, %v4026
        %v4028 = vpop.f32.mrf.mxu0
        %v4029 = vadd.f32 %v3940, %v4028
        %4030 = vmatmul.bf16.gmra.mxu0 %v979
        %v4031 = vpop.f32.mrf.mxu0
        %v4032 = vadd.f32 %v3943, %v4031
        %v4033 = vpop.f32.mrf.mxu0
        %v4034 = vadd.f32 %v3945, %v4033
        %4035 = vmatmul.bf16.gmra.mxu0 %v991
        %v4036 = vpop.f32.mrf.mxu0
        %v4037 = vadd.f32 %v3948, %v4036
        %v4038 = vpop.f32.mrf.mxu0
        %v4039 = vadd.f32 %v3950, %v4038
        %4040 = vmatmul.bf16.gmra.mxu0 %v1093
        %v4041 = vpop.f32.mrf.mxu0
        %v4042 = vadd.f32 %v3953, %v4041
        %v4043 = vpop.f32.mrf.mxu0
        %v4044 = vadd.f32 %v3955, %v4043
        %4045 = vdwg.mxu0
        %4046 = vmatpush.bf16.msra.mxu0 %v3504
        %4047 = vmatpush.bf16.msra.mxu0 %v3503
        %4048 = vmatpush.bf16.msra.mxu0 %v3502
        %4049 = vmatpush.bf16.msra.mxu0 %v3501
        %4050 = vmatpush.bf16.msra.mxu0 %v3500
        %4051 = vmatpush.bf16.msra.mxu0 %v3499
        %4052 = vmatpush.bf16.msra.mxu0 %v3498
        %4053 = vmatpush.bf16.msra.mxu0 %v3497
        %4054 = vmatmul.bf16.gmra.mxu0 %v1014
        %v4055 = vpop.f32.mrf.mxu0
        %v4056 = vadd.f32 %v3967, %v4055
        %v4057 = vpop.f32.mrf.mxu0
        %v4058 = vadd.f32 %v3969, %v4057
        %4059 = vmatmul.bf16.gmra.mxu0 %v1017
        %v4060 = vpop.f32.mrf.mxu0
        %v4061 = vadd.f32 %v3972, %v4060
        %v4062 = vpop.f32.mrf.mxu0
        %v4063 = vadd.f32 %v3974, %v4062
        %4064 = vmatmul.bf16.gmra.mxu0 %v1020
        %v4065 = vpop.f32.mrf.mxu0
        %v4066 = vadd.f32 %v3977, %v4065
        %v4067 = vpop.f32.mrf.mxu0
        %v4068 = vadd.f32 %v3979, %v4067
        %4069 = vmatmul.bf16.gmra.mxu0 %v1023
        %v4070 = vpop.f32.mrf.mxu0
        %v4071 = vadd.f32 %v3982, %v4070
        %v4072 = vpop.f32.mrf.mxu0
        %v4073 = vadd.f32 %v3984, %v4072
        %4074 = vmatmul.bf16.gmra.mxu0 %v1026
        %v4075 = vpop.f32.mrf.mxu0
        %v4076 = vadd.f32 %v3987, %v4075
        %v4077 = vpop.f32.mrf.mxu0
        %v4078 = vadd.f32 %v3989, %v4077
        %4079 = vmatmul.bf16.gmra.mxu0 %v1029
        %v4080 = vpop.f32.mrf.mxu0
        %v4081 = vadd.f32 %v3992, %v4080
        %v4082 = vpop.f32.mrf.mxu0
        %v4083 = vadd.f32 %v3994, %v4082
        %4084 = vmatmul.bf16.gmra.mxu0 %v1032
        %v4085 = vpop.f32.mrf.mxu0
        %v4086 = vadd.f32 %v3997, %v4085
        %v4087 = vpop.f32.mrf.mxu0
        %v4088 = vadd.f32 %v3999, %v4087
        %4089 = vmatmul.bf16.gmra.mxu0 %v1035
        %v4090 = vpop.f32.mrf.mxu0
        %v4091 = vadd.f32 %v4002, %v4090
        %v4092 = vpop.f32.mrf.mxu0
        %v4093 = vadd.f32 %v4004, %v4092
        %4094 = vmatmul.bf16.gmra.mxu0 %v1038
        %v4095 = vpop.f32.mrf.mxu0
        %v4096 = vadd.f32 %v4007, %v4095
        %v4097 = vpop.f32.mrf.mxu0
        %v4098 = vadd.f32 %v4009, %v4097
        %4099 = vmatmul.bf16.gmra.mxu0 %v1041
        %v4100 = vpop.f32.mrf.mxu0
        %v4101 = vadd.f32 %v4012, %v4100
        %v4102 = vpop.f32.mrf.mxu0
        %v4103 = vadd.f32 %v4014, %v4102
        %4104 = vmatmul.bf16.gmra.mxu0 %v1044
        %v4105 = vpop.f32.mrf.mxu0
        %v4106 = vadd.f32 %v4017, %v4105
        %v4107 = vpop.f32.mrf.mxu0
        %v4108 = vadd.f32 %v4019, %v4107
        %4109 = vmatmul.bf16.gmra.mxu0 %v1047
        %v4110 = vpop.f32.mrf.mxu0
        %v4111 = vadd.f32 %v4022, %v4110
        %v4112 = vpop.f32.mrf.mxu0
        %v4113 = vadd.f32 %v4024, %v4112
        %4114 = vmatmul.bf16.gmra.mxu0 %v1050
        %v4115 = vpop.f32.mrf.mxu0
        %v4116 = vadd.f32 %v4027, %v4115
        %v4117 = vpop.f32.mrf.mxu0
        %v4118 = vadd.f32 %v4029, %v4117
        %4119 = vmatmul.bf16.gmra.mxu0 %v1053
        %v4120 = vpop.f32.mrf.mxu0
        %v4121 = vadd.f32 %v4032, %v4120
        %v4122 = vpop.f32.mrf.mxu0
        %v4123 = vadd.f32 %v4034, %v4122
        %4124 = vmatmul.bf16.gmra.mxu0 %v1056
        %v4125 = vpop.f32.mrf.mxu0
        %v4126 = vadd.f32 %v4037, %v4125
        %v4127 = vpop.f32.mrf.mxu0
        %v4128 = vadd.f32 %v4039, %v4127
        %4129 = vmatmul.bf16.gmra.mxu0 %v1097
        %v4130 = vpop.f32.mrf.mxu0
        %v4131 = vadd.f32 %v4042, %v4130
        %v4132 = vpop.f32.mrf.mxu0
        %v4133 = vadd.f32 %v4044, %v4132
        %4134 = vdwg.mxu0
        %4135 = vmatpush.bf16.msra.mxu0 %v3512
        %4136 = vmatpush.bf16.msra.mxu0 %v3511
        %4137 = vmatpush.bf16.msra.mxu0 %v3510
        %4138 = vmatpush.bf16.msra.mxu0 %v3509
        %4139 = vmatpush.bf16.msra.mxu0 %v3508
        %4140 = vmatpush.bf16.msra.mxu0 %v3507
        %4141 = vmatpush.bf16.msra.mxu0 %v3506
        %4142 = vmatpush.bf16.msra.mxu0 %v3505
        %4143 = vmatmul.bf16.gmra.mxu0 %v721
        %v4144 = vpop.f32.mrf.mxu0
        %v4145 = vadd.f32 %v4056, %v4144
        %v4146 = vpop.f32.mrf.mxu0
        %v4147 = vadd.f32 %v4058, %v4146
        %4148 = vmatmul.bf16.gmra.mxu0 %v722
        %v4149 = vpop.f32.mrf.mxu0
        %v4150 = vadd.f32 %v4061, %v4149
        %v4151 = vpop.f32.mrf.mxu0
        %v4152 = vadd.f32 %v4063, %v4151
        %4153 = vmatmul.bf16.gmra.mxu0 %v723
        %v4154 = vpop.f32.mrf.mxu0
        %v4155 = vadd.f32 %v4066, %v4154
        %v4156 = vpop.f32.mrf.mxu0
        %v4157 = vadd.f32 %v4068, %v4156
        %4158 = vmatmul.bf16.gmra.mxu0 %v724
        %v4159 = vpop.f32.mrf.mxu0
        %v4160 = vadd.f32 %v4071, %v4159
        %v4161 = vpop.f32.mrf.mxu0
        %v4162 = vadd.f32 %v4073, %v4161
        %4163 = vmatmul.bf16.gmra.mxu0 %v725
        %v4164 = vpop.f32.mrf.mxu0
        %v4165 = vadd.f32 %v4076, %v4164
        %v4166 = vpop.f32.mrf.mxu0
        %v4167 = vadd.f32 %v4078, %v4166
        %4168 = vmatmul.bf16.gmra.mxu0 %v726
        %v4169 = vpop.f32.mrf.mxu0
        %v4170 = vadd.f32 %v4081, %v4169
        %v4171 = vpop.f32.mrf.mxu0
        %v4172 = vadd.f32 %v4083, %v4171
        %4173 = vmatmul.bf16.gmra.mxu0 %v727
        %v4174 = vpop.f32.mrf.mxu0
        %v4175 = vadd.f32 %v4086, %v4174
        %v4176 = vpop.f32.mrf.mxu0
        %v4177 = vadd.f32 %v4088, %v4176
        %4178 = vmatmul.bf16.gmra.mxu0 %v728
        %v4179 = vpop.f32.mrf.mxu0
        %v4180 = vadd.f32 %v4091, %v4179
        %v4181 = vpop.f32.mrf.mxu0
        %v4182 = vadd.f32 %v4093, %v4181
        %4183 = vmatmul.bf16.gmra.mxu0 %v729
        %v4184 = vpop.f32.mrf.mxu0
        %v4185 = vadd.f32 %v4096, %v4184
        %v4186 = vpop.f32.mrf.mxu0
        %v4187 = vadd.f32 %v4098, %v4186
        %4188 = vmatmul.bf16.gmra.mxu0 %v730
        %v4189 = vpop.f32.mrf.mxu0
        %v4190 = vadd.f32 %v4101, %v4189
        %v4191 = vpop.f32.mrf.mxu0
        %v4192 = vadd.f32 %v4103, %v4191
        %4193 = vmatmul.bf16.gmra.mxu0 %v731
        %v4194 = vpop.f32.mrf.mxu0
        %v4195 = vadd.f32 %v4106, %v4194
        %v4196 = vpop.f32.mrf.mxu0
        %v4197 = vadd.f32 %v4108, %v4196
        %4198 = vmatmul.bf16.gmra.mxu0 %v732
        %v4199 = vpop.f32.mrf.mxu0
        %v4200 = vadd.f32 %v4111, %v4199
        %v4201 = vpop.f32.mrf.mxu0
        %v4202 = vadd.f32 %v4113, %v4201
        %4203 = vmatmul.bf16.gmra.mxu0 %v733
        %v4204 = vpop.f32.mrf.mxu0
        %v4205 = vadd.f32 %v4116, %v4204
        %v4206 = vpop.f32.mrf.mxu0
        %v4207 = vadd.f32 %v4118, %v4206
        %4208 = vmatmul.bf16.gmra.mxu0 %v734
        %v4209 = vpop.f32.mrf.mxu0
        %v4210 = vadd.f32 %v4121, %v4209
        %v4211 = vpop.f32.mrf.mxu0
        %v4212 = vadd.f32 %v4123, %v4211
        %4213 = vmatmul.bf16.gmra.mxu0 %v1077
        %v4214 = vpop.f32.mrf.mxu0
        %v4215 = vadd.f32 %v4126, %v4214
        %v4216 = vpop.f32.mrf.mxu0
        %v4217 = vadd.f32 %v4128, %v4216
        %4218 = vmatmul.bf16.gmra.mxu0 %v1103
        %v4219 = vpop.f32.mrf.mxu0
        %v4220 = vadd.f32 %v4131, %v4219
        %v4221 = vpop.f32.mrf.mxu0
        %v4222 = vadd.f32 %v4133, %v4221
        %4223 = vdwg.mxu0
        %4224 = vmatpush.bf16.msra.mxu0 %v3520
        %4225 = vmatpush.bf16.msra.mxu0 %v3519
        %4226 = vmatpush.bf16.msra.mxu0 %v3518
        %4227 = vmatpush.bf16.msra.mxu0 %v3517
        %4228 = vmatpush.bf16.msra.mxu0 %v3516
        %4229 = vmatpush.bf16.msra.mxu0 %v3515
        %4230 = vmatpush.bf16.msra.mxu0 %v3514
        %4231 = vmatpush.bf16.msra.mxu0 %v3513
        %4232 = vmatmul.bf16.gmra.mxu0 %v835
        %v4233 = vpop.f32.mrf.mxu0
        %v4234 = vadd.f32 %v4145, %v4233
        %v4235 = vpop.f32.mrf.mxu0
        %v4236 = vadd.f32 %v4147, %v4235
        %4237 = vmatmul.bf16.gmra.mxu0 %v847
        %v4238 = vpop.f32.mrf.mxu0
        %v4239 = vadd.f32 %v4150, %v4238
        %v4240 = vpop.f32.mrf.mxu0
        %v4241 = vadd.f32 %v4152, %v4240
        %4242 = vmatmul.bf16.gmra.mxu0 %v859
        %v4243 = vpop.f32.mrf.mxu0
        %v4244 = vadd.f32 %v4155, %v4243
        %v4245 = vpop.f32.mrf.mxu0
        %v4246 = vadd.f32 %v4157, %v4245
        %4247 = vmatmul.bf16.gmra.mxu0 %v871
        %v4248 = vpop.f32.mrf.mxu0
        %v4249 = vadd.f32 %v4160, %v4248
        %v4250 = vpop.f32.mrf.mxu0
        %v4251 = vadd.f32 %v4162, %v4250
        %4252 = vmatmul.bf16.gmra.mxu0 %v883
        %v4253 = vpop.f32.mrf.mxu0
        %v4254 = vadd.f32 %v4165, %v4253
        %v4255 = vpop.f32.mrf.mxu0
        %v4256 = vadd.f32 %v4167, %v4255
        %4257 = vmatmul.bf16.gmra.mxu0 %v895
        %v4258 = vpop.f32.mrf.mxu0
        %v4259 = vadd.f32 %v4170, %v4258
        %v4260 = vpop.f32.mrf.mxu0
        %v4261 = vadd.f32 %v4172, %v4260
        %4262 = vmatmul.bf16.gmra.mxu0 %v907
        %v4263 = vpop.f32.mrf.mxu0
        %v4264 = vadd.f32 %v4175, %v4263
        %v4265 = vpop.f32.mrf.mxu0
        %v4266 = vadd.f32 %v4177, %v4265
        %4267 = vmatmul.bf16.gmra.mxu0 %v919
        %v4268 = vpop.f32.mrf.mxu0
        %v4269 = vadd.f32 %v4180, %v4268
        %v4270 = vpop.f32.mrf.mxu0
        %v4271 = vadd.f32 %v4182, %v4270
        %4272 = vmatmul.bf16.gmra.mxu0 %v931
        %v4273 = vpop.f32.mrf.mxu0
        %v4274 = vadd.f32 %v4185, %v4273
        %v4275 = vpop.f32.mrf.mxu0
        %v4276 = vadd.f32 %v4187, %v4275
        %4277 = vmatmul.bf16.gmra.mxu0 %v943
        %v4278 = vpop.f32.mrf.mxu0
        %v4279 = vadd.f32 %v4190, %v4278
        %v4280 = vpop.f32.mrf.mxu0
        %v4281 = vadd.f32 %v4192, %v4280
        %4282 = vmatmul.bf16.gmra.mxu0 %v955
        %v4283 = vpop.f32.mrf.mxu0
        %v4284 = vadd.f32 %v4195, %v4283
        %v4285 = vpop.f32.mrf.mxu0
        %v4286 = vadd.f32 %v4197, %v4285
        %4287 = vmatmul.bf16.gmra.mxu0 %v967
        %v4288 = vpop.f32.mrf.mxu0
        %v4289 = vadd.f32 %v4200, %v4288
        %v4290 = vpop.f32.mrf.mxu0
        %v4291 = vadd.f32 %v4202, %v4290
        %4292 = vmatmul.bf16.gmra.mxu0 %v979
        %v4293 = vpop.f32.mrf.mxu0
        %v4294 = vadd.f32 %v4205, %v4293
        %v4295 = vpop.f32.mrf.mxu0
        %v4296 = vadd.f32 %v4207, %v4295
        %4297 = vmatmul.bf16.gmra.mxu0 %v991
        %v4298 = vpop.f32.mrf.mxu0
        %v4299 = vadd.f32 %v4210, %v4298
        %v4300 = vpop.f32.mrf.mxu0
        %v4301 = vadd.f32 %v4212, %v4300
        %4302 = vmatmul.bf16.gmra.mxu0 %v1093
        %v4303 = vpop.f32.mrf.mxu0
        %v4304 = vadd.f32 %v4215, %v4303
        %v4305 = vpop.f32.mrf.mxu0
        %v4306 = vadd.f32 %v4217, %v4305
        %4307 = vmatmul.bf16.gmra.mxu0 %v1119
        %v4308 = vpop.f32.mrf.mxu0
        %v4309 = vadd.f32 %v4220, %v4308
        %v4310 = vpop.f32.mrf.mxu0
        %v4311 = vadd.f32 %v4222, %v4310
        %4312 = vdwg.mxu0
        %4313 = vmatpush.bf16.msra.mxu0 %v3528
        %4314 = vmatpush.bf16.msra.mxu0 %v3527
        %4315 = vmatpush.bf16.msra.mxu0 %v3526
        %4316 = vmatpush.bf16.msra.mxu0 %v3525
        %4317 = vmatpush.bf16.msra.mxu0 %v3524
        %4318 = vmatpush.bf16.msra.mxu0 %v3523
        %4319 = vmatpush.bf16.msra.mxu0 %v3522
        %4320 = vmatpush.bf16.msra.mxu0 %v3521
        %4321 = vmatmul.bf16.gmra.mxu0 %v1017
        %v4322 = vpop.f32.mrf.mxu0
        %v4323 = vadd.f32 %v4234, %v4322
        %v4324 = vpop.f32.mrf.mxu0
        %v4325 = vadd.f32 %v4236, %v4324
        %4326 = vmatmul.bf16.gmra.mxu0 %v1020
        %v4327 = vpop.f32.mrf.mxu0
        %v4328 = vadd.f32 %v4239, %v4327
        %v4329 = vpop.f32.mrf.mxu0
        %v4330 = vadd.f32 %v4241, %v4329
        %4331 = vmatmul.bf16.gmra.mxu0 %v1023
        %v4332 = vpop.f32.mrf.mxu0
        %v4333 = vadd.f32 %v4244, %v4332
        %v4334 = vpop.f32.mrf.mxu0
        %v4335 = vadd.f32 %v4246, %v4334
        %4336 = vmatmul.bf16.gmra.mxu0 %v1026
        %v4337 = vpop.f32.mrf.mxu0
        %v4338 = vadd.f32 %v4249, %v4337
        %v4339 = vpop.f32.mrf.mxu0
        %v4340 = vadd.f32 %v4251, %v4339
        %4341 = vmatmul.bf16.gmra.mxu0 %v1029
        %v4342 = vpop.f32.mrf.mxu0
        %v4343 = vadd.f32 %v4254, %v4342
        %v4344 = vpop.f32.mrf.mxu0
        %v4345 = vadd.f32 %v4256, %v4344
        %4346 = vmatmul.bf16.gmra.mxu0 %v1032
        %v4347 = vpop.f32.mrf.mxu0
        %v4348 = vadd.f32 %v4259, %v4347
        %v4349 = vpop.f32.mrf.mxu0
        %v4350 = vadd.f32 %v4261, %v4349
        %4351 = vmatmul.bf16.gmra.mxu0 %v1035
        %v4352 = vpop.f32.mrf.mxu0
        %v4353 = vadd.f32 %v4264, %v4352
        %v4354 = vpop.f32.mrf.mxu0
        %v4355 = vadd.f32 %v4266, %v4354
        %4356 = vmatmul.bf16.gmra.mxu0 %v1038
        %v4357 = vpop.f32.mrf.mxu0
        %v4358 = vadd.f32 %v4269, %v4357
        %v4359 = vpop.f32.mrf.mxu0
        %v4360 = vadd.f32 %v4271, %v4359
        %4361 = vmatmul.bf16.gmra.mxu0 %v1041
        %v4362 = vpop.f32.mrf.mxu0
        %v4363 = vadd.f32 %v4274, %v4362
        %v4364 = vpop.f32.mrf.mxu0
        %v4365 = vadd.f32 %v4276, %v4364
        %4366 = vmatmul.bf16.gmra.mxu0 %v1044
        %v4367 = vpop.f32.mrf.mxu0
        %v4368 = vadd.f32 %v4279, %v4367
        %v4369 = vpop.f32.mrf.mxu0
        %v4370 = vadd.f32 %v4281, %v4369
        %4371 = vmatmul.bf16.gmra.mxu0 %v1047
        %v4372 = vpop.f32.mrf.mxu0
        %v4373 = vadd.f32 %v4284, %v4372
        %v4374 = vpop.f32.mrf.mxu0
        %v4375 = vadd.f32 %v4286, %v4374
        %4376 = vmatmul.bf16.gmra.mxu0 %v1050
        %v4377 = vpop.f32.mrf.mxu0
        %v4378 = vadd.f32 %v4289, %v4377
        %v4379 = vpop.f32.mrf.mxu0
        %v4380 = vadd.f32 %v4291, %v4379
        %4381 = vmatmul.bf16.gmra.mxu0 %v1053
        %v4382 = vpop.f32.mrf.mxu0
        %v4383 = vadd.f32 %v4294, %v4382
        %v4384 = vpop.f32.mrf.mxu0
        %v4385 = vadd.f32 %v4296, %v4384
        %4386 = vmatmul.bf16.gmra.mxu0 %v1056
        %v4387 = vpop.f32.mrf.mxu0
        %v4388 = vadd.f32 %v4299, %v4387
        %v4389 = vpop.f32.mrf.mxu0
        %v4390 = vadd.f32 %v4301, %v4389
        %4391 = vmatmul.bf16.gmra.mxu0 %v1097
        %v4392 = vpop.f32.mrf.mxu0
        %v4393 = vadd.f32 %v4304, %v4392
        %v4394 = vpop.f32.mrf.mxu0
        %v4395 = vadd.f32 %v4306, %v4394
        %4396 = vmatmul.bf16.gmra.mxu0 %v1123
        %v4397 = vpop.f32.mrf.mxu0
        %v4398 = vadd.f32 %v4309, %v4397
        %v4399 = vpop.f32.mrf.mxu0
        %v4400 = vadd.f32 %v4311, %v4399
        %4401 = vdwg.mxu0
        %v4402 = vld [vmem:[%s411] sm:$0xf]
        %v4403 = vld [vmem:[%s411 + $0x4] sm:$0xf]
        %v4404 = vld [vmem:[%s411 + $0x8] sm:$0x1]
        %v4405 = vld [vmem:[%s411 + $0xc] sm:$0xf]
        %v4406 = vld [vmem:[%s411 + $0x10] sm:$0xf]
        %v4407 = vld [vmem:[%s411 + $0x14] sm:$0x1]
        %v4408 = vld [vmem:[%s411 + $0x18] sm:$0xf]
        %v4409 = vld [vmem:[%s411 + $0x1c] sm:$0xf]
        %v4410 = vld [vmem:[%s411 + $0x20] sm:$0x1]
        %v4411 = vld [vmem:[%s411 + $0x24] sm:$0xf]
        %v4412 = vld [vmem:[%s411 + $0x28] sm:$0xf]
        %v4413 = vld [vmem:[%s411 + $0x2c] sm:$0x1]
        %v4414 = vld [vmem:[%s411 + $0x30] sm:$0xf]
        %v4415 = vld [vmem:[%s411 + $0x34] sm:$0xf]
        %v4416 = vld [vmem:[%s411 + $0x38] sm:$0x1]
        %v4417 = vld [vmem:[%s411 + $0x3c] sm:$0xf]
        %v4418 = vld [vmem:[%s411 + $0x40] sm:$0xf]
        %v4419 = vld [vmem:[%s411 + $0x44] sm:$0x1]
        %v4420 = vld [vmem:[%s411 + $0x48] sm:$0xf]
        %v4421 = vld [vmem:[%s411 + $0x4c] sm:$0xf]
        %v4422 = vld [vmem:[%s411 + $0x50] sm:$0x1]
        %v4423 = vld [vmem:[%s411 + $0x54] sm:$0xf]
        %v4424 = vld [vmem:[%s411 + $0x58] sm:$0xf]
        %v4425 = vld [vmem:[%s411 + $0x5c] sm:$0x1]
        %v4426 = vld [vmem:[%s411 + $0x60] sm:$0xf]
        %v4427 = vld [vmem:[%s411 + $0x64] sm:$0xf]
        %v4428 = vld [vmem:[%s411 + $0x68] sm:$0x1]
        %v4429 = vld [vmem:[%s411 + $0x6c] sm:$0xf]
        %v4430 = vld [vmem:[%s411 + $0x70] sm:$0xf]
        %v4431 = vld [vmem:[%s411 + $0x74] sm:$0x1]
        %v4432 = vld [vmem:[%s411 + $0x78] sm:$0xf]
        %v4433 = vld [vmem:[%s411 + $0x7c] sm:$0xf]
        %v4434 = vld [vmem:[%s411 + $0x80] sm:$0x1]
        %v4435 = vld [vmem:[%s411 + $0x84] sm:$0xf]
        %v4436 = vld [vmem:[%s411 + $0x88] sm:$0xf]
        %v4437 = vld [vmem:[%s411 + $0x8c] sm:$0x1]
        %v4438 = vld [vmem:[%s411 + $0x90] sm:$0xf]
        %v4439 = vld [vmem:[%s411 + $0x94] sm:$0xf]
        %v4440 = vld [vmem:[%s411 + $0x98] sm:$0x1]
        %v4441 = vld [vmem:[%s411 + $0x9c] sm:$0xf]
        %v4442 = vld [vmem:[%s411 + $0xa0] sm:$0xf]
        %v4443 = vld [vmem:[%s411 + $0xa4] sm:$0x1]
        %v4444 = vld [vmem:[%s411 + $0xa8] sm:$0xf]
        %v4445 = vld [vmem:[%s411 + $0xac] sm:$0xf]
        %v4446 = vld [vmem:[%s411 + $0xb0] sm:$0x1]
        %v4447 = vld [vmem:[%s411 + $0xb4] sm:$0xf]
        %v4448 = vld [vmem:[%s411 + $0xb8] sm:$0xf]
        %v4449 = vld [vmem:[%s411 + $0xbc] sm:$0x1]
        %v4450 = vld [vmem:[%s411 + $0xc0] sm:$0xf]
        %v4451 = vld [vmem:[%s411 + $0xc4] sm:$0xf]
        %v4452 = vld [vmem:[%s411 + $0xc8] sm:$0x1]
        %v4453 = vld [vmem:[%s411 + $0xcc] sm:$0xf]
        %v4454 = vld [vmem:[%s411 + $0xd0] sm:$0xf]
        %v4455 = vld [vmem:[%s411 + $0xd4] sm:$0x1]
        %s4456 = sadd.s32 %s24, 1
        %p4457 = scmp.ge.s32.totalorder %s4456, 0
        %p4458 = scmp.lt.s32.totalorder %s4456, 8
        %p4459 = pnand %p4457, %p4458
        %p4460 = pneg %p4459
        %s4461 = scalar_select %p4460, 1, 0
        %s4462 = scvt.s32.f32 %s4461
        %p4464 = scmp.ne.f32.partialorder %s4462, %s4462
        %s4465 = sshrl.u32 %s4462, 16
        %s4466 = sand.u32 %s4465, 1
        %s4467 = sadd.s32 32767, %s4466
        %s4468 = sadd.s32 %s4462, %s4467
        %s4469 = sand.u32 %s4468, 4294901760
        %s4470 = scalar_select %p4464, 2143289344, %s4469
        %s4472 = sshrl.u32 %s4470, 16
        %s4473 = sshll.u32 %s4472, 16
        %s4474 = sor.u32 %s4472, %s4473
        %v4475 = vstv %s4474
        %v4477 = vunpack.c.l.bf16 %v4402
        %v4478 = vunpack.c.l.bf16 %v4403
        %v4479 = vunpack.c.l.bf16 %v4404
        %v4480 = vunpack.c.l.bf16 %v4405
        %v4481 = vunpack.c.l.bf16 %v4406
        %v4482 = vunpack.c.l.bf16 %v4407
        %v4483 = vunpack.c.l.bf16 %v4408
        %v4484 = vunpack.c.l.bf16 %v4409
        %v4485 = vunpack.c.l.bf16 %v4410
        %v4486 = vunpack.c.l.bf16 %v4411
        %v4487 = vunpack.c.l.bf16 %v4412
        %v4488 = vunpack.c.l.bf16 %v4413
        %v4489 = vunpack.c.l.bf16 %v4414
        %v4490 = vunpack.c.l.bf16 %v4415
        %v4491 = vunpack.c.l.bf16 %v4416
        %v4492 = vunpack.c.l.bf16 %v4417
        %v4493 = vunpack.c.l.bf16 %v4418
        %v4494 = vunpack.c.l.bf16 %v4419
        %v4495 = vunpack.c.l.bf16 %v4420
        %v4496 = vunpack.c.l.bf16 %v4421
        %v4497 = vunpack.c.l.bf16 %v4422
        %v4498 = vunpack.c.l.bf16 %v4423
        %v4499 = vunpack.c.l.bf16 %v4424
        %v4500 = vunpack.c.l.bf16 %v4425
        %v4501 = vunpack.c.l.bf16 %v4426
        %v4502 = vunpack.c.l.bf16 %v4427
        %v4503 = vunpack.c.l.bf16 %v4428
        %v4504 = vunpack.c.l.bf16 %v4429
        %v4505 = vunpack.c.l.bf16 %v4430
        %v4506 = vunpack.c.l.bf16 %v4431
        %v4507 = vunpack.c.l.bf16 %v4432
        %v4508 = vunpack.c.l.bf16 %v4433
        %v4509 = vunpack.c.l.bf16 %v4434
        %v4510 = vunpack.c.l.bf16 %v4435
        %v4511 = vunpack.c.l.bf16 %v4436
        %v4512 = vunpack.c.l.bf16 %v4437
        %v4513 = vunpack.c.l.bf16 %v4438
        %v4514 = vunpack.c.l.bf16 %v4439
        %v4515 = vunpack.c.l.bf16 %v4440
        %v4516 = vunpack.c.l.bf16 %v4441
        %v4517 = vunpack.c.l.bf16 %v4442
        %v4518 = vunpack.c.l.bf16 %v4443
        %v4519 = vunpack.c.l.bf16 %v4444
        %v4520 = vunpack.c.l.bf16 %v4445
        %v4521 = vunpack.c.l.bf16 %v4446
        %v4522 = vunpack.c.l.bf16 %v4447
        %v4523 = vunpack.c.l.bf16 %v4448
        %v4524 = vunpack.c.l.bf16 %v4449
        %v4525 = vunpack.c.l.bf16 %v4450
        %v4526 = vunpack.c.l.bf16 %v4451
        %v4527 = vunpack.c.l.bf16 %v4452
        %v4528 = vunpack.c.l.bf16 %v4453
        %v4529 = vunpack.c.l.bf16 %v4454
        %v4530 = vunpack.c.l.bf16 %v4455
        %v4531 = vunpack.c.l.bf16 %v4475
        %v4532 = vmul.f32 %v4477, %v4531
        %v4533 = vmul.f32 %v4478, %v4531
        %v4534 = vmul.f32 %v4479, %v4531
        %v4535 = vmul.f32 %v4480, %v4531
        %v4536 = vmul.f32 %v4481, %v4531
        %v4537 = vmul.f32 %v4482, %v4531
        %v4538 = vmul.f32 %v4483, %v4531
        %v4539 = vmul.f32 %v4484, %v4531
        %v4540 = vmul.f32 %v4485, %v4531
        %v4541 = vmul.f32 %v4486, %v4531
        %v4542 = vmul.f32 %v4487, %v4531
        %v4543 = vmul.f32 %v4488, %v4531
        %v4544 = vmul.f32 %v4489, %v4531
        %v4545 = vmul.f32 %v4490, %v4531
        %v4546 = vmul.f32 %v4491, %v4531
        %v4547 = vmul.f32 %v4492, %v4531
        %v4548 = vmul.f32 %v4493, %v4531
        %v4549 = vmul.f32 %v4494, %v4531
        %v4550 = vmul.f32 %v4495, %v4531
        %v4551 = vmul.f32 %v4496, %v4531
        %v4552 = vmul.f32 %v4497, %v4531
        %v4553 = vmul.f32 %v4498, %v4531
        %v4554 = vmul.f32 %v4499, %v4531
        %v4555 = vmul.f32 %v4500, %v4531
        %v4556 = vmul.f32 %v4501, %v4531
        %v4557 = vmul.f32 %v4502, %v4531
        %v4558 = vmul.f32 %v4503, %v4531
        %v4559 = vmul.f32 %v4504, %v4531
        %v4560 = vmul.f32 %v4505, %v4531
        %v4561 = vmul.f32 %v4506, %v4531
        %v4562 = vmul.f32 %v4507, %v4531
        %v4563 = vmul.f32 %v4508, %v4531
        %v4564 = vmul.f32 %v4509, %v4531
        %v4565 = vmul.f32 %v4510, %v4531
        %v4566 = vmul.f32 %v4511, %v4531
        %v4567 = vmul.f32 %v4512, %v4531
        %v4568 = vmul.f32 %v4513, %v4531
        %v4569 = vmul.f32 %v4514, %v4531
        %v4570 = vmul.f32 %v4515, %v4531
        %v4571 = vmul.f32 %v4516, %v4531
        %v4572 = vmul.f32 %v4517, %v4531
        %v4573 = vmul.f32 %v4518, %v4531
        %v4574 = vmul.f32 %v4519, %v4531
        %v4575 = vmul.f32 %v4520, %v4531
        %v4576 = vmul.f32 %v4521, %v4531
        %v4577 = vmul.f32 %v4522, %v4531
        %v4578 = vmul.f32 %v4523, %v4531
        %v4579 = vmul.f32 %v4524, %v4531
        %v4580 = vmul.f32 %v4525, %v4531
        %v4581 = vmul.f32 %v4526, %v4531
        %v4582 = vmul.f32 %v4527, %v4531
        %v4583 = vmul.f32 %v4528, %v4531
        %v4584 = vmul.f32 %v4529, %v4531
        %v4585 = vmul.f32 %v4530, %v4531
        %v4586 = vpack.c.bf16 %v4532, %v4532
        %v4587 = vpack.c.bf16 %v4533, %v4533
        %v4588 = vpack.c.bf16 %v4534, %v4534
        %v4589 = vpack.c.bf16 %v4535, %v4535
        %v4590 = vpack.c.bf16 %v4536, %v4536
        %v4591 = vpack.c.bf16 %v4537, %v4537
        %v4592 = vpack.c.bf16 %v4538, %v4538
        %v4593 = vpack.c.bf16 %v4539, %v4539
        %v4594 = vpack.c.bf16 %v4540, %v4540
        %v4595 = vpack.c.bf16 %v4541, %v4541
        %v4596 = vpack.c.bf16 %v4542, %v4542
        %v4597 = vpack.c.bf16 %v4543, %v4543
        %v4598 = vpack.c.bf16 %v4544, %v4544
        %v4599 = vpack.c.bf16 %v4545, %v4545
        %v4600 = vpack.c.bf16 %v4546, %v4546
        %v4601 = vpack.c.bf16 %v4547, %v4547
        %v4602 = vpack.c.bf16 %v4548, %v4548
        %v4603 = vpack.c.bf16 %v4549, %v4549
        %v4604 = vpack.c.bf16 %v4550, %v4550
        %v4605 = vpack.c.bf16 %v4551, %v4551
        %v4606 = vpack.c.bf16 %v4552, %v4552
        %v4607 = vpack.c.bf16 %v4553, %v4553
        %v4608 = vpack.c.bf16 %v4554, %v4554
        %v4609 = vpack.c.bf16 %v4555, %v4555
        %v4610 = vpack.c.bf16 %v4556, %v4556
        %v4611 = vpack.c.bf16 %v4557, %v4557
        %v4612 = vpack.c.bf16 %v4558, %v4558
        %v4613 = vpack.c.bf16 %v4559, %v4559
        %v4614 = vpack.c.bf16 %v4560, %v4560
        %v4615 = vpack.c.bf16 %v4561, %v4561
        %v4616 = vpack.c.bf16 %v4562, %v4562
        %v4617 = vpack.c.bf16 %v4563, %v4563
        %v4618 = vpack.c.bf16 %v4564, %v4564
        %v4619 = vpack.c.bf16 %v4565, %v4565
        %v4620 = vpack.c.bf16 %v4566, %v4566
        %v4621 = vpack.c.bf16 %v4567, %v4567
        %v4622 = vpack.c.bf16 %v4568, %v4568
        %v4623 = vpack.c.bf16 %v4569, %v4569
        %v4624 = vpack.c.bf16 %v4570, %v4570
        %v4625 = vpack.c.bf16 %v4571, %v4571
        %v4626 = vpack.c.bf16 %v4572, %v4572
        %v4627 = vpack.c.bf16 %v4573, %v4573
        %v4628 = vpack.c.bf16 %v4574, %v4574
        %v4629 = vpack.c.bf16 %v4575, %v4575
        %v4630 = vpack.c.bf16 %v4576, %v4576
        %v4631 = vpack.c.bf16 %v4577, %v4577
        %v4632 = vpack.c.bf16 %v4578, %v4578
        %v4633 = vpack.c.bf16 %v4579, %v4579
        %v4634 = vpack.c.bf16 %v4580, %v4580
        %v4635 = vpack.c.bf16 %v4581, %v4581
        %v4636 = vpack.c.bf16 %v4582, %v4582
        %v4637 = vpack.c.bf16 %v4583, %v4583
        %v4638 = vpack.c.bf16 %v4584, %v4584
        %v4639 = vpack.c.bf16 %v4585, %v4585
        %v4672 = vunpack.c.l.b16 %v4586
        %v4673 = vunpack.c.l.b16 %v4587
        %v4674 = vunpack.c.l.b16 %v4589
        %v4675 = vunpack.c.l.b16 %v4590
        %v4676 = vunpack.c.l.b16 %v4592
        %v4677 = vunpack.c.l.b16 %v4593
        %v4678 = vunpack.c.l.b16 %v4595
        %v4679 = vunpack.c.l.b16 %v4596
        %v4680 = vunpack.c.l.b16 %v4598
        %v4681 = vunpack.c.l.b16 %v4599
        %v4682 = vunpack.c.l.b16 %v4601
        %v4683 = vunpack.c.l.b16 %v4602
        %v4684 = vunpack.c.l.b16 %v4604
        %v4685 = vunpack.c.l.b16 %v4605
        %v4686 = vunpack.c.l.b16 %v4607
        %v4687 = vunpack.c.l.b16 %v4608
        %v4688 = vunpack.c.l.b16 %v4610
        %v4689 = vunpack.c.l.b16 %v4611
        %v4690 = vunpack.c.l.b16 %v4613
        %v4691 = vunpack.c.l.b16 %v4614
        %v4692 = vunpack.c.l.b16 %v4616
        %v4693 = vunpack.c.l.b16 %v4617
        %v4694 = vunpack.c.l.b16 %v4619
        %v4695 = vunpack.c.l.b16 %v4620
        %v4696 = vunpack.c.l.b16 %v4622
        %v4697 = vunpack.c.l.b16 %v4623
        %v4698 = vunpack.c.l.b16 %v4625
        %v4699 = vunpack.c.l.b16 %v4626
        %v4700 = vunpack.c.l.b16 %v4628
        %v4701 = vunpack.c.l.b16 %v4629
        %v4702 = vunpack.c.l.b16 %v4631
        %v4703 = vunpack.c.l.b16 %v4632
        %v4704 = vpack.c.b16 %v4673, %v4672
        %v4705 = vpack.c.b16 %v4675, %v4674
        %v4706 = vpack.c.b16 %v4677, %v4676
        %v4707 = vpack.c.b16 %v4679, %v4678
        %v4708 = vpack.c.b16 %v4681, %v4680
        %v4709 = vpack.c.b16 %v4683, %v4682
        %v4710 = vpack.c.b16 %v4685, %v4684
        %v4711 = vpack.c.b16 %v4687, %v4686
        %v4712 = vpack.c.b16 %v4689, %v4688
        %v4713 = vpack.c.b16 %v4691, %v4690
        %v4714 = vpack.c.b16 %v4693, %v4692
        %v4715 = vpack.c.b16 %v4695, %v4694
        %v4716 = vpack.c.b16 %v4697, %v4696
        %v4717 = vpack.c.b16 %v4699, %v4698
        %v4718 = vpack.c.b16 %v4701, %v4700
        %v4719 = vpack.c.b16 %v4703, %v4702
        %v4752 = vunpack.c.l.b16 %v4588
        %v4753 = vunpack.c.l.b16 %v4591
        %v4754 = vunpack.c.l.b16 %v4594
        %v4755 = vunpack.c.l.b16 %v4597
        %v4756 = vunpack.c.l.b16 %v4600
        %v4757 = vunpack.c.l.b16 %v4603
        %v4758 = vunpack.c.l.b16 %v4606
        %v4759 = vunpack.c.l.b16 %v4609
        %v4760 = vunpack.c.l.b16 %v4612
        %v4761 = vunpack.c.l.b16 %v4615
        %v4762 = vunpack.c.l.b16 %v4618
        %v4763 = vunpack.c.l.b16 %v4621
        %v4764 = vunpack.c.l.b16 %v4624
        %v4765 = vunpack.c.l.b16 %v4627
        %v4766 = vunpack.c.l.b16 %v4630
        %v4767 = vunpack.c.l.b16 %v4633
        %v4768 = vpack.c.b16 %v4752, %v4752
        %v4769 = vpack.c.b16 %v4753, %v4753
        %v4770 = vpack.c.b16 %v4754, %v4754
        %v4771 = vpack.c.b16 %v4755, %v4755
        %v4772 = vpack.c.b16 %v4756, %v4756
        %v4773 = vpack.c.b16 %v4757, %v4757
        %v4774 = vpack.c.b16 %v4758, %v4758
        %v4775 = vpack.c.b16 %v4759, %v4759
        %v4776 = vpack.c.b16 %v4760, %v4760
        %v4777 = vpack.c.b16 %v4761, %v4761
        %v4778 = vpack.c.b16 %v4762, %v4762
        %v4779 = vpack.c.b16 %v4763, %v4763
        %v4780 = vpack.c.b16 %v4764, %v4764
        %v4781 = vpack.c.b16 %v4765, %v4765
        %v4782 = vpack.c.b16 %v4766, %v4766
        %v4783 = vpack.c.b16 %v4767, %v4767
        %v4785 = vshrl.u32 %v4704, 16
        %v4787 = vshll.u32 %v4704, 16
        %v4789 = vrot.slane %v4787, 1
        %v4790 = vor.u32 %v4785, %v4789
        %v4792 = vshll.u32 %v4768, 16
        %v4794 = vrot.slane %v4792, 1
        %v4795 = vsel %vm799, %v4790, %v4794
        %v4797 = vshrl.u32 %v4705, 16
        %v4799 = vshll.u32 %v4705, 16
        %v4801 = vrot.slane %v4799, 1
        %v4802 = vor.u32 %v4797, %v4801
        %v4804 = vshll.u32 %v4769, 16
        %v4806 = vrot.slane %v4804, 1
        %v4807 = vsel %vm799, %v4802, %v4806
        %v4809 = vshrl.u32 %v4706, 16
        %v4811 = vshll.u32 %v4706, 16
        %v4813 = vrot.slane %v4811, 1
        %v4814 = vor.u32 %v4809, %v4813
        %v4816 = vshll.u32 %v4770, 16
        %v4818 = vrot.slane %v4816, 1
        %v4819 = vsel %vm799, %v4814, %v4818
        %v4821 = vshrl.u32 %v4707, 16
        %v4823 = vshll.u32 %v4707, 16
        %v4825 = vrot.slane %v4823, 1
        %v4826 = vor.u32 %v4821, %v4825
        %v4828 = vshll.u32 %v4771, 16
        %v4830 = vrot.slane %v4828, 1
        %v4831 = vsel %vm799, %v4826, %v4830
        %v4833 = vshrl.u32 %v4708, 16
        %v4835 = vshll.u32 %v4708, 16
        %v4837 = vrot.slane %v4835, 1
        %v4838 = vor.u32 %v4833, %v4837
        %v4840 = vshll.u32 %v4772, 16
        %v4842 = vrot.slane %v4840, 1
        %v4843 = vsel %vm799, %v4838, %v4842
        %v4845 = vshrl.u32 %v4709, 16
        %v4847 = vshll.u32 %v4709, 16
        %v4849 = vrot.slane %v4847, 1
        %v4850 = vor.u32 %v4845, %v4849
        %v4852 = vshll.u32 %v4773, 16
        %v4854 = vrot.slane %v4852, 1
        %v4855 = vsel %vm799, %v4850, %v4854
        %v4857 = vshrl.u32 %v4710, 16
        %v4859 = vshll.u32 %v4710, 16
        %v4861 = vrot.slane %v4859, 1
        %v4862 = vor.u32 %v4857, %v4861
        %v4864 = vshll.u32 %v4774, 16
        %v4866 = vrot.slane %v4864, 1
        %v4867 = vsel %vm799, %v4862, %v4866
        %v4869 = vshrl.u32 %v4711, 16
        %v4871 = vshll.u32 %v4711, 16
        %v4873 = vrot.slane %v4871, 1
        %v4874 = vor.u32 %v4869, %v4873
        %v4876 = vshll.u32 %v4775, 16
        %v4878 = vrot.slane %v4876, 1
        %v4879 = vsel %vm799, %v4874, %v4878
        %v4881 = vshrl.u32 %v4712, 16
        %v4883 = vshll.u32 %v4712, 16
        %v4885 = vrot.slane %v4883, 1
        %v4886 = vor.u32 %v4881, %v4885
        %v4888 = vshll.u32 %v4776, 16
        %v4890 = vrot.slane %v4888, 1
        %v4891 = vsel %vm799, %v4886, %v4890
        %v4893 = vshrl.u32 %v4713, 16
        %v4895 = vshll.u32 %v4713, 16
        %v4897 = vrot.slane %v4895, 1
        %v4898 = vor.u32 %v4893, %v4897
        %v4900 = vshll.u32 %v4777, 16
        %v4902 = vrot.slane %v4900, 1
        %v4903 = vsel %vm799, %v4898, %v4902
        %v4905 = vshrl.u32 %v4714, 16
        %v4907 = vshll.u32 %v4714, 16
        %v4909 = vrot.slane %v4907, 1
        %v4910 = vor.u32 %v4905, %v4909
        %v4912 = vshll.u32 %v4778, 16
        %v4914 = vrot.slane %v4912, 1
        %v4915 = vsel %vm799, %v4910, %v4914
        %v4917 = vshrl.u32 %v4715, 16
        %v4919 = vshll.u32 %v4715, 16
        %v4921 = vrot.slane %v4919, 1
        %v4922 = vor.u32 %v4917, %v4921
        %v4924 = vshll.u32 %v4779, 16
        %v4926 = vrot.slane %v4924, 1
        %v4927 = vsel %vm799, %v4922, %v4926
        %v4929 = vshrl.u32 %v4716, 16
        %v4931 = vshll.u32 %v4716, 16
        %v4933 = vrot.slane %v4931, 1
        %v4934 = vor.u32 %v4929, %v4933
        %v4936 = vshll.u32 %v4780, 16
        %v4938 = vrot.slane %v4936, 1
        %v4939 = vsel %vm799, %v4934, %v4938
        %v4941 = vshrl.u32 %v4717, 16
        %v4943 = vshll.u32 %v4717, 16
        %v4945 = vrot.slane %v4943, 1
        %v4946 = vor.u32 %v4941, %v4945
        %v4948 = vshll.u32 %v4781, 16
        %v4950 = vrot.slane %v4948, 1
        %v4951 = vsel %vm799, %v4946, %v4950
        %v4953 = vshrl.u32 %v4718, 16
        %v4955 = vshll.u32 %v4718, 16
        %v4957 = vrot.slane %v4955, 1
        %v4958 = vor.u32 %v4953, %v4957
        %v4960 = vshll.u32 %v4782, 16
        %v4962 = vrot.slane %v4960, 1
        %v4963 = vsel %vm799, %v4958, %v4962
        %v4965 = vshrl.u32 %v4719, 16
        %v4967 = vshll.u32 %v4719, 16
        %v4969 = vrot.slane %v4967, 1
        %v4970 = vor.u32 %v4965, %v4969
        %v4972 = vshll.u32 %v4783, 16
        %v4974 = vrot.slane %v4972, 1
        %v4975 = vsel %vm799, %v4970, %v4974
        %v4992 = vrot.slane %v4704, 1
        %v4993 = vrot.slane %v4768, 1
        %v4994 = vsel %vm1008, %v4992, %v4993
        %v4995 = vrot.slane %v4705, 1
        %v4996 = vrot.slane %v4769, 1
        %v4997 = vsel %vm1008, %v4995, %v4996
        %v4998 = vrot.slane %v4706, 1
        %v4999 = vrot.slane %v4770, 1
        %v5000 = vsel %vm1008, %v4998, %v4999
        %v5001 = vrot.slane %v4707, 1
        %v5002 = vrot.slane %v4771, 1
        %v5003 = vsel %vm1008, %v5001, %v5002
        %v5004 = vrot.slane %v4708, 1
        %v5005 = vrot.slane %v4772, 1
        %v5006 = vsel %vm1008, %v5004, %v5005
        %v5007 = vrot.slane %v4709, 1
        %v5008 = vrot.slane %v4773, 1
        %v5009 = vsel %vm1008, %v5007, %v5008
        %v5010 = vrot.slane %v4710, 1
        %v5011 = vrot.slane %v4774, 1
        %v5012 = vsel %vm1008, %v5010, %v5011
        %v5013 = vrot.slane %v4711, 1
        %v5014 = vrot.slane %v4775, 1
        %v5015 = vsel %vm1008, %v5013, %v5014
        %v5016 = vrot.slane %v4712, 1
        %v5017 = vrot.slane %v4776, 1
        %v5018 = vsel %vm1008, %v5016, %v5017
        %v5019 = vrot.slane %v4713, 1
        %v5020 = vrot.slane %v4777, 1
        %v5021 = vsel %vm1008, %v5019, %v5020
        %v5022 = vrot.slane %v4714, 1
        %v5023 = vrot.slane %v4778, 1
        %v5024 = vsel %vm1008, %v5022, %v5023
        %v5025 = vrot.slane %v4715, 1
        %v5026 = vrot.slane %v4779, 1
        %v5027 = vsel %vm1008, %v5025, %v5026
        %v5028 = vrot.slane %v4716, 1
        %v5029 = vrot.slane %v4780, 1
        %v5030 = vsel %vm1008, %v5028, %v5029
        %v5031 = vrot.slane %v4717, 1
        %v5032 = vrot.slane %v4781, 1
        %v5033 = vsel %vm1008, %v5031, %v5032
        %v5034 = vrot.slane %v4718, 1
        %v5035 = vrot.slane %v4782, 1
        %v5036 = vsel %vm1008, %v5034, %v5035
        %v5037 = vrot.slane %v4719, 1
        %v5038 = vrot.slane %v4783, 1
        %v5039 = vsel %vm1008, %v5037, %v5038
        %v5058 = vunpack.c.l.b16 %v4634
        %v5059 = vunpack.c.l.b16 %v4635
        %v5060 = vpack.c.b16 %v5059, %v5058
        %v5063 = vunpack.c.l.b16 %v4636
        %v5064 = vpack.c.b16 %v5063, %v5063
        %v5066 = vshrl.u32 %v5060, 16
        %v5068 = vshll.u32 %v5060, 16
        %v5070 = vrot.slane %v5068, 1
        %v5071 = vor.u32 %v5066, %v5070
        %v5073 = vshll.u32 %v5064, 16
        %v5075 = vrot.slane %v5073, 1
        %v5076 = vsel %vm799, %v5071, %v5075
        %v5078 = vrot.slane %v5060, 1
        %v5079 = vrot.slane %v5064, 1
        %v5080 = vsel %vm1008, %v5078, %v5079
        %v5084 = vunpack.c.l.b16 %v4637
        %v5085 = vunpack.c.l.b16 %v4638
        %v5086 = vpack.c.b16 %v5085, %v5084
        %v5089 = vunpack.c.l.b16 %v4639
        %v5090 = vpack.c.b16 %v5089, %v5089
        %v5092 = vshrl.u32 %v5086, 16
        %v5094 = vshll.u32 %v5086, 16
        %v5096 = vrot.slane %v5094, 1
        %v5097 = vor.u32 %v5092, %v5096
        %v5099 = vshll.u32 %v5090, 16
        %v5101 = vrot.slane %v5099, 1
        %v5102 = vsel %vm799, %v5097, %v5101
        %v5104 = vrot.slane %v5086, 1
        %v5105 = vrot.slane %v5090, 1
        %v5106 = vsel %vm1008, %v5104, %v5105
        %s5108 = scalar_lea.vmem %s3, 1152
        %v5109 = vld [vmem:[%s5108] sm:$0xf]
        %v5110 = vld [vmem:[%s5108 + $0x4] sm:$0xf]
        %v5111 = vld [vmem:[%s5108 + $0x8] sm:$0xf]
        %v5112 = vld [vmem:[%s5108 + $0xc] sm:$0xf]
        %v5113 = vld [vmem:[%s5108 + $0x10] sm:$0xf]
        %v5114 = vld [vmem:[%s5108 + $0x14] sm:$0xf]
        %v5115 = vld [vmem:[%s5108 + $0x18] sm:$0xf]
        %v5116 = vld [vmem:[%s5108 + $0x1c] sm:$0xf]
        %v5117 = vld [vmem:[%s5108 + $0x20] sm:$0xf]
        %v5118 = vld [vmem:[%s5108 + $0x24] sm:$0xf]
        %v5119 = vld [vmem:[%s5108 + $0x28] sm:$0xf]
        %v5120 = vld [vmem:[%s5108 + $0x2c] sm:$0xf]
        %v5121 = vld [vmem:[%s5108 + $0x30] sm:$0xf]
        %v5122 = vld [vmem:[%s5108 + $0x34] sm:$0xf]
        %v5123 = vld [vmem:[%s5108 + $0x38] sm:$0xf]
        %v5124 = vld [vmem:[%s5108 + $0x3c] sm:$0xf]
        %v5125 = vld [vmem:[%s5108 + $0x40] sm:$0xf]
        %v5126 = vld [vmem:[%s5108 + $0x44] sm:$0xf]
        %v5127 = vld [vmem:[%s5108 + $0x48] sm:$0xf]
        %v5128 = vld [vmem:[%s5108 + $0x4c] sm:$0xf]
        %v5129 = vld [vmem:[%s5108 + $0x50] sm:$0xf]
        %v5130 = vld [vmem:[%s5108 + $0x54] sm:$0xf]
        %v5131 = vld [vmem:[%s5108 + $0x58] sm:$0xf]
        %v5132 = vld [vmem:[%s5108 + $0x5c] sm:$0xf]
        %v5133 = vld [vmem:[%s5108 + $0x60] sm:$0xf]
        %v5134 = vld [vmem:[%s5108 + $0x64] sm:$0xf]
        %v5135 = vld [vmem:[%s5108 + $0x68] sm:$0xf]
        %v5136 = vld [vmem:[%s5108 + $0x6c] sm:$0xf]
        %v5137 = vld [vmem:[%s5108 + $0x70] sm:$0xf]
        %v5138 = vld [vmem:[%s5108 + $0x74] sm:$0xf]
        %v5139 = vld [vmem:[%s5108 + $0x78] sm:$0xf]
        %v5140 = vld [vmem:[%s5108 + $0x7c] sm:$0xf]
        %v5141 = vld [vmem:[%s5108 + $0x80] sm:$0xf]
        %v5142 = vld [vmem:[%s5108 + $0x84] sm:$0xf]
        %v5143 = vld [vmem:[%s5108 + $0x88] sm:$0xf]
        %v5144 = vld [vmem:[%s5108 + $0x8c] sm:$0xf]
        %v5145 = vld [vmem:[%s5108 + $0x90] sm:$0xf]
        %v5146 = vld [vmem:[%s5108 + $0x94] sm:$0xf]
        %v5147 = vld [vmem:[%s5108 + $0x98] sm:$0xf]
        %v5148 = vld [vmem:[%s5108 + $0x9c] sm:$0xf]
        %v5149 = vld [vmem:[%s5108 + $0xa0] sm:$0xf]
        %v5150 = vld [vmem:[%s5108 + $0xa4] sm:$0xf]
        %v5151 = vld [vmem:[%s5108 + $0xa8] sm:$0xf]
        %v5152 = vld [vmem:[%s5108 + $0xac] sm:$0xf]
        %v5153 = vld [vmem:[%s5108 + $0xb0] sm:$0xf]
        %v5154 = vld [vmem:[%s5108 + $0xb4] sm:$0xf]
        %v5155 = vld [vmem:[%s5108 + $0xb8] sm:$0xf]
        %v5156 = vld [vmem:[%s5108 + $0xbc] sm:$0xf]
        %v5157 = vld [vmem:[%s5108 + $0xc0] sm:$0xf]
        %v5158 = vld [vmem:[%s5108 + $0xc4] sm:$0xf]
        %v5159 = vld [vmem:[%s5108 + $0xc8] sm:$0xf]
        %v5160 = vld [vmem:[%s5108 + $0xcc] sm:$0xf]
        %v5161 = vld [vmem:[%s5108 + $0xd0] sm:$0xf]
        %v5162 = vld [vmem:[%s5108 + $0xd4] sm:$0xf]
        %v5163 = vld [vmem:[%s5108 + $0xd8] sm:$0xf]
        %v5164 = vld [vmem:[%s5108 + $0xdc] sm:$0xf]
        %v5165 = vld [vmem:[%s5108 + $0xe0] sm:$0xf]
        %v5166 = vld [vmem:[%s5108 + $0xe4] sm:$0xf]
        %v5167 = vld [vmem:[%s5108 + $0xe8] sm:$0xf]
        %v5168 = vld [vmem:[%s5108 + $0xec] sm:$0xf]
        %v5169 = vld [vmem:[%s5108 + $0xf0] sm:$0xf]
        %v5170 = vld [vmem:[%s5108 + $0xf4] sm:$0xf]
        %v5171 = vld [vmem:[%s5108 + $0xf8] sm:$0xf]
        %v5172 = vld [vmem:[%s5108 + $0xfc] sm:$0xf]
        %v5173 = vld [vmem:[%s5108 + $0x100] sm:$0xf]
        %v5174 = vld [vmem:[%s5108 + $0x104] sm:$0xf]
        %v5175 = vld [vmem:[%s5108 + $0x108] sm:$0xf]
        %v5176 = vld [vmem:[%s5108 + $0x10c] sm:$0xf]
        %v5177 = vld [vmem:[%s5108 + $0x110] sm:$0xf]
        %v5178 = vld [vmem:[%s5108 + $0x114] sm:$0xf]
        %v5179 = vld [vmem:[%s5108 + $0x118] sm:$0xf]
        %v5180 = vld [vmem:[%s5108 + $0x11c] sm:$0xf]
        %v5181 = vld [vmem:[%s5108 + $0x120] sm:$0xf]
        %v5182 = vld [vmem:[%s5108 + $0x124] sm:$0xf]
        %v5183 = vld [vmem:[%s5108 + $0x128] sm:$0xf]
        %v5184 = vld [vmem:[%s5108 + $0x12c] sm:$0xf]
        %v5185 = vld [vmem:[%s5108 + $0x130] sm:$0xf]
        %v5186 = vld [vmem:[%s5108 + $0x134] sm:$0xf]
        %v5187 = vld [vmem:[%s5108 + $0x138] sm:$0xf]
        %v5188 = vld [vmem:[%s5108 + $0x13c] sm:$0xf]
        %v5189 = vld [vmem:[%s5108 + $0x140] sm:$0xf]
        %v5190 = vld [vmem:[%s5108 + $0x144] sm:$0xf]
        %v5191 = vld [vmem:[%s5108 + $0x148] sm:$0xf]
        %v5192 = vld [vmem:[%s5108 + $0x14c] sm:$0xf]
        %v5193 = vld [vmem:[%s5108 + $0x150] sm:$0xf]
        %v5194 = vld [vmem:[%s5108 + $0x154] sm:$0xf]
        %v5195 = vld [vmem:[%s5108 + $0x158] sm:$0xf]
        %v5196 = vld [vmem:[%s5108 + $0x15c] sm:$0xf]
        %v5197 = vld [vmem:[%s5108 + $0x160] sm:$0xf]
        %v5198 = vld [vmem:[%s5108 + $0x164] sm:$0xf]
        %v5199 = vld [vmem:[%s5108 + $0x168] sm:$0xf]
        %v5200 = vld [vmem:[%s5108 + $0x16c] sm:$0xf]
        %v5201 = vld [vmem:[%s5108 + $0x170] sm:$0xf]
        %v5202 = vld [vmem:[%s5108 + $0x174] sm:$0xf]
        %v5203 = vld [vmem:[%s5108 + $0x178] sm:$0xf]
        %v5204 = vld [vmem:[%s5108 + $0x17c] sm:$0xf]
        %v5205 = vld [vmem:[%s5108 + $0x180] sm:$0xf]
        %v5206 = vld [vmem:[%s5108 + $0x184] sm:$0xf]
        %v5207 = vld [vmem:[%s5108 + $0x188] sm:$0xf]
        %v5208 = vld [vmem:[%s5108 + $0x18c] sm:$0xf]
        %v5209 = vld [vmem:[%s5108 + $0x190] sm:$0xf]
        %v5210 = vld [vmem:[%s5108 + $0x194] sm:$0xf]
        %v5211 = vld [vmem:[%s5108 + $0x198] sm:$0xf]
        %v5212 = vld [vmem:[%s5108 + $0x19c] sm:$0xf]
        %v5213 = vld [vmem:[%s5108 + $0x1a0] sm:$0xf]
        %v5214 = vld [vmem:[%s5108 + $0x1a4] sm:$0xf]
        %v5215 = vld [vmem:[%s5108 + $0x1a8] sm:$0xf]
        %v5216 = vld [vmem:[%s5108 + $0x1ac] sm:$0xf]
        %v5217 = vld [vmem:[%s5108 + $0x1b0] sm:$0xf]
        %v5218 = vld [vmem:[%s5108 + $0x1b4] sm:$0xf]
        %v5219 = vld [vmem:[%s5108 + $0x1b8] sm:$0xf]
        %v5220 = vld [vmem:[%s5108 + $0x1bc] sm:$0xf]
        %v5221 = vld [vmem:[%s5108 + $0x1c0] sm:$0xf]
        %v5222 = vld [vmem:[%s5108 + $0x1c4] sm:$0xf]
        %v5223 = vld [vmem:[%s5108 + $0x1c8] sm:$0xf]
        %v5224 = vld [vmem:[%s5108 + $0x1cc] sm:$0xf]
        %v5225 = vld [vmem:[%s5108 + $0x1d0] sm:$0xf]
        %v5226 = vld [vmem:[%s5108 + $0x1d4] sm:$0xf]
        %v5227 = vld [vmem:[%s5108 + $0x1d8] sm:$0xf]
        %v5228 = vld [vmem:[%s5108 + $0x1dc] sm:$0xf]
        %v5229 = vld [vmem:[%s5108 + $0x1e0] sm:$0xf]
        %v5230 = vld [vmem:[%s5108 + $0x1e4] sm:$0xf]
        %v5231 = vld [vmem:[%s5108 + $0x1e8] sm:$0xf]
        %v5232 = vld [vmem:[%s5108 + $0x1ec] sm:$0xf]
        %v5233 = vld [vmem:[%s5108 + $0x1f0] sm:$0xf]
        %v5234 = vld [vmem:[%s5108 + $0x1f4] sm:$0xf]
        %v5235 = vld [vmem:[%s5108 + $0x1f8] sm:$0xf]
        %v5236 = vld [vmem:[%s5108 + $0x1fc] sm:$0xf]
        %v5237 = vld [vmem:[%s5108 + $0x200] sm:$0xf]
        %v5238 = vld [vmem:[%s5108 + $0x204] sm:$0xf]
        %v5239 = vld [vmem:[%s5108 + $0x208] sm:$0xf]
        %v5240 = vld [vmem:[%s5108 + $0x20c] sm:$0xf]
        %v5241 = vld [vmem:[%s5108 + $0x210] sm:$0xf]
        %v5242 = vld [vmem:[%s5108 + $0x214] sm:$0xf]
        %v5243 = vld [vmem:[%s5108 + $0x218] sm:$0xf]
        %v5244 = vld [vmem:[%s5108 + $0x21c] sm:$0xf]
        %v5245 = vld [vmem:[%s5108 + $0x220] sm:$0xf]
        %v5246 = vld [vmem:[%s5108 + $0x224] sm:$0xf]
        %v5247 = vld [vmem:[%s5108 + $0x228] sm:$0xf]
        %v5248 = vld [vmem:[%s5108 + $0x22c] sm:$0xf]
        %v5249 = vld [vmem:[%s5108 + $0x230] sm:$0xf]
        %v5250 = vld [vmem:[%s5108 + $0x234] sm:$0xf]
        %v5251 = vld [vmem:[%s5108 + $0x238] sm:$0xf]
        %v5252 = vld [vmem:[%s5108 + $0x23c] sm:$0xf]
        %v5397 = vunpack.c.l.b16 %v5109
        %v5398 = vunpack.c.l.b16 %v5110
        %v5399 = vunpack.c.l.b16 %v5111
        %v5400 = vunpack.c.l.b16 %v5112
        %v5401 = vunpack.c.l.b16 %v5113
        %v5402 = vunpack.c.l.b16 %v5114
        %v5403 = vunpack.c.l.b16 %v5115
        %v5404 = vunpack.c.l.b16 %v5116
        %v5405 = vunpack.c.l.b16 %v5117
        %v5406 = vunpack.c.l.b16 %v5118
        %v5407 = vunpack.c.l.b16 %v5119
        %v5408 = vunpack.c.l.b16 %v5120
        %v5409 = vunpack.c.l.b16 %v5121
        %v5410 = vunpack.c.l.b16 %v5122
        %v5411 = vunpack.c.l.b16 %v5123
        %v5412 = vunpack.c.l.b16 %v5124
        %v5413 = vunpack.c.l.b16 %v5125
        %v5414 = vunpack.c.l.b16 %v5126
        %v5415 = vunpack.c.l.b16 %v5127
        %v5416 = vunpack.c.l.b16 %v5128
        %v5417 = vunpack.c.l.b16 %v5129
        %v5418 = vunpack.c.l.b16 %v5130
        %v5419 = vunpack.c.l.b16 %v5131
        %v5420 = vunpack.c.l.b16 %v5132
        %v5421 = vunpack.c.l.b16 %v5133
        %v5422 = vunpack.c.l.b16 %v5134
        %v5423 = vunpack.c.l.b16 %v5135
        %v5424 = vunpack.c.l.b16 %v5136
        %v5425 = vunpack.c.l.b16 %v5137
        %v5426 = vunpack.c.l.b16 %v5138
        %v5427 = vunpack.c.l.b16 %v5139
        %v5428 = vunpack.c.l.b16 %v5140
        %v5429 = vunpack.c.l.b16 %v5141
        %v5430 = vunpack.c.l.b16 %v5142
        %v5431 = vunpack.c.l.b16 %v5143
        %v5432 = vunpack.c.l.b16 %v5144
        %v5433 = vunpack.c.l.b16 %v5145
        %v5434 = vunpack.c.l.b16 %v5146
        %v5435 = vunpack.c.l.b16 %v5147
        %v5436 = vunpack.c.l.b16 %v5148
        %v5437 = vunpack.c.l.b16 %v5149
        %v5438 = vunpack.c.l.b16 %v5150
        %v5439 = vunpack.c.l.b16 %v5151
        %v5440 = vunpack.c.l.b16 %v5152
        %v5441 = vunpack.c.l.b16 %v5153
        %v5442 = vunpack.c.l.b16 %v5154
        %v5443 = vunpack.c.l.b16 %v5155
        %v5444 = vunpack.c.l.b16 %v5156
        %v5445 = vunpack.c.l.b16 %v5157
        %v5446 = vunpack.c.l.b16 %v5158
        %v5447 = vunpack.c.l.b16 %v5159
        %v5448 = vunpack.c.l.b16 %v5160
        %v5449 = vunpack.c.l.b16 %v5161
        %v5450 = vunpack.c.l.b16 %v5162
        %v5451 = vunpack.c.l.b16 %v5163
        %v5452 = vunpack.c.l.b16 %v5164
        %v5453 = vunpack.c.l.b16 %v5165
        %v5454 = vunpack.c.l.b16 %v5166
        %v5455 = vunpack.c.l.b16 %v5167
        %v5456 = vunpack.c.l.b16 %v5168
        %v5457 = vunpack.c.l.b16 %v5169
        %v5458 = vunpack.c.l.b16 %v5170
        %v5459 = vunpack.c.l.b16 %v5171
        %v5460 = vunpack.c.l.b16 %v5172
        %v5461 = vunpack.c.l.b16 %v5173
        %v5462 = vunpack.c.l.b16 %v5174
        %v5463 = vunpack.c.l.b16 %v5175
        %v5464 = vunpack.c.l.b16 %v5176
        %v5465 = vunpack.c.l.b16 %v5177
        %v5466 = vunpack.c.l.b16 %v5178
        %v5467 = vunpack.c.l.b16 %v5179
        %v5468 = vunpack.c.l.b16 %v5180
        %v5469 = vunpack.c.l.b16 %v5181
        %v5470 = vunpack.c.l.b16 %v5182
        %v5471 = vunpack.c.l.b16 %v5183
        %v5472 = vunpack.c.l.b16 %v5184
        %v5473 = vunpack.c.l.b16 %v5185
        %v5474 = vunpack.c.l.b16 %v5186
        %v5475 = vunpack.c.l.b16 %v5187
        %v5476 = vunpack.c.l.b16 %v5188
        %v5477 = vunpack.c.l.b16 %v5189
        %v5478 = vunpack.c.l.b16 %v5190
        %v5479 = vunpack.c.l.b16 %v5191
        %v5480 = vunpack.c.l.b16 %v5192
        %v5481 = vunpack.c.l.b16 %v5193
        %v5482 = vunpack.c.l.b16 %v5194
        %v5483 = vunpack.c.l.b16 %v5195
        %v5484 = vunpack.c.l.b16 %v5196
        %v5485 = vunpack.c.l.b16 %v5197
        %v5486 = vunpack.c.l.b16 %v5198
        %v5487 = vunpack.c.l.b16 %v5199
        %v5488 = vunpack.c.l.b16 %v5200
        %v5489 = vunpack.c.l.b16 %v5201
        %v5490 = vunpack.c.l.b16 %v5202
        %v5491 = vunpack.c.l.b16 %v5203
        %v5492 = vunpack.c.l.b16 %v5204
        %v5493 = vunpack.c.l.b16 %v5205
        %v5494 = vunpack.c.l.b16 %v5206
        %v5495 = vunpack.c.l.b16 %v5207
        %v5496 = vunpack.c.l.b16 %v5208
        %v5497 = vunpack.c.l.b16 %v5209
        %v5498 = vunpack.c.l.b16 %v5210
        %v5499 = vunpack.c.l.b16 %v5211
        %v5500 = vunpack.c.l.b16 %v5212
        %v5501 = vunpack.c.l.b16 %v5213
        %v5502 = vunpack.c.l.b16 %v5214
        %v5503 = vunpack.c.l.b16 %v5215
        %v5504 = vunpack.c.l.b16 %v5216
        %v5505 = vunpack.c.l.b16 %v5217
        %v5506 = vunpack.c.l.b16 %v5218
        %v5507 = vunpack.c.l.b16 %v5219
        %v5508 = vunpack.c.l.b16 %v5220
        %v5509 = vunpack.c.l.b16 %v5221
        %v5510 = vunpack.c.l.b16 %v5222
        %v5511 = vunpack.c.l.b16 %v5223
        %v5512 = vunpack.c.l.b16 %v5224
        %v5513 = vunpack.c.l.b16 %v5225
        %v5514 = vunpack.c.l.b16 %v5226
        %v5515 = vunpack.c.l.b16 %v5227
        %v5516 = vunpack.c.l.b16 %v5228
        %v5517 = vunpack.c.l.b16 %v5229
        %v5518 = vunpack.c.l.b16 %v5230
        %v5519 = vunpack.c.l.b16 %v5231
        %v5520 = vunpack.c.l.b16 %v5232
        %v5521 = vunpack.c.l.b16 %v5233
        %v5522 = vunpack.c.l.b16 %v5234
        %v5523 = vunpack.c.l.b16 %v5235
        %v5524 = vunpack.c.l.b16 %v5236
        %v5525 = vunpack.c.l.b16 %v5237
        %v5526 = vunpack.c.l.b16 %v5238
        %v5527 = vunpack.c.l.b16 %v5239
        %v5528 = vunpack.c.l.b16 %v5240
        %v5529 = vunpack.c.l.b16 %v5241
        %v5530 = vunpack.c.l.b16 %v5242
        %v5531 = vunpack.c.l.b16 %v5243
        %v5532 = vunpack.c.l.b16 %v5244
        %v5533 = vunpack.c.l.b16 %v5245
        %v5534 = vunpack.c.l.b16 %v5246
        %v5535 = vunpack.c.l.b16 %v5247
        %v5536 = vunpack.c.l.b16 %v5248
        %v5537 = vunpack.c.l.b16 %v5249
        %v5538 = vunpack.c.l.b16 %v5250
        %v5539 = vunpack.c.l.b16 %v5251
        %v5540 = vunpack.c.l.b16 %v5252
        %v5541 = vpack.c.b16 %v5398, %v5397
        %v5542 = vpack.c.b16 %v5400, %v5399
        %v5543 = vpack.c.b16 %v5402, %v5401
        %v5544 = vpack.c.b16 %v5404, %v5403
        %v5545 = vpack.c.b16 %v5406, %v5405
        %v5546 = vpack.c.b16 %v5408, %v5407
        %v5547 = vpack.c.b16 %v5410, %v5409
        %v5548 = vpack.c.b16 %v5412, %v5411
        %v5549 = vpack.c.b16 %v5414, %v5413
        %v5550 = vpack.c.b16 %v5416, %v5415
        %v5551 = vpack.c.b16 %v5418, %v5417
        %v5552 = vpack.c.b16 %v5420, %v5419
        %v5553 = vpack.c.b16 %v5422, %v5421
        %v5554 = vpack.c.b16 %v5424, %v5423
        %v5555 = vpack.c.b16 %v5426, %v5425
        %v5556 = vpack.c.b16 %v5428, %v5427
        %v5557 = vpack.c.b16 %v5430, %v5429
        %v5558 = vpack.c.b16 %v5432, %v5431
        %v5559 = vpack.c.b16 %v5434, %v5433
        %v5560 = vpack.c.b16 %v5436, %v5435
        %v5561 = vpack.c.b16 %v5438, %v5437
        %v5562 = vpack.c.b16 %v5440, %v5439
        %v5563 = vpack.c.b16 %v5442, %v5441
        %v5564 = vpack.c.b16 %v5444, %v5443
        %v5565 = vpack.c.b16 %v5446, %v5445
        %v5566 = vpack.c.b16 %v5448, %v5447
        %v5567 = vpack.c.b16 %v5450, %v5449
        %v5568 = vpack.c.b16 %v5452, %v5451
        %v5569 = vpack.c.b16 %v5454, %v5453
        %v5570 = vpack.c.b16 %v5456, %v5455
        %v5571 = vpack.c.b16 %v5458, %v5457
        %v5572 = vpack.c.b16 %v5460, %v5459
        %v5573 = vpack.c.b16 %v5462, %v5461
        %v5574 = vpack.c.b16 %v5464, %v5463
        %v5575 = vpack.c.b16 %v5466, %v5465
        %v5576 = vpack.c.b16 %v5468, %v5467
        %v5577 = vpack.c.b16 %v5470, %v5469
        %v5578 = vpack.c.b16 %v5472, %v5471
        %v5579 = vpack.c.b16 %v5474, %v5473
        %v5580 = vpack.c.b16 %v5476, %v5475
        %v5581 = vpack.c.b16 %v5478, %v5477
        %v5582 = vpack.c.b16 %v5480, %v5479
        %v5583 = vpack.c.b16 %v5482, %v5481
        %v5584 = vpack.c.b16 %v5484, %v5483
        %v5585 = vpack.c.b16 %v5486, %v5485
        %v5586 = vpack.c.b16 %v5488, %v5487
        %v5587 = vpack.c.b16 %v5490, %v5489
        %v5588 = vpack.c.b16 %v5492, %v5491
        %v5589 = vpack.c.b16 %v5494, %v5493
        %v5590 = vpack.c.b16 %v5496, %v5495
        %v5591 = vpack.c.b16 %v5498, %v5497
        %v5592 = vpack.c.b16 %v5500, %v5499
        %v5593 = vpack.c.b16 %v5502, %v5501
        %v5594 = vpack.c.b16 %v5504, %v5503
        %v5595 = vpack.c.b16 %v5506, %v5505
        %v5596 = vpack.c.b16 %v5508, %v5507
        %v5597 = vpack.c.b16 %v5510, %v5509
        %v5598 = vpack.c.b16 %v5512, %v5511
        %v5599 = vpack.c.b16 %v5514, %v5513
        %v5600 = vpack.c.b16 %v5516, %v5515
        %v5601 = vpack.c.b16 %v5518, %v5517
        %v5602 = vpack.c.b16 %v5520, %v5519
        %v5603 = vpack.c.b16 %v5522, %v5521
        %v5604 = vpack.c.b16 %v5524, %v5523
        %v5605 = vpack.c.b16 %v5526, %v5525
        %v5606 = vpack.c.b16 %v5528, %v5527
        %v5607 = vpack.c.b16 %v5530, %v5529
        %v5608 = vpack.c.b16 %v5532, %v5531
        %v5609 = vpack.c.b16 %v5534, %v5533
        %v5610 = vpack.c.b16 %v5536, %v5535
        %v5611 = vpack.c.b16 %v5538, %v5537
        %v5612 = vpack.c.b16 %v5540, %v5539
        %5685 = vmatpush.bf16.msra.mxu0 %v5548
        %5686 = vmatpush.bf16.msra.mxu0 %v5547
        %5687 = vmatpush.bf16.msra.mxu0 %v5546
        %5688 = vmatpush.bf16.msra.mxu0 %v5545
        %5689 = vmatpush.bf16.msra.mxu0 %v5544
        %5690 = vmatpush.bf16.msra.mxu0 %v5543
        %5691 = vmatpush.bf16.msra.mxu0 %v5542
        %5692 = vmatpush.bf16.msra.mxu0 %v5541
        %5693 = vmatmul.bf16.gmra.mxu0 %v4704
        %v5694 = vpop.f32.mrf.mxu0
        %v5695 = vadd.f32 0.0, %v5694
        %v5696 = vpop.f32.mrf.mxu0
        %v5697 = vadd.f32 0.0, %v5696
        %5698 = vmatmul.bf16.gmra.mxu0 %v4705
        %v5699 = vpop.f32.mrf.mxu0
        %v5700 = vadd.f32 0.0, %v5699
        %v5701 = vpop.f32.mrf.mxu0
        %v5702 = vadd.f32 0.0, %v5701
        %5703 = vmatmul.bf16.gmra.mxu0 %v4706
        %v5704 = vpop.f32.mrf.mxu0
        %v5705 = vadd.f32 0.0, %v5704
        %v5706 = vpop.f32.mrf.mxu0
        %v5707 = vadd.f32 0.0, %v5706
        %5708 = vmatmul.bf16.gmra.mxu0 %v4707
        %v5709 = vpop.f32.mrf.mxu0
        %v5710 = vadd.f32 0.0, %v5709
        %v5711 = vpop.f32.mrf.mxu0
        %v5712 = vadd.f32 0.0, %v5711
        %5713 = vmatmul.bf16.gmra.mxu0 %v4708
        %v5714 = vpop.f32.mrf.mxu0
        %v5715 = vadd.f32 0.0, %v5714
        %v5716 = vpop.f32.mrf.mxu0
        %v5717 = vadd.f32 0.0, %v5716
        %5718 = vmatmul.bf16.gmra.mxu0 %v4709
        %v5719 = vpop.f32.mrf.mxu0
        %v5720 = vadd.f32 0.0, %v5719
        %v5721 = vpop.f32.mrf.mxu0
        %v5722 = vadd.f32 0.0, %v5721
        %5723 = vmatmul.bf16.gmra.mxu0 %v4710
        %v5724 = vpop.f32.mrf.mxu0
        %v5725 = vadd.f32 0.0, %v5724
        %v5726 = vpop.f32.mrf.mxu0
        %v5727 = vadd.f32 0.0, %v5726
        %5728 = vmatmul.bf16.gmra.mxu0 %v4711
        %v5729 = vpop.f32.mrf.mxu0
        %v5730 = vadd.f32 0.0, %v5729
        %v5731 = vpop.f32.mrf.mxu0
        %v5732 = vadd.f32 0.0, %v5731
        %5733 = vmatmul.bf16.gmra.mxu0 %v4712
        %v5734 = vpop.f32.mrf.mxu0
        %v5735 = vadd.f32 0.0, %v5734
        %v5736 = vpop.f32.mrf.mxu0
        %v5737 = vadd.f32 0.0, %v5736
        %5738 = vmatmul.bf16.gmra.mxu0 %v4713
        %v5739 = vpop.f32.mrf.mxu0
        %v5740 = vadd.f32 0.0, %v5739
        %v5741 = vpop.f32.mrf.mxu0
        %v5742 = vadd.f32 0.0, %v5741
        %5743 = vmatmul.bf16.gmra.mxu0 %v4714
        %v5744 = vpop.f32.mrf.mxu0
        %v5745 = vadd.f32 0.0, %v5744
        %v5746 = vpop.f32.mrf.mxu0
        %v5747 = vadd.f32 0.0, %v5746
        %5748 = vmatmul.bf16.gmra.mxu0 %v4715
        %v5749 = vpop.f32.mrf.mxu0
        %v5750 = vadd.f32 0.0, %v5749
        %v5751 = vpop.f32.mrf.mxu0
        %v5752 = vadd.f32 0.0, %v5751
        %5753 = vmatmul.bf16.gmra.mxu0 %v4716
        %v5754 = vpop.f32.mrf.mxu0
        %v5755 = vadd.f32 0.0, %v5754
        %v5756 = vpop.f32.mrf.mxu0
        %v5757 = vadd.f32 0.0, %v5756
        %5758 = vmatmul.bf16.gmra.mxu0 %v4717
        %v5759 = vpop.f32.mrf.mxu0
        %v5760 = vadd.f32 0.0, %v5759
        %v5761 = vpop.f32.mrf.mxu0
        %v5762 = vadd.f32 0.0, %v5761
        %5763 = vmatmul.bf16.gmra.mxu0 %v4718
        %v5764 = vpop.f32.mrf.mxu0
        %v5765 = vadd.f32 0.0, %v5764
        %v5766 = vpop.f32.mrf.mxu0
        %v5767 = vadd.f32 0.0, %v5766
        %5768 = vmatmul.bf16.gmra.mxu0 %v4719
        %v5769 = vpop.f32.mrf.mxu0
        %v5770 = vadd.f32 0.0, %v5769
        %v5771 = vpop.f32.mrf.mxu0
        %v5772 = vadd.f32 0.0, %v5771
        %5773 = vdwg.mxu0
        %5774 = vmatpush.bf16.msra.mxu0 %v5556
        %5775 = vmatpush.bf16.msra.mxu0 %v5555
        %5776 = vmatpush.bf16.msra.mxu0 %v5554
        %5777 = vmatpush.bf16.msra.mxu0 %v5553
        %5778 = vmatpush.bf16.msra.mxu0 %v5552
        %5779 = vmatpush.bf16.msra.mxu0 %v5551
        %5780 = vmatpush.bf16.msra.mxu0 %v5550
        %5781 = vmatpush.bf16.msra.mxu0 %v5549
        %5782 = vmatmul.bf16.gmra.mxu0 %v4795
        %v5783 = vpop.f32.mrf.mxu0
        %v5784 = vadd.f32 %v5695, %v5783
        %v5785 = vpop.f32.mrf.mxu0
        %v5786 = vadd.f32 %v5697, %v5785
        %5787 = vmatmul.bf16.gmra.mxu0 %v4807
        %v5788 = vpop.f32.mrf.mxu0
        %v5789 = vadd.f32 %v5700, %v5788
        %v5790 = vpop.f32.mrf.mxu0
        %v5791 = vadd.f32 %v5702, %v5790
        %5792 = vmatmul.bf16.gmra.mxu0 %v4819
        %v5793 = vpop.f32.mrf.mxu0
        %v5794 = vadd.f32 %v5705, %v5793
        %v5795 = vpop.f32.mrf.mxu0
        %v5796 = vadd.f32 %v5707, %v5795
        %5797 = vmatmul.bf16.gmra.mxu0 %v4831
        %v5798 = vpop.f32.mrf.mxu0
        %v5799 = vadd.f32 %v5710, %v5798
        %v5800 = vpop.f32.mrf.mxu0
        %v5801 = vadd.f32 %v5712, %v5800
        %5802 = vmatmul.bf16.gmra.mxu0 %v4843
        %v5803 = vpop.f32.mrf.mxu0
        %v5804 = vadd.f32 %v5715, %v5803
        %v5805 = vpop.f32.mrf.mxu0
        %v5806 = vadd.f32 %v5717, %v5805
        %5807 = vmatmul.bf16.gmra.mxu0 %v4855
        %v5808 = vpop.f32.mrf.mxu0
        %v5809 = vadd.f32 %v5720, %v5808
        %v5810 = vpop.f32.mrf.mxu0
        %v5811 = vadd.f32 %v5722, %v5810
        %5812 = vmatmul.bf16.gmra.mxu0 %v4867
        %v5813 = vpop.f32.mrf.mxu0
        %v5814 = vadd.f32 %v5725, %v5813
        %v5815 = vpop.f32.mrf.mxu0
        %v5816 = vadd.f32 %v5727, %v5815
        %5817 = vmatmul.bf16.gmra.mxu0 %v4879
        %v5818 = vpop.f32.mrf.mxu0
        %v5819 = vadd.f32 %v5730, %v5818
        %v5820 = vpop.f32.mrf.mxu0
        %v5821 = vadd.f32 %v5732, %v5820
        %5822 = vmatmul.bf16.gmra.mxu0 %v4891
        %v5823 = vpop.f32.mrf.mxu0
        %v5824 = vadd.f32 %v5735, %v5823
        %v5825 = vpop.f32.mrf.mxu0
        %v5826 = vadd.f32 %v5737, %v5825
        %5827 = vmatmul.bf16.gmra.mxu0 %v4903
        %v5828 = vpop.f32.mrf.mxu0
        %v5829 = vadd.f32 %v5740, %v5828
        %v5830 = vpop.f32.mrf.mxu0
        %v5831 = vadd.f32 %v5742, %v5830
        %5832 = vmatmul.bf16.gmra.mxu0 %v4915
        %v5833 = vpop.f32.mrf.mxu0
        %v5834 = vadd.f32 %v5745, %v5833
        %v5835 = vpop.f32.mrf.mxu0
        %v5836 = vadd.f32 %v5747, %v5835
        %5837 = vmatmul.bf16.gmra.mxu0 %v4927
        %v5838 = vpop.f32.mrf.mxu0
        %v5839 = vadd.f32 %v5750, %v5838
        %v5840 = vpop.f32.mrf.mxu0
        %v5841 = vadd.f32 %v5752, %v5840
        %5842 = vmatmul.bf16.gmra.mxu0 %v4939
        %v5843 = vpop.f32.mrf.mxu0
        %v5844 = vadd.f32 %v5755, %v5843
        %v5845 = vpop.f32.mrf.mxu0
        %v5846 = vadd.f32 %v5757, %v5845
        %5847 = vmatmul.bf16.gmra.mxu0 %v4951
        %v5848 = vpop.f32.mrf.mxu0
        %v5849 = vadd.f32 %v5760, %v5848
        %v5850 = vpop.f32.mrf.mxu0
        %v5851 = vadd.f32 %v5762, %v5850
        %5852 = vmatmul.bf16.gmra.mxu0 %v4963
        %v5853 = vpop.f32.mrf.mxu0
        %v5854 = vadd.f32 %v5765, %v5853
        %v5855 = vpop.f32.mrf.mxu0
        %v5856 = vadd.f32 %v5767, %v5855
        %5857 = vmatmul.bf16.gmra.mxu0 %v4975
        %v5858 = vpop.f32.mrf.mxu0
        %v5859 = vadd.f32 %v5770, %v5858
        %v5860 = vpop.f32.mrf.mxu0
        %v5861 = vadd.f32 %v5772, %v5860
        %5862 = vdwg.mxu0
        %5863 = vmatpush.bf16.msra.mxu0 %v5564
        %5864 = vmatpush.bf16.msra.mxu0 %v5563
        %5865 = vmatpush.bf16.msra.mxu0 %v5562
        %5866 = vmatpush.bf16.msra.mxu0 %v5561
        %5867 = vmatpush.bf16.msra.mxu0 %v5560
        %5868 = vmatpush.bf16.msra.mxu0 %v5559
        %5869 = vmatpush.bf16.msra.mxu0 %v5558
        %5870 = vmatpush.bf16.msra.mxu0 %v5557
        %5871 = vmatmul.bf16.gmra.mxu0 %v4994
        %v5872 = vpop.f32.mrf.mxu0
        %v5873 = vadd.f32 %v5784, %v5872
        %v5874 = vpop.f32.mrf.mxu0
        %v5875 = vadd.f32 %v5786, %v5874
        %5876 = vmatmul.bf16.gmra.mxu0 %v4997
        %v5877 = vpop.f32.mrf.mxu0
        %v5878 = vadd.f32 %v5789, %v5877
        %v5879 = vpop.f32.mrf.mxu0
        %v5880 = vadd.f32 %v5791, %v5879
        %5881 = vmatmul.bf16.gmra.mxu0 %v5000
        %v5882 = vpop.f32.mrf.mxu0
        %v5883 = vadd.f32 %v5794, %v5882
        %v5884 = vpop.f32.mrf.mxu0
        %v5885 = vadd.f32 %v5796, %v5884
        %5886 = vmatmul.bf16.gmra.mxu0 %v5003
        %v5887 = vpop.f32.mrf.mxu0
        %v5888 = vadd.f32 %v5799, %v5887
        %v5889 = vpop.f32.mrf.mxu0
        %v5890 = vadd.f32 %v5801, %v5889
        %5891 = vmatmul.bf16.gmra.mxu0 %v5006
        %v5892 = vpop.f32.mrf.mxu0
        %v5893 = vadd.f32 %v5804, %v5892
        %v5894 = vpop.f32.mrf.mxu0
        %v5895 = vadd.f32 %v5806, %v5894
        %5896 = vmatmul.bf16.gmra.mxu0 %v5009
        %v5897 = vpop.f32.mrf.mxu0
        %v5898 = vadd.f32 %v5809, %v5897
        %v5899 = vpop.f32.mrf.mxu0
        %v5900 = vadd.f32 %v5811, %v5899
        %5901 = vmatmul.bf16.gmra.mxu0 %v5012
        %v5902 = vpop.f32.mrf.mxu0
        %v5903 = vadd.f32 %v5814, %v5902
        %v5904 = vpop.f32.mrf.mxu0
        %v5905 = vadd.f32 %v5816, %v5904
        %5906 = vmatmul.bf16.gmra.mxu0 %v5015
        %v5907 = vpop.f32.mrf.mxu0
        %v5908 = vadd.f32 %v5819, %v5907
        %v5909 = vpop.f32.mrf.mxu0
        %v5910 = vadd.f32 %v5821, %v5909
        %5911 = vmatmul.bf16.gmra.mxu0 %v5018
        %v5912 = vpop.f32.mrf.mxu0
        %v5913 = vadd.f32 %v5824, %v5912
        %v5914 = vpop.f32.mrf.mxu0
        %v5915 = vadd.f32 %v5826, %v5914
        %5916 = vmatmul.bf16.gmra.mxu0 %v5021
        %v5917 = vpop.f32.mrf.mxu0
        %v5918 = vadd.f32 %v5829, %v5917
        %v5919 = vpop.f32.mrf.mxu0
        %v5920 = vadd.f32 %v5831, %v5919
        %5921 = vmatmul.bf16.gmra.mxu0 %v5024
        %v5922 = vpop.f32.mrf.mxu0
        %v5923 = vadd.f32 %v5834, %v5922
        %v5924 = vpop.f32.mrf.mxu0
        %v5925 = vadd.f32 %v5836, %v5924
        %5926 = vmatmul.bf16.gmra.mxu0 %v5027
        %v5927 = vpop.f32.mrf.mxu0
        %v5928 = vadd.f32 %v5839, %v5927
        %v5929 = vpop.f32.mrf.mxu0
        %v5930 = vadd.f32 %v5841, %v5929
        %5931 = vmatmul.bf16.gmra.mxu0 %v5030
        %v5932 = vpop.f32.mrf.mxu0
        %v5933 = vadd.f32 %v5844, %v5932
        %v5934 = vpop.f32.mrf.mxu0
        %v5935 = vadd.f32 %v5846, %v5934
        %5936 = vmatmul.bf16.gmra.mxu0 %v5033
        %v5937 = vpop.f32.mrf.mxu0
        %v5938 = vadd.f32 %v5849, %v5937
        %v5939 = vpop.f32.mrf.mxu0
        %v5940 = vadd.f32 %v5851, %v5939
        %5941 = vmatmul.bf16.gmra.mxu0 %v5036
        %v5942 = vpop.f32.mrf.mxu0
        %v5943 = vadd.f32 %v5854, %v5942
        %v5944 = vpop.f32.mrf.mxu0
        %v5945 = vadd.f32 %v5856, %v5944
        %5946 = vmatmul.bf16.gmra.mxu0 %v5039
        %v5947 = vpop.f32.mrf.mxu0
        %v5948 = vadd.f32 %v5859, %v5947
        %v5949 = vpop.f32.mrf.mxu0
        %v5950 = vadd.f32 %v5861, %v5949
        %5951 = vdwg.mxu0
        %5952 = vmatpush.bf16.msra.mxu0 %v5572
        %5953 = vmatpush.bf16.msra.mxu0 %v5571
        %5954 = vmatpush.bf16.msra.mxu0 %v5570
        %5955 = vmatpush.bf16.msra.mxu0 %v5569
        %5956 = vmatpush.bf16.msra.mxu0 %v5568
        %5957 = vmatpush.bf16.msra.mxu0 %v5567
        %5958 = vmatpush.bf16.msra.mxu0 %v5566
        %5959 = vmatpush.bf16.msra.mxu0 %v5565
        %5960 = vmatmul.bf16.gmra.mxu0 %v4705
        %v5961 = vpop.f32.mrf.mxu0
        %v5962 = vadd.f32 %v5873, %v5961
        %v5963 = vpop.f32.mrf.mxu0
        %v5964 = vadd.f32 %v5875, %v5963
        %5965 = vmatmul.bf16.gmra.mxu0 %v4706
        %v5966 = vpop.f32.mrf.mxu0
        %v5967 = vadd.f32 %v5878, %v5966
        %v5968 = vpop.f32.mrf.mxu0
        %v5969 = vadd.f32 %v5880, %v5968
        %5970 = vmatmul.bf16.gmra.mxu0 %v4707
        %v5971 = vpop.f32.mrf.mxu0
        %v5972 = vadd.f32 %v5883, %v5971
        %v5973 = vpop.f32.mrf.mxu0
        %v5974 = vadd.f32 %v5885, %v5973
        %5975 = vmatmul.bf16.gmra.mxu0 %v4708
        %v5976 = vpop.f32.mrf.mxu0
        %v5977 = vadd.f32 %v5888, %v5976
        %v5978 = vpop.f32.mrf.mxu0
        %v5979 = vadd.f32 %v5890, %v5978
        %5980 = vmatmul.bf16.gmra.mxu0 %v4709
        %v5981 = vpop.f32.mrf.mxu0
        %v5982 = vadd.f32 %v5893, %v5981
        %v5983 = vpop.f32.mrf.mxu0
        %v5984 = vadd.f32 %v5895, %v5983
        %5985 = vmatmul.bf16.gmra.mxu0 %v4710
        %v5986 = vpop.f32.mrf.mxu0
        %v5987 = vadd.f32 %v5898, %v5986
        %v5988 = vpop.f32.mrf.mxu0
        %v5989 = vadd.f32 %v5900, %v5988
        %5990 = vmatmul.bf16.gmra.mxu0 %v4711
        %v5991 = vpop.f32.mrf.mxu0
        %v5992 = vadd.f32 %v5903, %v5991
        %v5993 = vpop.f32.mrf.mxu0
        %v5994 = vadd.f32 %v5905, %v5993
        %5995 = vmatmul.bf16.gmra.mxu0 %v4712
        %v5996 = vpop.f32.mrf.mxu0
        %v5997 = vadd.f32 %v5908, %v5996
        %v5998 = vpop.f32.mrf.mxu0
        %v5999 = vadd.f32 %v5910, %v5998
        %6000 = vmatmul.bf16.gmra.mxu0 %v4713
        %v6001 = vpop.f32.mrf.mxu0
        %v6002 = vadd.f32 %v5913, %v6001
        %v6003 = vpop.f32.mrf.mxu0
        %v6004 = vadd.f32 %v5915, %v6003
        %6005 = vmatmul.bf16.gmra.mxu0 %v4714
        %v6006 = vpop.f32.mrf.mxu0
        %v6007 = vadd.f32 %v5918, %v6006
        %v6008 = vpop.f32.mrf.mxu0
        %v6009 = vadd.f32 %v5920, %v6008
        %6010 = vmatmul.bf16.gmra.mxu0 %v4715
        %v6011 = vpop.f32.mrf.mxu0
        %v6012 = vadd.f32 %v5923, %v6011
        %v6013 = vpop.f32.mrf.mxu0
        %v6014 = vadd.f32 %v5925, %v6013
        %6015 = vmatmul.bf16.gmra.mxu0 %v4716
        %v6016 = vpop.f32.mrf.mxu0
        %v6017 = vadd.f32 %v5928, %v6016
        %v6018 = vpop.f32.mrf.mxu0
        %v6019 = vadd.f32 %v5930, %v6018
        %6020 = vmatmul.bf16.gmra.mxu0 %v4717
        %v6021 = vpop.f32.mrf.mxu0
        %v6022 = vadd.f32 %v5933, %v6021
        %v6023 = vpop.f32.mrf.mxu0
        %v6024 = vadd.f32 %v5935, %v6023
        %6025 = vmatmul.bf16.gmra.mxu0 %v4718
        %v6026 = vpop.f32.mrf.mxu0
        %v6027 = vadd.f32 %v5938, %v6026
        %v6028 = vpop.f32.mrf.mxu0
        %v6029 = vadd.f32 %v5940, %v6028
        %6030 = vmatmul.bf16.gmra.mxu0 %v4719
        %v6031 = vpop.f32.mrf.mxu0
        %v6032 = vadd.f32 %v5943, %v6031
        %v6033 = vpop.f32.mrf.mxu0
        %v6034 = vadd.f32 %v5945, %v6033
        %6035 = vmatmul.bf16.gmra.mxu0 %v5060
        %v6036 = vpop.f32.mrf.mxu0
        %v6037 = vadd.f32 %v5948, %v6036
        %v6038 = vpop.f32.mrf.mxu0
        %v6039 = vadd.f32 %v5950, %v6038
        %6040 = vdwg.mxu0
        %6041 = vmatpush.bf16.msra.mxu0 %v5580
        %6042 = vmatpush.bf16.msra.mxu0 %v5579
        %6043 = vmatpush.bf16.msra.mxu0 %v5578
        %6044 = vmatpush.bf16.msra.mxu0 %v5577
        %6045 = vmatpush.bf16.msra.mxu0 %v5576
        %6046 = vmatpush.bf16.msra.mxu0 %v5575
        %6047 = vmatpush.bf16.msra.mxu0 %v5574
        %6048 = vmatpush.bf16.msra.mxu0 %v5573
        %6049 = vmatmul.bf16.gmra.mxu0 %v4807
        %v6050 = vpop.f32.mrf.mxu0
        %v6051 = vadd.f32 %v5962, %v6050
        %v6052 = vpop.f32.mrf.mxu0
        %v6053 = vadd.f32 %v5964, %v6052
        %6054 = vmatmul.bf16.gmra.mxu0 %v4819
        %v6055 = vpop.f32.mrf.mxu0
        %v6056 = vadd.f32 %v5967, %v6055
        %v6057 = vpop.f32.mrf.mxu0
        %v6058 = vadd.f32 %v5969, %v6057
        %6059 = vmatmul.bf16.gmra.mxu0 %v4831
        %v6060 = vpop.f32.mrf.mxu0
        %v6061 = vadd.f32 %v5972, %v6060
        %v6062 = vpop.f32.mrf.mxu0
        %v6063 = vadd.f32 %v5974, %v6062
        %6064 = vmatmul.bf16.gmra.mxu0 %v4843
        %v6065 = vpop.f32.mrf.mxu0
        %v6066 = vadd.f32 %v5977, %v6065
        %v6067 = vpop.f32.mrf.mxu0
        %v6068 = vadd.f32 %v5979, %v6067
        %6069 = vmatmul.bf16.gmra.mxu0 %v4855
        %v6070 = vpop.f32.mrf.mxu0
        %v6071 = vadd.f32 %v5982, %v6070
        %v6072 = vpop.f32.mrf.mxu0
        %v6073 = vadd.f32 %v5984, %v6072
        %6074 = vmatmul.bf16.gmra.mxu0 %v4867
        %v6075 = vpop.f32.mrf.mxu0
        %v6076 = vadd.f32 %v5987, %v6075
        %v6077 = vpop.f32.mrf.mxu0
        %v6078 = vadd.f32 %v5989, %v6077
        %6079 = vmatmul.bf16.gmra.mxu0 %v4879
        %v6080 = vpop.f32.mrf.mxu0
        %v6081 = vadd.f32 %v5992, %v6080
        %v6082 = vpop.f32.mrf.mxu0
        %v6083 = vadd.f32 %v5994, %v6082
        %6084 = vmatmul.bf16.gmra.mxu0 %v4891
        %v6085 = vpop.f32.mrf.mxu0
        %v6086 = vadd.f32 %v5997, %v6085
        %v6087 = vpop.f32.mrf.mxu0
        %v6088 = vadd.f32 %v5999, %v6087
        %6089 = vmatmul.bf16.gmra.mxu0 %v4903
        %v6090 = vpop.f32.mrf.mxu0
        %v6091 = vadd.f32 %v6002, %v6090
        %v6092 = vpop.f32.mrf.mxu0
        %v6093 = vadd.f32 %v6004, %v6092
        %6094 = vmatmul.bf16.gmra.mxu0 %v4915
        %v6095 = vpop.f32.mrf.mxu0
        %v6096 = vadd.f32 %v6007, %v6095
        %v6097 = vpop.f32.mrf.mxu0
        %v6098 = vadd.f32 %v6009, %v6097
        %6099 = vmatmul.bf16.gmra.mxu0 %v4927
        %v6100 = vpop.f32.mrf.mxu0
        %v6101 = vadd.f32 %v6012, %v6100
        %v6102 = vpop.f32.mrf.mxu0
        %v6103 = vadd.f32 %v6014, %v6102
        %6104 = vmatmul.bf16.gmra.mxu0 %v4939
        %v6105 = vpop.f32.mrf.mxu0
        %v6106 = vadd.f32 %v6017, %v6105
        %v6107 = vpop.f32.mrf.mxu0
        %v6108 = vadd.f32 %v6019, %v6107
        %6109 = vmatmul.bf16.gmra.mxu0 %v4951
        %v6110 = vpop.f32.mrf.mxu0
        %v6111 = vadd.f32 %v6022, %v6110
        %v6112 = vpop.f32.mrf.mxu0
        %v6113 = vadd.f32 %v6024, %v6112
        %6114 = vmatmul.bf16.gmra.mxu0 %v4963
        %v6115 = vpop.f32.mrf.mxu0
        %v6116 = vadd.f32 %v6027, %v6115
        %v6117 = vpop.f32.mrf.mxu0
        %v6118 = vadd.f32 %v6029, %v6117
        %6119 = vmatmul.bf16.gmra.mxu0 %v4975
        %v6120 = vpop.f32.mrf.mxu0
        %v6121 = vadd.f32 %v6032, %v6120
        %v6122 = vpop.f32.mrf.mxu0
        %v6123 = vadd.f32 %v6034, %v6122
        %6124 = vmatmul.bf16.gmra.mxu0 %v5076
        %v6125 = vpop.f32.mrf.mxu0
        %v6126 = vadd.f32 %v6037, %v6125
        %v6127 = vpop.f32.mrf.mxu0
        %v6128 = vadd.f32 %v6039, %v6127
        %6129 = vdwg.mxu0
        %6130 = vmatpush.bf16.msra.mxu0 %v5588
        %6131 = vmatpush.bf16.msra.mxu0 %v5587
        %6132 = vmatpush.bf16.msra.mxu0 %v5586
        %6133 = vmatpush.bf16.msra.mxu0 %v5585
        %6134 = vmatpush.bf16.msra.mxu0 %v5584
        %6135 = vmatpush.bf16.msra.mxu0 %v5583
        %6136 = vmatpush.bf16.msra.mxu0 %v5582
        %6137 = vmatpush.bf16.msra.mxu0 %v5581
        %6138 = vmatmul.bf16.gmra.mxu0 %v4997
        %v6139 = vpop.f32.mrf.mxu0
        %v6140 = vadd.f32 %v6051, %v6139
        %v6141 = vpop.f32.mrf.mxu0
        %v6142 = vadd.f32 %v6053, %v6141
        %6143 = vmatmul.bf16.gmra.mxu0 %v5000
        %v6144 = vpop.f32.mrf.mxu0
        %v6145 = vadd.f32 %v6056, %v6144
        %v6146 = vpop.f32.mrf.mxu0
        %v6147 = vadd.f32 %v6058, %v6146
        %6148 = vmatmul.bf16.gmra.mxu0 %v5003
        %v6149 = vpop.f32.mrf.mxu0
        %v6150 = vadd.f32 %v6061, %v6149
        %v6151 = vpop.f32.mrf.mxu0
        %v6152 = vadd.f32 %v6063, %v6151
        %6153 = vmatmul.bf16.gmra.mxu0 %v5006
        %v6154 = vpop.f32.mrf.mxu0
        %v6155 = vadd.f32 %v6066, %v6154
        %v6156 = vpop.f32.mrf.mxu0
        %v6157 = vadd.f32 %v6068, %v6156
        %6158 = vmatmul.bf16.gmra.mxu0 %v5009
        %v6159 = vpop.f32.mrf.mxu0
        %v6160 = vadd.f32 %v6071, %v6159
        %v6161 = vpop.f32.mrf.mxu0
        %v6162 = vadd.f32 %v6073, %v6161
        %6163 = vmatmul.bf16.gmra.mxu0 %v5012
        %v6164 = vpop.f32.mrf.mxu0
        %v6165 = vadd.f32 %v6076, %v6164
        %v6166 = vpop.f32.mrf.mxu0
        %v6167 = vadd.f32 %v6078, %v6166
        %6168 = vmatmul.bf16.gmra.mxu0 %v5015
        %v6169 = vpop.f32.mrf.mxu0
        %v6170 = vadd.f32 %v6081, %v6169
        %v6171 = vpop.f32.mrf.mxu0
        %v6172 = vadd.f32 %v6083, %v6171
        %6173 = vmatmul.bf16.gmra.mxu0 %v5018
        %v6174 = vpop.f32.mrf.mxu0
        %v6175 = vadd.f32 %v6086, %v6174
        %v6176 = vpop.f32.mrf.mxu0
        %v6177 = vadd.f32 %v6088, %v6176
        %6178 = vmatmul.bf16.gmra.mxu0 %v5021
        %v6179 = vpop.f32.mrf.mxu0
        %v6180 = vadd.f32 %v6091, %v6179
        %v6181 = vpop.f32.mrf.mxu0
        %v6182 = vadd.f32 %v6093, %v6181
        %6183 = vmatmul.bf16.gmra.mxu0 %v5024
        %v6184 = vpop.f32.mrf.mxu0
        %v6185 = vadd.f32 %v6096, %v6184
        %v6186 = vpop.f32.mrf.mxu0
        %v6187 = vadd.f32 %v6098, %v6186
        %6188 = vmatmul.bf16.gmra.mxu0 %v5027
        %v6189 = vpop.f32.mrf.mxu0
        %v6190 = vadd.f32 %v6101, %v6189
        %v6191 = vpop.f32.mrf.mxu0
        %v6192 = vadd.f32 %v6103, %v6191
        %6193 = vmatmul.bf16.gmra.mxu0 %v5030
        %v6194 = vpop.f32.mrf.mxu0
        %v6195 = vadd.f32 %v6106, %v6194
        %v6196 = vpop.f32.mrf.mxu0
        %v6197 = vadd.f32 %v6108, %v6196
        %6198 = vmatmul.bf16.gmra.mxu0 %v5033
        %v6199 = vpop.f32.mrf.mxu0
        %v6200 = vadd.f32 %v6111, %v6199
        %v6201 = vpop.f32.mrf.mxu0
        %v6202 = vadd.f32 %v6113, %v6201
        %6203 = vmatmul.bf16.gmra.mxu0 %v5036
        %v6204 = vpop.f32.mrf.mxu0
        %v6205 = vadd.f32 %v6116, %v6204
        %v6206 = vpop.f32.mrf.mxu0
        %v6207 = vadd.f32 %v6118, %v6206
        %6208 = vmatmul.bf16.gmra.mxu0 %v5039
        %v6209 = vpop.f32.mrf.mxu0
        %v6210 = vadd.f32 %v6121, %v6209
        %v6211 = vpop.f32.mrf.mxu0
        %v6212 = vadd.f32 %v6123, %v6211
        %6213 = vmatmul.bf16.gmra.mxu0 %v5080
        %v6214 = vpop.f32.mrf.mxu0
        %v6215 = vadd.f32 %v6126, %v6214
        %v6216 = vpop.f32.mrf.mxu0
        %v6217 = vadd.f32 %v6128, %v6216
        %6218 = vdwg.mxu0
        %6219 = vmatpush.bf16.msra.mxu0 %v5596
        %6220 = vmatpush.bf16.msra.mxu0 %v5595
        %6221 = vmatpush.bf16.msra.mxu0 %v5594
        %6222 = vmatpush.bf16.msra.mxu0 %v5593
        %6223 = vmatpush.bf16.msra.mxu0 %v5592
        %6224 = vmatpush.bf16.msra.mxu0 %v5591
        %6225 = vmatpush.bf16.msra.mxu0 %v5590
        %6226 = vmatpush.bf16.msra.mxu0 %v5589
        %6227 = vmatmul.bf16.gmra.mxu0 %v4706
        %v6228 = vpop.f32.mrf.mxu0
        %v6229 = vadd.f32 %v6140, %v6228
        %v6230 = vpop.f32.mrf.mxu0
        %v6231 = vadd.f32 %v6142, %v6230
        %6232 = vmatmul.bf16.gmra.mxu0 %v4707
        %v6233 = vpop.f32.mrf.mxu0
        %v6234 = vadd.f32 %v6145, %v6233
        %v6235 = vpop.f32.mrf.mxu0
        %v6236 = vadd.f32 %v6147, %v6235
        %6237 = vmatmul.bf16.gmra.mxu0 %v4708
        %v6238 = vpop.f32.mrf.mxu0
        %v6239 = vadd.f32 %v6150, %v6238
        %v6240 = vpop.f32.mrf.mxu0
        %v6241 = vadd.f32 %v6152, %v6240
        %6242 = vmatmul.bf16.gmra.mxu0 %v4709
        %v6243 = vpop.f32.mrf.mxu0
        %v6244 = vadd.f32 %v6155, %v6243
        %v6245 = vpop.f32.mrf.mxu0
        %v6246 = vadd.f32 %v6157, %v6245
        %6247 = vmatmul.bf16.gmra.mxu0 %v4710
        %v6248 = vpop.f32.mrf.mxu0
        %v6249 = vadd.f32 %v6160, %v6248
        %v6250 = vpop.f32.mrf.mxu0
        %v6251 = vadd.f32 %v6162, %v6250
        %6252 = vmatmul.bf16.gmra.mxu0 %v4711
        %v6253 = vpop.f32.mrf.mxu0
        %v6254 = vadd.f32 %v6165, %v6253
        %v6255 = vpop.f32.mrf.mxu0
        %v6256 = vadd.f32 %v6167, %v6255
        %6257 = vmatmul.bf16.gmra.mxu0 %v4712
        %v6258 = vpop.f32.mrf.mxu0
        %v6259 = vadd.f32 %v6170, %v6258
        %v6260 = vpop.f32.mrf.mxu0
        %v6261 = vadd.f32 %v6172, %v6260
        %6262 = vmatmul.bf16.gmra.mxu0 %v4713
        %v6263 = vpop.f32.mrf.mxu0
        %v6264 = vadd.f32 %v6175, %v6263
        %v6265 = vpop.f32.mrf.mxu0
        %v6266 = vadd.f32 %v6177, %v6265
        %6267 = vmatmul.bf16.gmra.mxu0 %v4714
        %v6268 = vpop.f32.mrf.mxu0
        %v6269 = vadd.f32 %v6180, %v6268
        %v6270 = vpop.f32.mrf.mxu0
        %v6271 = vadd.f32 %v6182, %v6270
        %6272 = vmatmul.bf16.gmra.mxu0 %v4715
        %v6273 = vpop.f32.mrf.mxu0
        %v6274 = vadd.f32 %v6185, %v6273
        %v6275 = vpop.f32.mrf.mxu0
        %v6276 = vadd.f32 %v6187, %v6275
        %6277 = vmatmul.bf16.gmra.mxu0 %v4716
        %v6278 = vpop.f32.mrf.mxu0
        %v6279 = vadd.f32 %v6190, %v6278
        %v6280 = vpop.f32.mrf.mxu0
        %v6281 = vadd.f32 %v6192, %v6280
        %6282 = vmatmul.bf16.gmra.mxu0 %v4717
        %v6283 = vpop.f32.mrf.mxu0
        %v6284 = vadd.f32 %v6195, %v6283
        %v6285 = vpop.f32.mrf.mxu0
        %v6286 = vadd.f32 %v6197, %v6285
        %6287 = vmatmul.bf16.gmra.mxu0 %v4718
        %v6288 = vpop.f32.mrf.mxu0
        %v6289 = vadd.f32 %v6200, %v6288
        %v6290 = vpop.f32.mrf.mxu0
        %v6291 = vadd.f32 %v6202, %v6290
        %6292 = vmatmul.bf16.gmra.mxu0 %v4719
        %v6293 = vpop.f32.mrf.mxu0
        %v6294 = vadd.f32 %v6205, %v6293
        %v6295 = vpop.f32.mrf.mxu0
        %v6296 = vadd.f32 %v6207, %v6295
        %6297 = vmatmul.bf16.gmra.mxu0 %v5060
        %v6298 = vpop.f32.mrf.mxu0
        %v6299 = vadd.f32 %v6210, %v6298
        %v6300 = vpop.f32.mrf.mxu0
        %v6301 = vadd.f32 %v6212, %v6300
        %6302 = vmatmul.bf16.gmra.mxu0 %v5086
        %v6303 = vpop.f32.mrf.mxu0
        %v6304 = vadd.f32 %v6215, %v6303
        %v6305 = vpop.f32.mrf.mxu0
        %v6306 = vadd.f32 %v6217, %v6305
        %6307 = vdwg.mxu0
        %6308 = vmatpush.bf16.msra.mxu0 %v5604
        %6309 = vmatpush.bf16.msra.mxu0 %v5603
        %6310 = vmatpush.bf16.msra.mxu0 %v5602
        %6311 = vmatpush.bf16.msra.mxu0 %v5601
        %6312 = vmatpush.bf16.msra.mxu0 %v5600
        %6313 = vmatpush.bf16.msra.mxu0 %v5599
        %6314 = vmatpush.bf16.msra.mxu0 %v5598
        %6315 = vmatpush.bf16.msra.mxu0 %v5597
        %6316 = vmatmul.bf16.gmra.mxu0 %v4819
        %v6317 = vpop.f32.mrf.mxu0
        %v6318 = vadd.f32 %v6229, %v6317
        %v6319 = vpop.f32.mrf.mxu0
        %v6320 = vadd.f32 %v6231, %v6319
        %6321 = vmatmul.bf16.gmra.mxu0 %v4831
        %v6322 = vpop.f32.mrf.mxu0
        %v6323 = vadd.f32 %v6234, %v6322
        %v6324 = vpop.f32.mrf.mxu0
        %v6325 = vadd.f32 %v6236, %v6324
        %6326 = vmatmul.bf16.gmra.mxu0 %v4843
        %v6327 = vpop.f32.mrf.mxu0
        %v6328 = vadd.f32 %v6239, %v6327
        %v6329 = vpop.f32.mrf.mxu0
        %v6330 = vadd.f32 %v6241, %v6329
        %6331 = vmatmul.bf16.gmra.mxu0 %v4855
        %v6332 = vpop.f32.mrf.mxu0
        %v6333 = vadd.f32 %v6244, %v6332
        %v6334 = vpop.f32.mrf.mxu0
        %v6335 = vadd.f32 %v6246, %v6334
        %6336 = vmatmul.bf16.gmra.mxu0 %v4867
        %v6337 = vpop.f32.mrf.mxu0
        %v6338 = vadd.f32 %v6249, %v6337
        %v6339 = vpop.f32.mrf.mxu0
        %v6340 = vadd.f32 %v6251, %v6339
        %6341 = vmatmul.bf16.gmra.mxu0 %v4879
        %v6342 = vpop.f32.mrf.mxu0
        %v6343 = vadd.f32 %v6254, %v6342
        %v6344 = vpop.f32.mrf.mxu0
        %v6345 = vadd.f32 %v6256, %v6344
        %6346 = vmatmul.bf16.gmra.mxu0 %v4891
        %v6347 = vpop.f32.mrf.mxu0
        %v6348 = vadd.f32 %v6259, %v6347
        %v6349 = vpop.f32.mrf.mxu0
        %v6350 = vadd.f32 %v6261, %v6349
        %6351 = vmatmul.bf16.gmra.mxu0 %v4903
        %v6352 = vpop.f32.mrf.mxu0
        %v6353 = vadd.f32 %v6264, %v6352
        %v6354 = vpop.f32.mrf.mxu0
        %v6355 = vadd.f32 %v6266, %v6354
        %6356 = vmatmul.bf16.gmra.mxu0 %v4915
        %v6357 = vpop.f32.mrf.mxu0
        %v6358 = vadd.f32 %v6269, %v6357
        %v6359 = vpop.f32.mrf.mxu0
        %v6360 = vadd.f32 %v6271, %v6359
        %6361 = vmatmul.bf16.gmra.mxu0 %v4927
        %v6362 = vpop.f32.mrf.mxu0
        %v6363 = vadd.f32 %v6274, %v6362
        %v6364 = vpop.f32.mrf.mxu0
        %v6365 = vadd.f32 %v6276, %v6364
        %6366 = vmatmul.bf16.gmra.mxu0 %v4939
        %v6367 = vpop.f32.mrf.mxu0
        %v6368 = vadd.f32 %v6279, %v6367
        %v6369 = vpop.f32.mrf.mxu0
        %v6370 = vadd.f32 %v6281, %v6369
        %6371 = vmatmul.bf16.gmra.mxu0 %v4951
        %v6372 = vpop.f32.mrf.mxu0
        %v6373 = vadd.f32 %v6284, %v6372
        %v6374 = vpop.f32.mrf.mxu0
        %v6375 = vadd.f32 %v6286, %v6374
        %6376 = vmatmul.bf16.gmra.mxu0 %v4963
        %v6377 = vpop.f32.mrf.mxu0
        %v6378 = vadd.f32 %v6289, %v6377
        %v6379 = vpop.f32.mrf.mxu0
        %v6380 = vadd.f32 %v6291, %v6379
        %6381 = vmatmul.bf16.gmra.mxu0 %v4975
        %v6382 = vpop.f32.mrf.mxu0
        %v6383 = vadd.f32 %v6294, %v6382
        %v6384 = vpop.f32.mrf.mxu0
        %v6385 = vadd.f32 %v6296, %v6384
        %6386 = vmatmul.bf16.gmra.mxu0 %v5076
        %v6387 = vpop.f32.mrf.mxu0
        %v6388 = vadd.f32 %v6299, %v6387
        %v6389 = vpop.f32.mrf.mxu0
        %v6390 = vadd.f32 %v6301, %v6389
        %6391 = vmatmul.bf16.gmra.mxu0 %v5102
        %v6392 = vpop.f32.mrf.mxu0
        %v6393 = vadd.f32 %v6304, %v6392
        %v6394 = vpop.f32.mrf.mxu0
        %v6395 = vadd.f32 %v6306, %v6394
        %6396 = vdwg.mxu0
        %6397 = vmatpush.bf16.msra.mxu0 %v5612
        %6398 = vmatpush.bf16.msra.mxu0 %v5611
        %6399 = vmatpush.bf16.msra.mxu0 %v5610
        %6400 = vmatpush.bf16.msra.mxu0 %v5609
        %6401 = vmatpush.bf16.msra.mxu0 %v5608
        %6402 = vmatpush.bf16.msra.mxu0 %v5607
        %6403 = vmatpush.bf16.msra.mxu0 %v5606
        %6404 = vmatpush.bf16.msra.mxu0 %v5605
        %6405 = vmatmul.bf16.gmra.mxu0 %v5000
        %v6406 = vpop.f32.mrf.mxu0
        %v6407 = vadd.f32 %v6318, %v6406
        %v6408 = vpop.f32.mrf.mxu0
        %v6409 = vadd.f32 %v6320, %v6408
        %6410 = vmatmul.bf16.gmra.mxu0 %v5003
        %v6411 = vpop.f32.mrf.mxu0
        %v6412 = vadd.f32 %v6323, %v6411
        %v6413 = vpop.f32.mrf.mxu0
        %v6414 = vadd.f32 %v6325, %v6413
        %6415 = vmatmul.bf16.gmra.mxu0 %v5006
        %v6416 = vpop.f32.mrf.mxu0
        %v6417 = vadd.f32 %v6328, %v6416
        %v6418 = vpop.f32.mrf.mxu0
        %v6419 = vadd.f32 %v6330, %v6418
        %6420 = vmatmul.bf16.gmra.mxu0 %v5009
        %v6421 = vpop.f32.mrf.mxu0
        %v6422 = vadd.f32 %v6333, %v6421
        %v6423 = vpop.f32.mrf.mxu0
        %v6424 = vadd.f32 %v6335, %v6423
        %6425 = vmatmul.bf16.gmra.mxu0 %v5012
        %v6426 = vpop.f32.mrf.mxu0
        %v6427 = vadd.f32 %v6338, %v6426
        %v6428 = vpop.f32.mrf.mxu0
        %v6429 = vadd.f32 %v6340, %v6428
        %6430 = vmatmul.bf16.gmra.mxu0 %v5015
        %v6431 = vpop.f32.mrf.mxu0
        %v6432 = vadd.f32 %v6343, %v6431
        %v6433 = vpop.f32.mrf.mxu0
        %v6434 = vadd.f32 %v6345, %v6433
        %6435 = vmatmul.bf16.gmra.mxu0 %v5018
        %v6436 = vpop.f32.mrf.mxu0
        %v6437 = vadd.f32 %v6348, %v6436
        %v6438 = vpop.f32.mrf.mxu0
        %v6439 = vadd.f32 %v6350, %v6438
        %6440 = vmatmul.bf16.gmra.mxu0 %v5021
        %v6441 = vpop.f32.mrf.mxu0
        %v6442 = vadd.f32 %v6353, %v6441
        %v6443 = vpop.f32.mrf.mxu0
        %v6444 = vadd.f32 %v6355, %v6443
        %6445 = vmatmul.bf16.gmra.mxu0 %v5024
        %v6446 = vpop.f32.mrf.mxu0
        %v6447 = vadd.f32 %v6358, %v6446
        %v6448 = vpop.f32.mrf.mxu0
        %v6449 = vadd.f32 %v6360, %v6448
        %6450 = vmatmul.bf16.gmra.mxu0 %v5027
        %v6451 = vpop.f32.mrf.mxu0
        %v6452 = vadd.f32 %v6363, %v6451
        %v6453 = vpop.f32.mrf.mxu0
        %v6454 = vadd.f32 %v6365, %v6453
        %6455 = vmatmul.bf16.gmra.mxu0 %v5030
        %v6456 = vpop.f32.mrf.mxu0
        %v6457 = vadd.f32 %v6368, %v6456
        %v6458 = vpop.f32.mrf.mxu0
        %v6459 = vadd.f32 %v6370, %v6458
        %6460 = vmatmul.bf16.gmra.mxu0 %v5033
        %v6461 = vpop.f32.mrf.mxu0
        %v6462 = vadd.f32 %v6373, %v6461
        %v6463 = vpop.f32.mrf.mxu0
        %v6464 = vadd.f32 %v6375, %v6463
        %6465 = vmatmul.bf16.gmra.mxu0 %v5036
        %v6466 = vpop.f32.mrf.mxu0
        %v6467 = vadd.f32 %v6378, %v6466
        %v6468 = vpop.f32.mrf.mxu0
        %v6469 = vadd.f32 %v6380, %v6468
        %6470 = vmatmul.bf16.gmra.mxu0 %v5039
        %v6471 = vpop.f32.mrf.mxu0
        %v6472 = vadd.f32 %v6383, %v6471
        %v6473 = vpop.f32.mrf.mxu0
        %v6474 = vadd.f32 %v6385, %v6473
        %6475 = vmatmul.bf16.gmra.mxu0 %v5080
        %v6476 = vpop.f32.mrf.mxu0
        %v6477 = vadd.f32 %v6388, %v6476
        %v6478 = vpop.f32.mrf.mxu0
        %v6479 = vadd.f32 %v6390, %v6478
        %6480 = vmatmul.bf16.gmra.mxu0 %v5106
        %v6481 = vpop.f32.mrf.mxu0
        %v6482 = vadd.f32 %v6393, %v6481
        %v6483 = vpop.f32.mrf.mxu0
        %v6484 = vadd.f32 %v6395, %v6483
        %6485 = vdwg.mxu0
        %v6486 = vadd.f32 %v4323, %v6407
        %v6487 = vadd.f32 %v4325, %v6409
        %v6488 = vadd.f32 %v4328, %v6412
        %v6489 = vadd.f32 %v4330, %v6414
        %v6490 = vadd.f32 %v4333, %v6417
        %v6491 = vadd.f32 %v4335, %v6419
        %v6492 = vadd.f32 %v4338, %v6422
        %v6493 = vadd.f32 %v4340, %v6424
        %v6494 = vadd.f32 %v4343, %v6427
        %v6495 = vadd.f32 %v4345, %v6429
        %v6496 = vadd.f32 %v4348, %v6432
        %v6497 = vadd.f32 %v4350, %v6434
        %v6498 = vadd.f32 %v4353, %v6437
        %v6499 = vadd.f32 %v4355, %v6439
        %v6500 = vadd.f32 %v4358, %v6442
        %v6501 = vadd.f32 %v4360, %v6444
        %v6502 = vadd.f32 %v4363, %v6447
        %v6503 = vadd.f32 %v4365, %v6449
        %v6504 = vadd.f32 %v4368, %v6452
        %v6505 = vadd.f32 %v4370, %v6454
        %v6506 = vadd.f32 %v4373, %v6457
        %v6507 = vadd.f32 %v4375, %v6459
        %v6508 = vadd.f32 %v4378, %v6462
        %v6509 = vadd.f32 %v4380, %v6464
        %v6510 = vadd.f32 %v4383, %v6467
        %v6511 = vadd.f32 %v4385, %v6469
        %v6512 = vadd.f32 %v4388, %v6472
        %v6513 = vadd.f32 %v4390, %v6474
        %v6514 = vadd.f32 %v4393, %v6477
        %v6515 = vadd.f32 %v4395, %v6479
        %v6516 = vadd.f32 %v4398, %v6482
        %v6517 = vadd.f32 %v4400, %v6484
        %v6518 = vld [vmem:[%s4] sm:$0x1]
        %v6520 = vperm.slane %v6518, 0
        %v6522 = vadd.f32 %v6486, %v6520
        %v6523 = vadd.f32 %v6487, %v6520
        %v6524 = vadd.f32 %v6488, %v6520
        %v6525 = vadd.f32 %v6489, %v6520
        %v6526 = vadd.f32 %v6490, %v6520
        %v6527 = vadd.f32 %v6491, %v6520
        %v6528 = vadd.f32 %v6492, %v6520
        %v6529 = vadd.f32 %v6493, %v6520
        %v6530 = vadd.f32 %v6494, %v6520
        %v6531 = vadd.f32 %v6495, %v6520
        %v6532 = vadd.f32 %v6496, %v6520
        %v6533 = vadd.f32 %v6497, %v6520
        %v6534 = vadd.f32 %v6498, %v6520
        %v6535 = vadd.f32 %v6499, %v6520
        %v6536 = vadd.f32 %v6500, %v6520
        %v6537 = vadd.f32 %v6501, %v6520
        %v6538 = vadd.f32 %v6502, %v6520
        %v6539 = vadd.f32 %v6503, %v6520
        %v6540 = vadd.f32 %v6504, %v6520
        %v6541 = vadd.f32 %v6505, %v6520
        %v6542 = vadd.f32 %v6506, %v6520
        %v6543 = vadd.f32 %v6507, %v6520
        %v6544 = vadd.f32 %v6508, %v6520
        %v6545 = vadd.f32 %v6509, %v6520
        %v6546 = vadd.f32 %v6510, %v6520
        %v6547 = vadd.f32 %v6511, %v6520
        %v6548 = vadd.f32 %v6512, %v6520
        %v6549 = vadd.f32 %v6513, %v6520
        %v6550 = vadd.f32 %v6514, %v6520
        %v6551 = vadd.f32 %v6515, %v6520
        %v6552 = vadd.f32 %v6516, %v6520
        %v6553 = vadd.f32 %v6517, %v6520
        %v6554 = vmax.f32 %v6522, 0.0
        %v6555 = vmax.f32 %v6523, 0.0
        %v6556 = vmax.f32 %v6524, 0.0
        %v6557 = vmax.f32 %v6525, 0.0
        %v6558 = vmax.f32 %v6526, 0.0
        %v6559 = vmax.f32 %v6527, 0.0
        %v6560 = vmax.f32 %v6528, 0.0
        %v6561 = vmax.f32 %v6529, 0.0
        %v6562 = vmax.f32 %v6530, 0.0
        %v6563 = vmax.f32 %v6531, 0.0
        %v6564 = vmax.f32 %v6532, 0.0
        %v6565 = vmax.f32 %v6533, 0.0
        %v6566 = vmax.f32 %v6534, 0.0
        %v6567 = vmax.f32 %v6535, 0.0
        %v6568 = vmax.f32 %v6536, 0.0
        %v6569 = vmax.f32 %v6537, 0.0
        %v6570 = vmax.f32 %v6538, 0.0
        %v6571 = vmax.f32 %v6539, 0.0
        %v6572 = vmax.f32 %v6540, 0.0
        %v6573 = vmax.f32 %v6541, 0.0
        %v6574 = vmax.f32 %v6542, 0.0
        %v6575 = vmax.f32 %v6543, 0.0
        %v6576 = vmax.f32 %v6544, 0.0
        %v6577 = vmax.f32 %v6545, 0.0
        %v6578 = vmax.f32 %v6546, 0.0
        %v6579 = vmax.f32 %v6547, 0.0
        %v6580 = vmax.f32 %v6548, 0.0
        %v6581 = vmax.f32 %v6549, 0.0
        %v6582 = vmax.f32 %v6550, 0.0
        %v6583 = vmax.f32 %v6551, 0.0
        %v6584 = vmax.f32 %v6552, 0.0
        %v6585 = vmax.f32 %v6553, 0.0
        %6586 = vst [vmem:[%s361] sm:$0xff] %v6554
        %6587 = vst [vmem:[%s361 + $0x8] sm:$0xff] %v6555
        %6588 = vst [vmem:[%s361 + $0x10] sm:$0xff] %v6556
        %6589 = vst [vmem:[%s361 + $0x18] sm:$0xff] %v6557
        %6590 = vst [vmem:[%s361 + $0x20] sm:$0xff] %v6558
        %6591 = vst [vmem:[%s361 + $0x28] sm:$0xff] %v6559
        %6592 = vst [vmem:[%s361 + $0x30] sm:$0xff] %v6560
        %6593 = vst [vmem:[%s361 + $0x38] sm:$0xff] %v6561
        %6594 = vst [vmem:[%s361 + $0x40] sm:$0xff] %v6562
        %6595 = vst [vmem:[%s361 + $0x48] sm:$0xff] %v6563
        %6596 = vst [vmem:[%s361 + $0x50] sm:$0xff] %v6564
        %6597 = vst [vmem:[%s361 + $0x58] sm:$0xff] %v6565
        %6598 = vst [vmem:[%s361 + $0x60] sm:$0xff] %v6566
        %6599 = vst [vmem:[%s361 + $0x68] sm:$0xff] %v6567
        %6600 = vst [vmem:[%s361 + $0x70] sm:$0xff] %v6568
        %6601 = vst [vmem:[%s361 + $0x78] sm:$0xff] %v6569
        %6602 = vst [vmem:[%s361 + $0x80] sm:$0xff] %v6570
        %6603 = vst [vmem:[%s361 + $0x88] sm:$0xff] %v6571
        %6604 = vst [vmem:[%s361 + $0x90] sm:$0xff] %v6572
        %6605 = vst [vmem:[%s361 + $0x98] sm:$0xff] %v6573
        %6606 = vst [vmem:[%s361 + $0xa0] sm:$0xff] %v6574
        %6607 = vst [vmem:[%s361 + $0xa8] sm:$0xff] %v6575
        %6608 = vst [vmem:[%s361 + $0xb0] sm:$0xff] %v6576
        %6609 = vst [vmem:[%s361 + $0xb8] sm:$0xff] %v6577
        %6610 = vst [vmem:[%s361 + $0xc0] sm:$0xff] %v6578
        %6611 = vst [vmem:[%s361 + $0xc8] sm:$0xff] %v6579
        %6612 = vst [vmem:[%s361 + $0xd0] sm:$0xff] %v6580
        %6613 = vst [vmem:[%s361 + $0xd8] sm:$0xff] %v6581
        %6614 = vst [vmem:[%s361 + $0xe0] sm:$0xff] %v6582
        %6615 = vst [vmem:[%s361 + $0xe8] sm:$0xff] %v6583
        %6616 = vst [vmem:[%s361 + $0xf0] sm:$0xff] %v6584
        %6617 = vst [vmem:[%s361 + $0xf8] sm:$0xff] %v6585
        %s6618 = sand.u32 %s195, 1
        %s6619 = scalar_lea.sflag [#allocation3], %s6618
        %s6620 = sand.u32 %s195, 1
        %s6621 = smul.addr %s6620, 256
        %s6622 = scalar_lea.vmem [#allocation2], %s6621
        // Predicated region
        $region41: #{upblock3d_forward.3} parent=39 // pred_check
          %p6623 = pneg %p205
        $region42: #{upblock3d_forward.3} parent=39 // pred_check_branch
          %6625 = sbr.rel (%p6623) target = $region44
        $region43: #{upblock3d_forward.3} parent=39 // pred_region
          %6627 = vsyncadd %s6619, 0
          %s6628 = smul.addr %s24, 32
          %s6629 = smul.addr %s23, 256
          %s6630 = sadd.s32 %s6628, %s6629
          %s6631 = smul.addr %s6630, 8
          %s6632 = scalar_lea.hbm %s5, %s6631
          %s6633 = sshll.u32 %s6622, 4
          %s6634 = int_to_ptr.vmem [resolvable:$true] %s6633
          %s6635 = sshll.u32 %s6632, 4
          %s6636 = int_to_ptr.hbm [resolvable:$true] %s6635
          %6641 = dma.vmem_to_hbm [thread:$0]  %s6634, 4096, %s6636, %s6619, 128, 128, 8
        $region44: #{upblock3d_forward.3} parent=39 // pred_fallthru
          _
      $region40: #{upblock3d_forward.3} parent=5 // pred_fallthru
        _
      %p6642 = scmp.le.s32.totalorder 2, %s14
      // Predicated region
      $region45: #{upblock3d_forward.3} parent=5 // pred_check
        %p6643 = pneg %p6642
      $region46: #{upblock3d_forward.3} parent=5 // pred_check_branch
        %6645 = sbr.rel (%p6643) target = $region48
      $region47: #{upblock3d_forward.3} parent=5 // pred_region
        %s6646 = ssub.s32 %s14, 2
        // Predicated region
        $region49: #{upblock3d_forward.3} parent=47 // pred_check
          %p6647 = pneg %p211
        $region50: #{upblock3d_forward.3} parent=47 // pred_check_branch
          %6649 = sbr.rel (%p6647) target = $region52
        $region51: #{upblock3d_forward.3} parent=47 // pred_region
          %s6650 = sand.u32 %s196, 1
          %s6651 = scalar_lea.sflag [#allocation3], %s6650
          %s6652 = sand.u32 %s196, 1
          %s6653 = smul.addr %s6652, 256
          %s6654 = scalar_lea.vmem [#allocation2], %s6653
          %6656 = dma.done %s6651, 4096
        $region52: #{upblock3d_forward.3} parent=47 // pred_fallthru
          _
      $region48: #{upblock3d_forward.3} parent=5 // pred_fallthru
        _
    $region6: #{upblock3d_forward.3} parent=1 // loop_footer
      %s18 = sadd.s32 1, %s14
    $region7: #{upblock3d_forward.3} parent=1 // loop_footer_branch
      %13 = sbr.rel target = $region3
    $region8: #{upblock3d_forward.3} parent=1 // loop_exit
      _
    %6657 = vsyncpa [#allocation3], 1
    %s6658 = scalar_lea.sflag [#allocation3], 1
    %6659 = vsyncpa %s6658, 1

</llo_original>
